<compile_context>
chip_gen: v6e
topology: v6e:2x2x1
jax: 0.10.0
libtpu: 0.0.40
codegen_flags: <defaults>
</compile_context>

<pallas_src>
import jax
import jax.numpy as jnp
from jax.experimental import pallas as pl
from jax.experimental.pallas import tpu as pltpu

# -------------------------- configuration -----------------------------------
B = 2
C_IN, C1, C2, C3 = 8, 16, 32, 64
SEQ = 24
HID = 128
LAT = 64
KSIZE = 11
PAD = 5

LB = SEQ * B             # activation rows (row index = l*B + b)
PB = PAD * B             # zero-pad rows on each side of the staging buffer
LPB = LB + 2 * PB        # padded staging-buffer rows
FLAT = SEQ * C3          # flattened encoder features (kernel order l*C3 + c)

_SELU_ALPHA = 1.6732632423543772
_SELU_SCALE = 1.0507009873554805


def _act(x, kind):
    if kind == "leaky":          # nn.LeakyReLU(), negative_slope = 0.01
        return jnp.where(x > 0, x, 0.01 * x)
    if kind == "selu":           # F.selu
        return _SELU_SCALE * jnp.where(
            x > 0, x, _SELU_ALPHA * (jnp.exp(jnp.minimum(x, 0.0)) - 1.0))
    if kind == "sigmoid":
        return 1.0 / (1.0 + jnp.exp(-x))
    return x


# ------------------------------ fused kernel --------------------------------
def _vae_fused_kernel(x_ref, eps_ref,
                      c1w, c1b, c2w, c2b, c3w, c3b,
                      f1w, f1b, f2w, f2b, f3w, f3b, f4w, f4b,
                      c4w, c4b, c5w, c5b, c6w, c6b,
                      ml_ref, recon_ref,
                      xp_ref, cols_ref, flat_ref):
    """Whole MolecularVAE forward, fully VMEM-resident.

    xp_ref   : (LPB, C3)      zero-padded, batch-interleaved staging buffer
    cols_ref : (LB, K*C3)     im2col matrix (per-layer prefix [:, :K*Cin] used)
    flat_ref : (B, SEQ*C3)    flattened encoder features / fc4 output
    """

    def stage(y, cin):
        # Place an (LB, cin) activation between the (already zeroed) pad rows.
        xp_ref[PB:PB + LB, :cin] = y

    def conv(w_ref, b_ref, cin, act):
        # im2col: tap k of the window for output row (l, b) sits at padded row
        # (l + k)*B + b, i.e. the contiguous row block [k*B, k*B + LB).
        for k in range(KSIZE):
            cols_ref[:, k * cin:(k + 1) * cin] = xp_ref[k * B:k * B + LB, :cin]
        y = jnp.dot(cols_ref[:, :KSIZE * cin], w_ref[...],
                    preferred_element_type=jnp.float32) + b_ref[...]
        return _act(y, act)

    # Zero the pad rows once (scratch is uninitialized); never written again.
    xp_ref[0:PB, :] = jnp.zeros((PB, C3), jnp.float32)
    xp_ref[PB + LB:LPB, :] = jnp.zeros((PB, C3), jnp.float32)

    # ------------------------------ encoder ---------------------------------
    stage(x_ref[...], C_IN)
    stage(conv(c1w, c1b, C_IN, "leaky"), C1)        # conv_1 + LeakyReLU
    stage(conv(c2w, c2b, C1, "leaky"), C2)          # conv_2 + LeakyReLU
    stage(conv(c3w, c3b, C2, "leaky"), C3)          # conv_3 + LeakyReLU

    # Flatten to (B, SEQ*C3): flat[b, l*C3 + c] = h3[l*B + b, c]
    for l in range(SEQ):
        flat_ref[:, l * C3:(l + 1) * C3] = \
            xp_ref[PB + l * B:PB + (l + 1) * B, :C3]

    h5 = _act(jnp.dot(flat_ref[...], f1w[...],
                      preferred_element_type=jnp.float32) + f1b[...], "selu")

    # fc21 | fc22 fused -> one lane-dense (B, 2*LAT) = (2, 128) output.
    ml_ref[...] = jnp.dot(h5, f2w[...],
                          preferred_element_type=jnp.float32) + f2b[...]
    mu = ml_ref[:, 0:LAT]
    logvar = ml_ref[:, LAT:2 * LAT]

    # -------------------------- reparameterize ------------------------------
    z = mu + eps_ref[...] * jnp.exp(0.5 * logvar)

    # ------------------------------ decoder ---------------------------------
    z1 = _act(jnp.dot(z, f3w[...],
                      preferred_element_type=jnp.float32) + f3b[...], "leaky")
    z2 = _act(jnp.dot(z1, f4w[...],
                      preferred_element_type=jnp.float32) + f4b[...], "leaky")

    # Un-flatten straight into the padded conv staging buffer.
    flat_ref[...] = z2
    for l in range(SEQ):
        xp_ref[PB + l * B:PB + (l + 1) * B, :C3] = \
            flat_ref[:, l * C3:(l + 1) * C3]

    stage(conv(c4w, c4b, C3, "leaky"), C2)          # conv_4 (transposed conv)
    stage(conv(c5w, c5b, C2, "leaky"), C1)          # conv_5 (transposed conv)
    recon_ref[...] = conv(c6w, c6b, C1, "sigmoid")  # conv_6 + Sigmoid


# --------------------------- parameters (torch layout) ----------------------
def _uniform(key, shape, fan_in):
    bound = 1.0 / (fan_in ** 0.5)
    return jax.random.uniform(key, shape, jnp.float32, -bound, bound)


def init_torch_params(key):
    """Synthetic parameters in PyTorch layouts (scaled-down sizes)."""
    ks = jax.random.split(key, 22)
    p = {}
    p["conv_1.w"] = _uniform(ks[0], (C1, C_IN, KSIZE), C_IN * KSIZE)
    p["conv_1.b"] = _uniform(ks[1], (C1,), C_IN * KSIZE)
    p["conv_2.w"] = _uniform(ks[2], (C2, C1, KSIZE), C1 * KSIZE)
    p["conv_2.b"] = _uniform(ks[3], (C2,), C1 * KSIZE)
    p["conv_3.w"] = _uniform(ks[4], (C3, C2, KSIZE), C2 * KSIZE)
    p["conv_3.b"] = _uniform(ks[5], (C3,), C2 * KSIZE)
    p["fc1.w"] = _uniform(ks[6], (HID, FLAT), FLAT)
    p["fc1.b"] = _uniform(ks[7], (HID,), FLAT)
    p["fc21.w"] = _uniform(ks[8], (LAT, HID), HID)
    p["fc21.b"] = _uniform(ks[9], (LAT,), HID)
    p["fc22.w"] = _uniform(ks[10], (LAT, HID), HID)
    p["fc22.b"] = _uniform(ks[11], (LAT,), HID)
    p["fc3.w"] = _uniform(ks[12], (HID, LAT), LAT)
    p["fc3.b"] = _uniform(ks[13], (HID,), LAT)
    p["fc4.w"] = _uniform(ks[14], (FLAT, HID), HID)
    p["fc4.b"] = _uniform(ks[15], (FLAT,), HID)
    # ConvTranspose1d weights: (Cin, Cout, K)
    p["conv_4.w"] = _uniform(ks[16], (C3, C2, KSIZE), C3 * KSIZE)
    p["conv_4.b"] = _uniform(ks[17], (C2,), C3 * KSIZE)
    p["conv_5.w"] = _uniform(ks[18], (C2, C1, KSIZE), C2 * KSIZE)
    p["conv_5.b"] = _uniform(ks[19], (C1,), C2 * KSIZE)
    p["conv_6.w"] = _uniform(ks[20], (C1, C_IN, KSIZE), C1 * KSIZE)
    p["conv_6.b"] = _uniform(ks[21], (C_IN,), C1 * KSIZE)
    return p


def to_kernel_params(tp):
    """One-time (outside-kernel) conversion torch layout -> kernel layout."""
    def conv_w(w):      # Conv1d (Cout, Cin, K) -> (K*Cin, Cout)
        co, ci, k = w.shape
        return jnp.transpose(w, (2, 1, 0)).reshape(k * ci, co)

    def convT_w(w):     # ConvTranspose1d (Cin, Cout, K) -> equivalent conv
        ci, co, k = w.shape                       # flip taps, swap channels
        return jnp.transpose(jnp.flip(w, axis=2), (2, 0, 1)).reshape(k * ci, co)

    def row(b):
        return b.reshape(1, -1)

    kp = {
        "conv1_w": conv_w(tp["conv_1.w"]), "conv1_b": row(tp["conv_1.b"]),
        "conv2_w": conv_w(tp["conv_2.w"]), "conv2_b": row(tp["conv_2.b"]),
        "conv3_w": conv_w(tp["conv_3.w"]), "conv3_b": row(tp["conv_3.b"]),
        "conv4_w": convT_w(tp["conv_4.w"]), "conv4_b": row(tp["conv_4.b"]),
        "conv5_w": convT_w(tp["conv_5.w"]), "conv5_b": row(tp["conv_5.b"]),
        "conv6_w": convT_w(tp["conv_6.w"]), "conv6_b": row(tp["conv_6.b"]),
    }
    # fc1: torch flatten order is (c*SEQ + l); kernel flatten order is (l*C3 + c).
    kp["fc1_w"] = jnp.transpose(tp["fc1.w"].reshape(HID, C3, SEQ),
                                (2, 1, 0)).reshape(FLAT, HID)
    kp["fc1_b"] = row(tp["fc1.b"])
    # fc21 | fc22 fused along the output dim -> lane-dense (HID, 2*LAT).
    kp["fc2_w"] = jnp.concatenate([tp["fc21.w"].T, tp["fc22.w"].T], axis=1)
    kp["fc2_b"] = row(jnp.concatenate([tp["fc21.b"], tp["fc22.b"]]))
    kp["fc3_w"] = tp["fc3.w"].T
    kp["fc3_b"] = row(tp["fc3.b"])
    # fc4: kernel un-flatten order is (l*C3 + c); torch's view uses (c*SEQ + l).
    kp["fc4_w"] = jnp.transpose(tp["fc4.w"].reshape(C3, SEQ, HID),
                                (2, 1, 0)).reshape(HID, FLAT)
    kp["fc4_b"] = jnp.transpose(tp["fc4.b"].reshape(C3, SEQ), (1, 0)).reshape(1, FLAT)
    return kp


# --------------------------------- forward ----------------------------------
_VMEM_SPEC = pl.BlockSpec(memory_space=pltpu.MemorySpace.VMEM)
_PARAM_ORDER = ("conv1_w", "conv1_b", "conv2_w", "conv2_b", "conv3_w", "conv3_b",
                "fc1_w", "fc1_b", "fc2_w", "fc2_b", "fc3_w", "fc3_b",
                "fc4_w", "fc4_b",
                "conv4_w", "conv4_b", "conv5_w", "conv5_b", "conv6_w", "conv6_b")


def molecular_vae_forward(kparams, x_ncw, eps):
    """x_ncw: (B, C_IN, SEQ) NCW like torch Conv1d.  eps ~ N(0,1), (B, LAT)."""
    # NCW -> interleaved rows (row = l*B + b, channels last); tiny boundary op.
    x_rows = jnp.transpose(x_ncw, (2, 0, 1)).reshape(LB, C_IN)

    ml, recon_rows = pl.pallas_call(
        _vae_fused_kernel,
        out_shape=(jax.ShapeDtypeStruct((B, 2 * LAT), jnp.float32),
                   jax.ShapeDtypeStruct((LB, C_IN), jnp.float32)),
        in_specs=[_VMEM_SPEC] * (2 + len(_PARAM_ORDER)),
        out_specs=(_VMEM_SPEC, _VMEM_SPEC),
        scratch_shapes=[
            pltpu.VMEM((LPB, C3), jnp.float32),          # padded staging buffer
            pltpu.VMEM((LB, KSIZE * C3), jnp.float32),   # im2col matrix
            pltpu.VMEM((B, FLAT), jnp.float32),          # flattened features
        ],
    )(x_rows, eps, *[kparams[k] for k in _PARAM_ORDER])

    mu, logvar = ml[:, :LAT], ml[:, LAT:]
    recon = jnp.transpose(recon_rows.reshape(SEQ, B, C_IN), (1, 2, 0))  # NCW
    return recon, mu, logvar


if __name__ == "__main__":
    key = jax.random.PRNGKey(0)
    k_x, k_p, k_eps = jax.random.split(key, 3)
    x = jax.random.normal(k_x, (B, C_IN, SEQ), jnp.float32)   # NCW Conv1d input
    eps = jax.random.normal(k_eps, (B, LAT), jnp.float32)     # torch randn_like
    kparams = to_kernel_params(init_torch_params(k_p))

    fwd = jax.jit(molecular_vae_forward)
    recon, mu, logvar = fwd(kparams, x, eps)
    jax.block_until_ready((recon, mu, logvar))

    assert recon.shape == (B, C_IN, SEQ)
    assert mu.shape == (B, LAT) and logvar.shape == (B, LAT)
    assert bool(jnp.all(jnp.isfinite(recon)))
    assert bool(jnp.all(recon >= 0.0)) and bool(jnp.all(recon <= 1.0))
    print("KERNEL_OK")
</pallas_src>

<mosaic_0001>
module attributes {stable_mosaic.version = 11 : i64} {
  func.func @_vae_fused_kernel(%arg0: memref<48x8xf32, #tpu.memory_space<vmem>>, %arg1: memref<2x64xf32, #tpu.memory_space<vmem>>, %arg2: memref<88x16xf32, #tpu.memory_space<vmem>>, %arg3: memref<1x16xf32, #tpu.memory_space<vmem>>, %arg4: memref<176x32xf32, #tpu.memory_space<vmem>>, %arg5: memref<1x32xf32, #tpu.memory_space<vmem>>, %arg6: memref<352x64xf32, #tpu.memory_space<vmem>>, %arg7: memref<1x64xf32, #tpu.memory_space<vmem>>, %arg8: memref<1536x128xf32, #tpu.memory_space<vmem>>, %arg9: memref<1x128xf32, #tpu.memory_space<vmem>>, %arg10: memref<128x128xf32, #tpu.memory_space<vmem>>, %arg11: memref<1x128xf32, #tpu.memory_space<vmem>>, %arg12: memref<64x128xf32, #tpu.memory_space<vmem>>, %arg13: memref<1x128xf32, #tpu.memory_space<vmem>>, %arg14: memref<128x1536xf32, #tpu.memory_space<vmem>>, %arg15: memref<1x1536xf32, #tpu.memory_space<vmem>>, %arg16: memref<704x32xf32, #tpu.memory_space<vmem>>, %arg17: memref<1x32xf32, #tpu.memory_space<vmem>>, %arg18: memref<352x16xf32, #tpu.memory_space<vmem>>, %arg19: memref<1x16xf32, #tpu.memory_space<vmem>>, %arg20: memref<176x8xf32, #tpu.memory_space<vmem>>, %arg21: memref<1x8xf32, #tpu.memory_space<vmem>>, %arg22: memref<2x128xf32, #tpu.memory_space<vmem>>, %arg23: memref<48x8xf32, #tpu.memory_space<vmem>>, %arg24: memref<68x64xf32, #tpu.memory_space<vmem>>, %arg25: memref<48x704xf32, #tpu.memory_space<vmem>>, %arg26: memref<2x1536xf32, #tpu.memory_space<vmem>>) attributes {dimension_semantics = [], scalar_prefetch = 0 : i64, scratch_operands = 3 : i64, tpu.core_type = #tpu.core_type<tc>} {
    %cst = arith.constant 0.000000e+00 : f32
    %0 = vector.broadcast %cst : f32 to vector<10x64xf32>
    %c0 = arith.constant 0 : index
    %c0_0 = arith.constant 0 : index
    %1 = vector.load %arg24[%c0, %c0_0] : memref<68x64xf32, #tpu.memory_space<vmem>>, vector<10x64xf32>
    tpu.vector_store %arg24[%c0, %c0_0], %0 {strides = array<i32>} : memref<68x64xf32, #tpu.memory_space<vmem>>, vector<10x64xf32>,
    %cst_1 = arith.constant 0.000000e+00 : f32
    %2 = vector.broadcast %cst_1 : f32 to vector<10x64xf32>
    %c58 = arith.constant 58 : index
    %c0_2 = arith.constant 0 : index
    %3 = vector.load %arg24[%c58, %c0_2] : memref<68x64xf32, #tpu.memory_space<vmem>>, vector<10x64xf32>
    tpu.vector_store %arg24[%c58, %c0_2], %2 {strides = array<i32>} : memref<68x64xf32, #tpu.memory_space<vmem>>, vector<10x64xf32>,
    %c0_3 = arith.constant 0 : index
    %c0_4 = arith.constant 0 : index
    %4 = vector.load %arg0[%c0_3, %c0_4] : memref<48x8xf32, #tpu.memory_space<vmem>>, vector<48x8xf32>
    %c10 = arith.constant 10 : index
    %c0_5 = arith.constant 0 : index
    %5 = vector.load %arg24[%c10, %c0_5] : memref<68x64xf32, #tpu.memory_space<vmem>>, vector<48x8xf32>
    tpu.vector_store %arg24[%c10, %c0_5], %4 {strides = array<i32>} : memref<68x64xf32, #tpu.memory_space<vmem>>, vector<48x8xf32>,
    %c0_6 = arith.constant 0 : index
    %c0_7 = arith.constant 0 : index
    %6 = vector.load %arg24[%c0_6, %c0_7] : memref<68x64xf32, #tpu.memory_space<vmem>>, vector<48x8xf32>
    %c0_8 = arith.constant 0 : index
    %c0_9 = arith.constant 0 : index
    %7 = vector.load %arg25[%c0_8, %c0_9] : memref<48x704xf32, #tpu.memory_space<vmem>>, vector<48x8xf32>
    tpu.vector_store %arg25[%c0_8, %c0_9], %6 {strides = array<i32>} : memref<48x704xf32, #tpu.memory_space<vmem>>, vector<48x8xf32>,
    %c2 = arith.constant 2 : index
    %c0_10 = arith.constant 0 : index
    %8 = vector.load %arg24[%c2, %c0_10] : memref<68x64xf32, #tpu.memory_space<vmem>>, vector<48x8xf32>
    %c0_11 = arith.constant 0 : index
    %c8 = arith.constant 8 : index
    %9 = vector.load %arg25[%c0_11, %c8] : memref<48x704xf32, #tpu.memory_space<vmem>>, vector<48x8xf32>
    tpu.vector_store %arg25[%c0_11, %c8], %8 {strides = array<i32>} : memref<48x704xf32, #tpu.memory_space<vmem>>, vector<48x8xf32>,
    %c4 = arith.constant 4 : index
    %c0_12 = arith.constant 0 : index
    %10 = vector.load %arg24[%c4, %c0_12] : memref<68x64xf32, #tpu.memory_space<vmem>>, vector<48x8xf32>
    %c0_13 = arith.constant 0 : index
    %c16 = arith.constant 16 : index
    %11 = vector.load %arg25[%c0_13, %c16] : memref<48x704xf32, #tpu.memory_space<vmem>>, vector<48x8xf32>
    tpu.vector_store %arg25[%c0_13, %c16], %10 {strides = array<i32>} : memref<48x704xf32, #tpu.memory_space<vmem>>, vector<48x8xf32>,
    %c6 = arith.constant 6 : index
    %c0_14 = arith.constant 0 : index
    %12 = vector.load %arg24[%c6, %c0_14] : memref<68x64xf32, #tpu.memory_space<vmem>>, vector<48x8xf32>
    %c0_15 = arith.constant 0 : index
    %c24 = arith.constant 24 : index
    %13 = vector.load %arg25[%c0_15, %c24] : memref<48x704xf32, #tpu.memory_space<vmem>>, vector<48x8xf32>
    tpu.vector_store %arg25[%c0_15, %c24], %12 {strides = array<i32>} : memref<48x704xf32, #tpu.memory_space<vmem>>, vector<48x8xf32>,
    %c8_16 = arith.constant 8 : index
    %c0_17 = arith.constant 0 : index
    %14 = vector.load %arg24[%c8_16, %c0_17] : memref<68x64xf32, #tpu.memory_space<vmem>>, vector<48x8xf32>
    %c0_18 = arith.constant 0 : index
    %c32 = arith.constant 32 : index
    %15 = vector.load %arg25[%c0_18, %c32] : memref<48x704xf32, #tpu.memory_space<vmem>>, vector<48x8xf32>
    tpu.vector_store %arg25[%c0_18, %c32], %14 {strides = array<i32>} : memref<48x704xf32, #tpu.memory_space<vmem>>, vector<48x8xf32>,
    %c10_19 = arith.constant 10 : index
    %c0_20 = arith.constant 0 : index
    %16 = vector.load %arg24[%c10_19, %c0_20] : memref<68x64xf32, #tpu.memory_space<vmem>>, vector<48x8xf32>
    %c0_21 = arith.constant 0 : index
    %c40 = arith.constant 40 : index
    %17 = vector.load %arg25[%c0_21, %c40] : memref<48x704xf32, #tpu.memory_space<vmem>>, vector<48x8xf32>
    tpu.vector_store %arg25[%c0_21, %c40], %16 {strides = array<i32>} : memref<48x704xf32, #tpu.memory_space<vmem>>, vector<48x8xf32>,
    %c12 = arith.constant 12 : index
    %c0_22 = arith.constant 0 : index
    %18 = vector.load %arg24[%c12, %c0_22] : memref<68x64xf32, #tpu.memory_space<vmem>>, vector<48x8xf32>
    %c0_23 = arith.constant 0 : index
    %c48 = arith.constant 48 : index
    %19 = vector.load %arg25[%c0_23, %c48] : memref<48x704xf32, #tpu.memory_space<vmem>>, vector<48x8xf32>
    tpu.vector_store %arg25[%c0_23, %c48], %18 {strides = array<i32>} : memref<48x704xf32, #tpu.memory_space<vmem>>, vector<48x8xf32>,
    %c14 = arith.constant 14 : index
    %c0_24 = arith.constant 0 : index
    %20 = vector.load %arg24[%c14, %c0_24] : memref<68x64xf32, #tpu.memory_space<vmem>>, vector<48x8xf32>
    %c0_25 = arith.constant 0 : index
    %c56 = arith.constant 56 : index
    %21 = vector.load %arg25[%c0_25, %c56] : memref<48x704xf32, #tpu.memory_space<vmem>>, vector<48x8xf32>
    tpu.vector_store %arg25[%c0_25, %c56], %20 {strides = array<i32>} : memref<48x704xf32, #tpu.memory_space<vmem>>, vector<48x8xf32>,
    %c16_26 = arith.constant 16 : index
    %c0_27 = arith.constant 0 : index
    %22 = vector.load %arg24[%c16_26, %c0_27] : memref<68x64xf32, #tpu.memory_space<vmem>>, vector<48x8xf32>
    %c0_28 = arith.constant 0 : index
    %c64 = arith.constant 64 : index
    %23 = vector.load %arg25[%c0_28, %c64] : memref<48x704xf32, #tpu.memory_space<vmem>>, vector<48x8xf32>
    tpu.vector_store %arg25[%c0_28, %c64], %22 {strides = array<i32>} : memref<48x704xf32, #tpu.memory_space<vmem>>, vector<48x8xf32>,
    %c18 = arith.constant 18 : index
    %c0_29 = arith.constant 0 : index
    %24 = vector.load %arg24[%c18, %c0_29] : memref<68x64xf32, #tpu.memory_space<vmem>>, vector<48x8xf32>
    %c0_30 = arith.constant 0 : index
    %c72 = arith.constant 72 : index
    %25 = vector.load %arg25[%c0_30, %c72] : memref<48x704xf32, #tpu.memory_space<vmem>>, vector<48x8xf32>
    tpu.vector_store %arg25[%c0_30, %c72], %24 {strides = array<i32>} : memref<48x704xf32, #tpu.memory_space<vmem>>, vector<48x8xf32>,
    %c20 = arith.constant 20 : index
    %c0_31 = arith.constant 0 : index
    %26 = vector.load %arg24[%c20, %c0_31] : memref<68x64xf32, #tpu.memory_space<vmem>>, vector<48x8xf32>
    %c0_32 = arith.constant 0 : index
    %c80 = arith.constant 80 : index
    %27 = vector.load %arg25[%c0_32, %c80] : memref<48x704xf32, #tpu.memory_space<vmem>>, vector<48x8xf32>
    tpu.vector_store %arg25[%c0_32, %c80], %26 {strides = array<i32>} : memref<48x704xf32, #tpu.memory_space<vmem>>, vector<48x8xf32>,
    %c0_33 = arith.constant 0 : index
    %c0_34 = arith.constant 0 : index
    %28 = vector.load %arg25[%c0_33, %c0_34] : memref<48x704xf32, #tpu.memory_space<vmem>>, vector<48x88xf32>
    %c0_35 = arith.constant 0 : index
    %c0_36 = arith.constant 0 : index
    %29 = vector.load %arg2[%c0_35, %c0_36] : memref<88x16xf32, #tpu.memory_space<vmem>>, vector<88x16xf32>
    %cst_37 = arith.constant dense<0.000000e+00> : vector<48x16xf32>
    %30 = tpu.matmul %28, %29, %cst_37 {dimension_numbers = #tpu.dot_dimension_numbers<[1], [0], [0], [1], [0, 0, 1, 1], [], []>} : vector<48x88xf32>, vector<88x16xf32>, vector<48x16xf32> -> vector<48x16xf32>
    %c0_38 = arith.constant 0 : index
    %c0_39 = arith.constant 0 : index
    %31 = vector.load %arg3[%c0_38, %c0_39] : memref<1x16xf32, #tpu.memory_space<vmem>>, vector<1x16xf32>
    %32 = vector.broadcast %31 : vector<1x16xf32> to vector<48x16xf32>
    %33 = arith.addf %30, %32 : vector<48x16xf32>
    %cst_40 = arith.constant 0.000000e+00 : f32
    %34 = vector.broadcast %cst_40 : f32 to vector<48x16xf32>
    %35 = arith.cmpf ogt, %33, %34 : vector<48x16xf32>
    %cst_41 = arith.constant 0.00999999977 : f32
    %36 = vector.broadcast %cst_41 : f32 to vector<48x16xf32>
    %37 = arith.mulf %36, %33 : vector<48x16xf32>
    %38 = arith.select %35, %33, %37 : vector<48x16xi1>, vector<48x16xf32>
    %c10_42 = arith.constant 10 : index
    %c0_43 = arith.constant 0 : index
    %39 = vector.load %arg24[%c10_42, %c0_43] : memref<68x64xf32, #tpu.memory_space<vmem>>, vector<48x16xf32>
    tpu.vector_store %arg24[%c10_42, %c0_43], %38 {strides = array<i32>} : memref<68x64xf32, #tpu.memory_space<vmem>>, vector<48x16xf32>,
    %c0_44 = arith.constant 0 : index
    %c0_45 = arith.constant 0 : index
    %40 = vector.load %arg24[%c0_44, %c0_45] : memref<68x64xf32, #tpu.memory_space<vmem>>, vector<48x16xf32>
    %c0_46 = arith.constant 0 : index
    %c0_47 = arith.constant 0 : index
    %41 = vector.load %arg25[%c0_46, %c0_47] : memref<48x704xf32, #tpu.memory_space<vmem>>, vector<48x16xf32>
    tpu.vector_store %arg25[%c0_46, %c0_47], %40 {strides = array<i32>} : memref<48x704xf32, #tpu.memory_space<vmem>>, vector<48x16xf32>,
    %c2_48 = arith.constant 2 : index
    %c0_49 = arith.constant 0 : index
    %42 = vector.load %arg24[%c2_48, %c0_49] : memref<68x64xf32, #tpu.memory_space<vmem>>, vector<48x16xf32>
    %c0_50 = arith.constant 0 : index
    %c16_51 = arith.constant 16 : index
    %43 = vector.load %arg25[%c0_50, %c16_51] : memref<48x704xf32, #tpu.memory_space<vmem>>, vector<48x16xf32>
    tpu.vector_store %arg25[%c0_50, %c16_51], %42 {strides = array<i32>} : memref<48x704xf32, #tpu.memory_space<vmem>>, vector<48x16xf32>,
    %c4_52 = arith.constant 4 : index
    %c0_53 = arith.constant 0 : index
    %44 = vector.load %arg24[%c4_52, %c0_53] : memref<68x64xf32, #tpu.memory_space<vmem>>, vector<48x16xf32>
    %c0_54 = arith.constant 0 : index
    %c32_55 = arith.constant 32 : index
    %45 = vector.load %arg25[%c0_54, %c32_55] : memref<48x704xf32, #tpu.memory_space<vmem>>, vector<48x16xf32>
    tpu.vector_store %arg25[%c0_54, %c32_55], %44 {strides = array<i32>} : memref<48x704xf32, #tpu.memory_space<vmem>>, vector<48x16xf32>,
    %c6_56 = arith.constant 6 : index
    %c0_57 = arith.constant 0 : index
    %46 = vector.load %arg24[%c6_56, %c0_57] : memref<68x64xf32, #tpu.memory_space<vmem>>, vector<48x16xf32>
    %c0_58 = arith.constant 0 : index
    %c48_59 = arith.constant 48 : index
    %47 = vector.load %arg25[%c0_58, %c48_59] : memref<48x704xf32, #tpu.memory_space<vmem>>, vector<48x16xf32>
    tpu.vector_store %arg25[%c0_58, %c48_59], %46 {strides = array<i32>} : memref<48x704xf32, #tpu.memory_space<vmem>>, vector<48x16xf32>,
    %c8_60 = arith.constant 8 : index
    %c0_61 = arith.constant 0 : index
    %48 = vector.load %arg24[%c8_60, %c0_61] : memref<68x64xf32, #tpu.memory_space<vmem>>, vector<48x16xf32>
    %c0_62 = arith.constant 0 : index
    %c64_63 = arith.constant 64 : index
    %49 = vector.load %arg25[%c0_62, %c64_63] : memref<48x704xf32, #tpu.memory_space<vmem>>, vector<48x16xf32>
    tpu.vector_store %arg25[%c0_62, %c64_63], %48 {strides = array<i32>} : memref<48x704xf32, #tpu.memory_space<vmem>>, vector<48x16xf32>,
    %c10_64 = arith.constant 10 : index
    %c0_65 = arith.constant 0 : index
    %50 = vector.load %arg24[%c10_64, %c0_65] : memref<68x64xf32, #tpu.memory_space<vmem>>, vector<48x16xf32>
    %c0_66 = arith.constant 0 : index
    %c80_67 = arith.constant 80 : index
    %51 = vector.load %arg25[%c0_66, %c80_67] : memref<48x704xf32, #tpu.memory_space<vmem>>, vector<48x16xf32>
    tpu.vector_store %arg25[%c0_66, %c80_67], %50 {strides = array<i32>} : memref<48x704xf32, #tpu.memory_space<vmem>>, vector<48x16xf32>,
    %c12_68 = arith.constant 12 : index
    %c0_69 = arith.constant 0 : index
    %52 = vector.load %arg24[%c12_68, %c0_69] : memref<68x64xf32, #tpu.memory_space<vmem>>, vector<48x16xf32>
    %c0_70 = arith.constant 0 : index
    %c96 = arith.constant 96 : index
    %53 = vector.load %arg25[%c0_70, %c96] : memref<48x704xf32, #tpu.memory_space<vmem>>, vector<48x16xf32>
    tpu.vector_store %arg25[%c0_70, %c96], %52 {strides = array<i32>} : memref<48x704xf32, #tpu.memory_space<vmem>>, vector<48x16xf32>,
    %c14_71 = arith.constant 14 : index
    %c0_72 = arith.constant 0 : index
    %54 = vector.load %arg24[%c14_71, %c0_72] : memref<68x64xf32, #tpu.memory_space<vmem>>, vector<48x16xf32>
    %c0_73 = arith.constant 0 : index
    %c112 = arith.constant 112 : index
    %55 = vector.load %arg25[%c0_73, %c112] : memref<48x704xf32, #tpu.memory_space<vmem>>, vector<48x16xf32>
    tpu.vector_store %arg25[%c0_73, %c112], %54 {strides = array<i32>} : memref<48x704xf32, #tpu.memory_space<vmem>>, vector<48x16xf32>,
    %c16_74 = arith.constant 16 : index
    %c0_75 = arith.constant 0 : index
    %56 = vector.load %arg24[%c16_74, %c0_75] : memref<68x64xf32, #tpu.memory_space<vmem>>, vector<48x16xf32>
    %c0_76 = arith.constant 0 : index
    %c128 = arith.constant 128 : index
    %57 = vector.load %arg25[%c0_76, %c128] : memref<48x704xf32, #tpu.memory_space<vmem>>, vector<48x16xf32>
    tpu.vector_store %arg25[%c0_76, %c128], %56 {strides = array<i32>} : memref<48x704xf32, #tpu.memory_space<vmem>>, vector<48x16xf32>,
    %c18_77 = arith.constant 18 : index
    %c0_78 = arith.constant 0 : index
    %58 = vector.load %arg24[%c18_77, %c0_78] : memref<68x64xf32, #tpu.memory_space<vmem>>, vector<48x16xf32>
    %c0_79 = arith.constant 0 : index
    %c144 = arith.constant 144 : index
    %59 = vector.load %arg25[%c0_79, %c144] : memref<48x704xf32, #tpu.memory_space<vmem>>, vector<48x16xf32>
    tpu.vector_store %arg25[%c0_79, %c144], %58 {strides = array<i32>} : memref<48x704xf32, #tpu.memory_space<vmem>>, vector<48x16xf32>,
    %c20_80 = arith.constant 20 : index
    %c0_81 = arith.constant 0 : index
    %60 = vector.load %arg24[%c20_80, %c0_81] : memref<68x64xf32, #tpu.memory_space<vmem>>, vector<48x16xf32>
    %c0_82 = arith.constant 0 : index
    %c160 = arith.constant 160 : index
    %61 = vector.load %arg25[%c0_82, %c160] : memref<48x704xf32, #tpu.memory_space<vmem>>, vector<48x16xf32>
    tpu.vector_store %arg25[%c0_82, %c160], %60 {strides = array<i32>} : memref<48x704xf32, #tpu.memory_space<vmem>>, vector<48x16xf32>,
    %c0_83 = arith.constant 0 : index
    %c0_84 = arith.constant 0 : index
    %62 = vector.load %arg25[%c0_83, %c0_84] : memref<48x704xf32, #tpu.memory_space<vmem>>, vector<48x176xf32>
    %c0_85 = arith.constant 0 : index
    %c0_86 = arith.constant 0 : index
    %63 = vector.load %arg4[%c0_85, %c0_86] : memref<176x32xf32, #tpu.memory_space<vmem>>, vector<176x32xf32>
    %cst_87 = arith.constant dense<0.000000e+00> : vector<48x32xf32>
    %64 = tpu.matmul %62, %63, %cst_87 {dimension_numbers = #tpu.dot_dimension_numbers<[1], [0], [0], [1], [0, 0, 1, 1], [], []>} : vector<48x176xf32>, vector<176x32xf32>, vector<48x32xf32> -> vector<48x32xf32>
    %c0_88 = arith.constant 0 : index
    %c0_89 = arith.constant 0 : index
    %65 = vector.load %arg5[%c0_88, %c0_89] : memref<1x32xf32, #tpu.memory_space<vmem>>, vector<1x32xf32>
    %66 = vector.broadcast %65 : vector<1x32xf32> to vector<48x32xf32>
    %67 = arith.addf %64, %66 : vector<48x32xf32>
    %cst_90 = arith.constant 0.000000e+00 : f32
    %68 = vector.broadcast %cst_90 : f32 to vector<48x32xf32>
    %69 = arith.cmpf ogt, %67, %68 : vector<48x32xf32>
    %cst_91 = arith.constant 0.00999999977 : f32
    %70 = vector.broadcast %cst_91 : f32 to vector<48x32xf32>
    %71 = arith.mulf %70, %67 : vector<48x32xf32>
    %72 = arith.select %69, %67, %71 : vector<48x32xi1>, vector<48x32xf32>
    %c10_92 = arith.constant 10 : index
    %c0_93 = arith.constant 0 : index
    %73 = vector.load %arg24[%c10_92, %c0_93] : memref<68x64xf32, #tpu.memory_space<vmem>>, vector<48x32xf32>
    tpu.vector_store %arg24[%c10_92, %c0_93], %72 {strides = array<i32>} : memref<68x64xf32, #tpu.memory_space<vmem>>, vector<48x32xf32>,
    %c0_94 = arith.constant 0 : index
    %c0_95 = arith.constant 0 : index
    %74 = vector.load %arg24[%c0_94, %c0_95] : memref<68x64xf32, #tpu.memory_space<vmem>>, vector<48x32xf32>
    %c0_96 = arith.constant 0 : index
    %c0_97 = arith.constant 0 : index
    %75 = vector.load %arg25[%c0_96, %c0_97] : memref<48x704xf32, #tpu.memory_space<vmem>>, vector<48x32xf32>
    tpu.vector_store %arg25[%c0_96, %c0_97], %74 {strides = array<i32>} : memref<48x704xf32, #tpu.memory_space<vmem>>, vector<48x32xf32>,
    %c2_98 = arith.constant 2 : index
    %c0_99 = arith.constant 0 : index
    %76 = vector.load %arg24[%c2_98, %c0_99] : memref<68x64xf32, #tpu.memory_space<vmem>>, vector<48x32xf32>
    %c0_100 = arith.constant 0 : index
    %c32_101 = arith.constant 32 : index
    %77 = vector.load %arg25[%c0_100, %c32_101] : memref<48x704xf32, #tpu.memory_space<vmem>>, vector<48x32xf32>
    tpu.vector_store %arg25[%c0_100, %c32_101], %76 {strides = array<i32>} : memref<48x704xf32, #tpu.memory_space<vmem>>, vector<48x32xf32>,
    %c4_102 = arith.constant 4 : index
    %c0_103 = arith.constant 0 : index
    %78 = vector.load %arg24[%c4_102, %c0_103] : memref<68x64xf32, #tpu.memory_space<vmem>>, vector<48x32xf32>
    %c0_104 = arith.constant 0 : index
    %c64_105 = arith.constant 64 : index
    %79 = vector.load %arg25[%c0_104, %c64_105] : memref<48x704xf32, #tpu.memory_space<vmem>>, vector<48x32xf32>
    tpu.vector_store %arg25[%c0_104, %c64_105], %78 {strides = array<i32>} : memref<48x704xf32, #tpu.memory_space<vmem>>, vector<48x32xf32>,
    %c6_106 = arith.constant 6 : index
    %c0_107 = arith.constant 0 : index
    %80 = vector.load %arg24[%c6_106, %c0_107] : memref<68x64xf32, #tpu.memory_space<vmem>>, vector<48x32xf32>
    %c0_108 = arith.constant 0 : index
    %c96_109 = arith.constant 96 : index
    %81 = vector.load %arg25[%c0_108, %c96_109] : memref<48x704xf32, #tpu.memory_space<vmem>>, vector<48x32xf32>
    tpu.vector_store %arg25[%c0_108, %c96_109], %80 {strides = array<i32>} : memref<48x704xf32, #tpu.memory_space<vmem>>, vector<48x32xf32>,
    %c8_110 = arith.constant 8 : index
    %c0_111 = arith.constant 0 : index
    %82 = vector.load %arg24[%c8_110, %c0_111] : memref<68x64xf32, #tpu.memory_space<vmem>>, vector<48x32xf32>
    %c0_112 = arith.constant 0 : index
    %c128_113 = arith.constant 128 : index
    %83 = vector.load %arg25[%c0_112, %c128_113] : memref<48x704xf32, #tpu.memory_space<vmem>>, vector<48x32xf32>
    tpu.vector_store %arg25[%c0_112, %c128_113], %82 {strides = array<i32>} : memref<48x704xf32, #tpu.memory_space<vmem>>, vector<48x32xf32>,
    %c10_114 = arith.constant 10 : index
    %c0_115 = arith.constant 0 : index
    %84 = vector.load %arg24[%c10_114, %c0_115] : memref<68x64xf32, #tpu.memory_space<vmem>>, vector<48x32xf32>
    %c0_116 = arith.constant 0 : index
    %c160_117 = arith.constant 160 : index
    %85 = vector.load %arg25[%c0_116, %c160_117] : memref<48x704xf32, #tpu.memory_space<vmem>>, vector<48x32xf32>
    tpu.vector_store %arg25[%c0_116, %c160_117], %84 {strides = array<i32>} : memref<48x704xf32, #tpu.memory_space<vmem>>, vector<48x32xf32>,
    %c12_118 = arith.constant 12 : index
    %c0_119 = arith.constant 0 : index
    %86 = vector.load %arg24[%c12_118, %c0_119] : memref<68x64xf32, #tpu.memory_space<vmem>>, vector<48x32xf32>
    %c0_120 = arith.constant 0 : index
    %c192 = arith.constant 192 : index
    %87 = vector.load %arg25[%c0_120, %c192] : memref<48x704xf32, #tpu.memory_space<vmem>>, vector<48x32xf32>
    tpu.vector_store %arg25[%c0_120, %c192], %86 {strides = array<i32>} : memref<48x704xf32, #tpu.memory_space<vmem>>, vector<48x32xf32>,
    %c14_121 = arith.constant 14 : index
    %c0_122 = arith.constant 0 : index
    %88 = vector.load %arg24[%c14_121, %c0_122] : memref<68x64xf32, #tpu.memory_space<vmem>>, vector<48x32xf32>
    %c0_123 = arith.constant 0 : index
    %c224 = arith.constant 224 : index
    %89 = vector.load %arg25[%c0_123, %c224] : memref<48x704xf32, #tpu.memory_space<vmem>>, vector<48x32xf32>
    tpu.vector_store %arg25[%c0_123, %c224], %88 {strides = array<i32>} : memref<48x704xf32, #tpu.memory_space<vmem>>, vector<48x32xf32>,
    %c16_124 = arith.constant 16 : index
    %c0_125 = arith.constant 0 : index
    %90 = vector.load %arg24[%c16_124, %c0_125] : memref<68x64xf32, #tpu.memory_space<vmem>>, vector<48x32xf32>
    %c0_126 = arith.constant 0 : index
    %c256 = arith.constant 256 : index
    %91 = vector.load %arg25[%c0_126, %c256] : memref<48x704xf32, #tpu.memory_space<vmem>>, vector<48x32xf32>
    tpu.vector_store %arg25[%c0_126, %c256], %90 {strides = array<i32>} : memref<48x704xf32, #tpu.memory_space<vmem>>, vector<48x32xf32>,
    %c18_127 = arith.constant 18 : index
    %c0_128 = arith.constant 0 : index
    %92 = vector.load %arg24[%c18_127, %c0_128] : memref<68x64xf32, #tpu.memory_space<vmem>>, vector<48x32xf32>
    %c0_129 = arith.constant 0 : index
    %c288 = arith.constant 288 : index
    %93 = vector.load %arg25[%c0_129, %c288] : memref<48x704xf32, #tpu.memory_space<vmem>>, vector<48x32xf32>
    tpu.vector_store %arg25[%c0_129, %c288], %92 {strides = array<i32>} : memref<48x704xf32, #tpu.memory_space<vmem>>, vector<48x32xf32>,
    %c20_130 = arith.constant 20 : index
    %c0_131 = arith.constant 0 : index
    %94 = vector.load %arg24[%c20_130, %c0_131] : memref<68x64xf32, #tpu.memory_space<vmem>>, vector<48x32xf32>
    %c0_132 = arith.constant 0 : index
    %c320 = arith.constant 320 : index
    %95 = vector.load %arg25[%c0_132, %c320] : memref<48x704xf32, #tpu.memory_space<vmem>>, vector<48x32xf32>
    tpu.vector_store %arg25[%c0_132, %c320], %94 {strides = array<i32>} : memref<48x704xf32, #tpu.memory_space<vmem>>, vector<48x32xf32>,
    %c0_133 = arith.constant 0 : index
    %c0_134 = arith.constant 0 : index
    %96 = vector.load %arg25[%c0_133, %c0_134] : memref<48x704xf32, #tpu.memory_space<vmem>>, vector<48x352xf32>
    %c0_135 = arith.constant 0 : index
    %c0_136 = arith.constant 0 : index
    %97 = vector.load %arg6[%c0_135, %c0_136] : memref<352x64xf32, #tpu.memory_space<vmem>>, vector<352x64xf32>
    %cst_137 = arith.constant dense<0.000000e+00> : vector<48x64xf32>
    %98 = tpu.matmul %96, %97, %cst_137 {dimension_numbers = #tpu.dot_dimension_numbers<[1], [0], [0], [1], [0, 0, 1, 1], [], []>} : vector<48x352xf32>, vector<352x64xf32>, vector<48x64xf32> -> vector<48x64xf32>
    %c0_138 = arith.constant 0 : index
    %c0_139 = arith.constant 0 : index
    %99 = vector.load %arg7[%c0_138, %c0_139] : memref<1x64xf32, #tpu.memory_space<vmem>>, vector<1x64xf32>
    %100 = vector.broadcast %99 : vector<1x64xf32> to vector<48x64xf32>
    %101 = arith.addf %98, %100 : vector<48x64xf32>
    %cst_140 = arith.constant 0.000000e+00 : f32
    %102 = vector.broadcast %cst_140 : f32 to vector<48x64xf32>
    %103 = arith.cmpf ogt, %101, %102 : vector<48x64xf32>
    %cst_141 = arith.constant 0.00999999977 : f32
    %104 = vector.broadcast %cst_141 : f32 to vector<48x64xf32>
    %105 = arith.mulf %104, %101 : vector<48x64xf32>
    %106 = arith.select %103, %101, %105 : vector<48x64xi1>, vector<48x64xf32>
    %c10_142 = arith.constant 10 : index
    %c0_143 = arith.constant 0 : index
    %107 = vector.load %arg24[%c10_142, %c0_143] : memref<68x64xf32, #tpu.memory_space<vmem>>, vector<48x64xf32>
    tpu.vector_store %arg24[%c10_142, %c0_143], %106 {strides = array<i32>} : memref<68x64xf32, #tpu.memory_space<vmem>>, vector<48x64xf32>,
    %c10_144 = arith.constant 10 : index
    %c0_145 = arith.constant 0 : index
    %108 = vector.load %arg24[%c10_144, %c0_145] : memref<68x64xf32, #tpu.memory_space<vmem>>, vector<2x64xf32>
    %c0_146 = arith.constant 0 : index
    %c0_147 = arith.constant 0 : index
    %109 = vector.load %arg26[%c0_146, %c0_147] : memref<2x1536xf32, #tpu.memory_space<vmem>>, vector<2x64xf32>
    tpu.vector_store %arg26[%c0_146, %c0_147], %108 {strides = array<i32>} : memref<2x1536xf32, #tpu.memory_space<vmem>>, vector<2x64xf32>,
    %c12_148 = arith.constant 12 : index
    %c0_149 = arith.constant 0 : index
    %110 = vector.load %arg24[%c12_148, %c0_149] : memref<68x64xf32, #tpu.memory_space<vmem>>, vector<2x64xf32>
    %c0_150 = arith.constant 0 : index
    %c64_151 = arith.constant 64 : index
    %111 = vector.load %arg26[%c0_150, %c64_151] : memref<2x1536xf32, #tpu.memory_space<vmem>>, vector<2x64xf32>
    tpu.vector_store %arg26[%c0_150, %c64_151], %110 {strides = array<i32>} : memref<2x1536xf32, #tpu.memory_space<vmem>>, vector<2x64xf32>,
    %c14_152 = arith.constant 14 : index
    %c0_153 = arith.constant 0 : index
    %112 = vector.load %arg24[%c14_152, %c0_153] : memref<68x64xf32, #tpu.memory_space<vmem>>, vector<2x64xf32>
    %c0_154 = arith.constant 0 : index
    %c128_155 = arith.constant 128 : index
    %113 = vector.load %arg26[%c0_154, %c128_155] : memref<2x1536xf32, #tpu.memory_space<vmem>>, vector<2x64xf32>
    tpu.vector_store %arg26[%c0_154, %c128_155], %112 {strides = array<i32>} : memref<2x1536xf32, #tpu.memory_space<vmem>>, vector<2x64xf32>,
    %c16_156 = arith.constant 16 : index
    %c0_157 = arith.constant 0 : index
    %114 = vector.load %arg24[%c16_156, %c0_157] : memref<68x64xf32, #tpu.memory_space<vmem>>, vector<2x64xf32>
    %c0_158 = arith.constant 0 : index
    %c192_159 = arith.constant 192 : index
    %115 = vector.load %arg26[%c0_158, %c192_159] : memref<2x1536xf32, #tpu.memory_space<vmem>>, vector<2x64xf32>
    tpu.vector_store %arg26[%c0_158, %c192_159], %114 {strides = array<i32>} : memref<2x1536xf32, #tpu.memory_space<vmem>>, vector<2x64xf32>,
    %c18_160 = arith.constant 18 : index
    %c0_161 = arith.constant 0 : index
    %116 = vector.load %arg24[%c18_160, %c0_161] : memref<68x64xf32, #tpu.memory_space<vmem>>, vector<2x64xf32>
    %c0_162 = arith.constant 0 : index
    %c256_163 = arith.constant 256 : index
    %117 = vector.load %arg26[%c0_162, %c256_163] : memref<2x1536xf32, #tpu.memory_space<vmem>>, vector<2x64xf32>
    tpu.vector_store %arg26[%c0_162, %c256_163], %116 {strides = array<i32>} : memref<2x1536xf32, #tpu.memory_space<vmem>>, vector<2x64xf32>,
    %c20_164 = arith.constant 20 : index
    %c0_165 = arith.constant 0 : index
    %118 = vector.load %arg24[%c20_164, %c0_165] : memref<68x64xf32, #tpu.memory_space<vmem>>, vector<2x64xf32>
    %c0_166 = arith.constant 0 : index
    %c320_167 = arith.constant 320 : index
    %119 = vector.load %arg26[%c0_166, %c320_167] : memref<2x1536xf32, #tpu.memory_space<vmem>>, vector<2x64xf32>
    tpu.vector_store %arg26[%c0_166, %c320_167], %118 {strides = array<i32>} : memref<2x1536xf32, #tpu.memory_space<vmem>>, vector<2x64xf32>,
    %c22 = arith.constant 22 : index
    %c0_168 = arith.constant 0 : index
    %120 = vector.load %arg24[%c22, %c0_168] : memref<68x64xf32, #tpu.memory_space<vmem>>, vector<2x64xf32>
    %c0_169 = arith.constant 0 : index
    %c384 = arith.constant 384 : index
    %121 = vector.load %arg26[%c0_169, %c384] : memref<2x1536xf32, #tpu.memory_space<vmem>>, vector<2x64xf32>
    tpu.vector_store %arg26[%c0_169, %c384], %120 {strides = array<i32>} : memref<2x1536xf32, #tpu.memory_space<vmem>>, vector<2x64xf32>,
    %c24_170 = arith.constant 24 : index
    %c0_171 = arith.constant 0 : index
    %122 = vector.load %arg24[%c24_170, %c0_171] : memref<68x64xf32, #tpu.memory_space<vmem>>, vector<2x64xf32>
    %c0_172 = arith.constant 0 : index
    %c448 = arith.constant 448 : index
    %123 = vector.load %arg26[%c0_172, %c448] : memref<2x1536xf32, #tpu.memory_space<vmem>>, vector<2x64xf32>
    tpu.vector_store %arg26[%c0_172, %c448], %122 {strides = array<i32>} : memref<2x1536xf32, #tpu.memory_space<vmem>>, vector<2x64xf32>,
    %c26 = arith.constant 26 : index
    %c0_173 = arith.constant 0 : index
    %124 = vector.load %arg24[%c26, %c0_173] : memref<68x64xf32, #tpu.memory_space<vmem>>, vector<2x64xf32>
    %c0_174 = arith.constant 0 : index
    %c512 = arith.constant 512 : index
    %125 = vector.load %arg26[%c0_174, %c512] : memref<2x1536xf32, #tpu.memory_space<vmem>>, vector<2x64xf32>
    tpu.vector_store %arg26[%c0_174, %c512], %124 {strides = array<i32>} : memref<2x1536xf32, #tpu.memory_space<vmem>>, vector<2x64xf32>,
    %c28 = arith.constant 28 : index
    %c0_175 = arith.constant 0 : index
    %126 = vector.load %arg24[%c28, %c0_175] : memref<68x64xf32, #tpu.memory_space<vmem>>, vector<2x64xf32>
    %c0_176 = arith.constant 0 : index
    %c576 = arith.constant 576 : index
    %127 = vector.load %arg26[%c0_176, %c576] : memref<2x1536xf32, #tpu.memory_space<vmem>>, vector<2x64xf32>
    tpu.vector_store %arg26[%c0_176, %c576], %126 {strides = array<i32>} : memref<2x1536xf32, #tpu.memory_space<vmem>>, vector<2x64xf32>,
    %c30 = arith.constant 30 : index
    %c0_177 = arith.constant 0 : index
    %128 = vector.load %arg24[%c30, %c0_177] : memref<68x64xf32, #tpu.memory_space<vmem>>, vector<2x64xf32>
    %c0_178 = arith.constant 0 : index
    %c640 = arith.constant 640 : index
    %129 = vector.load %arg26[%c0_178, %c640] : memref<2x1536xf32, #tpu.memory_space<vmem>>, vector<2x64xf32>
    tpu.vector_store %arg26[%c0_178, %c640], %128 {strides = array<i32>} : memref<2x1536xf32, #tpu.memory_space<vmem>>, vector<2x64xf32>,
    %c32_179 = arith.constant 32 : index
    %c0_180 = arith.constant 0 : index
    %130 = vector.load %arg24[%c32_179, %c0_180] : memref<68x64xf32, #tpu.memory_space<vmem>>, vector<2x64xf32>
    %c0_181 = arith.constant 0 : index
    %c704 = arith.constant 704 : index
    %131 = vector.load %arg26[%c0_181, %c704] : memref<2x1536xf32, #tpu.memory_space<vmem>>, vector<2x64xf32>
    tpu.vector_store %arg26[%c0_181, %c704], %130 {strides = array<i32>} : memref<2x1536xf32, #tpu.memory_space<vmem>>, vector<2x64xf32>,
    %c34 = arith.constant 34 : index
    %c0_182 = arith.constant 0 : index
    %132 = vector.load %arg24[%c34, %c0_182] : memref<68x64xf32, #tpu.memory_space<vmem>>, vector<2x64xf32>
    %c0_183 = arith.constant 0 : index
    %c768 = arith.constant 768 : index
    %133 = vector.load %arg26[%c0_183, %c768] : memref<2x1536xf32, #tpu.memory_space<vmem>>, vector<2x64xf32>
    tpu.vector_store %arg26[%c0_183, %c768], %132 {strides = array<i32>} : memref<2x1536xf32, #tpu.memory_space<vmem>>, vector<2x64xf32>,
    %c36 = arith.constant 36 : index
    %c0_184 = arith.constant 0 : index
    %134 = vector.load %arg24[%c36, %c0_184] : memref<68x64xf32, #tpu.memory_space<vmem>>, vector<2x64xf32>
    %c0_185 = arith.constant 0 : index
    %c832 = arith.constant 832 : index
    %135 = vector.load %arg26[%c0_185, %c832] : memref<2x1536xf32, #tpu.memory_space<vmem>>, vector<2x64xf32>
    tpu.vector_store %arg26[%c0_185, %c832], %134 {strides = array<i32>} : memref<2x1536xf32, #tpu.memory_space<vmem>>, vector<2x64xf32>,
    %c38 = arith.constant 38 : index
    %c0_186 = arith.constant 0 : index
    %136 = vector.load %arg24[%c38, %c0_186] : memref<68x64xf32, #tpu.memory_space<vmem>>, vector<2x64xf32>
    %c0_187 = arith.constant 0 : index
    %c896 = arith.constant 896 : index
    %137 = vector.load %arg26[%c0_187, %c896] : memref<2x1536xf32, #tpu.memory_space<vmem>>, vector<2x64xf32>
    tpu.vector_store %arg26[%c0_187, %c896], %136 {strides = array<i32>} : memref<2x1536xf32, #tpu.memory_space<vmem>>, vector<2x64xf32>,
    %c40_188 = arith.constant 40 : index
    %c0_189 = arith.constant 0 : index
    %138 = vector.load %arg24[%c40_188, %c0_189] : memref<68x64xf32, #tpu.memory_space<vmem>>, vector<2x64xf32>
    %c0_190 = arith.constant 0 : index
    %c960 = arith.constant 960 : index
    %139 = vector.load %arg26[%c0_190, %c960] : memref<2x1536xf32, #tpu.memory_space<vmem>>, vector<2x64xf32>
    tpu.vector_store %arg26[%c0_190, %c960], %138 {strides = array<i32>} : memref<2x1536xf32, #tpu.memory_space<vmem>>, vector<2x64xf32>,
    %c42 = arith.constant 42 : index
    %c0_191 = arith.constant 0 : index
    %140 = vector.load %arg24[%c42, %c0_191] : memref<68x64xf32, #tpu.memory_space<vmem>>, vector<2x64xf32>
    %c0_192 = arith.constant 0 : index
    %c1024 = arith.constant 1024 : index
    %141 = vector.load %arg26[%c0_192, %c1024] : memref<2x1536xf32, #tpu.memory_space<vmem>>, vector<2x64xf32>
    tpu.vector_store %arg26[%c0_192, %c1024], %140 {strides = array<i32>} : memref<2x1536xf32, #tpu.memory_space<vmem>>, vector<2x64xf32>,
    %c44 = arith.constant 44 : index
    %c0_193 = arith.constant 0 : index
    %142 = vector.load %arg24[%c44, %c0_193] : memref<68x64xf32, #tpu.memory_space<vmem>>, vector<2x64xf32>
    %c0_194 = arith.constant 0 : index
    %c1088 = arith.constant 1088 : index
    %143 = vector.load %arg26[%c0_194, %c1088] : memref<2x1536xf32, #tpu.memory_space<vmem>>, vector<2x64xf32>
    tpu.vector_store %arg26[%c0_194, %c1088], %142 {strides = array<i32>} : memref<2x1536xf32, #tpu.memory_space<vmem>>, vector<2x64xf32>,
    %c46 = arith.constant 46 : index
    %c0_195 = arith.constant 0 : index
    %144 = vector.load %arg24[%c46, %c0_195] : memref<68x64xf32, #tpu.memory_space<vmem>>, vector<2x64xf32>
    %c0_196 = arith.constant 0 : index
    %c1152 = arith.constant 1152 : index
    %145 = vector.load %arg26[%c0_196, %c1152] : memref<2x1536xf32, #tpu.memory_space<vmem>>, vector<2x64xf32>
    tpu.vector_store %arg26[%c0_196, %c1152], %144 {strides = array<i32>} : memref<2x1536xf32, #tpu.memory_space<vmem>>, vector<2x64xf32>,
    %c48_197 = arith.constant 48 : index
    %c0_198 = arith.constant 0 : index
    %146 = vector.load %arg24[%c48_197, %c0_198] : memref<68x64xf32, #tpu.memory_space<vmem>>, vector<2x64xf32>
    %c0_199 = arith.constant 0 : index
    %c1216 = arith.constant 1216 : index
    %147 = vector.load %arg26[%c0_199, %c1216] : memref<2x1536xf32, #tpu.memory_space<vmem>>, vector<2x64xf32>
    tpu.vector_store %arg26[%c0_199, %c1216], %146 {strides = array<i32>} : memref<2x1536xf32, #tpu.memory_space<vmem>>, vector<2x64xf32>,
    %c50 = arith.constant 50 : index
    %c0_200 = arith.constant 0 : index
    %148 = vector.load %arg24[%c50, %c0_200] : memref<68x64xf32, #tpu.memory_space<vmem>>, vector<2x64xf32>
    %c0_201 = arith.constant 0 : index
    %c1280 = arith.constant 1280 : index
    %149 = vector.load %arg26[%c0_201, %c1280] : memref<2x1536xf32, #tpu.memory_space<vmem>>, vector<2x64xf32>
    tpu.vector_store %arg26[%c0_201, %c1280], %148 {strides = array<i32>} : memref<2x1536xf32, #tpu.memory_space<vmem>>, vector<2x64xf32>,
    %c52 = arith.constant 52 : index
    %c0_202 = arith.constant 0 : index
    %150 = vector.load %arg24[%c52, %c0_202] : memref<68x64xf32, #tpu.memory_space<vmem>>, vector<2x64xf32>
    %c0_203 = arith.constant 0 : index
    %c1344 = arith.constant 1344 : index
    %151 = vector.load %arg26[%c0_203, %c1344] : memref<2x1536xf32, #tpu.memory_space<vmem>>, vector<2x64xf32>
    tpu.vector_store %arg26[%c0_203, %c1344], %150 {strides = array<i32>} : memref<2x1536xf32, #tpu.memory_space<vmem>>, vector<2x64xf32>,
    %c54 = arith.constant 54 : index
    %c0_204 = arith.constant 0 : index
    %152 = vector.load %arg24[%c54, %c0_204] : memref<68x64xf32, #tpu.memory_space<vmem>>, vector<2x64xf32>
    %c0_205 = arith.constant 0 : index
    %c1408 = arith.constant 1408 : index
    %153 = vector.load %arg26[%c0_205, %c1408] : memref<2x1536xf32, #tpu.memory_space<vmem>>, vector<2x64xf32>
    tpu.vector_store %arg26[%c0_205, %c1408], %152 {strides = array<i32>} : memref<2x1536xf32, #tpu.memory_space<vmem>>, vector<2x64xf32>,
    %c56_206 = arith.constant 56 : index
    %c0_207 = arith.constant 0 : index
    %154 = vector.load %arg24[%c56_206, %c0_207] : memref<68x64xf32, #tpu.memory_space<vmem>>, vector<2x64xf32>
    %c0_208 = arith.constant 0 : index
    %c1472 = arith.constant 1472 : index
    %155 = vector.load %arg26[%c0_208, %c1472] : memref<2x1536xf32, #tpu.memory_space<vmem>>, vector<2x64xf32>
    tpu.vector_store %arg26[%c0_208, %c1472], %154 {strides = array<i32>} : memref<2x1536xf32, #tpu.memory_space<vmem>>, vector<2x64xf32>,
    %c0_209 = arith.constant 0 : index
    %c0_210 = arith.constant 0 : index
    %156 = vector.load %arg26[%c0_209, %c0_210] : memref<2x1536xf32, #tpu.memory_space<vmem>>, vector<2x1536xf32>
    %c0_211 = arith.constant 0 : index
    %c0_212 = arith.constant 0 : index
    %157 = vector.load %arg8[%c0_211, %c0_212] : memref<1536x128xf32, #tpu.memory_space<vmem>>, vector<1536x128xf32>
    %cst_213 = arith.constant dense<0.000000e+00> : vector<2x128xf32>
    %158 = tpu.matmul %156, %157, %cst_213 {dimension_numbers = #tpu.dot_dimension_numbers<[1], [0], [0], [1], [0, 0, 1, 1], [], []>} : vector<2x1536xf32>, vector<1536x128xf32>, vector<2x128xf32> -> vector<2x128xf32>
    %c0_214 = arith.constant 0 : index
    %c0_215 = arith.constant 0 : index
    %159 = vector.load %arg9[%c0_214, %c0_215] : memref<1x128xf32, #tpu.memory_space<vmem>>, vector<1x128xf32>
    %160 = vector.broadcast %159 : vector<1x128xf32> to vector<2x128xf32>
    %161 = arith.addf %158, %160 : vector<2x128xf32>
    %cst_216 = arith.constant 0.000000e+00 : f32
    %162 = vector.broadcast %cst_216 : f32 to vector<2x128xf32>
    %163 = arith.cmpf ogt, %161, %162 : vector<2x128xf32>
    %cst_217 = arith.constant 0.000000e+00 : f32
    %164 = vector.broadcast %cst_217 : f32 to vector<2x128xf32>
    %165 = arith.minimumf %161, %164 : vector<2x128xf32>
    %166 = math.exp %165 : vector<2x128xf32>
    %cst_218 = arith.constant 1.000000e+00 : f32
    %167 = vector.broadcast %cst_218 : f32 to vector<2x128xf32>
    %168 = arith.subf %166, %167 : vector<2x128xf32>
    %cst_219 = arith.constant 1.67326319 : f32
    %169 = vector.broadcast %cst_219 : f32 to vector<2x128xf32>
    %170 = arith.mulf %169, %168 : vector<2x128xf32>
    %171 = arith.select %163, %161, %170 : vector<2x128xi1>, vector<2x128xf32>
    %cst_220 = arith.constant 1.05070102 : f32
    %172 = vector.broadcast %cst_220 : f32 to vector<2x128xf32>
    %173 = arith.mulf %172, %171 : vector<2x128xf32>
    %c0_221 = arith.constant 0 : index
    %c0_222 = arith.constant 0 : index
    %174 = vector.load %arg10[%c0_221, %c0_222] : memref<128x128xf32, #tpu.memory_space<vmem>>, vector<128x128xf32>
    %cst_223 = arith.constant dense<0.000000e+00> : vector<2x128xf32>
    %175 = tpu.matmul %173, %174, %cst_223 {dimension_numbers = #tpu.dot_dimension_numbers<[1], [0], [0], [1], [0, 0, 1, 1], [], []>} : vector<2x128xf32>, vector<128x128xf32>, vector<2x128xf32> -> vector<2x128xf32>
    %c0_224 = arith.constant 0 : index
    %c0_225 = arith.constant 0 : index
    %176 = vector.load %arg11[%c0_224, %c0_225] : memref<1x128xf32, #tpu.memory_space<vmem>>, vector<1x128xf32>
    %177 = vector.broadcast %176 : vector<1x128xf32> to vector<2x128xf32>
    %178 = arith.addf %175, %177 : vector<2x128xf32>
    %c0_226 = arith.constant 0 : index
    %c0_227 = arith.constant 0 : index
    %179 = vector.load %arg22[%c0_226, %c0_227] : memref<2x128xf32, #tpu.memory_space<vmem>>, vector<2x128xf32>
    tpu.vector_store %arg22[%c0_226, %c0_227], %178 {strides = array<i32>} : memref<2x128xf32, #tpu.memory_space<vmem>>, vector<2x128xf32>,
    %c0_228 = arith.constant 0 : index
    %c0_229 = arith.constant 0 : index
    %180 = vector.load %arg22[%c0_228, %c0_229] : memref<2x128xf32, #tpu.memory_space<vmem>>, vector<2x64xf32>
    %c0_230 = arith.constant 0 : index
    %c64_231 = arith.constant 64 : index
    %181 = vector.load %arg22[%c0_230, %c64_231] : memref<2x128xf32, #tpu.memory_space<vmem>>, vector<2x64xf32>
    %c0_232 = arith.constant 0 : index
    %c0_233 = arith.constant 0 : index
    %182 = vector.load %arg1[%c0_232, %c0_233] : memref<2x64xf32, #tpu.memory_space<vmem>>, vector<2x64xf32>
    %cst_234 = arith.constant 5.000000e-01 : f32
    %183 = vector.broadcast %cst_234 : f32 to vector<2x64xf32>
    %184 = arith.mulf %183, %181 : vector<2x64xf32>
    %185 = math.exp %184 : vector<2x64xf32>
    %186 = arith.mulf %182, %185 : vector<2x64xf32>
    %187 = arith.addf %180, %186 : vector<2x64xf32>
    %c0_235 = arith.constant 0 : index
    %c0_236 = arith.constant 0 : index
    %188 = vector.load %arg12[%c0_235, %c0_236] : memref<64x128xf32, #tpu.memory_space<vmem>>, vector<64x128xf32>
    %cst_237 = arith.constant dense<0.000000e+00> : vector<2x128xf32>
    %189 = tpu.matmul %187, %188, %cst_237 {dimension_numbers = #tpu.dot_dimension_numbers<[1], [0], [0], [1], [0, 0, 1, 1], [], []>} : vector<2x64xf32>, vector<64x128xf32>, vector<2x128xf32> -> vector<2x128xf32>
    %c0_238 = arith.constant 0 : index
    %c0_239 = arith.constant 0 : index
    %190 = vector.load %arg13[%c0_238, %c0_239] : memref<1x128xf32, #tpu.memory_space<vmem>>, vector<1x128xf32>
    %191 = vector.broadcast %190 : vector<1x128xf32> to vector<2x128xf32>
    %192 = arith.addf %189, %191 : vector<2x128xf32>
    %cst_240 = arith.constant 0.000000e+00 : f32
    %193 = vector.broadcast %cst_240 : f32 to vector<2x128xf32>
    %194 = arith.cmpf ogt, %192, %193 : vector<2x128xf32>
    %cst_241 = arith.constant 0.00999999977 : f32
    %195 = vector.broadcast %cst_241 : f32 to vector<2x128xf32>
    %196 = arith.mulf %195, %192 : vector<2x128xf32>
    %197 = arith.select %194, %192, %196 : vector<2x128xi1>, vector<2x128xf32>
    %c0_242 = arith.constant 0 : index
    %c0_243 = arith.constant 0 : index
    %198 = vector.load %arg14[%c0_242, %c0_243] : memref<128x1536xf32, #tpu.memory_space<vmem>>, vector<128x1536xf32>
    %cst_244 = arith.constant dense<0.000000e+00> : vector<2x1536xf32>
    %199 = tpu.matmul %197, %198, %cst_244 {dimension_numbers = #tpu.dot_dimension_numbers<[1], [0], [0], [1], [0, 0, 1, 1], [], []>} : vector<2x128xf32>, vector<128x1536xf32>, vector<2x1536xf32> -> vector<2x1536xf32>
    %c0_245 = arith.constant 0 : index
    %c0_246 = arith.constant 0 : index
    %200 = vector.load %arg15[%c0_245, %c0_246] : memref<1x1536xf32, #tpu.memory_space<vmem>>, vector<1x1536xf32>
    %201 = vector.broadcast %200 : vector<1x1536xf32> to vector<2x1536xf32>
    %202 = arith.addf %199, %201 : vector<2x1536xf32>
    %cst_247 = arith.constant 0.000000e+00 : f32
    %203 = vector.broadcast %cst_247 : f32 to vector<2x1536xf32>
    %204 = arith.cmpf ogt, %202, %203 : vector<2x1536xf32>
    %cst_248 = arith.constant 0.00999999977 : f32
    %205 = vector.broadcast %cst_248 : f32 to vector<2x1536xf32>
    %206 = arith.mulf %205, %202 : vector<2x1536xf32>
    %207 = arith.select %204, %202, %206 : vector<2x1536xi1>, vector<2x1536xf32>
    %c0_249 = arith.constant 0 : index
    %c0_250 = arith.constant 0 : index
    %208 = vector.load %arg26[%c0_249, %c0_250] : memref<2x1536xf32, #tpu.memory_space<vmem>>, vector<2x1536xf32>
    tpu.vector_store %arg26[%c0_249, %c0_250], %207 {strides = array<i32>} : memref<2x1536xf32, #tpu.memory_space<vmem>>, vector<2x1536xf32>,
    %c0_251 = arith.constant 0 : index
    %c0_252 = arith.constant 0 : index
    %209 = vector.load %arg26[%c0_251, %c0_252] : memref<2x1536xf32, #tpu.memory_space<vmem>>, vector<2x64xf32>
    %c10_253 = arith.constant 10 : index
    %c0_254 = arith.constant 0 : index
    %210 = vector.load %arg24[%c10_253, %c0_254] : memref<68x64xf32, #tpu.memory_space<vmem>>, vector<2x64xf32>
    tpu.vector_store %arg24[%c10_253, %c0_254], %209 {strides = array<i32>} : memref<68x64xf32, #tpu.memory_space<vmem>>, vector<2x64xf32>,
    %c0_255 = arith.constant 0 : index
    %c64_256 = arith.constant 64 : index
    %211 = vector.load %arg26[%c0_255, %c64_256] : memref<2x1536xf32, #tpu.memory_space<vmem>>, vector<2x64xf32>
    %c12_257 = arith.constant 12 : index
    %c0_258 = arith.constant 0 : index
    %212 = vector.load %arg24[%c12_257, %c0_258] : memref<68x64xf32, #tpu.memory_space<vmem>>, vector<2x64xf32>
    tpu.vector_store %arg24[%c12_257, %c0_258], %211 {strides = array<i32>} : memref<68x64xf32, #tpu.memory_space<vmem>>, vector<2x64xf32>,
    %c0_259 = arith.constant 0 : index
    %c128_260 = arith.constant 128 : index
    %213 = vector.load %arg26[%c0_259, %c128_260] : memref<2x1536xf32, #tpu.memory_space<vmem>>, vector<2x64xf32>
    %c14_261 = arith.constant 14 : index
    %c0_262 = arith.constant 0 : index
    %214 = vector.load %arg24[%c14_261, %c0_262] : memref<68x64xf32, #tpu.memory_space<vmem>>, vector<2x64xf32>
    tpu.vector_store %arg24[%c14_261, %c0_262], %213 {strides = array<i32>} : memref<68x64xf32, #tpu.memory_space<vmem>>, vector<2x64xf32>,
    %c0_263 = arith.constant 0 : index
    %c192_264 = arith.constant 192 : index
    %215 = vector.load %arg26[%c0_263, %c192_264] : memref<2x1536xf32, #tpu.memory_space<vmem>>, vector<2x64xf32>
    %c16_265 = arith.constant 16 : index
    %c0_266 = arith.constant 0 : index
    %216 = vector.load %arg24[%c16_265, %c0_266] : memref<68x64xf32, #tpu.memory_space<vmem>>, vector<2x64xf32>
    tpu.vector_store %arg24[%c16_265, %c0_266], %215 {strides = array<i32>} : memref<68x64xf32, #tpu.memory_space<vmem>>, vector<2x64xf32>,
    %c0_267 = arith.constant 0 : index
    %c256_268 = arith.constant 256 : index
    %217 = vector.load %arg26[%c0_267, %c256_268] : memref<2x1536xf32, #tpu.memory_space<vmem>>, vector<2x64xf32>
    %c18_269 = arith.constant 18 : index
    %c0_270 = arith.constant 0 : index
    %218 = vector.load %arg24[%c18_269, %c0_270] : memref<68x64xf32, #tpu.memory_space<vmem>>, vector<2x64xf32>
    tpu.vector_store %arg24[%c18_269, %c0_270], %217 {strides = array<i32>} : memref<68x64xf32, #tpu.memory_space<vmem>>, vector<2x64xf32>,
    %c0_271 = arith.constant 0 : index
    %c320_272 = arith.constant 320 : index
    %219 = vector.load %arg26[%c0_271, %c320_272] : memref<2x1536xf32, #tpu.memory_space<vmem>>, vector<2x64xf32>
    %c20_273 = arith.constant 20 : index
    %c0_274 = arith.constant 0 : index
    %220 = vector.load %arg24[%c20_273, %c0_274] : memref<68x64xf32, #tpu.memory_space<vmem>>, vector<2x64xf32>
    tpu.vector_store %arg24[%c20_273, %c0_274], %219 {strides = array<i32>} : memref<68x64xf32, #tpu.memory_space<vmem>>, vector<2x64xf32>,
    %c0_275 = arith.constant 0 : index
    %c384_276 = arith.constant 384 : index
    %221 = vector.load %arg26[%c0_275, %c384_276] : memref<2x1536xf32, #tpu.memory_space<vmem>>, vector<2x64xf32>
    %c22_277 = arith.constant 22 : index
    %c0_278 = arith.constant 0 : index
    %222 = vector.load %arg24[%c22_277, %c0_278] : memref<68x64xf32, #tpu.memory_space<vmem>>, vector<2x64xf32>
    tpu.vector_store %arg24[%c22_277, %c0_278], %221 {strides = array<i32>} : memref<68x64xf32, #tpu.memory_space<vmem>>, vector<2x64xf32>,
    %c0_279 = arith.constant 0 : index
    %c448_280 = arith.constant 448 : index
    %223 = vector.load %arg26[%c0_279, %c448_280] : memref<2x1536xf32, #tpu.memory_space<vmem>>, vector<2x64xf32>
    %c24_281 = arith.constant 24 : index
    %c0_282 = arith.constant 0 : index
    %224 = vector.load %arg24[%c24_281, %c0_282] : memref<68x64xf32, #tpu.memory_space<vmem>>, vector<2x64xf32>
    tpu.vector_store %arg24[%c24_281, %c0_282], %223 {strides = array<i32>} : memref<68x64xf32, #tpu.memory_space<vmem>>, vector<2x64xf32>,
    %c0_283 = arith.constant 0 : index
    %c512_284 = arith.constant 512 : index
    %225 = vector.load %arg26[%c0_283, %c512_284] : memref<2x1536xf32, #tpu.memory_space<vmem>>, vector<2x64xf32>
    %c26_285 = arith.constant 26 : index
    %c0_286 = arith.constant 0 : index
    %226 = vector.load %arg24[%c26_285, %c0_286] : memref<68x64xf32, #tpu.memory_space<vmem>>, vector<2x64xf32>
    tpu.vector_store %arg24[%c26_285, %c0_286], %225 {strides = array<i32>} : memref<68x64xf32, #tpu.memory_space<vmem>>, vector<2x64xf32>,
    %c0_287 = arith.constant 0 : index
    %c576_288 = arith.constant 576 : index
    %227 = vector.load %arg26[%c0_287, %c576_288] : memref<2x1536xf32, #tpu.memory_space<vmem>>, vector<2x64xf32>
    %c28_289 = arith.constant 28 : index
    %c0_290 = arith.constant 0 : index
    %228 = vector.load %arg24[%c28_289, %c0_290] : memref<68x64xf32, #tpu.memory_space<vmem>>, vector<2x64xf32>
    tpu.vector_store %arg24[%c28_289, %c0_290], %227 {strides = array<i32>} : memref<68x64xf32, #tpu.memory_space<vmem>>, vector<2x64xf32>,
    %c0_291 = arith.constant 0 : index
    %c640_292 = arith.constant 640 : index
    %229 = vector.load %arg26[%c0_291, %c640_292] : memref<2x1536xf32, #tpu.memory_space<vmem>>, vector<2x64xf32>
    %c30_293 = arith.constant 30 : index
    %c0_294 = arith.constant 0 : index
    %230 = vector.load %arg24[%c30_293, %c0_294] : memref<68x64xf32, #tpu.memory_space<vmem>>, vector<2x64xf32>
    tpu.vector_store %arg24[%c30_293, %c0_294], %229 {strides = array<i32>} : memref<68x64xf32, #tpu.memory_space<vmem>>, vector<2x64xf32>,
    %c0_295 = arith.constant 0 : index
    %c704_296 = arith.constant 704 : index
    %231 = vector.load %arg26[%c0_295, %c704_296] : memref<2x1536xf32, #tpu.memory_space<vmem>>, vector<2x64xf32>
    %c32_297 = arith.constant 32 : index
    %c0_298 = arith.constant 0 : index
    %232 = vector.load %arg24[%c32_297, %c0_298] : memref<68x64xf32, #tpu.memory_space<vmem>>, vector<2x64xf32>
    tpu.vector_store %arg24[%c32_297, %c0_298], %231 {strides = array<i32>} : memref<68x64xf32, #tpu.memory_space<vmem>>, vector<2x64xf32>,
    %c0_299 = arith.constant 0 : index
    %c768_300 = arith.constant 768 : index
    %233 = vector.load %arg26[%c0_299, %c768_300] : memref<2x1536xf32, #tpu.memory_space<vmem>>, vector<2x64xf32>
    %c34_301 = arith.constant 34 : index
    %c0_302 = arith.constant 0 : index
    %234 = vector.load %arg24[%c34_301, %c0_302] : memref<68x64xf32, #tpu.memory_space<vmem>>, vector<2x64xf32>
    tpu.vector_store %arg24[%c34_301, %c0_302], %233 {strides = array<i32>} : memref<68x64xf32, #tpu.memory_space<vmem>>, vector<2x64xf32>,
    %c0_303 = arith.constant 0 : index
    %c832_304 = arith.constant 832 : index
    %235 = vector.load %arg26[%c0_303, %c832_304] : memref<2x1536xf32, #tpu.memory_space<vmem>>, vector<2x64xf32>
    %c36_305 = arith.constant 36 : index
    %c0_306 = arith.constant 0 : index
    %236 = vector.load %arg24[%c36_305, %c0_306] : memref<68x64xf32, #tpu.memory_space<vmem>>, vector<2x64xf32>
    tpu.vector_store %arg24[%c36_305, %c0_306], %235 {strides = array<i32>} : memref<68x64xf32, #tpu.memory_space<vmem>>, vector<2x64xf32>,
    %c0_307 = arith.constant 0 : index
    %c896_308 = arith.constant 896 : index
    %237 = vector.load %arg26[%c0_307, %c896_308] : memref<2x1536xf32, #tpu.memory_space<vmem>>, vector<2x64xf32>
    %c38_309 = arith.constant 38 : index
    %c0_310 = arith.constant 0 : index
    %238 = vector.load %arg24[%c38_309, %c0_310] : memref<68x64xf32, #tpu.memory_space<vmem>>, vector<2x64xf32>
    tpu.vector_store %arg24[%c38_309, %c0_310], %237 {strides = array<i32>} : memref<68x64xf32, #tpu.memory_space<vmem>>, vector<2x64xf32>,
    %c0_311 = arith.constant 0 : index
    %c960_312 = arith.constant 960 : index
    %239 = vector.load %arg26[%c0_311, %c960_312] : memref<2x1536xf32, #tpu.memory_space<vmem>>, vector<2x64xf32>
    %c40_313 = arith.constant 40 : index
    %c0_314 = arith.constant 0 : index
    %240 = vector.load %arg24[%c40_313, %c0_314] : memref<68x64xf32, #tpu.memory_space<vmem>>, vector<2x64xf32>
    tpu.vector_store %arg24[%c40_313, %c0_314], %239 {strides = array<i32>} : memref<68x64xf32, #tpu.memory_space<vmem>>, vector<2x64xf32>,
    %c0_315 = arith.constant 0 : index
    %c1024_316 = arith.constant 1024 : index
    %241 = vector.load %arg26[%c0_315, %c1024_316] : memref<2x1536xf32, #tpu.memory_space<vmem>>, vector<2x64xf32>
    %c42_317 = arith.constant 42 : index
    %c0_318 = arith.constant 0 : index
    %242 = vector.load %arg24[%c42_317, %c0_318] : memref<68x64xf32, #tpu.memory_space<vmem>>, vector<2x64xf32>
    tpu.vector_store %arg24[%c42_317, %c0_318], %241 {strides = array<i32>} : memref<68x64xf32, #tpu.memory_space<vmem>>, vector<2x64xf32>,
    %c0_319 = arith.constant 0 : index
    %c1088_320 = arith.constant 1088 : index
    %243 = vector.load %arg26[%c0_319, %c1088_320] : memref<2x1536xf32, #tpu.memory_space<vmem>>, vector<2x64xf32>
    %c44_321 = arith.constant 44 : index
    %c0_322 = arith.constant 0 : index
    %244 = vector.load %arg24[%c44_321, %c0_322] : memref<68x64xf32, #tpu.memory_space<vmem>>, vector<2x64xf32>
    tpu.vector_store %arg24[%c44_321, %c0_322], %243 {strides = array<i32>} : memref<68x64xf32, #tpu.memory_space<vmem>>, vector<2x64xf32>,
    %c0_323 = arith.constant 0 : index
    %c1152_324 = arith.constant 1152 : index
    %245 = vector.load %arg26[%c0_323, %c1152_324] : memref<2x1536xf32, #tpu.memory_space<vmem>>, vector<2x64xf32>
    %c46_325 = arith.constant 46 : index
    %c0_326 = arith.constant 0 : index
    %246 = vector.load %arg24[%c46_325, %c0_326] : memref<68x64xf32, #tpu.memory_space<vmem>>, vector<2x64xf32>
    tpu.vector_store %arg24[%c46_325, %c0_326], %245 {strides = array<i32>} : memref<68x64xf32, #tpu.memory_space<vmem>>, vector<2x64xf32>,
    %c0_327 = arith.constant 0 : index
    %c1216_328 = arith.constant 1216 : index
    %247 = vector.load %arg26[%c0_327, %c1216_328] : memref<2x1536xf32, #tpu.memory_space<vmem>>, vector<2x64xf32>
    %c48_329 = arith.constant 48 : index
    %c0_330 = arith.constant 0 : index
    %248 = vector.load %arg24[%c48_329, %c0_330] : memref<68x64xf32, #tpu.memory_space<vmem>>, vector<2x64xf32>
    tpu.vector_store %arg24[%c48_329, %c0_330], %247 {strides = array<i32>} : memref<68x64xf32, #tpu.memory_space<vmem>>, vector<2x64xf32>,
    %c0_331 = arith.constant 0 : index
    %c1280_332 = arith.constant 1280 : index
    %249 = vector.load %arg26[%c0_331, %c1280_332] : memref<2x1536xf32, #tpu.memory_space<vmem>>, vector<2x64xf32>
    %c50_333 = arith.constant 50 : index
    %c0_334 = arith.constant 0 : index
    %250 = vector.load %arg24[%c50_333, %c0_334] : memref<68x64xf32, #tpu.memory_space<vmem>>, vector<2x64xf32>
    tpu.vector_store %arg24[%c50_333, %c0_334], %249 {strides = array<i32>} : memref<68x64xf32, #tpu.memory_space<vmem>>, vector<2x64xf32>,
    %c0_335 = arith.constant 0 : index
    %c1344_336 = arith.constant 1344 : index
    %251 = vector.load %arg26[%c0_335, %c1344_336] : memref<2x1536xf32, #tpu.memory_space<vmem>>, vector<2x64xf32>
    %c52_337 = arith.constant 52 : index
    %c0_338 = arith.constant 0 : index
    %252 = vector.load %arg24[%c52_337, %c0_338] : memref<68x64xf32, #tpu.memory_space<vmem>>, vector<2x64xf32>
    tpu.vector_store %arg24[%c52_337, %c0_338], %251 {strides = array<i32>} : memref<68x64xf32, #tpu.memory_space<vmem>>, vector<2x64xf32>,
    %c0_339 = arith.constant 0 : index
    %c1408_340 = arith.constant 1408 : index
    %253 = vector.load %arg26[%c0_339, %c1408_340] : memref<2x1536xf32, #tpu.memory_space<vmem>>, vector<2x64xf32>
    %c54_341 = arith.constant 54 : index
    %c0_342 = arith.constant 0 : index
    %254 = vector.load %arg24[%c54_341, %c0_342] : memref<68x64xf32, #tpu.memory_space<vmem>>, vector<2x64xf32>
    tpu.vector_store %arg24[%c54_341, %c0_342], %253 {strides = array<i32>} : memref<68x64xf32, #tpu.memory_space<vmem>>, vector<2x64xf32>,
    %c0_343 = arith.constant 0 : index
    %c1472_344 = arith.constant 1472 : index
    %255 = vector.load %arg26[%c0_343, %c1472_344] : memref<2x1536xf32, #tpu.memory_space<vmem>>, vector<2x64xf32>
    %c56_345 = arith.constant 56 : index
    %c0_346 = arith.constant 0 : index
    %256 = vector.load %arg24[%c56_345, %c0_346] : memref<68x64xf32, #tpu.memory_space<vmem>>, vector<2x64xf32>
    tpu.vector_store %arg24[%c56_345, %c0_346], %255 {strides = array<i32>} : memref<68x64xf32, #tpu.memory_space<vmem>>, vector<2x64xf32>,
    %c0_347 = arith.constant 0 : index
    %c0_348 = arith.constant 0 : index
    %257 = vector.load %arg24[%c0_347, %c0_348] : memref<68x64xf32, #tpu.memory_space<vmem>>, vector<48x64xf32>
    %c0_349 = arith.constant 0 : index
    %c0_350 = arith.constant 0 : index
    %258 = vector.load %arg25[%c0_349, %c0_350] : memref<48x704xf32, #tpu.memory_space<vmem>>, vector<48x64xf32>
    tpu.vector_store %arg25[%c0_349, %c0_350], %257 {strides = array<i32>} : memref<48x704xf32, #tpu.memory_space<vmem>>, vector<48x64xf32>,
    %c2_351 = arith.constant 2 : index
    %c0_352 = arith.constant 0 : index
    %259 = vector.load %arg24[%c2_351, %c0_352] : memref<68x64xf32, #tpu.memory_space<vmem>>, vector<48x64xf32>
    %c0_353 = arith.constant 0 : index
    %c64_354 = arith.constant 64 : index
    %260 = vector.load %arg25[%c0_353, %c64_354] : memref<48x704xf32, #tpu.memory_space<vmem>>, vector<48x64xf32>
    tpu.vector_store %arg25[%c0_353, %c64_354], %259 {strides = array<i32>} : memref<48x704xf32, #tpu.memory_space<vmem>>, vector<48x64xf32>,
    %c4_355 = arith.constant 4 : index
    %c0_356 = arith.constant 0 : index
    %261 = vector.load %arg24[%c4_355, %c0_356] : memref<68x64xf32, #tpu.memory_space<vmem>>, vector<48x64xf32>
    %c0_357 = arith.constant 0 : index
    %c128_358 = arith.constant 128 : index
    %262 = vector.load %arg25[%c0_357, %c128_358] : memref<48x704xf32, #tpu.memory_space<vmem>>, vector<48x64xf32>
    tpu.vector_store %arg25[%c0_357, %c128_358], %261 {strides = array<i32>} : memref<48x704xf32, #tpu.memory_space<vmem>>, vector<48x64xf32>,
    %c6_359 = arith.constant 6 : index
    %c0_360 = arith.constant 0 : index
    %263 = vector.load %arg24[%c6_359, %c0_360] : memref<68x64xf32, #tpu.memory_space<vmem>>, vector<48x64xf32>
    %c0_361 = arith.constant 0 : index
    %c192_362 = arith.constant 192 : index
    %264 = vector.load %arg25[%c0_361, %c192_362] : memref<48x704xf32, #tpu.memory_space<vmem>>, vector<48x64xf32>
    tpu.vector_store %arg25[%c0_361, %c192_362], %263 {strides = array<i32>} : memref<48x704xf32, #tpu.memory_space<vmem>>, vector<48x64xf32>,
    %c8_363 = arith.constant 8 : index
    %c0_364 = arith.constant 0 : index
    %265 = vector.load %arg24[%c8_363, %c0_364] : memref<68x64xf32, #tpu.memory_space<vmem>>, vector<48x64xf32>
    %c0_365 = arith.constant 0 : index
    %c256_366 = arith.constant 256 : index
    %266 = vector.load %arg25[%c0_365, %c256_366] : memref<48x704xf32, #tpu.memory_space<vmem>>, vector<48x64xf32>
    tpu.vector_store %arg25[%c0_365, %c256_366], %265 {strides = array<i32>} : memref<48x704xf32, #tpu.memory_space<vmem>>, vector<48x64xf32>,
    %c10_367 = arith.constant 10 : index
    %c0_368 = arith.constant 0 : index
    %267 = vector.load %arg24[%c10_367, %c0_368] : memref<68x64xf32, #tpu.memory_space<vmem>>, vector<48x64xf32>
    %c0_369 = arith.constant 0 : index
    %c320_370 = arith.constant 320 : index
    %268 = vector.load %arg25[%c0_369, %c320_370] : memref<48x704xf32, #tpu.memory_space<vmem>>, vector<48x64xf32>
    tpu.vector_store %arg25[%c0_369, %c320_370], %267 {strides = array<i32>} : memref<48x704xf32, #tpu.memory_space<vmem>>, vector<48x64xf32>,
    %c12_371 = arith.constant 12 : index
    %c0_372 = arith.constant 0 : index
    %269 = vector.load %arg24[%c12_371, %c0_372] : memref<68x64xf32, #tpu.memory_space<vmem>>, vector<48x64xf32>
    %c0_373 = arith.constant 0 : index
    %c384_374 = arith.constant 384 : index
    %270 = vector.load %arg25[%c0_373, %c384_374] : memref<48x704xf32, #tpu.memory_space<vmem>>, vector<48x64xf32>
    tpu.vector_store %arg25[%c0_373, %c384_374], %269 {strides = array<i32>} : memref<48x704xf32, #tpu.memory_space<vmem>>, vector<48x64xf32>,
    %c14_375 = arith.constant 14 : index
    %c0_376 = arith.constant 0 : index
    %271 = vector.load %arg24[%c14_375, %c0_376] : memref<68x64xf32, #tpu.memory_space<vmem>>, vector<48x64xf32>
    %c0_377 = arith.constant 0 : index
    %c448_378 = arith.constant 448 : index
    %272 = vector.load %arg25[%c0_377, %c448_378] : memref<48x704xf32, #tpu.memory_space<vmem>>, vector<48x64xf32>
    tpu.vector_store %arg25[%c0_377, %c448_378], %271 {strides = array<i32>} : memref<48x704xf32, #tpu.memory_space<vmem>>, vector<48x64xf32>,
    %c16_379 = arith.constant 16 : index
    %c0_380 = arith.constant 0 : index
    %273 = vector.load %arg24[%c16_379, %c0_380] : memref<68x64xf32, #tpu.memory_space<vmem>>, vector<48x64xf32>
    %c0_381 = arith.constant 0 : index
    %c512_382 = arith.constant 512 : index
    %274 = vector.load %arg25[%c0_381, %c512_382] : memref<48x704xf32, #tpu.memory_space<vmem>>, vector<48x64xf32>
    tpu.vector_store %arg25[%c0_381, %c512_382], %273 {strides = array<i32>} : memref<48x704xf32, #tpu.memory_space<vmem>>, vector<48x64xf32>,
    %c18_383 = arith.constant 18 : index
    %c0_384 = arith.constant 0 : index
    %275 = vector.load %arg24[%c18_383, %c0_384] : memref<68x64xf32, #tpu.memory_space<vmem>>, vector<48x64xf32>
    %c0_385 = arith.constant 0 : index
    %c576_386 = arith.constant 576 : index
    %276 = vector.load %arg25[%c0_385, %c576_386] : memref<48x704xf32, #tpu.memory_space<vmem>>, vector<48x64xf32>
    tpu.vector_store %arg25[%c0_385, %c576_386], %275 {strides = array<i32>} : memref<48x704xf32, #tpu.memory_space<vmem>>, vector<48x64xf32>,
    %c20_387 = arith.constant 20 : index
    %c0_388 = arith.constant 0 : index
    %277 = vector.load %arg24[%c20_387, %c0_388] : memref<68x64xf32, #tpu.memory_space<vmem>>, vector<48x64xf32>
    %c0_389 = arith.constant 0 : index
    %c640_390 = arith.constant 640 : index
    %278 = vector.load %arg25[%c0_389, %c640_390] : memref<48x704xf32, #tpu.memory_space<vmem>>, vector<48x64xf32>
    tpu.vector_store %arg25[%c0_389, %c640_390], %277 {strides = array<i32>} : memref<48x704xf32, #tpu.memory_space<vmem>>, vector<48x64xf32>,
    %c0_391 = arith.constant 0 : index
    %c0_392 = arith.constant 0 : index
    %279 = vector.load %arg25[%c0_391, %c0_392] : memref<48x704xf32, #tpu.memory_space<vmem>>, vector<48x704xf32>
    %c0_393 = arith.constant 0 : index
    %c0_394 = arith.constant 0 : index
    %280 = vector.load %arg16[%c0_393, %c0_394] : memref<704x32xf32, #tpu.memory_space<vmem>>, vector<704x32xf32>
    %cst_395 = arith.constant dense<0.000000e+00> : vector<48x32xf32>
    %281 = tpu.matmul %279, %280, %cst_395 {dimension_numbers = #tpu.dot_dimension_numbers<[1], [0], [0], [1], [0, 0, 1, 1], [], []>} : vector<48x704xf32>, vector<704x32xf32>, vector<48x32xf32> -> vector<48x32xf32>
    %c0_396 = arith.constant 0 : index
    %c0_397 = arith.constant 0 : index
    %282 = vector.load %arg17[%c0_396, %c0_397] : memref<1x32xf32, #tpu.memory_space<vmem>>, vector<1x32xf32>
    %283 = vector.broadcast %282 : vector<1x32xf32> to vector<48x32xf32>
    %284 = arith.addf %281, %283 : vector<48x32xf32>
    %cst_398 = arith.constant 0.000000e+00 : f32
    %285 = vector.broadcast %cst_398 : f32 to vector<48x32xf32>
    %286 = arith.cmpf ogt, %284, %285 : vector<48x32xf32>
    %cst_399 = arith.constant 0.00999999977 : f32
    %287 = vector.broadcast %cst_399 : f32 to vector<48x32xf32>
    %288 = arith.mulf %287, %284 : vector<48x32xf32>
    %289 = arith.select %286, %284, %288 : vector<48x32xi1>, vector<48x32xf32>
    %c10_400 = arith.constant 10 : index
    %c0_401 = arith.constant 0 : index
    %290 = vector.load %arg24[%c10_400, %c0_401] : memref<68x64xf32, #tpu.memory_space<vmem>>, vector<48x32xf32>
    tpu.vector_store %arg24[%c10_400, %c0_401], %289 {strides = array<i32>} : memref<68x64xf32, #tpu.memory_space<vmem>>, vector<48x32xf32>,
    %c0_402 = arith.constant 0 : index
    %c0_403 = arith.constant 0 : index
    %291 = vector.load %arg24[%c0_402, %c0_403] : memref<68x64xf32, #tpu.memory_space<vmem>>, vector<48x32xf32>
    %c0_404 = arith.constant 0 : index
    %c0_405 = arith.constant 0 : index
    %292 = vector.load %arg25[%c0_404, %c0_405] : memref<48x704xf32, #tpu.memory_space<vmem>>, vector<48x32xf32>
    tpu.vector_store %arg25[%c0_404, %c0_405], %291 {strides = array<i32>} : memref<48x704xf32, #tpu.memory_space<vmem>>, vector<48x32xf32>,
    %c2_406 = arith.constant 2 : index
    %c0_407 = arith.constant 0 : index
    %293 = vector.load %arg24[%c2_406, %c0_407] : memref<68x64xf32, #tpu.memory_space<vmem>>, vector<48x32xf32>
    %c0_408 = arith.constant 0 : index
    %c32_409 = arith.constant 32 : index
    %294 = vector.load %arg25[%c0_408, %c32_409] : memref<48x704xf32, #tpu.memory_space<vmem>>, vector<48x32xf32>
    tpu.vector_store %arg25[%c0_408, %c32_409], %293 {strides = array<i32>} : memref<48x704xf32, #tpu.memory_space<vmem>>, vector<48x32xf32>,
    %c4_410 = arith.constant 4 : index
    %c0_411 = arith.constant 0 : index
    %295 = vector.load %arg24[%c4_410, %c0_411] : memref<68x64xf32, #tpu.memory_space<vmem>>, vector<48x32xf32>
    %c0_412 = arith.constant 0 : index
    %c64_413 = arith.constant 64 : index
    %296 = vector.load %arg25[%c0_412, %c64_413] : memref<48x704xf32, #tpu.memory_space<vmem>>, vector<48x32xf32>
    tpu.vector_store %arg25[%c0_412, %c64_413], %295 {strides = array<i32>} : memref<48x704xf32, #tpu.memory_space<vmem>>, vector<48x32xf32>,
    %c6_414 = arith.constant 6 : index
    %c0_415 = arith.constant 0 : index
    %297 = vector.load %arg24[%c6_414, %c0_415] : memref<68x64xf32, #tpu.memory_space<vmem>>, vector<48x32xf32>
    %c0_416 = arith.constant 0 : index
    %c96_417 = arith.constant 96 : index
    %298 = vector.load %arg25[%c0_416, %c96_417] : memref<48x704xf32, #tpu.memory_space<vmem>>, vector<48x32xf32>
    tpu.vector_store %arg25[%c0_416, %c96_417], %297 {strides = array<i32>} : memref<48x704xf32, #tpu.memory_space<vmem>>, vector<48x32xf32>,
    %c8_418 = arith.constant 8 : index
    %c0_419 = arith.constant 0 : index
    %299 = vector.load %arg24[%c8_418, %c0_419] : memref<68x64xf32, #tpu.memory_space<vmem>>, vector<48x32xf32>
    %c0_420 = arith.constant 0 : index
    %c128_421 = arith.constant 128 : index
    %300 = vector.load %arg25[%c0_420, %c128_421] : memref<48x704xf32, #tpu.memory_space<vmem>>, vector<48x32xf32>
    tpu.vector_store %arg25[%c0_420, %c128_421], %299 {strides = array<i32>} : memref<48x704xf32, #tpu.memory_space<vmem>>, vector<48x32xf32>,
    %c10_422 = arith.constant 10 : index
    %c0_423 = arith.constant 0 : index
    %301 = vector.load %arg24[%c10_422, %c0_423] : memref<68x64xf32, #tpu.memory_space<vmem>>, vector<48x32xf32>
    %c0_424 = arith.constant 0 : index
    %c160_425 = arith.constant 160 : index
    %302 = vector.load %arg25[%c0_424, %c160_425] : memref<48x704xf32, #tpu.memory_space<vmem>>, vector<48x32xf32>
    tpu.vector_store %arg25[%c0_424, %c160_425], %301 {strides = array<i32>} : memref<48x704xf32, #tpu.memory_space<vmem>>, vector<48x32xf32>,
    %c12_426 = arith.constant 12 : index
    %c0_427 = arith.constant 0 : index
    %303 = vector.load %arg24[%c12_426, %c0_427] : memref<68x64xf32, #tpu.memory_space<vmem>>, vector<48x32xf32>
    %c0_428 = arith.constant 0 : index
    %c192_429 = arith.constant 192 : index
    %304 = vector.load %arg25[%c0_428, %c192_429] : memref<48x704xf32, #tpu.memory_space<vmem>>, vector<48x32xf32>
    tpu.vector_store %arg25[%c0_428, %c192_429], %303 {strides = array<i32>} : memref<48x704xf32, #tpu.memory_space<vmem>>, vector<48x32xf32>,
    %c14_430 = arith.constant 14 : index
    %c0_431 = arith.constant 0 : index
    %305 = vector.load %arg24[%c14_430, %c0_431] : memref<68x64xf32, #tpu.memory_space<vmem>>, vector<48x32xf32>
    %c0_432 = arith.constant 0 : index
    %c224_433 = arith.constant 224 : index
    %306 = vector.load %arg25[%c0_432, %c224_433] : memref<48x704xf32, #tpu.memory_space<vmem>>, vector<48x32xf32>
    tpu.vector_store %arg25[%c0_432, %c224_433], %305 {strides = array<i32>} : memref<48x704xf32, #tpu.memory_space<vmem>>, vector<48x32xf32>,
    %c16_434 = arith.constant 16 : index
    %c0_435 = arith.constant 0 : index
    %307 = vector.load %arg24[%c16_434, %c0_435] : memref<68x64xf32, #tpu.memory_space<vmem>>, vector<48x32xf32>
    %c0_436 = arith.constant 0 : index
    %c256_437 = arith.constant 256 : index
    %308 = vector.load %arg25[%c0_436, %c256_437] : memref<48x704xf32, #tpu.memory_space<vmem>>, vector<48x32xf32>
    tpu.vector_store %arg25[%c0_436, %c256_437], %307 {strides = array<i32>} : memref<48x704xf32, #tpu.memory_space<vmem>>, vector<48x32xf32>,
    %c18_438 = arith.constant 18 : index
    %c0_439 = arith.constant 0 : index
    %309 = vector.load %arg24[%c18_438, %c0_439] : memref<68x64xf32, #tpu.memory_space<vmem>>, vector<48x32xf32>
    %c0_440 = arith.constant 0 : index
    %c288_441 = arith.constant 288 : index
    %310 = vector.load %arg25[%c0_440, %c288_441] : memref<48x704xf32, #tpu.memory_space<vmem>>, vector<48x32xf32>
    tpu.vector_store %arg25[%c0_440, %c288_441], %309 {strides = array<i32>} : memref<48x704xf32, #tpu.memory_space<vmem>>, vector<48x32xf32>,
    %c20_442 = arith.constant 20 : index
    %c0_443 = arith.constant 0 : index
    %311 = vector.load %arg24[%c20_442, %c0_443] : memref<68x64xf32, #tpu.memory_space<vmem>>, vector<48x32xf32>
    %c0_444 = arith.constant 0 : index
    %c320_445 = arith.constant 320 : index
    %312 = vector.load %arg25[%c0_444, %c320_445] : memref<48x704xf32, #tpu.memory_space<vmem>>, vector<48x32xf32>
    tpu.vector_store %arg25[%c0_444, %c320_445], %311 {strides = array<i32>} : memref<48x704xf32, #tpu.memory_space<vmem>>, vector<48x32xf32>,
    %c0_446 = arith.constant 0 : index
    %c0_447 = arith.constant 0 : index
    %313 = vector.load %arg25[%c0_446, %c0_447] : memref<48x704xf32, #tpu.memory_space<vmem>>, vector<48x352xf32>
    %c0_448 = arith.constant 0 : index
    %c0_449 = arith.constant 0 : index
    %314 = vector.load %arg18[%c0_448, %c0_449] : memref<352x16xf32, #tpu.memory_space<vmem>>, vector<352x16xf32>
    %cst_450 = arith.constant dense<0.000000e+00> : vector<48x16xf32>
    %315 = tpu.matmul %313, %314, %cst_450 {dimension_numbers = #tpu.dot_dimension_numbers<[1], [0], [0], [1], [0, 0, 1, 1], [], []>} : vector<48x352xf32>, vector<352x16xf32>, vector<48x16xf32> -> vector<48x16xf32>
    %c0_451 = arith.constant 0 : index
    %c0_452 = arith.constant 0 : index
    %316 = vector.load %arg19[%c0_451, %c0_452] : memref<1x16xf32, #tpu.memory_space<vmem>>, vector<1x16xf32>
    %317 = vector.broadcast %316 : vector<1x16xf32> to vector<48x16xf32>
    %318 = arith.addf %315, %317 : vector<48x16xf32>
    %cst_453 = arith.constant 0.000000e+00 : f32
    %319 = vector.broadcast %cst_453 : f32 to vector<48x16xf32>
    %320 = arith.cmpf ogt, %318, %319 : vector<48x16xf32>
    %cst_454 = arith.constant 0.00999999977 : f32
    %321 = vector.broadcast %cst_454 : f32 to vector<48x16xf32>
    %322 = arith.mulf %321, %318 : vector<48x16xf32>
    %323 = arith.select %320, %318, %322 : vector<48x16xi1>, vector<48x16xf32>
    %c10_455 = arith.constant 10 : index
    %c0_456 = arith.constant 0 : index
    %324 = vector.load %arg24[%c10_455, %c0_456] : memref<68x64xf32, #tpu.memory_space<vmem>>, vector<48x16xf32>
    tpu.vector_store %arg24[%c10_455, %c0_456], %323 {strides = array<i32>} : memref<68x64xf32, #tpu.memory_space<vmem>>, vector<48x16xf32>,
    %c0_457 = arith.constant 0 : index
    %c0_458 = arith.constant 0 : index
    %325 = vector.load %arg24[%c0_457, %c0_458] : memref<68x64xf32, #tpu.memory_space<vmem>>, vector<48x16xf32>
    %c0_459 = arith.constant 0 : index
    %c0_460 = arith.constant 0 : index
    %326 = vector.load %arg25[%c0_459, %c0_460] : memref<48x704xf32, #tpu.memory_space<vmem>>, vector<48x16xf32>
    tpu.vector_store %arg25[%c0_459, %c0_460], %325 {strides = array<i32>} : memref<48x704xf32, #tpu.memory_space<vmem>>, vector<48x16xf32>,
    %c2_461 = arith.constant 2 : index
    %c0_462 = arith.constant 0 : index
    %327 = vector.load %arg24[%c2_461, %c0_462] : memref<68x64xf32, #tpu.memory_space<vmem>>, vector<48x16xf32>
    %c0_463 = arith.constant 0 : index
    %c16_464 = arith.constant 16 : index
    %328 = vector.load %arg25[%c0_463, %c16_464] : memref<48x704xf32, #tpu.memory_space<vmem>>, vector<48x16xf32>
    tpu.vector_store %arg25[%c0_463, %c16_464], %327 {strides = array<i32>} : memref<48x704xf32, #tpu.memory_space<vmem>>, vector<48x16xf32>,
    %c4_465 = arith.constant 4 : index
    %c0_466 = arith.constant 0 : index
    %329 = vector.load %arg24[%c4_465, %c0_466] : memref<68x64xf32, #tpu.memory_space<vmem>>, vector<48x16xf32>
    %c0_467 = arith.constant 0 : index
    %c32_468 = arith.constant 32 : index
    %330 = vector.load %arg25[%c0_467, %c32_468] : memref<48x704xf32, #tpu.memory_space<vmem>>, vector<48x16xf32>
    tpu.vector_store %arg25[%c0_467, %c32_468], %329 {strides = array<i32>} : memref<48x704xf32, #tpu.memory_space<vmem>>, vector<48x16xf32>,
    %c6_469 = arith.constant 6 : index
    %c0_470 = arith.constant 0 : index
    %331 = vector.load %arg24[%c6_469, %c0_470] : memref<68x64xf32, #tpu.memory_space<vmem>>, vector<48x16xf32>
    %c0_471 = arith.constant 0 : index
    %c48_472 = arith.constant 48 : index
    %332 = vector.load %arg25[%c0_471, %c48_472] : memref<48x704xf32, #tpu.memory_space<vmem>>, vector<48x16xf32>
    tpu.vector_store %arg25[%c0_471, %c48_472], %331 {strides = array<i32>} : memref<48x704xf32, #tpu.memory_space<vmem>>, vector<48x16xf32>,
    %c8_473 = arith.constant 8 : index
    %c0_474 = arith.constant 0 : index
    %333 = vector.load %arg24[%c8_473, %c0_474] : memref<68x64xf32, #tpu.memory_space<vmem>>, vector<48x16xf32>
    %c0_475 = arith.constant 0 : index
    %c64_476 = arith.constant 64 : index
    %334 = vector.load %arg25[%c0_475, %c64_476] : memref<48x704xf32, #tpu.memory_space<vmem>>, vector<48x16xf32>
    tpu.vector_store %arg25[%c0_475, %c64_476], %333 {strides = array<i32>} : memref<48x704xf32, #tpu.memory_space<vmem>>, vector<48x16xf32>,
    %c10_477 = arith.constant 10 : index
    %c0_478 = arith.constant 0 : index
    %335 = vector.load %arg24[%c10_477, %c0_478] : memref<68x64xf32, #tpu.memory_space<vmem>>, vector<48x16xf32>
    %c0_479 = arith.constant 0 : index
    %c80_480 = arith.constant 80 : index
    %336 = vector.load %arg25[%c0_479, %c80_480] : memref<48x704xf32, #tpu.memory_space<vmem>>, vector<48x16xf32>
    tpu.vector_store %arg25[%c0_479, %c80_480], %335 {strides = array<i32>} : memref<48x704xf32, #tpu.memory_space<vmem>>, vector<48x16xf32>,
    %c12_481 = arith.constant 12 : index
    %c0_482 = arith.constant 0 : index
    %337 = vector.load %arg24[%c12_481, %c0_482] : memref<68x64xf32, #tpu.memory_space<vmem>>, vector<48x16xf32>
    %c0_483 = arith.constant 0 : index
    %c96_484 = arith.constant 96 : index
    %338 = vector.load %arg25[%c0_483, %c96_484] : memref<48x704xf32, #tpu.memory_space<vmem>>, vector<48x16xf32>
    tpu.vector_store %arg25[%c0_483, %c96_484], %337 {strides = array<i32>} : memref<48x704xf32, #tpu.memory_space<vmem>>, vector<48x16xf32>,
    %c14_485 = arith.constant 14 : index
    %c0_486 = arith.constant 0 : index
    %339 = vector.load %arg24[%c14_485, %c0_486] : memref<68x64xf32, #tpu.memory_space<vmem>>, vector<48x16xf32>
    %c0_487 = arith.constant 0 : index
    %c112_488 = arith.constant 112 : index
    %340 = vector.load %arg25[%c0_487, %c112_488] : memref<48x704xf32, #tpu.memory_space<vmem>>, vector<48x16xf32>
    tpu.vector_store %arg25[%c0_487, %c112_488], %339 {strides = array<i32>} : memref<48x704xf32, #tpu.memory_space<vmem>>, vector<48x16xf32>,
    %c16_489 = arith.constant 16 : index
    %c0_490 = arith.constant 0 : index
    %341 = vector.load %arg24[%c16_489, %c0_490] : memref<68x64xf32, #tpu.memory_space<vmem>>, vector<48x16xf32>
    %c0_491 = arith.constant 0 : index
    %c128_492 = arith.constant 128 : index
    %342 = vector.load %arg25[%c0_491, %c128_492] : memref<48x704xf32, #tpu.memory_space<vmem>>, vector<48x16xf32>
    tpu.vector_store %arg25[%c0_491, %c128_492], %341 {strides = array<i32>} : memref<48x704xf32, #tpu.memory_space<vmem>>, vector<48x16xf32>,
    %c18_493 = arith.constant 18 : index
    %c0_494 = arith.constant 0 : index
    %343 = vector.load %arg24[%c18_493, %c0_494] : memref<68x64xf32, #tpu.memory_space<vmem>>, vector<48x16xf32>
    %c0_495 = arith.constant 0 : index
    %c144_496 = arith.constant 144 : index
    %344 = vector.load %arg25[%c0_495, %c144_496] : memref<48x704xf32, #tpu.memory_space<vmem>>, vector<48x16xf32>
    tpu.vector_store %arg25[%c0_495, %c144_496], %343 {strides = array<i32>} : memref<48x704xf32, #tpu.memory_space<vmem>>, vector<48x16xf32>,
    %c20_497 = arith.constant 20 : index
    %c0_498 = arith.constant 0 : index
    %345 = vector.load %arg24[%c20_497, %c0_498] : memref<68x64xf32, #tpu.memory_space<vmem>>, vector<48x16xf32>
    %c0_499 = arith.constant 0 : index
    %c160_500 = arith.constant 160 : index
    %346 = vector.load %arg25[%c0_499, %c160_500] : memref<48x704xf32, #tpu.memory_space<vmem>>, vector<48x16xf32>
    tpu.vector_store %arg25[%c0_499, %c160_500], %345 {strides = array<i32>} : memref<48x704xf32, #tpu.memory_space<vmem>>, vector<48x16xf32>,
    %c0_501 = arith.constant 0 : index
    %c0_502 = arith.constant 0 : index
    %347 = vector.load %arg25[%c0_501, %c0_502] : memref<48x704xf32, #tpu.memory_space<vmem>>, vector<48x176xf32>
    %c0_503 = arith.constant 0 : index
    %c0_504 = arith.constant 0 : index
    %348 = vector.load %arg20[%c0_503, %c0_504] : memref<176x8xf32, #tpu.memory_space<vmem>>, vector<176x8xf32>
    %cst_505 = arith.constant dense<0.000000e+00> : vector<48x8xf32>
    %349 = tpu.matmul %347, %348, %cst_505 {dimension_numbers = #tpu.dot_dimension_numbers<[1], [0], [0], [1], [0, 0, 1, 1], [], []>} : vector<48x176xf32>, vector<176x8xf32>, vector<48x8xf32> -> vector<48x8xf32>
    %c0_506 = arith.constant 0 : index
    %c0_507 = arith.constant 0 : index
    %350 = vector.load %arg21[%c0_506, %c0_507] : memref<1x8xf32, #tpu.memory_space<vmem>>, vector<1x8xf32>
    %351 = vector.broadcast %350 : vector<1x8xf32> to vector<48x8xf32>
    %352 = arith.addf %349, %351 : vector<48x8xf32>
    %cst_508 = arith.constant 0.000000e+00 : f32
    %353 = vector.broadcast %cst_508 : f32 to vector<48x8xf32>
    %354 = arith.subf %353, %352 : vector<48x8xf32>
    %355 = math.exp %354 : vector<48x8xf32>
    %cst_509 = arith.constant 1.000000e+00 : f32
    %356 = vector.broadcast %cst_509 : f32 to vector<48x8xf32>
    %357 = arith.addf %356, %355 : vector<48x8xf32>
    %cst_510 = arith.constant 1.000000e+00 : f32
    %358 = vector.broadcast %cst_510 : f32 to vector<48x8xf32>
    %359 = arith.divf %358, %357 : vector<48x8xf32>
    %c0_511 = arith.constant 0 : index
    %c0_512 = arith.constant 0 : index
    %360 = vector.load %arg23[%c0_511, %c0_512] : memref<48x8xf32, #tpu.memory_space<vmem>>, vector<48x8xf32>
    tpu.vector_store %arg23[%c0_511, %c0_512], %359 {strides = array<i32>} : memref<48x8xf32, #tpu.memory_space<vmem>>, vector<48x8xf32>,
    return
  }
}

</mosaic_0001>

<llo_original>
// kernel: molecular_vae_forward.1
$region0: #{molecular_vae_forward.1}
  #allocation0 [shape = 'u32[]', space=smem, size = 0x4, offset = 0x4, fixed_abs, tag = 'smem constant byte address 0x4 - core index']
  #allocation1 [shape = 'u32[144,128]{1,0:T(1,128)}', space=vmem, size = 0x12000, scoped, tag = 'internal scratch']
  #allocation2 [shape = 'f32[68,64]{1,0:T(8,128)}', space=vmem, size = 0x9000, scoped, tag = 'scratch operand']
  #allocation3 [shape = 'f32[48,704]{1,0:T(8,128)}', space=vmem, size = 0x24000, scoped, tag = 'scratch operand']
  #allocation4 [shape = 'f32[2,1536]{1,0:T(2,128)}', space=vmem, size = 0x3000, scoped, tag = 'scratch operand']
  %s0 = inlined_call_operand.vmem [shape: f32[48,8], index: 0, kind: input, shape index: {}]
  %s1 = inlined_call_operand.vmem [shape: f32[2,64], index: 1, kind: input, shape index: {}]
  %s2 = inlined_call_operand.vmem [shape: f32[88,16], index: 2, kind: input, shape index: {}]
  %s3 = inlined_call_operand.vmem [shape: f32[1,16], index: 3, kind: input, shape index: {}]
  %s4 = inlined_call_operand.vmem [shape: f32[176,32], index: 4, kind: input, shape index: {}]
  %s5 = inlined_call_operand.vmem [shape: f32[1,32], index: 5, kind: input, shape index: {}]
  %s6 = inlined_call_operand.vmem [shape: f32[352,64], index: 6, kind: input, shape index: {}]
  %s7 = inlined_call_operand.vmem [shape: f32[1,64], index: 7, kind: input, shape index: {}]
  %s8 = inlined_call_operand.vmem [shape: f32[1536,128], index: 8, kind: input, shape index: {}]
  %s9 = inlined_call_operand.vmem [shape: f32[1,128], index: 9, kind: input, shape index: {}]
  %s10 = inlined_call_operand.vmem [shape: f32[128,128], index: 10, kind: input, shape index: {}]
  %s11 = inlined_call_operand.vmem [shape: f32[1,128], index: 11, kind: input, shape index: {}]
  %s12 = inlined_call_operand.vmem [shape: f32[64,128], index: 12, kind: input, shape index: {}]
  %s13 = inlined_call_operand.vmem [shape: f32[1,128], index: 13, kind: input, shape index: {}]
  %s14 = inlined_call_operand.hbm [shape: f32[128,1536], index: 14, kind: input, shape index: {}]
  %s15 = inlined_call_operand.vmem [shape: f32[1,1536], index: 15, kind: input, shape index: {}]
  %s16 = inlined_call_operand.vmem [shape: f32[704,32], index: 16, kind: input, shape index: {}]
  %s17 = inlined_call_operand.vmem [shape: f32[1,32], index: 17, kind: input, shape index: {}]
  %s18 = inlined_call_operand.vmem [shape: f32[352,16], index: 18, kind: input, shape index: {}]
  %s19 = inlined_call_operand.vmem [shape: f32[1,16], index: 19, kind: input, shape index: {}]
  %s20 = inlined_call_operand.vmem [shape: f32[176,8], index: 20, kind: input, shape index: {}]
  %s21 = inlined_call_operand.vmem [shape: f32[1,8], index: 21, kind: input, shape index: {}]
  %s22 = inlined_call_operand.vmem [shape: f32[2,128], index: 22, kind: output, shape index: {0}]
  %s23 = inlined_call_operand.vmem [shape: f32[48,8], index: 23, kind: output, shape index: {1}]
  %24 = xla_tuple %s22, %s23
  %s25 = sld [smem:[#allocation0]]
  $region110: #{molecular_vae_forward.1} parent=0
    _
  %s27 = ssub.s32 1, %s25
  %s28 = scalar_select 0, %s27, %s25
  $region1: #{molecular_vae_forward.1} parent=0
    #allocation5 [shape = 'u8[786432]{0}', space=vmem, size = 0xc0000, scoped, tag = 'input window, operand 14, single buffered']
    #allocation6 [shape = 's32[1]{0}', space=sflag, size = 0x4, scoped, tag = 'scoped memory for molecular_vae_forward.1']
    %29 = vsyncpa [#allocation6], 0
    // Predicated region
    $region2: #{molecular_vae_forward.1} parent=1 // pred_check
      _
    $region3: #{molecular_vae_forward.1} parent=1 // pred_check_branch
      %31 = sbr.rel (0) target = $region5
    $region4: #{molecular_vae_forward.1} parent=1 // pred_region
      _
    $region5: #{molecular_vae_forward.1} parent=1 // pred_fallthru
      _
    // Predicated region
    $region6: #{molecular_vae_forward.1} parent=1 // pred_check
      _
    $region7: #{molecular_vae_forward.1} parent=1 // pred_check_branch
      %33 = sbr.rel (0) target = $region9
    $region8: #{molecular_vae_forward.1} parent=1 // pred_region
      _
    $region9: #{molecular_vae_forward.1} parent=1 // pred_fallthru
      _
    // Predicated region
    $region10: #{molecular_vae_forward.1} parent=1 // pred_check
      _
    $region11: #{molecular_vae_forward.1} parent=1 // pred_check_branch
      %35 = sbr.rel (0) target = $region13
    $region12: #{molecular_vae_forward.1} parent=1 // pred_region
      _
    $region13: #{molecular_vae_forward.1} parent=1 // pred_fallthru
      _
    // Predicated region
    $region14: #{molecular_vae_forward.1} parent=1 // pred_check
      _
    $region15: #{molecular_vae_forward.1} parent=1 // pred_check_branch
      %37 = sbr.rel (0) target = $region17
    $region16: #{molecular_vae_forward.1} parent=1 // pred_region
      _
    $region17: #{molecular_vae_forward.1} parent=1 // pred_fallthru
      _
    // Predicated region
    $region18: #{molecular_vae_forward.1} parent=1 // pred_check
      _
    $region19: #{molecular_vae_forward.1} parent=1 // pred_check_branch
      %39 = sbr.rel (0) target = $region21
    $region20: #{molecular_vae_forward.1} parent=1 // pred_region
      _
    $region21: #{molecular_vae_forward.1} parent=1 // pred_fallthru
      _
    // Predicated region
    $region22: #{molecular_vae_forward.1} parent=1 // pred_check
      _
    $region23: #{molecular_vae_forward.1} parent=1 // pred_check_branch
      %41 = sbr.rel (0) target = $region25
    $region24: #{molecular_vae_forward.1} parent=1 // pred_region
      _
    $region25: #{molecular_vae_forward.1} parent=1 // pred_fallthru
      _
    // Predicated region
    $region26: #{molecular_vae_forward.1} parent=1 // pred_check
      _
    $region27: #{molecular_vae_forward.1} parent=1 // pred_check_branch
      %43 = sbr.rel (0) target = $region29
    $region28: #{molecular_vae_forward.1} parent=1 // pred_region
      _
    $region29: #{molecular_vae_forward.1} parent=1 // pred_fallthru
      _
    // Predicated region
    $region30: #{molecular_vae_forward.1} parent=1 // pred_check
      _
    $region31: #{molecular_vae_forward.1} parent=1 // pred_check_branch
      %45 = sbr.rel (0) target = $region33
    $region32: #{molecular_vae_forward.1} parent=1 // pred_region
      _
    $region33: #{molecular_vae_forward.1} parent=1 // pred_fallthru
      _
    // Predicated region
    $region34: #{molecular_vae_forward.1} parent=1 // pred_check
      _
    $region35: #{molecular_vae_forward.1} parent=1 // pred_check_branch
      %47 = sbr.rel (0) target = $region37
    $region36: #{molecular_vae_forward.1} parent=1 // pred_region
      _
    $region37: #{molecular_vae_forward.1} parent=1 // pred_fallthru
      _
    // Predicated region
    $region38: #{molecular_vae_forward.1} parent=1 // pred_check
      _
    $region39: #{molecular_vae_forward.1} parent=1 // pred_check_branch
      %49 = sbr.rel (0) target = $region41
    $region40: #{molecular_vae_forward.1} parent=1 // pred_region
      _
    $region41: #{molecular_vae_forward.1} parent=1 // pred_fallthru
      _
    // Predicated region
    $region42: #{molecular_vae_forward.1} parent=1 // pred_check
      _
    $region43: #{molecular_vae_forward.1} parent=1 // pred_check_branch
      %51 = sbr.rel (0) target = $region45
    $region44: #{molecular_vae_forward.1} parent=1 // pred_region
      _
    $region45: #{molecular_vae_forward.1} parent=1 // pred_fallthru
      _
    // Predicated region
    $region46: #{molecular_vae_forward.1} parent=1 // pred_check
      _
    $region47: #{molecular_vae_forward.1} parent=1 // pred_check_branch
      %53 = sbr.rel (0) target = $region49
    $region48: #{molecular_vae_forward.1} parent=1 // pred_region
      _
    $region49: #{molecular_vae_forward.1} parent=1 // pred_fallthru
      _
    // Predicated region
    $region50: #{molecular_vae_forward.1} parent=1 // pred_check
      _
    $region51: #{molecular_vae_forward.1} parent=1 // pred_check_branch
      %55 = sbr.rel (0) target = $region53
    $region52: #{molecular_vae_forward.1} parent=1 // pred_region
      _
    $region53: #{molecular_vae_forward.1} parent=1 // pred_fallthru
      _
    // Predicated region
    $region54: #{molecular_vae_forward.1} parent=1 // pred_check
      _
    $region55: #{molecular_vae_forward.1} parent=1 // pred_check_branch
      %57 = sbr.rel (0) target = $region57
    $region56: #{molecular_vae_forward.1} parent=1 // pred_region
      _
    $region57: #{molecular_vae_forward.1} parent=1 // pred_fallthru
      _
    // Predicated region
    $region58: #{molecular_vae_forward.1} parent=1 // pred_check
      _
    $region59: #{molecular_vae_forward.1} parent=1 // pred_check_branch
      %59 = sbr.rel (0) target = $region61
    $region60: #{molecular_vae_forward.1} parent=1 // pred_region
      %s61 = ssub.s32 24576, 24576
      %62 = vsyncadd [#allocation6], %s61
      %s63 = sshll.u32 [#allocation5], 4
      %s64 = int_to_ptr.vmem [resolvable:$true] %s63
      %69 = dma.hbm_to_vmem [thread:$0]  %s14, 24576, %s64, [#allocation6], 1536, 1536, 96
    $region61: #{molecular_vae_forward.1} parent=1 // pred_fallthru
      _
    // Predicated region
    $region62: #{molecular_vae_forward.1} parent=1 // pred_check
      _
    $region63: #{molecular_vae_forward.1} parent=1 // pred_check_branch
      %71 = sbr.rel (0) target = $region65
    $region64: #{molecular_vae_forward.1} parent=1 // pred_region
      _
    $region65: #{molecular_vae_forward.1} parent=1 // pred_fallthru
      _
    // Predicated region
    $region66: #{molecular_vae_forward.1} parent=1 // pred_check
      _
    $region67: #{molecular_vae_forward.1} parent=1 // pred_check_branch
      %73 = sbr.rel (0) target = $region69
    $region68: #{molecular_vae_forward.1} parent=1 // pred_region
      _
    $region69: #{molecular_vae_forward.1} parent=1 // pred_fallthru
      _
    // Predicated region
    $region70: #{molecular_vae_forward.1} parent=1 // pred_check
      _
    $region71: #{molecular_vae_forward.1} parent=1 // pred_check_branch
      %75 = sbr.rel (0) target = $region73
    $region72: #{molecular_vae_forward.1} parent=1 // pred_region
      _
    $region73: #{molecular_vae_forward.1} parent=1 // pred_fallthru
      _
    // Predicated region
    $region74: #{molecular_vae_forward.1} parent=1 // pred_check
      _
    $region75: #{molecular_vae_forward.1} parent=1 // pred_check_branch
      %77 = sbr.rel (0) target = $region77
    $region76: #{molecular_vae_forward.1} parent=1 // pred_region
      _
    $region77: #{molecular_vae_forward.1} parent=1 // pred_fallthru
      _
    // Predicated region
    $region78: #{molecular_vae_forward.1} parent=1 // pred_check
      _
    $region79: #{molecular_vae_forward.1} parent=1 // pred_check_branch
      %79 = sbr.rel (0) target = $region81
    $region80: #{molecular_vae_forward.1} parent=1 // pred_region
      _
    $region81: #{molecular_vae_forward.1} parent=1 // pred_fallthru
      _
    // Predicated region
    $region82: #{molecular_vae_forward.1} parent=1 // pred_check
      _
    $region83: #{molecular_vae_forward.1} parent=1 // pred_check_branch
      %81 = sbr.rel (0) target = $region85
    $region84: #{molecular_vae_forward.1} parent=1 // pred_region
      _
    $region85: #{molecular_vae_forward.1} parent=1 // pred_fallthru
      _
    // Predicated region
    $region86: #{molecular_vae_forward.1} parent=1 // pred_check
      _
    $region87: #{molecular_vae_forward.1} parent=1 // pred_check_branch
      %83 = sbr.rel (0) target = $region89
    $region88: #{molecular_vae_forward.1} parent=1 // pred_region
      _
    $region89: #{molecular_vae_forward.1} parent=1 // pred_fallthru
      _
    // Predicated region
    $region90: #{molecular_vae_forward.1} parent=1 // pred_check
      _
    $region91: #{molecular_vae_forward.1} parent=1 // pred_check_branch
      %85 = sbr.rel (0) target = $region93
    $region92: #{molecular_vae_forward.1} parent=1 // pred_region
      %86 = dma.done [#allocation6], 24576
    $region93: #{molecular_vae_forward.1} parent=1 // pred_fallthru
      _
    %vm87 = vcmask 523264
    %88 = vst.msk [vmem:[#allocation2] sm:$0xff] %vm87, 0.0
    %vm89 = vcmask 517120
    %90 = vst.msk [vmem:[#allocation2 + $0x8] sm:$0x3] %vm89, 0.0
    %91 = vst.msk [vmem:[#allocation2 + $0x3a] sm:$0xff] %vm87, 0.0
    %92 = vst.msk [vmem:[#allocation2 + $0x42] sm:$0x3] %vm89, 0.0
    %v93 = vld [vmem:[%s0] sm:$0xff]
    %v94 = vld [vmem:[%s0 + $0x8] sm:$0xff]
    %v95 = vld [vmem:[%s0 + $0x10] sm:$0xff]
    %v96 = vld [vmem:[%s0 + $0x18] sm:$0xff]
    %v97 = vld [vmem:[%s0 + $0x20] sm:$0xff]
    %v98 = vld [vmem:[%s0 + $0x28] sm:$0xff]
    %vm99 = vcmask 64512
    %100 = vst.msk [vmem:[#allocation2 + $0xa] sm:$0xff] %vm99, %v93
    %101 = vst.msk [vmem:[#allocation2 + $0x12] sm:$0xff] %vm99, %v94
    %102 = vst.msk [vmem:[#allocation2 + $0x1a] sm:$0xff] %vm99, %v95
    %103 = vst.msk [vmem:[#allocation2 + $0x22] sm:$0xff] %vm99, %v96
    %104 = vst.msk [vmem:[#allocation2 + $0x2a] sm:$0xff] %vm99, %v97
    %105 = vst.msk [vmem:[#allocation2 + $0x32] sm:$0xff] %vm99, %v98
    %v106 = vld [vmem:[#allocation2] sm:$0xff]
    %v107 = vld [vmem:[#allocation2 + $0x8] sm:$0xff]
    %v108 = vld [vmem:[#allocation2 + $0x10] sm:$0xff]
    %v109 = vld [vmem:[#allocation2 + $0x18] sm:$0xff]
    %v110 = vld [vmem:[#allocation2 + $0x20] sm:$0xff]
    %v111 = vld [vmem:[#allocation2 + $0x28] sm:$0xff]
    %112 = vst.msk [vmem:[#allocation3] sm:$0xff] %vm99, %v106
    %113 = vst.msk [vmem:[#allocation3 + $0x30] sm:$0xff] %vm99, %v107
    %114 = vst.msk [vmem:[#allocation3 + $0x60] sm:$0xff] %vm99, %v108
    %115 = vst.msk [vmem:[#allocation3 + $0x90] sm:$0xff] %vm99, %v109
    %116 = vst.msk [vmem:[#allocation3 + $0xc0] sm:$0xff] %vm99, %v110
    %117 = vst.msk [vmem:[#allocation3 + $0xf0] sm:$0xff] %vm99, %v111
    %v118 = vld [vmem:[#allocation2 + $0x2] sm:$0xff]
    %v119 = vld [vmem:[#allocation2 + $0xa] sm:$0xff]
    %v120 = vld [vmem:[#allocation2 + $0x12] sm:$0xff]
    %v121 = vld [vmem:[#allocation2 + $0x1a] sm:$0xff]
    %v122 = vld [vmem:[#allocation2 + $0x22] sm:$0xff]
    %v123 = vld [vmem:[#allocation2 + $0x2a] sm:$0xff]
    %130 = vrot.lane.b32.xlu0 %v118, 8
    %v131 = vpop.permute.xlu0 %130
    %132 = vrot.lane.b32.xlu0 %v119, 8
    %v133 = vpop.permute.xlu0 %132
    %134 = vrot.lane.b32.xlu0 %v120, 8
    %v135 = vpop.permute.xlu0 %134
    %136 = vrot.lane.b32.xlu0 %v121, 8
    %v137 = vpop.permute.xlu0 %136
    %138 = vrot.lane.b32.xlu0 %v122, 8
    %v139 = vpop.permute.xlu0 %138
    %140 = vrot.lane.b32.xlu0 %v123, 8
    %v141 = vpop.permute.xlu0 %140
    %vm148 = vcmask 130112
    %149 = vst.msk [vmem:[#allocation3] sm:$0xff] %vm148, %v131
    %150 = vst.msk [vmem:[#allocation3 + $0x30] sm:$0xff] %vm148, %v133
    %151 = vst.msk [vmem:[#allocation3 + $0x60] sm:$0xff] %vm148, %v135
    %152 = vst.msk [vmem:[#allocation3 + $0x90] sm:$0xff] %vm148, %v137
    %153 = vst.msk [vmem:[#allocation3 + $0xc0] sm:$0xff] %vm148, %v139
    %154 = vst.msk [vmem:[#allocation3 + $0xf0] sm:$0xff] %vm148, %v141
    %v155 = vld [vmem:[#allocation2 + $0x4] sm:$0xff]
    %v156 = vld [vmem:[#allocation2 + $0xc] sm:$0xff]
    %v157 = vld [vmem:[#allocation2 + $0x14] sm:$0xff]
    %v158 = vld [vmem:[#allocation2 + $0x1c] sm:$0xff]
    %v159 = vld [vmem:[#allocation2 + $0x24] sm:$0xff]
    %v160 = vld [vmem:[#allocation2 + $0x2c] sm:$0xff]
    %167 = vrot.lane.b32.xlu0 %v155, 16
    %v168 = vpop.permute.xlu0 %167
    %169 = vrot.lane.b32.xlu0 %v156, 16
    %v170 = vpop.permute.xlu0 %169
    %171 = vrot.lane.b32.xlu0 %v157, 16
    %v172 = vpop.permute.xlu0 %171
    %173 = vrot.lane.b32.xlu0 %v158, 16
    %v174 = vpop.permute.xlu0 %173
    %175 = vrot.lane.b32.xlu0 %v159, 16
    %v176 = vpop.permute.xlu0 %175
    %177 = vrot.lane.b32.xlu0 %v160, 16
    %v178 = vpop.permute.xlu0 %177
    %vm185 = vcmask 195712
    %186 = vst.msk [vmem:[#allocation3] sm:$0xff] %vm185, %v168
    %187 = vst.msk [vmem:[#allocation3 + $0x30] sm:$0xff] %vm185, %v170
    %188 = vst.msk [vmem:[#allocation3 + $0x60] sm:$0xff] %vm185, %v172
    %189 = vst.msk [vmem:[#allocation3 + $0x90] sm:$0xff] %vm185, %v174
    %190 = vst.msk [vmem:[#allocation3 + $0xc0] sm:$0xff] %vm185, %v176
    %191 = vst.msk [vmem:[#allocation3 + $0xf0] sm:$0xff] %vm185, %v178
    %v192 = vld [vmem:[#allocation2 + $0x6] sm:$0xff]
    %v193 = vld [vmem:[#allocation2 + $0xe] sm:$0xff]
    %v194 = vld [vmem:[#allocation2 + $0x16] sm:$0xff]
    %v195 = vld [vmem:[#allocation2 + $0x1e] sm:$0xff]
    %v196 = vld [vmem:[#allocation2 + $0x26] sm:$0xff]
    %v197 = vld [vmem:[#allocation2 + $0x2e] sm:$0xff]
    %204 = vrot.lane.b32.xlu0 %v192, 24
    %v205 = vpop.permute.xlu0 %204
    %206 = vrot.lane.b32.xlu0 %v193, 24
    %v207 = vpop.permute.xlu0 %206
    %208 = vrot.lane.b32.xlu0 %v194, 24
    %v209 = vpop.permute.xlu0 %208
    %210 = vrot.lane.b32.xlu0 %v195, 24
    %v211 = vpop.permute.xlu0 %210
    %212 = vrot.lane.b32.xlu0 %v196, 24
    %v213 = vpop.permute.xlu0 %212
    %214 = vrot.lane.b32.xlu0 %v197, 24
    %v215 = vpop.permute.xlu0 %214
    %vm222 = vcmask 261312
    %223 = vst.msk [vmem:[#allocation3] sm:$0xff] %vm222, %v205
    %224 = vst.msk [vmem:[#allocation3 + $0x30] sm:$0xff] %vm222, %v207
    %225 = vst.msk [vmem:[#allocation3 + $0x60] sm:$0xff] %vm222, %v209
    %226 = vst.msk [vmem:[#allocation3 + $0x90] sm:$0xff] %vm222, %v211
    %227 = vst.msk [vmem:[#allocation3 + $0xc0] sm:$0xff] %vm222, %v213
    %228 = vst.msk [vmem:[#allocation3 + $0xf0] sm:$0xff] %vm222, %v215
    %v229 = vld [vmem:[#allocation2 + $0x8] sm:$0xff]
    %v230 = vld [vmem:[#allocation2 + $0x10] sm:$0xff]
    %v231 = vld [vmem:[#allocation2 + $0x18] sm:$0xff]
    %v232 = vld [vmem:[#allocation2 + $0x20] sm:$0xff]
    %v233 = vld [vmem:[#allocation2 + $0x28] sm:$0xff]
    %v234 = vld [vmem:[#allocation2 + $0x30] sm:$0xff]
    %241 = vrot.lane.b32.xlu0 %v229, 32
    %v242 = vpop.permute.xlu0 %241
    %243 = vrot.lane.b32.xlu0 %v230, 32
    %v244 = vpop.permute.xlu0 %243
    %245 = vrot.lane.b32.xlu0 %v231, 32
    %v246 = vpop.permute.xlu0 %245
    %247 = vrot.lane.b32.xlu0 %v232, 32
    %v248 = vpop.permute.xlu0 %247
    %249 = vrot.lane.b32.xlu0 %v233, 32
    %v250 = vpop.permute.xlu0 %249
    %251 = vrot.lane.b32.xlu0 %v234, 32
    %v252 = vpop.permute.xlu0 %251
    %vm259 = vcmask 326912
    %260 = vst.msk [vmem:[#allocation3] sm:$0xff] %vm259, %v242
    %261 = vst.msk [vmem:[#allocation3 + $0x30] sm:$0xff] %vm259, %v244
    %262 = vst.msk [vmem:[#allocation3 + $0x60] sm:$0xff] %vm259, %v246
    %263 = vst.msk [vmem:[#allocation3 + $0x90] sm:$0xff] %vm259, %v248
    %264 = vst.msk [vmem:[#allocation3 + $0xc0] sm:$0xff] %vm259, %v250
    %265 = vst.msk [vmem:[#allocation3 + $0xf0] sm:$0xff] %vm259, %v252
    %v266 = vld [vmem:[#allocation2 + $0xa] sm:$0xff]
    %v267 = vld [vmem:[#allocation2 + $0x12] sm:$0xff]
    %v268 = vld [vmem:[#allocation2 + $0x1a] sm:$0xff]
    %v269 = vld [vmem:[#allocation2 + $0x22] sm:$0xff]
    %v270 = vld [vmem:[#allocation2 + $0x2a] sm:$0xff]
    %v271 = vld [vmem:[#allocation2 + $0x32] sm:$0xff]
    %278 = vrot.lane.b32.xlu0 %v266, 40
    %v279 = vpop.permute.xlu0 %278
    %280 = vrot.lane.b32.xlu0 %v267, 40
    %v281 = vpop.permute.xlu0 %280
    %282 = vrot.lane.b32.xlu0 %v268, 40
    %v283 = vpop.permute.xlu0 %282
    %284 = vrot.lane.b32.xlu0 %v269, 40
    %v285 = vpop.permute.xlu0 %284
    %286 = vrot.lane.b32.xlu0 %v270, 40
    %v287 = vpop.permute.xlu0 %286
    %288 = vrot.lane.b32.xlu0 %v271, 40
    %v289 = vpop.permute.xlu0 %288
    %vm296 = vcmask 392512
    %297 = vst.msk [vmem:[#allocation3] sm:$0xff] %vm296, %v279
    %298 = vst.msk [vmem:[#allocation3 + $0x30] sm:$0xff] %vm296, %v281
    %299 = vst.msk [vmem:[#allocation3 + $0x60] sm:$0xff] %vm296, %v283
    %300 = vst.msk [vmem:[#allocation3 + $0x90] sm:$0xff] %vm296, %v285
    %301 = vst.msk [vmem:[#allocation3 + $0xc0] sm:$0xff] %vm296, %v287
    %302 = vst.msk [vmem:[#allocation3 + $0xf0] sm:$0xff] %vm296, %v289
    %v303 = vld [vmem:[#allocation2 + $0xc] sm:$0xff]
    %v304 = vld [vmem:[#allocation2 + $0x14] sm:$0xff]
    %v305 = vld [vmem:[#allocation2 + $0x1c] sm:$0xff]
    %v306 = vld [vmem:[#allocation2 + $0x24] sm:$0xff]
    %v307 = vld [vmem:[#allocation2 + $0x2c] sm:$0xff]
    %v308 = vld [vmem:[#allocation2 + $0x34] sm:$0xff]
    %315 = vrot.lane.b32.xlu0 %v303, 48
    %v316 = vpop.permute.xlu0 %315
    %317 = vrot.lane.b32.xlu0 %v304, 48
    %v318 = vpop.permute.xlu0 %317
    %319 = vrot.lane.b32.xlu0 %v305, 48
    %v320 = vpop.permute.xlu0 %319
    %321 = vrot.lane.b32.xlu0 %v306, 48
    %v322 = vpop.permute.xlu0 %321
    %323 = vrot.lane.b32.xlu0 %v307, 48
    %v324 = vpop.permute.xlu0 %323
    %325 = vrot.lane.b32.xlu0 %v308, 48
    %v326 = vpop.permute.xlu0 %325
    %vm333 = vcmask 458112
    %334 = vst.msk [vmem:[#allocation3] sm:$0xff] %vm333, %v316
    %335 = vst.msk [vmem:[#allocation3 + $0x30] sm:$0xff] %vm333, %v318
    %336 = vst.msk [vmem:[#allocation3 + $0x60] sm:$0xff] %vm333, %v320
    %337 = vst.msk [vmem:[#allocation3 + $0x90] sm:$0xff] %vm333, %v322
    %338 = vst.msk [vmem:[#allocation3 + $0xc0] sm:$0xff] %vm333, %v324
    %339 = vst.msk [vmem:[#allocation3 + $0xf0] sm:$0xff] %vm333, %v326
    %v340 = vld [vmem:[#allocation2 + $0xe] sm:$0xff]
    %v341 = vld [vmem:[#allocation2 + $0x16] sm:$0xff]
    %v342 = vld [vmem:[#allocation2 + $0x1e] sm:$0xff]
    %v343 = vld [vmem:[#allocation2 + $0x26] sm:$0xff]
    %v344 = vld [vmem:[#allocation2 + $0x2e] sm:$0xff]
    %v345 = vld [vmem:[#allocation2 + $0x36] sm:$0xff]
    %352 = vrot.lane.b32.xlu0 %v340, 56
    %v353 = vpop.permute.xlu0 %352
    %354 = vrot.lane.b32.xlu0 %v341, 56
    %v355 = vpop.permute.xlu0 %354
    %356 = vrot.lane.b32.xlu0 %v342, 56
    %v357 = vpop.permute.xlu0 %356
    %358 = vrot.lane.b32.xlu0 %v343, 56
    %v359 = vpop.permute.xlu0 %358
    %360 = vrot.lane.b32.xlu0 %v344, 56
    %v361 = vpop.permute.xlu0 %360
    %362 = vrot.lane.b32.xlu0 %v345, 56
    %v363 = vpop.permute.xlu0 %362
    %vm370 = vcmask 523712
    %371 = vst.msk [vmem:[#allocation3] sm:$0xff] %vm370, %v353
    %372 = vst.msk [vmem:[#allocation3 + $0x30] sm:$0xff] %vm370, %v355
    %373 = vst.msk [vmem:[#allocation3 + $0x60] sm:$0xff] %vm370, %v357
    %374 = vst.msk [vmem:[#allocation3 + $0x90] sm:$0xff] %vm370, %v359
    %375 = vst.msk [vmem:[#allocation3 + $0xc0] sm:$0xff] %vm370, %v361
    %376 = vst.msk [vmem:[#allocation3 + $0xf0] sm:$0xff] %vm370, %v363
    %v377 = vld [vmem:[#allocation2 + $0x10] sm:$0xff]
    %v378 = vld [vmem:[#allocation2 + $0x18] sm:$0xff]
    %v379 = vld [vmem:[#allocation2 + $0x20] sm:$0xff]
    %v380 = vld [vmem:[#allocation2 + $0x28] sm:$0xff]
    %v381 = vld [vmem:[#allocation2 + $0x30] sm:$0xff]
    %v382 = vld [vmem:[#allocation2 + $0x38] sm:$0xff]
    %389 = vrot.lane.b32.xlu0 %v377, 64
    %v390 = vpop.permute.xlu0 %389
    %391 = vrot.lane.b32.xlu0 %v378, 64
    %v392 = vpop.permute.xlu0 %391
    %393 = vrot.lane.b32.xlu0 %v379, 64
    %v394 = vpop.permute.xlu0 %393
    %395 = vrot.lane.b32.xlu0 %v380, 64
    %v396 = vpop.permute.xlu0 %395
    %397 = vrot.lane.b32.xlu0 %v381, 64
    %v398 = vpop.permute.xlu0 %397
    %399 = vrot.lane.b32.xlu0 %v382, 64
    %v400 = vpop.permute.xlu0 %399
    %vm407 = vcmask 589312
    %408 = vst.msk [vmem:[#allocation3] sm:$0xff] %vm407, %v390
    %409 = vst.msk [vmem:[#allocation3 + $0x30] sm:$0xff] %vm407, %v392
    %410 = vst.msk [vmem:[#allocation3 + $0x60] sm:$0xff] %vm407, %v394
    %411 = vst.msk [vmem:[#allocation3 + $0x90] sm:$0xff] %vm407, %v396
    %412 = vst.msk [vmem:[#allocation3 + $0xc0] sm:$0xff] %vm407, %v398
    %413 = vst.msk [vmem:[#allocation3 + $0xf0] sm:$0xff] %vm407, %v400
    %v414 = vld [vmem:[#allocation2 + $0x12] sm:$0xff]
    %v415 = vld [vmem:[#allocation2 + $0x1a] sm:$0xff]
    %v416 = vld [vmem:[#allocation2 + $0x22] sm:$0xff]
    %v417 = vld [vmem:[#allocation2 + $0x2a] sm:$0xff]
    %v418 = vld [vmem:[#allocation2 + $0x32] sm:$0xff]
    %v419 = vld [vmem:[#allocation2 + $0x3a] sm:$0xff]
    %426 = vrot.lane.b32.xlu0 %v414, 72
    %v427 = vpop.permute.xlu0 %426
    %428 = vrot.lane.b32.xlu0 %v415, 72
    %v429 = vpop.permute.xlu0 %428
    %430 = vrot.lane.b32.xlu0 %v416, 72
    %v431 = vpop.permute.xlu0 %430
    %432 = vrot.lane.b32.xlu0 %v417, 72
    %v433 = vpop.permute.xlu0 %432
    %434 = vrot.lane.b32.xlu0 %v418, 72
    %v435 = vpop.permute.xlu0 %434
    %436 = vrot.lane.b32.xlu0 %v419, 72
    %v437 = vpop.permute.xlu0 %436
    %vm444 = vcmask 654912
    %445 = vst.msk [vmem:[#allocation3] sm:$0xff] %vm444, %v427
    %446 = vst.msk [vmem:[#allocation3 + $0x30] sm:$0xff] %vm444, %v429
    %447 = vst.msk [vmem:[#allocation3 + $0x60] sm:$0xff] %vm444, %v431
    %448 = vst.msk [vmem:[#allocation3 + $0x90] sm:$0xff] %vm444, %v433
    %449 = vst.msk [vmem:[#allocation3 + $0xc0] sm:$0xff] %vm444, %v435
    %450 = vst.msk [vmem:[#allocation3 + $0xf0] sm:$0xff] %vm444, %v437
    %v451 = vld [vmem:[#allocation2 + $0x14] sm:$0xff]
    %v452 = vld [vmem:[#allocation2 + $0x1c] sm:$0xff]
    %v453 = vld [vmem:[#allocation2 + $0x24] sm:$0xff]
    %v454 = vld [vmem:[#allocation2 + $0x2c] sm:$0xff]
    %v455 = vld [vmem:[#allocation2 + $0x34] sm:$0xff]
    %v456 = vld [vmem:[#allocation2 + $0x3c] sm:$0xff]
    %463 = vrot.lane.b32.xlu0 %v451, 80
    %v464 = vpop.permute.xlu0 %463
    %465 = vrot.lane.b32.xlu0 %v452, 80
    %v466 = vpop.permute.xlu0 %465
    %467 = vrot.lane.b32.xlu0 %v453, 80
    %v468 = vpop.permute.xlu0 %467
    %469 = vrot.lane.b32.xlu0 %v454, 80
    %v470 = vpop.permute.xlu0 %469
    %471 = vrot.lane.b32.xlu0 %v455, 80
    %v472 = vpop.permute.xlu0 %471
    %473 = vrot.lane.b32.xlu0 %v456, 80
    %v474 = vpop.permute.xlu0 %473
    %vm481 = vcmask 720512
    %482 = vst.msk [vmem:[#allocation3] sm:$0xff] %vm481, %v464
    %483 = vst.msk [vmem:[#allocation3 + $0x30] sm:$0xff] %vm481, %v466
    %484 = vst.msk [vmem:[#allocation3 + $0x60] sm:$0xff] %vm481, %v468
    %485 = vst.msk [vmem:[#allocation3 + $0x90] sm:$0xff] %vm481, %v470
    %486 = vst.msk [vmem:[#allocation3 + $0xc0] sm:$0xff] %vm481, %v472
    %487 = vst.msk [vmem:[#allocation3 + $0xf0] sm:$0xff] %vm481, %v474
    %v488 = vld [vmem:[#allocation3] sm:$0xff]
    %v489 = vld [vmem:[#allocation3 + $0x30] sm:$0xff]
    %v490 = vld [vmem:[#allocation3 + $0x60] sm:$0xff]
    %v491 = vld [vmem:[#allocation3 + $0x90] sm:$0xff]
    %v492 = vld [vmem:[#allocation3 + $0xc0] sm:$0xff]
    %v493 = vld [vmem:[#allocation3 + $0xf0] sm:$0xff]
    %v494 = vld [vmem:[%s2] sm:$0xff]
    %v495 = vld [vmem:[%s2 + $0x8] sm:$0xff]
    %v496 = vld [vmem:[%s2 + $0x10] sm:$0xff]
    %v497 = vld [vmem:[%s2 + $0x18] sm:$0xff]
    %v498 = vld [vmem:[%s2 + $0x20] sm:$0xff]
    %v499 = vld [vmem:[%s2 + $0x28] sm:$0xff]
    %v500 = vld [vmem:[%s2 + $0x30] sm:$0xff]
    %v501 = vld [vmem:[%s2 + $0x38] sm:$0xff]
    %v502 = vld [vmem:[%s2 + $0x40] sm:$0xff]
    %v503 = vld [vmem:[%s2 + $0x48] sm:$0xff]
    %v504 = vld [vmem:[%s2 + $0x50] sm:$0xff]
    %v505 = vld [vmem:[%s3] sm:$0x1]
    %v507 = vlaneseq
    %v508 = vshrl.u32 %v507, 7
    %v509 = vsub.s32 0, %v508
    %v510 = vrot.slane %v505, %v509
    %vm512 = vcmask 719872
    %v514 = vsel %vm512, %v488, 0
    %v517 = vsel %vm512, %v489, 0
    %v520 = vsel %vm512, %v490, 0
    %v523 = vsel %vm512, %v491, 0
    %v526 = vsel %vm512, %v492, 0
    %v529 = vsel %vm512, %v493, 0
    %531 = vmatprep.subr.mxu0 0.0
    %532 = vmatpush1.msra.mxu0 0.0
    %533 = vmatprep.subr.mxu0 0.0
    %534 = vmatpush1.msra.mxu0 0.0
    %535 = vmatprep.subr.mxu0 0.0
    %536 = vmatpush1.msra.mxu0 0.0
    %537 = vmatprep.subr.mxu0 0.0
    %538 = vmatpush1.msra.mxu0 0.0
    %539 = vmatprep.subr.mxu0 0.0
    %540 = vmatpush1.msra.mxu0 0.0
    %541 = vmatprep.subr.mxu0 0.0
    %542 = vmatpush1.msra.mxu0 %v504
    %543 = vmatprep.subr.mxu0 0.0
    %544 = vmatpush1.msra.mxu0 %v503
    %545 = vmatprep.subr.mxu0 0.0
    %546 = vmatpush1.msra.mxu0 %v502
    %547 = vmatprep.subr.mxu0 0.0
    %548 = vmatpush1.msra.mxu0 %v501
    %549 = vmatprep.subr.mxu0 0.0
    %550 = vmatpush1.msra.mxu0 %v500
    %551 = vmatprep.subr.mxu0 0.0
    %552 = vmatpush1.msra.mxu0 %v499
    %553 = vmatprep.subr.mxu0 0.0
    %554 = vmatpush1.msra.mxu0 %v498
    %555 = vmatprep.subr.mxu0 0.0
    %556 = vmatpush1.msra.mxu0 %v497
    %557 = vmatprep.subr.mxu0 0.0
    %558 = vmatpush1.msra.mxu0 %v496
    %559 = vmatprep.subr.mxu0 0.0
    %560 = vmatpush1.msra.mxu0 %v495
    %561 = vmatprep.subr.mxu0 0.0
    %562 = vmatpush1.msra.mxu0 %v494
    %563 = vmatprep.subr.mxu0 0.0
    %564 = vmatpush2.msra.mxu0 0.0
    %565 = vmatprep.subr.mxu0 0.0
    %566 = vmatpush2.msra.mxu0 0.0
    %567 = vmatprep.subr.mxu0 0.0
    %568 = vmatpush2.msra.mxu0 0.0
    %569 = vmatprep.subr.mxu0 0.0
    %570 = vmatpush2.msra.mxu0 0.0
    %571 = vmatprep.subr.mxu0 0.0
    %572 = vmatpush2.msra.mxu0 0.0
    %573 = vmatprep.subr.mxu0 0.0
    %574 = vmatpush2.msra.mxu0 0.0
    %575 = vmatprep.subr.mxu0 0.0
    %576 = vmatpush2.msra.mxu0 0.0
    %577 = vmatprep.subr.mxu0 0.0
    %578 = vmatpush2.msra.mxu0 0.0
    %579 = vmatprep.subr.mxu0 0.0
    %580 = vmatpush2.msra.mxu0 0.0
    %581 = vmatprep.subr.mxu0 0.0
    %582 = vmatpush2.msra.mxu0 0.0
    %583 = vmatprep.subr.mxu0 0.0
    %584 = vmatpush2.msra.mxu0 0.0
    %585 = vmatprep.subr.mxu0 0.0
    %586 = vmatpush2.msra.mxu0 0.0
    %587 = vmatprep.subr.mxu0 0.0
    %588 = vmatpush2.msra.mxu0 0.0
    %589 = vmatprep.subr.mxu0 0.0
    %590 = vmatpush2.msra.mxu0 0.0
    %591 = vmatprep.subr.mxu0 0.0
    %592 = vmatpush2.msra.mxu0 0.0
    %593 = vmatprep.subr.mxu0 0.0
    %594 = vmatpush2.msra.mxu0 0.0
    %595 = vmatprep.mubr.f32.mxu0 0.0
    %596 = vmatmul.mubr.f32.gmra.mxu0 %v514
    %v597 = vpop.f32.mrf.mxu0
    %v598 = vadd.f32 %v510, %v597
    %v599 = vpop.f32.mrf.mxu0
    %600 = vmatprep.mubr.f32.mxu0 0.0
    %601 = vmatmul.mubr.f32.gmra.mxu0 %v517
    %v602 = vpop.f32.mrf.mxu0
    %v603 = vadd.f32 %v510, %v602
    %v604 = vpop.f32.mrf.mxu0
    %605 = vmatprep.mubr.f32.mxu0 0.0
    %606 = vmatmul.mubr.f32.gmra.mxu0 %v520
    %v607 = vpop.f32.mrf.mxu0
    %v608 = vadd.f32 %v510, %v607
    %v609 = vpop.f32.mrf.mxu0
    %610 = vmatprep.mubr.f32.mxu0 0.0
    %611 = vmatmul.mubr.f32.gmra.mxu0 %v523
    %v612 = vpop.f32.mrf.mxu0
    %v613 = vadd.f32 %v510, %v612
    %v614 = vpop.f32.mrf.mxu0
    %615 = vmatprep.mubr.f32.mxu0 0.0
    %616 = vmatmul.mubr.f32.gmra.mxu0 %v526
    %v617 = vpop.f32.mrf.mxu0
    %v618 = vadd.f32 %v510, %v617
    %v619 = vpop.f32.mrf.mxu0
    %620 = vmatprep.mubr.f32.mxu0 0.0
    %621 = vmatmul.mubr.f32.gmra.mxu0 %v529
    %v622 = vpop.f32.mrf.mxu0
    %v623 = vadd.f32 %v510, %v622
    %v624 = vpop.f32.mrf.mxu0
    %625 = vdwg.mxu0
    %vm626 = vcmp.gt.f32.partialorder %v598, 0.0
    %vm627 = vcmp.gt.f32.partialorder %v603, 0.0
    %vm628 = vcmp.gt.f32.partialorder %v608, 0.0
    %vm629 = vcmp.gt.f32.partialorder %v613, 0.0
    %vm630 = vcmp.gt.f32.partialorder %v618, 0.0
    %vm631 = vcmp.gt.f32.partialorder %v623, 0.0
    %v632 = vmul.f32 %v598, 0.01
    %v633 = vmul.f32 %v603, 0.01
    %v634 = vmul.f32 %v608, 0.01
    %v635 = vmul.f32 %v613, 0.01
    %v636 = vmul.f32 %v618, 0.01
    %v637 = vmul.f32 %v623, 0.01
    %v638 = vsel %vm626, %v598, %v632
    %v639 = vsel %vm627, %v603, %v633
    %v640 = vsel %vm628, %v608, %v634
    %v641 = vsel %vm629, %v613, %v635
    %v642 = vsel %vm630, %v618, %v636
    %v643 = vsel %vm631, %v623, %v637
    %vm644 = vcmask 130048
    %645 = vst.msk [vmem:[#allocation2 + $0xa] sm:$0xff] %vm644, %v638
    %646 = vst.msk [vmem:[#allocation2 + $0x12] sm:$0xff] %vm644, %v639
    %647 = vst.msk [vmem:[#allocation2 + $0x1a] sm:$0xff] %vm644, %v640
    %648 = vst.msk [vmem:[#allocation2 + $0x22] sm:$0xff] %vm644, %v641
    %649 = vst.msk [vmem:[#allocation2 + $0x2a] sm:$0xff] %vm644, %v642
    %650 = vst.msk [vmem:[#allocation2 + $0x32] sm:$0xff] %vm644, %v643
    %v651 = vld [vmem:[#allocation2] sm:$0xff]
    %v652 = vld [vmem:[#allocation2 + $0x8] sm:$0xff]
    %v653 = vld [vmem:[#allocation2 + $0x10] sm:$0xff]
    %v654 = vld [vmem:[#allocation2 + $0x18] sm:$0xff]
    %v655 = vld [vmem:[#allocation2 + $0x20] sm:$0xff]
    %v656 = vld [vmem:[#allocation2 + $0x28] sm:$0xff]
    %657 = vst.msk [vmem:[#allocation3] sm:$0xff] %vm644, %v651
    %658 = vst.msk [vmem:[#allocation3 + $0x30] sm:$0xff] %vm644, %v652
    %659 = vst.msk [vmem:[#allocation3 + $0x60] sm:$0xff] %vm644, %v653
    %660 = vst.msk [vmem:[#allocation3 + $0x90] sm:$0xff] %vm644, %v654
    %661 = vst.msk [vmem:[#allocation3 + $0xc0] sm:$0xff] %vm644, %v655
    %662 = vst.msk [vmem:[#allocation3 + $0xf0] sm:$0xff] %vm644, %v656
    %v663 = vld [vmem:[#allocation2 + $0x2] sm:$0xff]
    %v664 = vld [vmem:[#allocation2 + $0xa] sm:$0xff]
    %v665 = vld [vmem:[#allocation2 + $0x12] sm:$0xff]
    %v666 = vld [vmem:[#allocation2 + $0x1a] sm:$0xff]
    %v667 = vld [vmem:[#allocation2 + $0x22] sm:$0xff]
    %v668 = vld [vmem:[#allocation2 + $0x2a] sm:$0xff]
    %675 = vrot.lane.b32.xlu0 %v663, 16
    %v676 = vpop.permute.xlu0 %675
    %677 = vrot.lane.b32.xlu0 %v664, 16
    %v678 = vpop.permute.xlu0 %677
    %679 = vrot.lane.b32.xlu0 %v665, 16
    %v680 = vpop.permute.xlu0 %679
    %681 = vrot.lane.b32.xlu0 %v666, 16
    %v682 = vpop.permute.xlu0 %681
    %683 = vrot.lane.b32.xlu0 %v667, 16
    %v684 = vpop.permute.xlu0 %683
    %685 = vrot.lane.b32.xlu0 %v668, 16
    %v686 = vpop.permute.xlu0 %685
    %vm693 = vcmask 261248
    %694 = vst.msk [vmem:[#allocation3] sm:$0xff] %vm693, %v676
    %695 = vst.msk [vmem:[#allocation3 + $0x30] sm:$0xff] %vm693, %v678
    %696 = vst.msk [vmem:[#allocation3 + $0x60] sm:$0xff] %vm693, %v680
    %697 = vst.msk [vmem:[#allocation3 + $0x90] sm:$0xff] %vm693, %v682
    %698 = vst.msk [vmem:[#allocation3 + $0xc0] sm:$0xff] %vm693, %v684
    %699 = vst.msk [vmem:[#allocation3 + $0xf0] sm:$0xff] %vm693, %v686
    %v700 = vld [vmem:[#allocation2 + $0x4] sm:$0xff]
    %v701 = vld [vmem:[#allocation2 + $0xc] sm:$0xff]
    %v702 = vld [vmem:[#allocation2 + $0x14] sm:$0xff]
    %v703 = vld [vmem:[#allocation2 + $0x1c] sm:$0xff]
    %v704 = vld [vmem:[#allocation2 + $0x24] sm:$0xff]
    %v705 = vld [vmem:[#allocation2 + $0x2c] sm:$0xff]
    %712 = vrot.lane.b32.xlu0 %v700, 32
    %v713 = vpop.permute.xlu0 %712
    %714 = vrot.lane.b32.xlu0 %v701, 32
    %v715 = vpop.permute.xlu0 %714
    %716 = vrot.lane.b32.xlu0 %v702, 32
    %v717 = vpop.permute.xlu0 %716
    %718 = vrot.lane.b32.xlu0 %v703, 32
    %v719 = vpop.permute.xlu0 %718
    %720 = vrot.lane.b32.xlu0 %v704, 32
    %v721 = vpop.permute.xlu0 %720
    %722 = vrot.lane.b32.xlu0 %v705, 32
    %v723 = vpop.permute.xlu0 %722
    %vm730 = vcmask 392448
    %731 = vst.msk [vmem:[#allocation3] sm:$0xff] %vm730, %v713
    %732 = vst.msk [vmem:[#allocation3 + $0x30] sm:$0xff] %vm730, %v715
    %733 = vst.msk [vmem:[#allocation3 + $0x60] sm:$0xff] %vm730, %v717
    %734 = vst.msk [vmem:[#allocation3 + $0x90] sm:$0xff] %vm730, %v719
    %735 = vst.msk [vmem:[#allocation3 + $0xc0] sm:$0xff] %vm730, %v721
    %736 = vst.msk [vmem:[#allocation3 + $0xf0] sm:$0xff] %vm730, %v723
    %v737 = vld [vmem:[#allocation2 + $0x6] sm:$0xff]
    %v738 = vld [vmem:[#allocation2 + $0xe] sm:$0xff]
    %v739 = vld [vmem:[#allocation2 + $0x16] sm:$0xff]
    %v740 = vld [vmem:[#allocation2 + $0x1e] sm:$0xff]
    %v741 = vld [vmem:[#allocation2 + $0x26] sm:$0xff]
    %v742 = vld [vmem:[#allocation2 + $0x2e] sm:$0xff]
    %749 = vrot.lane.b32.xlu0 %v737, 48
    %v750 = vpop.permute.xlu0 %749
    %751 = vrot.lane.b32.xlu0 %v738, 48
    %v752 = vpop.permute.xlu0 %751
    %753 = vrot.lane.b32.xlu0 %v739, 48
    %v754 = vpop.permute.xlu0 %753
    %755 = vrot.lane.b32.xlu0 %v740, 48
    %v756 = vpop.permute.xlu0 %755
    %757 = vrot.lane.b32.xlu0 %v741, 48
    %v758 = vpop.permute.xlu0 %757
    %759 = vrot.lane.b32.xlu0 %v742, 48
    %v760 = vpop.permute.xlu0 %759
    %vm767 = vcmask 523648
    %768 = vst.msk [vmem:[#allocation3] sm:$0xff] %vm767, %v750
    %769 = vst.msk [vmem:[#allocation3 + $0x30] sm:$0xff] %vm767, %v752
    %770 = vst.msk [vmem:[#allocation3 + $0x60] sm:$0xff] %vm767, %v754
    %771 = vst.msk [vmem:[#allocation3 + $0x90] sm:$0xff] %vm767, %v756
    %772 = vst.msk [vmem:[#allocation3 + $0xc0] sm:$0xff] %vm767, %v758
    %773 = vst.msk [vmem:[#allocation3 + $0xf0] sm:$0xff] %vm767, %v760
    %v774 = vld [vmem:[#allocation2 + $0x8] sm:$0xff]
    %v775 = vld [vmem:[#allocation2 + $0x10] sm:$0xff]
    %v776 = vld [vmem:[#allocation2 + $0x18] sm:$0xff]
    %v777 = vld [vmem:[#allocation2 + $0x20] sm:$0xff]
    %v778 = vld [vmem:[#allocation2 + $0x28] sm:$0xff]
    %v779 = vld [vmem:[#allocation2 + $0x30] sm:$0xff]
    %786 = vrot.lane.b32.xlu0 %v774, 64
    %v787 = vpop.permute.xlu0 %786
    %788 = vrot.lane.b32.xlu0 %v775, 64
    %v789 = vpop.permute.xlu0 %788
    %790 = vrot.lane.b32.xlu0 %v776, 64
    %v791 = vpop.permute.xlu0 %790
    %792 = vrot.lane.b32.xlu0 %v777, 64
    %v793 = vpop.permute.xlu0 %792
    %794 = vrot.lane.b32.xlu0 %v778, 64
    %v795 = vpop.permute.xlu0 %794
    %796 = vrot.lane.b32.xlu0 %v779, 64
    %v797 = vpop.permute.xlu0 %796
    %vm804 = vcmask 654848
    %805 = vst.msk [vmem:[#allocation3] sm:$0xff] %vm804, %v787
    %806 = vst.msk [vmem:[#allocation3 + $0x30] sm:$0xff] %vm804, %v789
    %807 = vst.msk [vmem:[#allocation3 + $0x60] sm:$0xff] %vm804, %v791
    %808 = vst.msk [vmem:[#allocation3 + $0x90] sm:$0xff] %vm804, %v793
    %809 = vst.msk [vmem:[#allocation3 + $0xc0] sm:$0xff] %vm804, %v795
    %810 = vst.msk [vmem:[#allocation3 + $0xf0] sm:$0xff] %vm804, %v797
    %v811 = vld [vmem:[#allocation2 + $0xa] sm:$0xff]
    %v812 = vld [vmem:[#allocation2 + $0x12] sm:$0xff]
    %v813 = vld [vmem:[#allocation2 + $0x1a] sm:$0xff]
    %v814 = vld [vmem:[#allocation2 + $0x22] sm:$0xff]
    %v815 = vld [vmem:[#allocation2 + $0x2a] sm:$0xff]
    %v816 = vld [vmem:[#allocation2 + $0x32] sm:$0xff]
    %823 = vrot.lane.b32.xlu0 %v811, 80
    %v824 = vpop.permute.xlu0 %823
    %825 = vrot.lane.b32.xlu0 %v812, 80
    %v826 = vpop.permute.xlu0 %825
    %827 = vrot.lane.b32.xlu0 %v813, 80
    %v828 = vpop.permute.xlu0 %827
    %829 = vrot.lane.b32.xlu0 %v814, 80
    %v830 = vpop.permute.xlu0 %829
    %831 = vrot.lane.b32.xlu0 %v815, 80
    %v832 = vpop.permute.xlu0 %831
    %833 = vrot.lane.b32.xlu0 %v816, 80
    %v834 = vpop.permute.xlu0 %833
    %vm841 = vcmask 786048
    %842 = vst.msk [vmem:[#allocation3] sm:$0xff] %vm841, %v824
    %843 = vst.msk [vmem:[#allocation3 + $0x30] sm:$0xff] %vm841, %v826
    %844 = vst.msk [vmem:[#allocation3 + $0x60] sm:$0xff] %vm841, %v828
    %845 = vst.msk [vmem:[#allocation3 + $0x90] sm:$0xff] %vm841, %v830
    %846 = vst.msk [vmem:[#allocation3 + $0xc0] sm:$0xff] %vm841, %v832
    %847 = vst.msk [vmem:[#allocation3 + $0xf0] sm:$0xff] %vm841, %v834
    %v848 = vld [vmem:[#allocation2 + $0xc] sm:$0xff]
    %v849 = vld [vmem:[#allocation2 + $0x14] sm:$0xff]
    %v850 = vld [vmem:[#allocation2 + $0x1c] sm:$0xff]
    %v851 = vld [vmem:[#allocation2 + $0x24] sm:$0xff]
    %v852 = vld [vmem:[#allocation2 + $0x2c] sm:$0xff]
    %v853 = vld [vmem:[#allocation2 + $0x34] sm:$0xff]
    %860 = vrot.lane.b32.xlu0 %v848, 96
    %v861 = vpop.permute.xlu0 %860
    %862 = vrot.lane.b32.xlu0 %v849, 96
    %v863 = vpop.permute.xlu0 %862
    %864 = vrot.lane.b32.xlu0 %v850, 96
    %v865 = vpop.permute.xlu0 %864
    %866 = vrot.lane.b32.xlu0 %v851, 96
    %v867 = vpop.permute.xlu0 %866
    %868 = vrot.lane.b32.xlu0 %v852, 96
    %v869 = vpop.permute.xlu0 %868
    %870 = vrot.lane.b32.xlu0 %v853, 96
    %v871 = vpop.permute.xlu0 %870
    %vm878 = vcmask 917248
    %879 = vst.msk [vmem:[#allocation3] sm:$0xff] %vm878, %v861
    %880 = vst.msk [vmem:[#allocation3 + $0x30] sm:$0xff] %vm878, %v863
    %881 = vst.msk [vmem:[#allocation3 + $0x60] sm:$0xff] %vm878, %v865
    %882 = vst.msk [vmem:[#allocation3 + $0x90] sm:$0xff] %vm878, %v867
    %883 = vst.msk [vmem:[#allocation3 + $0xc0] sm:$0xff] %vm878, %v869
    %884 = vst.msk [vmem:[#allocation3 + $0xf0] sm:$0xff] %vm878, %v871
    %v885 = vld [vmem:[#allocation2 + $0xe] sm:$0xff]
    %v886 = vld [vmem:[#allocation2 + $0x16] sm:$0xff]
    %v887 = vld [vmem:[#allocation2 + $0x1e] sm:$0xff]
    %v888 = vld [vmem:[#allocation2 + $0x26] sm:$0xff]
    %v889 = vld [vmem:[#allocation2 + $0x2e] sm:$0xff]
    %v890 = vld [vmem:[#allocation2 + $0x36] sm:$0xff]
    %897 = vrot.lane.b32.xlu0 %v885, 112
    %v898 = vpop.permute.xlu0 %897
    %899 = vrot.lane.b32.xlu0 %v886, 112
    %v900 = vpop.permute.xlu0 %899
    %901 = vrot.lane.b32.xlu0 %v887, 112
    %v902 = vpop.permute.xlu0 %901
    %903 = vrot.lane.b32.xlu0 %v888, 112
    %v904 = vpop.permute.xlu0 %903
    %905 = vrot.lane.b32.xlu0 %v889, 112
    %v906 = vpop.permute.xlu0 %905
    %907 = vrot.lane.b32.xlu0 %v890, 112
    %v908 = vpop.permute.xlu0 %907
    %vm915 = vcmask 1048448
    %916 = vst.msk [vmem:[#allocation3] sm:$0xff] %vm915, %v898
    %917 = vst.msk [vmem:[#allocation3 + $0x30] sm:$0xff] %vm915, %v900
    %918 = vst.msk [vmem:[#allocation3 + $0x60] sm:$0xff] %vm915, %v902
    %919 = vst.msk [vmem:[#allocation3 + $0x90] sm:$0xff] %vm915, %v904
    %920 = vst.msk [vmem:[#allocation3 + $0xc0] sm:$0xff] %vm915, %v906
    %921 = vst.msk [vmem:[#allocation3 + $0xf0] sm:$0xff] %vm915, %v908
    %v922 = vld [vmem:[#allocation2 + $0x10] sm:$0xff]
    %v923 = vld [vmem:[#allocation2 + $0x18] sm:$0xff]
    %v924 = vld [vmem:[#allocation2 + $0x20] sm:$0xff]
    %v925 = vld [vmem:[#allocation2 + $0x28] sm:$0xff]
    %v926 = vld [vmem:[#allocation2 + $0x30] sm:$0xff]
    %v927 = vld [vmem:[#allocation2 + $0x38] sm:$0xff]
    %928 = vst.msk [vmem:[#allocation3 + $0x8] sm:$0xff] %vm644, %v922
    %929 = vst.msk [vmem:[#allocation3 + $0x38] sm:$0xff] %vm644, %v923
    %930 = vst.msk [vmem:[#allocation3 + $0x68] sm:$0xff] %vm644, %v924
    %931 = vst.msk [vmem:[#allocation3 + $0x98] sm:$0xff] %vm644, %v925
    %932 = vst.msk [vmem:[#allocation3 + $0xc8] sm:$0xff] %vm644, %v926
    %933 = vst.msk [vmem:[#allocation3 + $0xf8] sm:$0xff] %vm644, %v927
    %v934 = vld [vmem:[#allocation2 + $0x12] sm:$0xff]
    %v935 = vld [vmem:[#allocation2 + $0x1a] sm:$0xff]
    %v936 = vld [vmem:[#allocation2 + $0x22] sm:$0xff]
    %v937 = vld [vmem:[#allocation2 + $0x2a] sm:$0xff]
    %v938 = vld [vmem:[#allocation2 + $0x32] sm:$0xff]
    %v939 = vld [vmem:[#allocation2 + $0x3a] sm:$0xff]
    %946 = vrot.lane.b32.xlu0 %v934, 16
    %v947 = vpop.permute.xlu0 %946
    %948 = vrot.lane.b32.xlu0 %v935, 16
    %v949 = vpop.permute.xlu0 %948
    %950 = vrot.lane.b32.xlu0 %v936, 16
    %v951 = vpop.permute.xlu0 %950
    %952 = vrot.lane.b32.xlu0 %v937, 16
    %v953 = vpop.permute.xlu0 %952
    %954 = vrot.lane.b32.xlu0 %v938, 16
    %v955 = vpop.permute.xlu0 %954
    %956 = vrot.lane.b32.xlu0 %v939, 16
    %v957 = vpop.permute.xlu0 %956
    %964 = vst.msk [vmem:[#allocation3 + $0x8] sm:$0xff] %vm693, %v947
    %965 = vst.msk [vmem:[#allocation3 + $0x38] sm:$0xff] %vm693, %v949
    %966 = vst.msk [vmem:[#allocation3 + $0x68] sm:$0xff] %vm693, %v951
    %967 = vst.msk [vmem:[#allocation3 + $0x98] sm:$0xff] %vm693, %v953
    %968 = vst.msk [vmem:[#allocation3 + $0xc8] sm:$0xff] %vm693, %v955
    %969 = vst.msk [vmem:[#allocation3 + $0xf8] sm:$0xff] %vm693, %v957
    %v970 = vld [vmem:[#allocation2 + $0x14] sm:$0xff]
    %v971 = vld [vmem:[#allocation2 + $0x1c] sm:$0xff]
    %v972 = vld [vmem:[#allocation2 + $0x24] sm:$0xff]
    %v973 = vld [vmem:[#allocation2 + $0x2c] sm:$0xff]
    %v974 = vld [vmem:[#allocation2 + $0x34] sm:$0xff]
    %v975 = vld [vmem:[#allocation2 + $0x3c] sm:$0xff]
    %982 = vrot.lane.b32.xlu0 %v970, 32
    %v983 = vpop.permute.xlu0 %982
    %984 = vrot.lane.b32.xlu0 %v971, 32
    %v985 = vpop.permute.xlu0 %984
    %986 = vrot.lane.b32.xlu0 %v972, 32
    %v987 = vpop.permute.xlu0 %986
    %988 = vrot.lane.b32.xlu0 %v973, 32
    %v989 = vpop.permute.xlu0 %988
    %990 = vrot.lane.b32.xlu0 %v974, 32
    %v991 = vpop.permute.xlu0 %990
    %992 = vrot.lane.b32.xlu0 %v975, 32
    %v993 = vpop.permute.xlu0 %992
    %1000 = vst.msk [vmem:[#allocation3 + $0x8] sm:$0xff] %vm730, %v983
    %1001 = vst.msk [vmem:[#allocation3 + $0x38] sm:$0xff] %vm730, %v985
    %1002 = vst.msk [vmem:[#allocation3 + $0x68] sm:$0xff] %vm730, %v987
    %1003 = vst.msk [vmem:[#allocation3 + $0x98] sm:$0xff] %vm730, %v989
    %1004 = vst.msk [vmem:[#allocation3 + $0xc8] sm:$0xff] %vm730, %v991
    %1005 = vst.msk [vmem:[#allocation3 + $0xf8] sm:$0xff] %vm730, %v993
    %v1006 = vld [vmem:[#allocation3] sm:$0xff]
    %v1007 = vld [vmem:[#allocation3 + $0x8] sm:$0xff]
    %v1008 = vld [vmem:[#allocation3 + $0x30] sm:$0xff]
    %v1009 = vld [vmem:[#allocation3 + $0x38] sm:$0xff]
    %v1010 = vld [vmem:[#allocation3 + $0x60] sm:$0xff]
    %v1011 = vld [vmem:[#allocation3 + $0x68] sm:$0xff]
    %v1012 = vld [vmem:[#allocation3 + $0x90] sm:$0xff]
    %v1013 = vld [vmem:[#allocation3 + $0x98] sm:$0xff]
    %v1014 = vld [vmem:[#allocation3 + $0xc0] sm:$0xff]
    %v1015 = vld [vmem:[#allocation3 + $0xc8] sm:$0xff]
    %v1016 = vld [vmem:[#allocation3 + $0xf0] sm:$0xff]
    %v1017 = vld [vmem:[#allocation3 + $0xf8] sm:$0xff]
    %v1018 = vld [vmem:[%s4] sm:$0xff]
    %v1019 = vld [vmem:[%s4 + $0x8] sm:$0xff]
    %v1020 = vld [vmem:[%s4 + $0x10] sm:$0xff]
    %v1021 = vld [vmem:[%s4 + $0x18] sm:$0xff]
    %v1022 = vld [vmem:[%s4 + $0x20] sm:$0xff]
    %v1023 = vld [vmem:[%s4 + $0x28] sm:$0xff]
    %v1024 = vld [vmem:[%s4 + $0x30] sm:$0xff]
    %v1025 = vld [vmem:[%s4 + $0x38] sm:$0xff]
    %v1026 = vld [vmem:[%s4 + $0x40] sm:$0xff]
    %v1027 = vld [vmem:[%s4 + $0x48] sm:$0xff]
    %v1028 = vld [vmem:[%s4 + $0x50] sm:$0xff]
    %v1029 = vld [vmem:[%s4 + $0x58] sm:$0xff]
    %v1030 = vld [vmem:[%s4 + $0x60] sm:$0xff]
    %v1031 = vld [vmem:[%s4 + $0x68] sm:$0xff]
    %v1032 = vld [vmem:[%s4 + $0x70] sm:$0xff]
    %v1033 = vld [vmem:[%s4 + $0x78] sm:$0xff]
    %v1034 = vld [vmem:[%s4 + $0x80] sm:$0xff]
    %v1035 = vld [vmem:[%s4 + $0x88] sm:$0xff]
    %v1036 = vld [vmem:[%s4 + $0x90] sm:$0xff]
    %v1037 = vld [vmem:[%s4 + $0x98] sm:$0xff]
    %v1038 = vld [vmem:[%s4 + $0xa0] sm:$0xff]
    %v1039 = vld [vmem:[%s4 + $0xa8] sm:$0xff]
    %v1040 = vld [vmem:[%s5] sm:$0x1]
    %v1042 = vlaneseq
    %v1043 = vshrl.u32 %v1042, 7
    %v1044 = vsub.s32 0, %v1043
    %v1045 = vrot.slane %v1040, %v1044
    %vm1047 = vcmask 392192
    %v1049 = vsel %vm1047, %v1007, 0
    %v1052 = vsel %vm1047, %v1009, 0
    %v1055 = vsel %vm1047, %v1011, 0
    %v1058 = vsel %vm1047, %v1013, 0
    %v1061 = vsel %vm1047, %v1015, 0
    %v1064 = vsel %vm1047, %v1017, 0
    %1066 = vmatprep.subr.mxu0 0.0
    %1067 = vmatpush1.msra.mxu0 %v1033
    %1068 = vmatprep.subr.mxu0 0.0
    %1069 = vmatpush1.msra.mxu0 %v1032
    %1070 = vmatprep.subr.mxu0 0.0
    %1071 = vmatpush1.msra.mxu0 %v1031
    %1072 = vmatprep.subr.mxu0 0.0
    %1073 = vmatpush1.msra.mxu0 %v1030
    %1074 = vmatprep.subr.mxu0 0.0
    %1075 = vmatpush1.msra.mxu0 %v1029
    %1076 = vmatprep.subr.mxu0 0.0
    %1077 = vmatpush1.msra.mxu0 %v1028
    %1078 = vmatprep.subr.mxu0 0.0
    %1079 = vmatpush1.msra.mxu0 %v1027
    %1080 = vmatprep.subr.mxu0 0.0
    %1081 = vmatpush1.msra.mxu0 %v1026
    %1082 = vmatprep.subr.mxu0 0.0
    %1083 = vmatpush1.msra.mxu0 %v1025
    %1084 = vmatprep.subr.mxu0 0.0
    %1085 = vmatpush1.msra.mxu0 %v1024
    %1086 = vmatprep.subr.mxu0 0.0
    %1087 = vmatpush1.msra.mxu0 %v1023
    %1088 = vmatprep.subr.mxu0 0.0
    %1089 = vmatpush1.msra.mxu0 %v1022
    %1090 = vmatprep.subr.mxu0 0.0
    %1091 = vmatpush1.msra.mxu0 %v1021
    %1092 = vmatprep.subr.mxu0 0.0
    %1093 = vmatpush1.msra.mxu0 %v1020
    %1094 = vmatprep.subr.mxu0 0.0
    %1095 = vmatpush1.msra.mxu0 %v1019
    %1096 = vmatprep.subr.mxu0 0.0
    %1097 = vmatpush1.msra.mxu0 %v1018
    %1098 = vmatprep.subr.mxu0 0.0
    %1099 = vmatpush2.msra.mxu0 0.0
    %1100 = vmatprep.subr.mxu0 0.0
    %1101 = vmatpush2.msra.mxu0 0.0
    %1102 = vmatprep.subr.mxu0 0.0
    %1103 = vmatpush2.msra.mxu0 0.0
    %1104 = vmatprep.subr.mxu0 0.0
    %1105 = vmatpush2.msra.mxu0 0.0
    %1106 = vmatprep.subr.mxu0 0.0
    %1107 = vmatpush2.msra.mxu0 0.0
    %1108 = vmatprep.subr.mxu0 0.0
    %1109 = vmatpush2.msra.mxu0 0.0
    %1110 = vmatprep.subr.mxu0 0.0
    %1111 = vmatpush2.msra.mxu0 0.0
    %1112 = vmatprep.subr.mxu0 0.0
    %1113 = vmatpush2.msra.mxu0 0.0
    %1114 = vmatprep.subr.mxu0 0.0
    %1115 = vmatpush2.msra.mxu0 0.0
    %1116 = vmatprep.subr.mxu0 0.0
    %1117 = vmatpush2.msra.mxu0 0.0
    %1118 = vmatprep.subr.mxu0 0.0
    %1119 = vmatpush2.msra.mxu0 %v1039
    %1120 = vmatprep.subr.mxu0 0.0
    %1121 = vmatpush2.msra.mxu0 %v1038
    %1122 = vmatprep.subr.mxu0 0.0
    %1123 = vmatpush2.msra.mxu0 %v1037
    %1124 = vmatprep.subr.mxu0 0.0
    %1125 = vmatpush2.msra.mxu0 %v1036
    %1126 = vmatprep.subr.mxu0 0.0
    %1127 = vmatpush2.msra.mxu0 %v1035
    %1128 = vmatprep.subr.mxu0 0.0
    %1129 = vmatpush2.msra.mxu0 %v1034
    %1130 = vmatprep.mubr.f32.mxu0 %v1049
    %1131 = vmatmul.mubr.f32.gmra.mxu0 %v1006
    %v1132 = vpop.f32.mrf.mxu0
    %v1133 = vadd.f32 %v1045, %v1132
    %v1134 = vpop.f32.mrf.mxu0
    %1135 = vmatprep.mubr.f32.mxu0 %v1052
    %1136 = vmatmul.mubr.f32.gmra.mxu0 %v1008
    %v1137 = vpop.f32.mrf.mxu0
    %v1138 = vadd.f32 %v1045, %v1137
    %v1139 = vpop.f32.mrf.mxu0
    %1140 = vmatprep.mubr.f32.mxu0 %v1055
    %1141 = vmatmul.mubr.f32.gmra.mxu0 %v1010
    %v1142 = vpop.f32.mrf.mxu0
    %v1143 = vadd.f32 %v1045, %v1142
    %v1144 = vpop.f32.mrf.mxu0
    %1145 = vmatprep.mubr.f32.mxu0 %v1058
    %1146 = vmatmul.mubr.f32.gmra.mxu0 %v1012
    %v1147 = vpop.f32.mrf.mxu0
    %v1148 = vadd.f32 %v1045, %v1147
    %v1149 = vpop.f32.mrf.mxu0
    %1150 = vmatprep.mubr.f32.mxu0 %v1061
    %1151 = vmatmul.mubr.f32.gmra.mxu0 %v1014
    %v1152 = vpop.f32.mrf.mxu0
    %v1153 = vadd.f32 %v1045, %v1152
    %v1154 = vpop.f32.mrf.mxu0
    %1155 = vmatprep.mubr.f32.mxu0 %v1064
    %1156 = vmatmul.mubr.f32.gmra.mxu0 %v1016
    %v1157 = vpop.f32.mrf.mxu0
    %v1158 = vadd.f32 %v1045, %v1157
    %v1159 = vpop.f32.mrf.mxu0
    %1160 = vdwg.mxu0
    %vm1161 = vcmp.gt.f32.partialorder %v1133, 0.0
    %vm1162 = vcmp.gt.f32.partialorder %v1138, 0.0
    %vm1163 = vcmp.gt.f32.partialorder %v1143, 0.0
    %vm1164 = vcmp.gt.f32.partialorder %v1148, 0.0
    %vm1165 = vcmp.gt.f32.partialorder %v1153, 0.0
    %vm1166 = vcmp.gt.f32.partialorder %v1158, 0.0
    %v1167 = vmul.f32 %v1133, 0.01
    %v1168 = vmul.f32 %v1138, 0.01
    %v1169 = vmul.f32 %v1143, 0.01
    %v1170 = vmul.f32 %v1148, 0.01
    %v1171 = vmul.f32 %v1153, 0.01
    %v1172 = vmul.f32 %v1158, 0.01
    %v1173 = vsel %vm1161, %v1133, %v1167
    %v1174 = vsel %vm1162, %v1138, %v1168
    %v1175 = vsel %vm1163, %v1143, %v1169
    %v1176 = vsel %vm1164, %v1148, %v1170
    %v1177 = vsel %vm1165, %v1153, %v1171
    %v1178 = vsel %vm1166, %v1158, %v1172
    %vm1179 = vcmask 261120
    %1180 = vst.msk [vmem:[#allocation2 + $0xa] sm:$0xff] %vm1179, %v1173
    %1181 = vst.msk [vmem:[#allocation2 + $0x12] sm:$0xff] %vm1179, %v1174
    %1182 = vst.msk [vmem:[#allocation2 + $0x1a] sm:$0xff] %vm1179, %v1175
    %1183 = vst.msk [vmem:[#allocation2 + $0x22] sm:$0xff] %vm1179, %v1176
    %1184 = vst.msk [vmem:[#allocation2 + $0x2a] sm:$0xff] %vm1179, %v1177
    %1185 = vst.msk [vmem:[#allocation2 + $0x32] sm:$0xff] %vm1179, %v1178
    %v1186 = vld [vmem:[#allocation2] sm:$0xff]
    %v1187 = vld [vmem:[#allocation2 + $0x8] sm:$0xff]
    %v1188 = vld [vmem:[#allocation2 + $0x10] sm:$0xff]
    %v1189 = vld [vmem:[#allocation2 + $0x18] sm:$0xff]
    %v1190 = vld [vmem:[#allocation2 + $0x20] sm:$0xff]
    %v1191 = vld [vmem:[#allocation2 + $0x28] sm:$0xff]
    %1192 = vst.msk [vmem:[#allocation3] sm:$0xff] %vm1179, %v1186
    %1193 = vst.msk [vmem:[#allocation3 + $0x30] sm:$0xff] %vm1179, %v1187
    %1194 = vst.msk [vmem:[#allocation3 + $0x60] sm:$0xff] %vm1179, %v1188
    %1195 = vst.msk [vmem:[#allocation3 + $0x90] sm:$0xff] %vm1179, %v1189
    %1196 = vst.msk [vmem:[#allocation3 + $0xc0] sm:$0xff] %vm1179, %v1190
    %1197 = vst.msk [vmem:[#allocation3 + $0xf0] sm:$0xff] %vm1179, %v1191
    %v1198 = vld [vmem:[#allocation2 + $0x2] sm:$0xff]
    %v1199 = vld [vmem:[#allocation2 + $0xa] sm:$0xff]
    %v1200 = vld [vmem:[#allocation2 + $0x12] sm:$0xff]
    %v1201 = vld [vmem:[#allocation2 + $0x1a] sm:$0xff]
    %v1202 = vld [vmem:[#allocation2 + $0x22] sm:$0xff]
    %v1203 = vld [vmem:[#allocation2 + $0x2a] sm:$0xff]
    %1210 = vrot.lane.b32.xlu0 %v1198, 32
    %v1211 = vpop.permute.xlu0 %1210
    %1212 = vrot.lane.b32.xlu0 %v1199, 32
    %v1213 = vpop.permute.xlu0 %1212
    %1214 = vrot.lane.b32.xlu0 %v1200, 32
    %v1215 = vpop.permute.xlu0 %1214
    %1216 = vrot.lane.b32.xlu0 %v1201, 32
    %v1217 = vpop.permute.xlu0 %1216
    %1218 = vrot.lane.b32.xlu0 %v1202, 32
    %v1219 = vpop.permute.xlu0 %1218
    %1220 = vrot.lane.b32.xlu0 %v1203, 32
    %v1221 = vpop.permute.xlu0 %1220
    %vm1228 = vcmask 523520
    %1229 = vst.msk [vmem:[#allocation3] sm:$0xff] %vm1228, %v1211
    %1230 = vst.msk [vmem:[#allocation3 + $0x30] sm:$0xff] %vm1228, %v1213
    %1231 = vst.msk [vmem:[#allocation3 + $0x60] sm:$0xff] %vm1228, %v1215
    %1232 = vst.msk [vmem:[#allocation3 + $0x90] sm:$0xff] %vm1228, %v1217
    %1233 = vst.msk [vmem:[#allocation3 + $0xc0] sm:$0xff] %vm1228, %v1219
    %1234 = vst.msk [vmem:[#allocation3 + $0xf0] sm:$0xff] %vm1228, %v1221
    %v1235 = vld [vmem:[#allocation2 + $0x4] sm:$0xff]
    %v1236 = vld [vmem:[#allocation2 + $0xc] sm:$0xff]
    %v1237 = vld [vmem:[#allocation2 + $0x14] sm:$0xff]
    %v1238 = vld [vmem:[#allocation2 + $0x1c] sm:$0xff]
    %v1239 = vld [vmem:[#allocation2 + $0x24] sm:$0xff]
    %v1240 = vld [vmem:[#allocation2 + $0x2c] sm:$0xff]
    %1247 = vrot.lane.b32.xlu0 %v1235, 64
    %v1248 = vpop.permute.xlu0 %1247
    %1249 = vrot.lane.b32.xlu0 %v1236, 64
    %v1250 = vpop.permute.xlu0 %1249
    %1251 = vrot.lane.b32.xlu0 %v1237, 64
    %v1252 = vpop.permute.xlu0 %1251
    %1253 = vrot.lane.b32.xlu0 %v1238, 64
    %v1254 = vpop.permute.xlu0 %1253
    %1255 = vrot.lane.b32.xlu0 %v1239, 64
    %v1256 = vpop.permute.xlu0 %1255
    %1257 = vrot.lane.b32.xlu0 %v1240, 64
    %v1258 = vpop.permute.xlu0 %1257
    %vm1265 = vcmask 785920
    %1266 = vst.msk [vmem:[#allocation3] sm:$0xff] %vm1265, %v1248
    %1267 = vst.msk [vmem:[#allocation3 + $0x30] sm:$0xff] %vm1265, %v1250
    %1268 = vst.msk [vmem:[#allocation3 + $0x60] sm:$0xff] %vm1265, %v1252
    %1269 = vst.msk [vmem:[#allocation3 + $0x90] sm:$0xff] %vm1265, %v1254
    %1270 = vst.msk [vmem:[#allocation3 + $0xc0] sm:$0xff] %vm1265, %v1256
    %1271 = vst.msk [vmem:[#allocation3 + $0xf0] sm:$0xff] %vm1265, %v1258
    %v1272 = vld [vmem:[#allocation2 + $0x6] sm:$0xff]
    %v1273 = vld [vmem:[#allocation2 + $0xe] sm:$0xff]
    %v1274 = vld [vmem:[#allocation2 + $0x16] sm:$0xff]
    %v1275 = vld [vmem:[#allocation2 + $0x1e] sm:$0xff]
    %v1276 = vld [vmem:[#allocation2 + $0x26] sm:$0xff]
    %v1277 = vld [vmem:[#allocation2 + $0x2e] sm:$0xff]
    %1284 = vrot.lane.b32.xlu0 %v1272, 96
    %v1285 = vpop.permute.xlu0 %1284
    %1286 = vrot.lane.b32.xlu0 %v1273, 96
    %v1287 = vpop.permute.xlu0 %1286
    %1288 = vrot.lane.b32.xlu0 %v1274, 96
    %v1289 = vpop.permute.xlu0 %1288
    %1290 = vrot.lane.b32.xlu0 %v1275, 96
    %v1291 = vpop.permute.xlu0 %1290
    %1292 = vrot.lane.b32.xlu0 %v1276, 96
    %v1293 = vpop.permute.xlu0 %1292
    %1294 = vrot.lane.b32.xlu0 %v1277, 96
    %v1295 = vpop.permute.xlu0 %1294
    %vm1302 = vcmask 1048320
    %1303 = vst.msk [vmem:[#allocation3] sm:$0xff] %vm1302, %v1285
    %1304 = vst.msk [vmem:[#allocation3 + $0x30] sm:$0xff] %vm1302, %v1287
    %1305 = vst.msk [vmem:[#allocation3 + $0x60] sm:$0xff] %vm1302, %v1289
    %1306 = vst.msk [vmem:[#allocation3 + $0x90] sm:$0xff] %vm1302, %v1291
    %1307 = vst.msk [vmem:[#allocation3 + $0xc0] sm:$0xff] %vm1302, %v1293
    %1308 = vst.msk [vmem:[#allocation3 + $0xf0] sm:$0xff] %vm1302, %v1295
    %v1309 = vld [vmem:[#allocation2 + $0x8] sm:$0xff]
    %v1310 = vld [vmem:[#allocation2 + $0x10] sm:$0xff]
    %v1311 = vld [vmem:[#allocation2 + $0x18] sm:$0xff]
    %v1312 = vld [vmem:[#allocation2 + $0x20] sm:$0xff]
    %v1313 = vld [vmem:[#allocation2 + $0x28] sm:$0xff]
    %v1314 = vld [vmem:[#allocation2 + $0x30] sm:$0xff]
    %1315 = vst.msk [vmem:[#allocation3 + $0x8] sm:$0xff] %vm1179, %v1309
    %1316 = vst.msk [vmem:[#allocation3 + $0x38] sm:$0xff] %vm1179, %v1310
    %1317 = vst.msk [vmem:[#allocation3 + $0x68] sm:$0xff] %vm1179, %v1311
    %1318 = vst.msk [vmem:[#allocation3 + $0x98] sm:$0xff] %vm1179, %v1312
    %1319 = vst.msk [vmem:[#allocation3 + $0xc8] sm:$0xff] %vm1179, %v1313
    %1320 = vst.msk [vmem:[#allocation3 + $0xf8] sm:$0xff] %vm1179, %v1314
    %v1321 = vld [vmem:[#allocation2 + $0xa] sm:$0xff]
    %v1322 = vld [vmem:[#allocation2 + $0x12] sm:$0xff]
    %v1323 = vld [vmem:[#allocation2 + $0x1a] sm:$0xff]
    %v1324 = vld [vmem:[#allocation2 + $0x22] sm:$0xff]
    %v1325 = vld [vmem:[#allocation2 + $0x2a] sm:$0xff]
    %v1326 = vld [vmem:[#allocation2 + $0x32] sm:$0xff]
    %1333 = vrot.lane.b32.xlu0 %v1321, 32
    %v1334 = vpop.permute.xlu0 %1333
    %1335 = vrot.lane.b32.xlu0 %v1322, 32
    %v1336 = vpop.permute.xlu0 %1335
    %1337 = vrot.lane.b32.xlu0 %v1323, 32
    %v1338 = vpop.permute.xlu0 %1337
    %1339 = vrot.lane.b32.xlu0 %v1324, 32
    %v1340 = vpop.permute.xlu0 %1339
    %1341 = vrot.lane.b32.xlu0 %v1325, 32
    %v1342 = vpop.permute.xlu0 %1341
    %1343 = vrot.lane.b32.xlu0 %v1326, 32
    %v1344 = vpop.permute.xlu0 %1343
    %1351 = vst.msk [vmem:[#allocation3 + $0x8] sm:$0xff] %vm1228, %v1334
    %1352 = vst.msk [vmem:[#allocation3 + $0x38] sm:$0xff] %vm1228, %v1336
    %1353 = vst.msk [vmem:[#allocation3 + $0x68] sm:$0xff] %vm1228, %v1338
    %1354 = vst.msk [vmem:[#allocation3 + $0x98] sm:$0xff] %vm1228, %v1340
    %1355 = vst.msk [vmem:[#allocation3 + $0xc8] sm:$0xff] %vm1228, %v1342
    %1356 = vst.msk [vmem:[#allocation3 + $0xf8] sm:$0xff] %vm1228, %v1344
    %v1357 = vld [vmem:[#allocation2 + $0xc] sm:$0xff]
    %v1358 = vld [vmem:[#allocation2 + $0x14] sm:$0xff]
    %v1359 = vld [vmem:[#allocation2 + $0x1c] sm:$0xff]
    %v1360 = vld [vmem:[#allocation2 + $0x24] sm:$0xff]
    %v1361 = vld [vmem:[#allocation2 + $0x2c] sm:$0xff]
    %v1362 = vld [vmem:[#allocation2 + $0x34] sm:$0xff]
    %1369 = vrot.lane.b32.xlu0 %v1357, 64
    %v1370 = vpop.permute.xlu0 %1369
    %1371 = vrot.lane.b32.xlu0 %v1358, 64
    %v1372 = vpop.permute.xlu0 %1371
    %1373 = vrot.lane.b32.xlu0 %v1359, 64
    %v1374 = vpop.permute.xlu0 %1373
    %1375 = vrot.lane.b32.xlu0 %v1360, 64
    %v1376 = vpop.permute.xlu0 %1375
    %1377 = vrot.lane.b32.xlu0 %v1361, 64
    %v1378 = vpop.permute.xlu0 %1377
    %1379 = vrot.lane.b32.xlu0 %v1362, 64
    %v1380 = vpop.permute.xlu0 %1379
    %1387 = vst.msk [vmem:[#allocation3 + $0x8] sm:$0xff] %vm1265, %v1370
    %1388 = vst.msk [vmem:[#allocation3 + $0x38] sm:$0xff] %vm1265, %v1372
    %1389 = vst.msk [vmem:[#allocation3 + $0x68] sm:$0xff] %vm1265, %v1374
    %1390 = vst.msk [vmem:[#allocation3 + $0x98] sm:$0xff] %vm1265, %v1376
    %1391 = vst.msk [vmem:[#allocation3 + $0xc8] sm:$0xff] %vm1265, %v1378
    %1392 = vst.msk [vmem:[#allocation3 + $0xf8] sm:$0xff] %vm1265, %v1380
    %v1393 = vld [vmem:[#allocation2 + $0xe] sm:$0xff]
    %v1394 = vld [vmem:[#allocation2 + $0x16] sm:$0xff]
    %v1395 = vld [vmem:[#allocation2 + $0x1e] sm:$0xff]
    %v1396 = vld [vmem:[#allocation2 + $0x26] sm:$0xff]
    %v1397 = vld [vmem:[#allocation2 + $0x2e] sm:$0xff]
    %v1398 = vld [vmem:[#allocation2 + $0x36] sm:$0xff]
    %1405 = vrot.lane.b32.xlu0 %v1393, 96
    %v1406 = vpop.permute.xlu0 %1405
    %1407 = vrot.lane.b32.xlu0 %v1394, 96
    %v1408 = vpop.permute.xlu0 %1407
    %1409 = vrot.lane.b32.xlu0 %v1395, 96
    %v1410 = vpop.permute.xlu0 %1409
    %1411 = vrot.lane.b32.xlu0 %v1396, 96
    %v1412 = vpop.permute.xlu0 %1411
    %1413 = vrot.lane.b32.xlu0 %v1397, 96
    %v1414 = vpop.permute.xlu0 %1413
    %1415 = vrot.lane.b32.xlu0 %v1398, 96
    %v1416 = vpop.permute.xlu0 %1415
    %1423 = vst.msk [vmem:[#allocation3 + $0x8] sm:$0xff] %vm1302, %v1406
    %1424 = vst.msk [vmem:[#allocation3 + $0x38] sm:$0xff] %vm1302, %v1408
    %1425 = vst.msk [vmem:[#allocation3 + $0x68] sm:$0xff] %vm1302, %v1410
    %1426 = vst.msk [vmem:[#allocation3 + $0x98] sm:$0xff] %vm1302, %v1412
    %1427 = vst.msk [vmem:[#allocation3 + $0xc8] sm:$0xff] %vm1302, %v1414
    %1428 = vst.msk [vmem:[#allocation3 + $0xf8] sm:$0xff] %vm1302, %v1416
    %v1429 = vld [vmem:[#allocation2 + $0x10] sm:$0xff]
    %v1430 = vld [vmem:[#allocation2 + $0x18] sm:$0xff]
    %v1431 = vld [vmem:[#allocation2 + $0x20] sm:$0xff]
    %v1432 = vld [vmem:[#allocation2 + $0x28] sm:$0xff]
    %v1433 = vld [vmem:[#allocation2 + $0x30] sm:$0xff]
    %v1434 = vld [vmem:[#allocation2 + $0x38] sm:$0xff]
    %1435 = vst.msk [vmem:[#allocation3 + $0x10] sm:$0xff] %vm1179, %v1429
    %1436 = vst.msk [vmem:[#allocation3 + $0x40] sm:$0xff] %vm1179, %v1430
    %1437 = vst.msk [vmem:[#allocation3 + $0x70] sm:$0xff] %vm1179, %v1431
    %1438 = vst.msk [vmem:[#allocation3 + $0xa0] sm:$0xff] %vm1179, %v1432
    %1439 = vst.msk [vmem:[#allocation3 + $0xd0] sm:$0xff] %vm1179, %v1433
    %1440 = vst.msk [vmem:[#allocation3 + $0x100] sm:$0xff] %vm1179, %v1434
    %v1441 = vld [vmem:[#allocation2 + $0x12] sm:$0xff]
    %v1442 = vld [vmem:[#allocation2 + $0x1a] sm:$0xff]
    %v1443 = vld [vmem:[#allocation2 + $0x22] sm:$0xff]
    %v1444 = vld [vmem:[#allocation2 + $0x2a] sm:$0xff]
    %v1445 = vld [vmem:[#allocation2 + $0x32] sm:$0xff]
    %v1446 = vld [vmem:[#allocation2 + $0x3a] sm:$0xff]
    %1453 = vrot.lane.b32.xlu0 %v1441, 32
    %v1454 = vpop.permute.xlu0 %1453
    %1455 = vrot.lane.b32.xlu0 %v1442, 32
    %v1456 = vpop.permute.xlu0 %1455
    %1457 = vrot.lane.b32.xlu0 %v1443, 32
    %v1458 = vpop.permute.xlu0 %1457
    %1459 = vrot.lane.b32.xlu0 %v1444, 32
    %v1460 = vpop.permute.xlu0 %1459
    %1461 = vrot.lane.b32.xlu0 %v1445, 32
    %v1462 = vpop.permute.xlu0 %1461
    %1463 = vrot.lane.b32.xlu0 %v1446, 32
    %v1464 = vpop.permute.xlu0 %1463
    %1471 = vst.msk [vmem:[#allocation3 + $0x10] sm:$0xff] %vm1228, %v1454
    %1472 = vst.msk [vmem:[#allocation3 + $0x40] sm:$0xff] %vm1228, %v1456
    %1473 = vst.msk [vmem:[#allocation3 + $0x70] sm:$0xff] %vm1228, %v1458
    %1474 = vst.msk [vmem:[#allocation3 + $0xa0] sm:$0xff] %vm1228, %v1460
    %1475 = vst.msk [vmem:[#allocation3 + $0xd0] sm:$0xff] %vm1228, %v1462
    %1476 = vst.msk [vmem:[#allocation3 + $0x100] sm:$0xff] %vm1228, %v1464
    %v1477 = vld [vmem:[#allocation2 + $0x14] sm:$0xff]
    %v1478 = vld [vmem:[#allocation2 + $0x1c] sm:$0xff]
    %v1479 = vld [vmem:[#allocation2 + $0x24] sm:$0xff]
    %v1480 = vld [vmem:[#allocation2 + $0x2c] sm:$0xff]
    %v1481 = vld [vmem:[#allocation2 + $0x34] sm:$0xff]
    %v1482 = vld [vmem:[#allocation2 + $0x3c] sm:$0xff]
    %1489 = vrot.lane.b32.xlu0 %v1477, 64
    %v1490 = vpop.permute.xlu0 %1489
    %1491 = vrot.lane.b32.xlu0 %v1478, 64
    %v1492 = vpop.permute.xlu0 %1491
    %1493 = vrot.lane.b32.xlu0 %v1479, 64
    %v1494 = vpop.permute.xlu0 %1493
    %1495 = vrot.lane.b32.xlu0 %v1480, 64
    %v1496 = vpop.permute.xlu0 %1495
    %1497 = vrot.lane.b32.xlu0 %v1481, 64
    %v1498 = vpop.permute.xlu0 %1497
    %1499 = vrot.lane.b32.xlu0 %v1482, 64
    %v1500 = vpop.permute.xlu0 %1499
    %1507 = vst.msk [vmem:[#allocation3 + $0x10] sm:$0xff] %vm1265, %v1490
    %1508 = vst.msk [vmem:[#allocation3 + $0x40] sm:$0xff] %vm1265, %v1492
    %1509 = vst.msk [vmem:[#allocation3 + $0x70] sm:$0xff] %vm1265, %v1494
    %1510 = vst.msk [vmem:[#allocation3 + $0xa0] sm:$0xff] %vm1265, %v1496
    %1511 = vst.msk [vmem:[#allocation3 + $0xd0] sm:$0xff] %vm1265, %v1498
    %1512 = vst.msk [vmem:[#allocation3 + $0x100] sm:$0xff] %vm1265, %v1500
    %v1513 = vld [vmem:[#allocation3] sm:$0xff]
    %v1514 = vld [vmem:[#allocation3 + $0x8] sm:$0xff]
    %v1515 = vld [vmem:[#allocation3 + $0x10] sm:$0xff]
    %v1516 = vld [vmem:[#allocation3 + $0x30] sm:$0xff]
    %v1517 = vld [vmem:[#allocation3 + $0x38] sm:$0xff]
    %v1518 = vld [vmem:[#allocation3 + $0x40] sm:$0xff]
    %v1519 = vld [vmem:[#allocation3 + $0x60] sm:$0xff]
    %v1520 = vld [vmem:[#allocation3 + $0x68] sm:$0xff]
    %v1521 = vld [vmem:[#allocation3 + $0x70] sm:$0xff]
    %v1522 = vld [vmem:[#allocation3 + $0x90] sm:$0xff]
    %v1523 = vld [vmem:[#allocation3 + $0x98] sm:$0xff]
    %v1524 = vld [vmem:[#allocation3 + $0xa0] sm:$0xff]
    %v1525 = vld [vmem:[#allocation3 + $0xc0] sm:$0xff]
    %v1526 = vld [vmem:[#allocation3 + $0xc8] sm:$0xff]
    %v1527 = vld [vmem:[#allocation3 + $0xd0] sm:$0xff]
    %v1528 = vld [vmem:[#allocation3 + $0xf0] sm:$0xff]
    %v1529 = vld [vmem:[#allocation3 + $0xf8] sm:$0xff]
    %v1530 = vld [vmem:[#allocation3 + $0x100] sm:$0xff]
    %v1531 = vld [vmem:[%s6] sm:$0xff]
    %v1532 = vld [vmem:[%s6 + $0x8] sm:$0xff]
    %v1533 = vld [vmem:[%s6 + $0x10] sm:$0xff]
    %v1534 = vld [vmem:[%s6 + $0x18] sm:$0xff]
    %v1535 = vld [vmem:[%s6 + $0x20] sm:$0xff]
    %v1536 = vld [vmem:[%s6 + $0x28] sm:$0xff]
    %v1537 = vld [vmem:[%s6 + $0x30] sm:$0xff]
    %v1538 = vld [vmem:[%s6 + $0x38] sm:$0xff]
    %v1539 = vld [vmem:[%s6 + $0x40] sm:$0xff]
    %v1540 = vld [vmem:[%s6 + $0x48] sm:$0xff]
    %v1541 = vld [vmem:[%s6 + $0x50] sm:$0xff]
    %v1542 = vld [vmem:[%s6 + $0x58] sm:$0xff]
    %v1543 = vld [vmem:[%s6 + $0x60] sm:$0xff]
    %v1544 = vld [vmem:[%s6 + $0x68] sm:$0xff]
    %v1545 = vld [vmem:[%s6 + $0x70] sm:$0xff]
    %v1546 = vld [vmem:[%s6 + $0x78] sm:$0xff]
    %v1547 = vld [vmem:[%s6 + $0x80] sm:$0xff]
    %v1548 = vld [vmem:[%s6 + $0x88] sm:$0xff]
    %v1549 = vld [vmem:[%s6 + $0x90] sm:$0xff]
    %v1550 = vld [vmem:[%s6 + $0x98] sm:$0xff]
    %v1551 = vld [vmem:[%s6 + $0xa0] sm:$0xff]
    %v1552 = vld [vmem:[%s6 + $0xa8] sm:$0xff]
    %v1553 = vld [vmem:[%s6 + $0xb0] sm:$0xff]
    %v1554 = vld [vmem:[%s6 + $0xb8] sm:$0xff]
    %v1555 = vld [vmem:[%s6 + $0xc0] sm:$0xff]
    %v1556 = vld [vmem:[%s6 + $0xc8] sm:$0xff]
    %v1557 = vld [vmem:[%s6 + $0xd0] sm:$0xff]
    %v1558 = vld [vmem:[%s6 + $0xd8] sm:$0xff]
    %v1559 = vld [vmem:[%s6 + $0xe0] sm:$0xff]
    %v1560 = vld [vmem:[%s6 + $0xe8] sm:$0xff]
    %v1561 = vld [vmem:[%s6 + $0xf0] sm:$0xff]
    %v1562 = vld [vmem:[%s6 + $0xf8] sm:$0xff]
    %v1563 = vld [vmem:[%s6 + $0x100] sm:$0xff]
    %v1564 = vld [vmem:[%s6 + $0x108] sm:$0xff]
    %v1565 = vld [vmem:[%s6 + $0x110] sm:$0xff]
    %v1566 = vld [vmem:[%s6 + $0x118] sm:$0xff]
    %v1567 = vld [vmem:[%s6 + $0x120] sm:$0xff]
    %v1568 = vld [vmem:[%s6 + $0x128] sm:$0xff]
    %v1569 = vld [vmem:[%s6 + $0x130] sm:$0xff]
    %v1570 = vld [vmem:[%s6 + $0x138] sm:$0xff]
    %v1571 = vld [vmem:[%s6 + $0x140] sm:$0xff]
    %v1572 = vld [vmem:[%s6 + $0x148] sm:$0xff]
    %v1573 = vld [vmem:[%s6 + $0x150] sm:$0xff]
    %v1574 = vld [vmem:[%s6 + $0x158] sm:$0xff]
    %v1575 = vld [vmem:[%s7] sm:$0x1]
    %v1577 = vlaneseq
    %v1578 = vshrl.u32 %v1577, 7
    %v1579 = vsub.s32 0, %v1578
    %v1580 = vrot.slane %v1575, %v1579
    %vm1582 = vcmask 785408
    %v1584 = vsel %vm1582, %v1515, 0
    %v1587 = vsel %vm1582, %v1518, 0
    %v1590 = vsel %vm1582, %v1521, 0
    %v1593 = vsel %vm1582, %v1524, 0
    %v1596 = vsel %vm1582, %v1527, 0
    %v1599 = vsel %vm1582, %v1530, 0
    %1601 = vmatprep.subr.mxu0 0.0
    %1602 = vmatpush1.msra.mxu0 %v1546
    %1603 = vmatprep.subr.mxu0 0.0
    %1604 = vmatpush1.msra.mxu0 %v1545
    %1605 = vmatprep.subr.mxu0 0.0
    %1606 = vmatpush1.msra.mxu0 %v1544
    %1607 = vmatprep.subr.mxu0 0.0
    %1608 = vmatpush1.msra.mxu0 %v1543
    %1609 = vmatprep.subr.mxu0 0.0
    %1610 = vmatpush1.msra.mxu0 %v1542
    %1611 = vmatprep.subr.mxu0 0.0
    %1612 = vmatpush1.msra.mxu0 %v1541
    %1613 = vmatprep.subr.mxu0 0.0
    %1614 = vmatpush1.msra.mxu0 %v1540
    %1615 = vmatprep.subr.mxu0 0.0
    %1616 = vmatpush1.msra.mxu0 %v1539
    %1617 = vmatprep.subr.mxu0 0.0
    %1618 = vmatpush1.msra.mxu0 %v1538
    %1619 = vmatprep.subr.mxu0 0.0
    %1620 = vmatpush1.msra.mxu0 %v1537
    %1621 = vmatprep.subr.mxu0 0.0
    %1622 = vmatpush1.msra.mxu0 %v1536
    %1623 = vmatprep.subr.mxu0 0.0
    %1624 = vmatpush1.msra.mxu0 %v1535
    %1625 = vmatprep.subr.mxu0 0.0
    %1626 = vmatpush1.msra.mxu0 %v1534
    %1627 = vmatprep.subr.mxu0 0.0
    %1628 = vmatpush1.msra.mxu0 %v1533
    %1629 = vmatprep.subr.mxu0 0.0
    %1630 = vmatpush1.msra.mxu0 %v1532
    %1631 = vmatprep.subr.mxu0 0.0
    %1632 = vmatpush1.msra.mxu0 %v1531
    %1633 = vmatprep.subr.mxu0 0.0
    %1634 = vmatpush2.msra.mxu0 %v1562
    %1635 = vmatprep.subr.mxu0 0.0
    %1636 = vmatpush2.msra.mxu0 %v1561
    %1637 = vmatprep.subr.mxu0 0.0
    %1638 = vmatpush2.msra.mxu0 %v1560
    %1639 = vmatprep.subr.mxu0 0.0
    %1640 = vmatpush2.msra.mxu0 %v1559
    %1641 = vmatprep.subr.mxu0 0.0
    %1642 = vmatpush2.msra.mxu0 %v1558
    %1643 = vmatprep.subr.mxu0 0.0
    %1644 = vmatpush2.msra.mxu0 %v1557
    %1645 = vmatprep.subr.mxu0 0.0
    %1646 = vmatpush2.msra.mxu0 %v1556
    %1647 = vmatprep.subr.mxu0 0.0
    %1648 = vmatpush2.msra.mxu0 %v1555
    %1649 = vmatprep.subr.mxu0 0.0
    %1650 = vmatpush2.msra.mxu0 %v1554
    %1651 = vmatprep.subr.mxu0 0.0
    %1652 = vmatpush2.msra.mxu0 %v1553
    %1653 = vmatprep.subr.mxu0 0.0
    %1654 = vmatpush2.msra.mxu0 %v1552
    %1655 = vmatprep.subr.mxu0 0.0
    %1656 = vmatpush2.msra.mxu0 %v1551
    %1657 = vmatprep.subr.mxu0 0.0
    %1658 = vmatpush2.msra.mxu0 %v1550
    %1659 = vmatprep.subr.mxu0 0.0
    %1660 = vmatpush2.msra.mxu0 %v1549
    %1661 = vmatprep.subr.mxu0 0.0
    %1662 = vmatpush2.msra.mxu0 %v1548
    %1663 = vmatprep.subr.mxu0 0.0
    %1664 = vmatpush2.msra.mxu0 %v1547
    %1665 = vmatprep.mubr.f32.mxu0 %v1514
    %1666 = vmatmul.mubr.f32.gmra.mxu0 %v1513
    %v1667 = vpop.f32.mrf.mxu0
    %v1668 = vadd.f32 %v1580, %v1667
    %v1669 = vpop.f32.mrf.mxu0
    %1670 = vmatprep.mubr.f32.mxu0 %v1517
    %1671 = vmatmul.mubr.f32.gmra.mxu0 %v1516
    %v1672 = vpop.f32.mrf.mxu0
    %v1673 = vadd.f32 %v1580, %v1672
    %v1674 = vpop.f32.mrf.mxu0
    %1675 = vmatprep.mubr.f32.mxu0 %v1520
    %1676 = vmatmul.mubr.f32.gmra.mxu0 %v1519
    %v1677 = vpop.f32.mrf.mxu0
    %v1678 = vadd.f32 %v1580, %v1677
    %v1679 = vpop.f32.mrf.mxu0
    %1680 = vmatprep.mubr.f32.mxu0 %v1523
    %1681 = vmatmul.mubr.f32.gmra.mxu0 %v1522
    %v1682 = vpop.f32.mrf.mxu0
    %v1683 = vadd.f32 %v1580, %v1682
    %v1684 = vpop.f32.mrf.mxu0
    %1685 = vmatprep.mubr.f32.mxu0 %v1526
    %1686 = vmatmul.mubr.f32.gmra.mxu0 %v1525
    %v1687 = vpop.f32.mrf.mxu0
    %v1688 = vadd.f32 %v1580, %v1687
    %v1689 = vpop.f32.mrf.mxu0
    %1690 = vmatprep.mubr.f32.mxu0 %v1529
    %1691 = vmatmul.mubr.f32.gmra.mxu0 %v1528
    %v1692 = vpop.f32.mrf.mxu0
    %v1693 = vadd.f32 %v1580, %v1692
    %v1694 = vpop.f32.mrf.mxu0
    %1695 = vdwg.mxu0
    %1696 = vmatprep.subr.mxu0 0.0
    %1697 = vmatpush1.msra.mxu0 0.0
    %1698 = vmatprep.subr.mxu0 0.0
    %1699 = vmatpush1.msra.mxu0 0.0
    %1700 = vmatprep.subr.mxu0 0.0
    %1701 = vmatpush1.msra.mxu0 0.0
    %1702 = vmatprep.subr.mxu0 0.0
    %1703 = vmatpush1.msra.mxu0 0.0
    %1704 = vmatprep.subr.mxu0 0.0
    %1705 = vmatpush1.msra.mxu0 %v1574
    %1706 = vmatprep.subr.mxu0 0.0
    %1707 = vmatpush1.msra.mxu0 %v1573
    %1708 = vmatprep.subr.mxu0 0.0
    %1709 = vmatpush1.msra.mxu0 %v1572
    %1710 = vmatprep.subr.mxu0 0.0
    %1711 = vmatpush1.msra.mxu0 %v1571
    %1712 = vmatprep.subr.mxu0 0.0
    %1713 = vmatpush1.msra.mxu0 %v1570
    %1714 = vmatprep.subr.mxu0 0.0
    %1715 = vmatpush1.msra.mxu0 %v1569
    %1716 = vmatprep.subr.mxu0 0.0
    %1717 = vmatpush1.msra.mxu0 %v1568
    %1718 = vmatprep.subr.mxu0 0.0
    %1719 = vmatpush1.msra.mxu0 %v1567
    %1720 = vmatprep.subr.mxu0 0.0
    %1721 = vmatpush1.msra.mxu0 %v1566
    %1722 = vmatprep.subr.mxu0 0.0
    %1723 = vmatpush1.msra.mxu0 %v1565
    %1724 = vmatprep.subr.mxu0 0.0
    %1725 = vmatpush1.msra.mxu0 %v1564
    %1726 = vmatprep.subr.mxu0 0.0
    %1727 = vmatpush1.msra.mxu0 %v1563
    %1728 = vmatprep.subr.mxu0 0.0
    %1729 = vmatpush2.msra.mxu0 0.0
    %1730 = vmatprep.subr.mxu0 0.0
    %1731 = vmatpush2.msra.mxu0 0.0
    %1732 = vmatprep.subr.mxu0 0.0
    %1733 = vmatpush2.msra.mxu0 0.0
    %1734 = vmatprep.subr.mxu0 0.0
    %1735 = vmatpush2.msra.mxu0 0.0
    %1736 = vmatprep.subr.mxu0 0.0
    %1737 = vmatpush2.msra.mxu0 0.0
    %1738 = vmatprep.subr.mxu0 0.0
    %1739 = vmatpush2.msra.mxu0 0.0
    %1740 = vmatprep.subr.mxu0 0.0
    %1741 = vmatpush2.msra.mxu0 0.0
    %1742 = vmatprep.subr.mxu0 0.0
    %1743 = vmatpush2.msra.mxu0 0.0
    %1744 = vmatprep.subr.mxu0 0.0
    %1745 = vmatpush2.msra.mxu0 0.0
    %1746 = vmatprep.subr.mxu0 0.0
    %1747 = vmatpush2.msra.mxu0 0.0
    %1748 = vmatprep.subr.mxu0 0.0
    %1749 = vmatpush2.msra.mxu0 0.0
    %1750 = vmatprep.subr.mxu0 0.0
    %1751 = vmatpush2.msra.mxu0 0.0
    %1752 = vmatprep.subr.mxu0 0.0
    %1753 = vmatpush2.msra.mxu0 0.0
    %1754 = vmatprep.subr.mxu0 0.0
    %1755 = vmatpush2.msra.mxu0 0.0
    %1756 = vmatprep.subr.mxu0 0.0
    %1757 = vmatpush2.msra.mxu0 0.0
    %1758 = vmatprep.subr.mxu0 0.0
    %1759 = vmatpush2.msra.mxu0 0.0
    %1760 = vmatprep.mubr.f32.mxu0 0.0
    %1761 = vmatmul.mubr.f32.gmra.mxu0 %v1584
    %v1762 = vpop.f32.mrf.mxu0
    %v1763 = vadd.f32 %v1668, %v1762
    %v1764 = vpop.f32.mrf.mxu0
    %1765 = vmatprep.mubr.f32.mxu0 0.0
    %1766 = vmatmul.mubr.f32.gmra.mxu0 %v1587
    %v1767 = vpop.f32.mrf.mxu0
    %v1768 = vadd.f32 %v1673, %v1767
    %v1769 = vpop.f32.mrf.mxu0
    %1770 = vmatprep.mubr.f32.mxu0 0.0
    %1771 = vmatmul.mubr.f32.gmra.mxu0 %v1590
    %v1772 = vpop.f32.mrf.mxu0
    %v1773 = vadd.f32 %v1678, %v1772
    %v1774 = vpop.f32.mrf.mxu0
    %1775 = vmatprep.mubr.f32.mxu0 0.0
    %1776 = vmatmul.mubr.f32.gmra.mxu0 %v1593
    %v1777 = vpop.f32.mrf.mxu0
    %v1778 = vadd.f32 %v1683, %v1777
    %v1779 = vpop.f32.mrf.mxu0
    %1780 = vmatprep.mubr.f32.mxu0 0.0
    %1781 = vmatmul.mubr.f32.gmra.mxu0 %v1596
    %v1782 = vpop.f32.mrf.mxu0
    %v1783 = vadd.f32 %v1688, %v1782
    %v1784 = vpop.f32.mrf.mxu0
    %1785 = vmatprep.mubr.f32.mxu0 0.0
    %1786 = vmatmul.mubr.f32.gmra.mxu0 %v1599
    %v1787 = vpop.f32.mrf.mxu0
    %v1788 = vadd.f32 %v1693, %v1787
    %v1789 = vpop.f32.mrf.mxu0
    %1790 = vdwg.mxu0
    %vm1791 = vcmp.gt.f32.partialorder %v1763, 0.0
    %vm1792 = vcmp.gt.f32.partialorder %v1768, 0.0
    %vm1793 = vcmp.gt.f32.partialorder %v1773, 0.0
    %vm1794 = vcmp.gt.f32.partialorder %v1778, 0.0
    %vm1795 = vcmp.gt.f32.partialorder %v1783, 0.0
    %vm1796 = vcmp.gt.f32.partialorder %v1788, 0.0
    %v1797 = vmul.f32 %v1763, 0.01
    %v1798 = vmul.f32 %v1768, 0.01
    %v1799 = vmul.f32 %v1773, 0.01
    %v1800 = vmul.f32 %v1778, 0.01
    %v1801 = vmul.f32 %v1783, 0.01
    %v1802 = vmul.f32 %v1788, 0.01
    %v1803 = vsel %vm1791, %v1763, %v1797
    %v1804 = vsel %vm1792, %v1768, %v1798
    %v1805 = vsel %vm1793, %v1773, %v1799
    %v1806 = vsel %vm1794, %v1778, %v1800
    %v1807 = vsel %vm1795, %v1783, %v1801
    %v1808 = vsel %vm1796, %v1788, %v1802
    %1809 = vst.msk [vmem:[#allocation2 + $0xa] sm:$0xff] %vm87, %v1803
    %1810 = vst.msk [vmem:[#allocation2 + $0x12] sm:$0xff] %vm87, %v1804
    %1811 = vst.msk [vmem:[#allocation2 + $0x1a] sm:$0xff] %vm87, %v1805
    %1812 = vst.msk [vmem:[#allocation2 + $0x22] sm:$0xff] %vm87, %v1806
    %1813 = vst.msk [vmem:[#allocation2 + $0x2a] sm:$0xff] %vm87, %v1807
    %1814 = vst.msk [vmem:[#allocation2 + $0x32] sm:$0xff] %vm87, %v1808
    %v1815 = vld [vmem:[#allocation2 + $0xa] sm:$0x3]
    %1816 = vst.msk [vmem:[#allocation4] sm:$0x3] %vm89, %v1815
    %v1817 = vld [vmem:[#allocation2 + $0xc] sm:$0x3]
    %v1820 = vunpack.c.l.s4 1983009808
    %v1821 = vunpack.c.0.s8 %v1820
    %v1822 = vlaneseq
    %v1823 = vshrl.u32 %v1822, 7
    %v1824 = vsub.s32 %v1821, %v1823
    %v1825 = vrot.slane %v1817, %v1824
    %1826 = vrot.lane.b32.xlu0 %v1825, 64
    %v1827 = vpop.permute.xlu0 %1826
    %vm1829 = vcmask 1041920
    %1830 = vst.msk [vmem:[#allocation4] sm:$0x3] %vm1829, %v1827
    %v1831 = vld [vmem:[#allocation2 + $0xe] sm:$0x3]
    %1832 = vst.msk [vmem:[#allocation4 + $0x2] sm:$0x3] %vm89, %v1831
    %v1833 = vld [vmem:[#allocation2 + $0x10] sm:$0x3]
    %v1836 = vunpack.c.l.s4 1983009808
    %v1837 = vunpack.c.0.s8 %v1836
    %v1838 = vlaneseq
    %v1839 = vshrl.u32 %v1838, 7
    %v1840 = vsub.s32 %v1837, %v1839
    %v1841 = vrot.slane %v1833, %v1840
    %1842 = vrot.lane.b32.xlu0 %v1841, 64
    %v1843 = vpop.permute.xlu0 %1842
    %1845 = vst.msk [vmem:[#allocation4 + $0x2] sm:$0x3] %vm1829, %v1843
    %v1846 = vld [vmem:[#allocation2 + $0x12] sm:$0x3]
    %1847 = vst.msk [vmem:[#allocation4 + $0x4] sm:$0x3] %vm89, %v1846
    %v1848 = vld [vmem:[#allocation2 + $0x14] sm:$0x3]
    %v1851 = vunpack.c.l.s4 1983009808
    %v1852 = vunpack.c.0.s8 %v1851
    %v1853 = vlaneseq
    %v1854 = vshrl.u32 %v1853, 7
    %v1855 = vsub.s32 %v1852, %v1854
    %v1856 = vrot.slane %v1848, %v1855
    %1857 = vrot.lane.b32.xlu0 %v1856, 64
    %v1858 = vpop.permute.xlu0 %1857
    %1860 = vst.msk [vmem:[#allocation4 + $0x4] sm:$0x3] %vm1829, %v1858
    %v1861 = vld [vmem:[#allocation2 + $0x16] sm:$0x3]
    %1862 = vst.msk [vmem:[#allocation4 + $0x6] sm:$0x3] %vm89, %v1861
    %v1863 = vld [vmem:[#allocation2 + $0x18] sm:$0x3]
    %v1866 = vunpack.c.l.s4 1983009808
    %v1867 = vunpack.c.0.s8 %v1866
    %v1868 = vlaneseq
    %v1869 = vshrl.u32 %v1868, 7
    %v1870 = vsub.s32 %v1867, %v1869
    %v1871 = vrot.slane %v1863, %v1870
    %1872 = vrot.lane.b32.xlu0 %v1871, 64
    %v1873 = vpop.permute.xlu0 %1872
    %1875 = vst.msk [vmem:[#allocation4 + $0x6] sm:$0x3] %vm1829, %v1873
    %v1876 = vld [vmem:[#allocation2 + $0x1a] sm:$0x3]
    %1877 = vst.msk [vmem:[#allocation4 + $0x8] sm:$0x3] %vm89, %v1876
    %v1878 = vld [vmem:[#allocation2 + $0x1c] sm:$0x3]
    %v1881 = vunpack.c.l.s4 1983009808
    %v1882 = vunpack.c.0.s8 %v1881
    %v1883 = vlaneseq
    %v1884 = vshrl.u32 %v1883, 7
    %v1885 = vsub.s32 %v1882, %v1884
    %v1886 = vrot.slane %v1878, %v1885
    %1887 = vrot.lane.b32.xlu0 %v1886, 64
    %v1888 = vpop.permute.xlu0 %1887
    %1890 = vst.msk [vmem:[#allocation4 + $0x8] sm:$0x3] %vm1829, %v1888
    %v1891 = vld [vmem:[#allocation2 + $0x1e] sm:$0x3]
    %1892 = vst.msk [vmem:[#allocation4 + $0xa] sm:$0x3] %vm89, %v1891
    %v1893 = vld [vmem:[#allocation2 + $0x20] sm:$0x3]
    %v1896 = vunpack.c.l.s4 1983009808
    %v1897 = vunpack.c.0.s8 %v1896
    %v1898 = vlaneseq
    %v1899 = vshrl.u32 %v1898, 7
    %v1900 = vsub.s32 %v1897, %v1899
    %v1901 = vrot.slane %v1893, %v1900
    %1902 = vrot.lane.b32.xlu0 %v1901, 64
    %v1903 = vpop.permute.xlu0 %1902
    %1905 = vst.msk [vmem:[#allocation4 + $0xa] sm:$0x3] %vm1829, %v1903
    %v1906 = vld [vmem:[#allocation2 + $0x22] sm:$0x3]
    %1907 = vst.msk [vmem:[#allocation4 + $0xc] sm:$0x3] %vm89, %v1906
    %v1908 = vld [vmem:[#allocation2 + $0x24] sm:$0x3]
    %v1911 = vunpack.c.l.s4 1983009808
    %v1912 = vunpack.c.0.s8 %v1911
    %v1913 = vlaneseq
    %v1914 = vshrl.u32 %v1913, 7
    %v1915 = vsub.s32 %v1912, %v1914
    %v1916 = vrot.slane %v1908, %v1915
    %1917 = vrot.lane.b32.xlu0 %v1916, 64
    %v1918 = vpop.permute.xlu0 %1917
    %1920 = vst.msk [vmem:[#allocation4 + $0xc] sm:$0x3] %vm1829, %v1918
    %v1921 = vld [vmem:[#allocation2 + $0x26] sm:$0x3]
    %1922 = vst.msk [vmem:[#allocation4 + $0xe] sm:$0x3] %vm89, %v1921
    %v1923 = vld [vmem:[#allocation2 + $0x28] sm:$0x3]
    %v1926 = vunpack.c.l.s4 1983009808
    %v1927 = vunpack.c.0.s8 %v1926
    %v1928 = vlaneseq
    %v1929 = vshrl.u32 %v1928, 7
    %v1930 = vsub.s32 %v1927, %v1929
    %v1931 = vrot.slane %v1923, %v1930
    %1932 = vrot.lane.b32.xlu0 %v1931, 64
    %v1933 = vpop.permute.xlu0 %1932
    %1935 = vst.msk [vmem:[#allocation4 + $0xe] sm:$0x3] %vm1829, %v1933
    %v1936 = vld [vmem:[#allocation2 + $0x2a] sm:$0x3]
    %1937 = vst.msk [vmem:[#allocation4 + $0x10] sm:$0x3] %vm89, %v1936
    %v1938 = vld [vmem:[#allocation2 + $0x2c] sm:$0x3]
    %v1941 = vunpack.c.l.s4 1983009808
    %v1942 = vunpack.c.0.s8 %v1941
    %v1943 = vlaneseq
    %v1944 = vshrl.u32 %v1943, 7
    %v1945 = vsub.s32 %v1942, %v1944
    %v1946 = vrot.slane %v1938, %v1945
    %1947 = vrot.lane.b32.xlu0 %v1946, 64
    %v1948 = vpop.permute.xlu0 %1947
    %1950 = vst.msk [vmem:[#allocation4 + $0x10] sm:$0x3] %vm1829, %v1948
    %v1951 = vld [vmem:[#allocation2 + $0x2e] sm:$0x3]
    %1952 = vst.msk [vmem:[#allocation4 + $0x12] sm:$0x3] %vm89, %v1951
    %v1953 = vld [vmem:[#allocation2 + $0x30] sm:$0x3]
    %v1956 = vunpack.c.l.s4 1983009808
    %v1957 = vunpack.c.0.s8 %v1956
    %v1958 = vlaneseq
    %v1959 = vshrl.u32 %v1958, 7
    %v1960 = vsub.s32 %v1957, %v1959
    %v1961 = vrot.slane %v1953, %v1960
    %1962 = vrot.lane.b32.xlu0 %v1961, 64
    %v1963 = vpop.permute.xlu0 %1962
    %1965 = vst.msk [vmem:[#allocation4 + $0x12] sm:$0x3] %vm1829, %v1963
    %v1966 = vld [vmem:[#allocation2 + $0x32] sm:$0x3]
    %1967 = vst.msk [vmem:[#allocation4 + $0x14] sm:$0x3] %vm89, %v1966
    %v1968 = vld [vmem:[#allocation2 + $0x34] sm:$0x3]
    %v1971 = vunpack.c.l.s4 1983009808
    %v1972 = vunpack.c.0.s8 %v1971
    %v1973 = vlaneseq
    %v1974 = vshrl.u32 %v1973, 7
    %v1975 = vsub.s32 %v1972, %v1974
    %v1976 = vrot.slane %v1968, %v1975
    %1977 = vrot.lane.b32.xlu0 %v1976, 64
    %v1978 = vpop.permute.xlu0 %1977
    %1980 = vst.msk [vmem:[#allocation4 + $0x14] sm:$0x3] %vm1829, %v1978
    %v1981 = vld [vmem:[#allocation2 + $0x36] sm:$0x3]
    %1982 = vst.msk [vmem:[#allocation4 + $0x16] sm:$0x3] %vm89, %v1981
    %v1983 = vld [vmem:[#allocation2 + $0x38] sm:$0x3]
    %v1986 = vunpack.c.l.s4 1983009808
    %v1987 = vunpack.c.0.s8 %v1986
    %v1988 = vlaneseq
    %v1989 = vshrl.u32 %v1988, 7
    %v1990 = vsub.s32 %v1987, %v1989
    %v1991 = vrot.slane %v1983, %v1990
    %1992 = vrot.lane.b32.xlu0 %v1991, 64
    %v1993 = vpop.permute.xlu0 %1992
    %1995 = vst.msk [vmem:[#allocation4 + $0x16] sm:$0x3] %vm1829, %v1993
    %v1996 = vld [vmem:[#allocation4] sm:$0xff]
    %v1997 = vld [vmem:[#allocation4 + $0x8] sm:$0xff]
    %v1998 = vld [vmem:[#allocation4 + $0x10] sm:$0xff]
    %v1999 = vld [vmem:[%s8] sm:$0xff]
    %v2000 = vld [vmem:[%s8 + $0x8] sm:$0xff]
    %v2001 = vld [vmem:[%s8 + $0x10] sm:$0xff]
    %v2002 = vld [vmem:[%s8 + $0x18] sm:$0xff]
    %v2003 = vld [vmem:[%s8 + $0x20] sm:$0xff]
    %v2004 = vld [vmem:[%s8 + $0x28] sm:$0xff]
    %v2005 = vld [vmem:[%s8 + $0x30] sm:$0xff]
    %v2006 = vld [vmem:[%s8 + $0x38] sm:$0xff]
    %v2007 = vld [vmem:[%s8 + $0x40] sm:$0xff]
    %v2008 = vld [vmem:[%s8 + $0x48] sm:$0xff]
    %v2009 = vld [vmem:[%s8 + $0x50] sm:$0xff]
    %v2010 = vld [vmem:[%s8 + $0x58] sm:$0xff]
    %v2011 = vld [vmem:[%s8 + $0x60] sm:$0xff]
    %v2012 = vld [vmem:[%s8 + $0x68] sm:$0xff]
    %v2013 = vld [vmem:[%s8 + $0x70] sm:$0xff]
    %v2014 = vld [vmem:[%s8 + $0x78] sm:$0xff]
    %v2015 = vld [vmem:[%s8 + $0x80] sm:$0xff]
    %v2016 = vld [vmem:[%s8 + $0x88] sm:$0xff]
    %v2017 = vld [vmem:[%s8 + $0x90] sm:$0xff]
    %v2018 = vld [vmem:[%s8 + $0x98] sm:$0xff]
    %v2019 = vld [vmem:[%s8 + $0xa0] sm:$0xff]
    %v2020 = vld [vmem:[%s8 + $0xa8] sm:$0xff]
    %v2021 = vld [vmem:[%s8 + $0xb0] sm:$0xff]
    %v2022 = vld [vmem:[%s8 + $0xb8] sm:$0xff]
    %v2023 = vld [vmem:[%s8 + $0xc0] sm:$0xff]
    %v2024 = vld [vmem:[%s8 + $0xc8] sm:$0xff]
    %v2025 = vld [vmem:[%s8 + $0xd0] sm:$0xff]
    %v2026 = vld [vmem:[%s8 + $0xd8] sm:$0xff]
    %v2027 = vld [vmem:[%s8 + $0xe0] sm:$0xff]
    %v2028 = vld [vmem:[%s8 + $0xe8] sm:$0xff]
    %v2029 = vld [vmem:[%s8 + $0xf0] sm:$0xff]
    %v2030 = vld [vmem:[%s8 + $0xf8] sm:$0xff]
    %v2031 = vld [vmem:[%s8 + $0x100] sm:$0xff]
    %v2032 = vld [vmem:[%s8 + $0x108] sm:$0xff]
    %v2033 = vld [vmem:[%s8 + $0x110] sm:$0xff]
    %v2034 = vld [vmem:[%s8 + $0x118] sm:$0xff]
    %v2035 = vld [vmem:[%s8 + $0x120] sm:$0xff]
    %v2036 = vld [vmem:[%s8 + $0x128] sm:$0xff]
    %v2037 = vld [vmem:[%s8 + $0x130] sm:$0xff]
    %v2038 = vld [vmem:[%s8 + $0x138] sm:$0xff]
    %v2039 = vld [vmem:[%s8 + $0x140] sm:$0xff]
    %v2040 = vld [vmem:[%s8 + $0x148] sm:$0xff]
    %v2041 = vld [vmem:[%s8 + $0x150] sm:$0xff]
    %v2042 = vld [vmem:[%s8 + $0x158] sm:$0xff]
    %v2043 = vld [vmem:[%s8 + $0x160] sm:$0xff]
    %v2044 = vld [vmem:[%s8 + $0x168] sm:$0xff]
    %v2045 = vld [vmem:[%s8 + $0x170] sm:$0xff]
    %v2046 = vld [vmem:[%s8 + $0x178] sm:$0xff]
    %v2047 = vld [vmem:[%s8 + $0x180] sm:$0xff]
    %v2048 = vld [vmem:[%s8 + $0x188] sm:$0xff]
    %v2049 = vld [vmem:[%s8 + $0x190] sm:$0xff]
    %v2050 = vld [vmem:[%s8 + $0x198] sm:$0xff]
    %v2051 = vld [vmem:[%s8 + $0x1a0] sm:$0xff]
    %v2052 = vld [vmem:[%s8 + $0x1a8] sm:$0xff]
    %v2053 = vld [vmem:[%s8 + $0x1b0] sm:$0xff]
    %v2054 = vld [vmem:[%s8 + $0x1b8] sm:$0xff]
    %v2055 = vld [vmem:[%s8 + $0x1c0] sm:$0xff]
    %v2056 = vld [vmem:[%s8 + $0x1c8] sm:$0xff]
    %v2057 = vld [vmem:[%s8 + $0x1d0] sm:$0xff]
    %v2058 = vld [vmem:[%s8 + $0x1d8] sm:$0xff]
    %v2059 = vld [vmem:[%s8 + $0x1e0] sm:$0xff]
    %v2060 = vld [vmem:[%s8 + $0x1e8] sm:$0xff]
    %v2061 = vld [vmem:[%s8 + $0x1f0] sm:$0xff]
    %v2062 = vld [vmem:[%s8 + $0x1f8] sm:$0xff]
    %v2063 = vld [vmem:[%s8 + $0x200] sm:$0xff]
    %v2064 = vld [vmem:[%s8 + $0x208] sm:$0xff]
    %v2065 = vld [vmem:[%s8 + $0x210] sm:$0xff]
    %v2066 = vld [vmem:[%s8 + $0x218] sm:$0xff]
    %v2067 = vld [vmem:[%s8 + $0x220] sm:$0xff]
    %v2068 = vld [vmem:[%s8 + $0x228] sm:$0xff]
    %v2069 = vld [vmem:[%s8 + $0x230] sm:$0xff]
    %v2070 = vld [vmem:[%s8 + $0x238] sm:$0xff]
    %v2071 = vld [vmem:[%s8 + $0x240] sm:$0xff]
    %v2072 = vld [vmem:[%s8 + $0x248] sm:$0xff]
    %v2073 = vld [vmem:[%s8 + $0x250] sm:$0xff]
    %v2074 = vld [vmem:[%s8 + $0x258] sm:$0xff]
    %v2075 = vld [vmem:[%s8 + $0x260] sm:$0xff]
    %v2076 = vld [vmem:[%s8 + $0x268] sm:$0xff]
    %v2077 = vld [vmem:[%s8 + $0x270] sm:$0xff]
    %v2078 = vld [vmem:[%s8 + $0x278] sm:$0xff]
    %v2079 = vld [vmem:[%s8 + $0x280] sm:$0xff]
    %v2080 = vld [vmem:[%s8 + $0x288] sm:$0xff]
    %v2081 = vld [vmem:[%s8 + $0x290] sm:$0xff]
    %v2082 = vld [vmem:[%s8 + $0x298] sm:$0xff]
    %v2083 = vld [vmem:[%s8 + $0x2a0] sm:$0xff]
    %v2084 = vld [vmem:[%s8 + $0x2a8] sm:$0xff]
    %v2085 = vld [vmem:[%s8 + $0x2b0] sm:$0xff]
    %v2086 = vld [vmem:[%s8 + $0x2b8] sm:$0xff]
    %v2087 = vld [vmem:[%s8 + $0x2c0] sm:$0xff]
    %v2088 = vld [vmem:[%s8 + $0x2c8] sm:$0xff]
    %v2089 = vld [vmem:[%s8 + $0x2d0] sm:$0xff]
    %v2090 = vld [vmem:[%s8 + $0x2d8] sm:$0xff]
    %v2091 = vld [vmem:[%s8 + $0x2e0] sm:$0xff]
    %v2092 = vld [vmem:[%s8 + $0x2e8] sm:$0xff]
    %v2093 = vld [vmem:[%s8 + $0x2f0] sm:$0xff]
    %v2094 = vld [vmem:[%s8 + $0x2f8] sm:$0xff]
    %v2095 = vld [vmem:[%s8 + $0x300] sm:$0xff]
    %v2096 = vld [vmem:[%s8 + $0x308] sm:$0xff]
    %v2097 = vld [vmem:[%s8 + $0x310] sm:$0xff]
    %v2098 = vld [vmem:[%s8 + $0x318] sm:$0xff]
    %v2099 = vld [vmem:[%s8 + $0x320] sm:$0xff]
    %v2100 = vld [vmem:[%s8 + $0x328] sm:$0xff]
    %v2101 = vld [vmem:[%s8 + $0x330] sm:$0xff]
    %v2102 = vld [vmem:[%s8 + $0x338] sm:$0xff]
    %v2103 = vld [vmem:[%s8 + $0x340] sm:$0xff]
    %v2104 = vld [vmem:[%s8 + $0x348] sm:$0xff]
    %v2105 = vld [vmem:[%s8 + $0x350] sm:$0xff]
    %v2106 = vld [vmem:[%s8 + $0x358] sm:$0xff]
    %v2107 = vld [vmem:[%s8 + $0x360] sm:$0xff]
    %v2108 = vld [vmem:[%s8 + $0x368] sm:$0xff]
    %v2109 = vld [vmem:[%s8 + $0x370] sm:$0xff]
    %v2110 = vld [vmem:[%s8 + $0x378] sm:$0xff]
    %v2111 = vld [vmem:[%s8 + $0x380] sm:$0xff]
    %v2112 = vld [vmem:[%s8 + $0x388] sm:$0xff]
    %v2113 = vld [vmem:[%s8 + $0x390] sm:$0xff]
    %v2114 = vld [vmem:[%s8 + $0x398] sm:$0xff]
    %v2115 = vld [vmem:[%s8 + $0x3a0] sm:$0xff]
    %v2116 = vld [vmem:[%s8 + $0x3a8] sm:$0xff]
    %v2117 = vld [vmem:[%s8 + $0x3b0] sm:$0xff]
    %v2118 = vld [vmem:[%s8 + $0x3b8] sm:$0xff]
    %v2119 = vld [vmem:[%s8 + $0x3c0] sm:$0xff]
    %v2120 = vld [vmem:[%s8 + $0x3c8] sm:$0xff]
    %v2121 = vld [vmem:[%s8 + $0x3d0] sm:$0xff]
    %v2122 = vld [vmem:[%s8 + $0x3d8] sm:$0xff]
    %v2123 = vld [vmem:[%s8 + $0x3e0] sm:$0xff]
    %v2124 = vld [vmem:[%s8 + $0x3e8] sm:$0xff]
    %v2125 = vld [vmem:[%s8 + $0x3f0] sm:$0xff]
    %v2126 = vld [vmem:[%s8 + $0x3f8] sm:$0xff]
    %v2127 = vld [vmem:[%s8 + $0x400] sm:$0xff]
    %v2128 = vld [vmem:[%s8 + $0x408] sm:$0xff]
    %v2129 = vld [vmem:[%s8 + $0x410] sm:$0xff]
    %v2130 = vld [vmem:[%s8 + $0x418] sm:$0xff]
    %v2131 = vld [vmem:[%s8 + $0x420] sm:$0xff]
    %v2132 = vld [vmem:[%s8 + $0x428] sm:$0xff]
    %v2133 = vld [vmem:[%s8 + $0x430] sm:$0xff]
    %v2134 = vld [vmem:[%s8 + $0x438] sm:$0xff]
    %v2135 = vld [vmem:[%s8 + $0x440] sm:$0xff]
    %v2136 = vld [vmem:[%s8 + $0x448] sm:$0xff]
    %v2137 = vld [vmem:[%s8 + $0x450] sm:$0xff]
    %v2138 = vld [vmem:[%s8 + $0x458] sm:$0xff]
    %v2139 = vld [vmem:[%s8 + $0x460] sm:$0xff]
    %v2140 = vld [vmem:[%s8 + $0x468] sm:$0xff]
    %v2141 = vld [vmem:[%s8 + $0x470] sm:$0xff]
    %v2142 = vld [vmem:[%s8 + $0x478] sm:$0xff]
    %v2143 = vld [vmem:[%s8 + $0x480] sm:$0xff]
    %v2144 = vld [vmem:[%s8 + $0x488] sm:$0xff]
    %v2145 = vld [vmem:[%s8 + $0x490] sm:$0xff]
    %v2146 = vld [vmem:[%s8 + $0x498] sm:$0xff]
    %v2147 = vld [vmem:[%s8 + $0x4a0] sm:$0xff]
    %v2148 = vld [vmem:[%s8 + $0x4a8] sm:$0xff]
    %v2149 = vld [vmem:[%s8 + $0x4b0] sm:$0xff]
    %v2150 = vld [vmem:[%s8 + $0x4b8] sm:$0xff]
    %v2151 = vld [vmem:[%s8 + $0x4c0] sm:$0xff]
    %v2152 = vld [vmem:[%s8 + $0x4c8] sm:$0xff]
    %v2153 = vld [vmem:[%s8 + $0x4d0] sm:$0xff]
    %v2154 = vld [vmem:[%s8 + $0x4d8] sm:$0xff]
    %v2155 = vld [vmem:[%s8 + $0x4e0] sm:$0xff]
    %v2156 = vld [vmem:[%s8 + $0x4e8] sm:$0xff]
    %v2157 = vld [vmem:[%s8 + $0x4f0] sm:$0xff]
    %v2158 = vld [vmem:[%s8 + $0x4f8] sm:$0xff]
    %v2159 = vld [vmem:[%s8 + $0x500] sm:$0xff]
    %v2160 = vld [vmem:[%s8 + $0x508] sm:$0xff]
    %v2161 = vld [vmem:[%s8 + $0x510] sm:$0xff]
    %v2162 = vld [vmem:[%s8 + $0x518] sm:$0xff]
    %v2163 = vld [vmem:[%s8 + $0x520] sm:$0xff]
    %v2164 = vld [vmem:[%s8 + $0x528] sm:$0xff]
    %v2165 = vld [vmem:[%s8 + $0x530] sm:$0xff]
    %v2166 = vld [vmem:[%s8 + $0x538] sm:$0xff]
    %v2167 = vld [vmem:[%s8 + $0x540] sm:$0xff]
    %v2168 = vld [vmem:[%s8 + $0x548] sm:$0xff]
    %v2169 = vld [vmem:[%s8 + $0x550] sm:$0xff]
    %v2170 = vld [vmem:[%s8 + $0x558] sm:$0xff]
    %v2171 = vld [vmem:[%s8 + $0x560] sm:$0xff]
    %v2172 = vld [vmem:[%s8 + $0x568] sm:$0xff]
    %v2173 = vld [vmem:[%s8 + $0x570] sm:$0xff]
    %v2174 = vld [vmem:[%s8 + $0x578] sm:$0xff]
    %v2175 = vld [vmem:[%s8 + $0x580] sm:$0xff]
    %v2176 = vld [vmem:[%s8 + $0x588] sm:$0xff]
    %v2177 = vld [vmem:[%s8 + $0x590] sm:$0xff]
    %v2178 = vld [vmem:[%s8 + $0x598] sm:$0xff]
    %v2179 = vld [vmem:[%s8 + $0x5a0] sm:$0xff]
    %v2180 = vld [vmem:[%s8 + $0x5a8] sm:$0xff]
    %v2181 = vld [vmem:[%s8 + $0x5b0] sm:$0xff]
    %v2182 = vld [vmem:[%s8 + $0x5b8] sm:$0xff]
    %v2183 = vld [vmem:[%s8 + $0x5c0] sm:$0xff]
    %v2184 = vld [vmem:[%s8 + $0x5c8] sm:$0xff]
    %v2185 = vld [vmem:[%s8 + $0x5d0] sm:$0xff]
    %v2186 = vld [vmem:[%s8 + $0x5d8] sm:$0xff]
    %v2187 = vld [vmem:[%s8 + $0x5e0] sm:$0xff]
    %v2188 = vld [vmem:[%s8 + $0x5e8] sm:$0xff]
    %v2189 = vld [vmem:[%s8 + $0x5f0] sm:$0xff]
    %v2190 = vld [vmem:[%s8 + $0x5f8] sm:$0xff]
    %v2191 = vld [vmem:[%s9] sm:$0x1]
    %v2193 = vlaneseq
    %v2194 = vshrl.u32 %v2193, 7
    %v2195 = vsub.s32 0, %v2194
    %v2196 = vrot.slane %v2191, %v2195
    %v2201 = vcombine.high %v1996, %v1996
    %v2203 = vunpack.c.l.s4 1983009808
    %v2204 = vunpack.c.0.s8 %v2203
    %v2205 = vlaneseq
    %v2206 = vshrl.u32 %v2205, 7
    %v2207 = vsub.s32 %v2204, %v2206
    %v2208 = vrot.slane %v1996, %v2207
    %v2210 = vunpack.c.l.s4 1983009808
    %v2211 = vunpack.c.0.s8 %v2210
    %v2212 = vlaneseq
    %v2213 = vshrl.u32 %v2212, 7
    %v2214 = vsub.s32 %v2211, %v2213
    %v2215 = vrot.slane %v2201, %v2214
    %v2216 = vcombine.high %v2208, %v2208
    %v2217 = vcombine.high %v2215, %v2215
    %v2218 = vcombine.high %v1997, %v1997
    %v2220 = vunpack.c.l.s4 1983009808
    %v2221 = vunpack.c.0.s8 %v2220
    %v2222 = vlaneseq
    %v2223 = vshrl.u32 %v2222, 7
    %v2224 = vsub.s32 %v2221, %v2223
    %v2225 = vrot.slane %v1997, %v2224
    %v2227 = vunpack.c.l.s4 1983009808
    %v2228 = vunpack.c.0.s8 %v2227
    %v2229 = vlaneseq
    %v2230 = vshrl.u32 %v2229, 7
    %v2231 = vsub.s32 %v2228, %v2230
    %v2232 = vrot.slane %v2218, %v2231
    %v2233 = vcombine.high %v2225, %v2225
    %v2234 = vcombine.high %v2232, %v2232
    %v2235 = vcombine.high %v1998, %v1998
    %v2237 = vunpack.c.l.s4 1983009808
    %v2238 = vunpack.c.0.s8 %v2237
    %v2239 = vlaneseq
    %v2240 = vshrl.u32 %v2239, 7
    %v2241 = vsub.s32 %v2238, %v2240
    %v2242 = vrot.slane %v1998, %v2241
    %v2244 = vunpack.c.l.s4 1983009808
    %v2245 = vunpack.c.0.s8 %v2244
    %v2246 = vlaneseq
    %v2247 = vshrl.u32 %v2246, 7
    %v2248 = vsub.s32 %v2245, %v2247
    %v2249 = vrot.slane %v2235, %v2248
    %v2250 = vcombine.high %v2242, %v2242
    %v2251 = vcombine.high %v2249, %v2249
    %2264 = vmatprep.subr.mxu0 0.0
    %2265 = vmatpush1.msra.mxu0 %v2014
    %2266 = vmatprep.subr.mxu0 0.0
    %2267 = vmatpush1.msra.mxu0 %v2013
    %2268 = vmatprep.subr.mxu0 0.0
    %2269 = vmatpush1.msra.mxu0 %v2012
    %2270 = vmatprep.subr.mxu0 0.0
    %2271 = vmatpush1.msra.mxu0 %v2011
    %2272 = vmatprep.subr.mxu0 0.0
    %2273 = vmatpush1.msra.mxu0 %v2010
    %2274 = vmatprep.subr.mxu0 0.0
    %2275 = vmatpush1.msra.mxu0 %v2009
    %2276 = vmatprep.subr.mxu0 0.0
    %2277 = vmatpush1.msra.mxu0 %v2008
    %2278 = vmatprep.subr.mxu0 0.0
    %2279 = vmatpush1.msra.mxu0 %v2007
    %2280 = vmatprep.subr.mxu0 0.0
    %2281 = vmatpush1.msra.mxu0 %v2006
    %2282 = vmatprep.subr.mxu0 0.0
    %2283 = vmatpush1.msra.mxu0 %v2005
    %2284 = vmatprep.subr.mxu0 0.0
    %2285 = vmatpush1.msra.mxu0 %v2004
    %2286 = vmatprep.subr.mxu0 0.0
    %2287 = vmatpush1.msra.mxu0 %v2003
    %2288 = vmatprep.subr.mxu0 0.0
    %2289 = vmatpush1.msra.mxu0 %v2002
    %2290 = vmatprep.subr.mxu0 0.0
    %2291 = vmatpush1.msra.mxu0 %v2001
    %2292 = vmatprep.subr.mxu0 0.0
    %2293 = vmatpush1.msra.mxu0 %v2000
    %2294 = vmatprep.subr.mxu0 0.0
    %2295 = vmatpush1.msra.mxu0 %v1999
    %2296 = vmatprep.subr.mxu0 0.0
    %2297 = vmatpush2.msra.mxu0 %v2030
    %2298 = vmatprep.subr.mxu0 0.0
    %2299 = vmatpush2.msra.mxu0 %v2029
    %2300 = vmatprep.subr.mxu0 0.0
    %2301 = vmatpush2.msra.mxu0 %v2028
    %2302 = vmatprep.subr.mxu0 0.0
    %2303 = vmatpush2.msra.mxu0 %v2027
    %2304 = vmatprep.subr.mxu0 0.0
    %2305 = vmatpush2.msra.mxu0 %v2026
    %2306 = vmatprep.subr.mxu0 0.0
    %2307 = vmatpush2.msra.mxu0 %v2025
    %2308 = vmatprep.subr.mxu0 0.0
    %2309 = vmatpush2.msra.mxu0 %v2024
    %2310 = vmatprep.subr.mxu0 0.0
    %2311 = vmatpush2.msra.mxu0 %v2023
    %2312 = vmatprep.subr.mxu0 0.0
    %2313 = vmatpush2.msra.mxu0 %v2022
    %2314 = vmatprep.subr.mxu0 0.0
    %2315 = vmatpush2.msra.mxu0 %v2021
    %2316 = vmatprep.subr.mxu0 0.0
    %2317 = vmatpush2.msra.mxu0 %v2020
    %2318 = vmatprep.subr.mxu0 0.0
    %2319 = vmatpush2.msra.mxu0 %v2019
    %2320 = vmatprep.subr.mxu0 0.0
    %2321 = vmatpush2.msra.mxu0 %v2018
    %2322 = vmatprep.subr.mxu0 0.0
    %2323 = vmatpush2.msra.mxu0 %v2017
    %2324 = vmatprep.subr.mxu0 0.0
    %2325 = vmatpush2.msra.mxu0 %v2016
    %2326 = vmatprep.subr.mxu0 0.0
    %2327 = vmatpush2.msra.mxu0 %v2015
    %2328 = vmatprep.mubr.f32.mxu0 %v2216
    %2329 = vmatmul.mubr.f32.gmra.mxu0 %v2208
    %v2330 = vpop.f32.mrf.mxu0
    %v2331 = vadd.f32 %v2196, %v2330
    %v2332 = vpop.f32.mrf.mxu0
    %2333 = vdwg.mxu0
    %2334 = vmatprep.subr.mxu0 0.0
    %2335 = vmatpush1.msra.mxu0 %v2046
    %2336 = vmatprep.subr.mxu0 0.0
    %2337 = vmatpush1.msra.mxu0 %v2045
    %2338 = vmatprep.subr.mxu0 0.0
    %2339 = vmatpush1.msra.mxu0 %v2044
    %2340 = vmatprep.subr.mxu0 0.0
    %2341 = vmatpush1.msra.mxu0 %v2043
    %2342 = vmatprep.subr.mxu0 0.0
    %2343 = vmatpush1.msra.mxu0 %v2042
    %2344 = vmatprep.subr.mxu0 0.0
    %2345 = vmatpush1.msra.mxu0 %v2041
    %2346 = vmatprep.subr.mxu0 0.0
    %2347 = vmatpush1.msra.mxu0 %v2040
    %2348 = vmatprep.subr.mxu0 0.0
    %2349 = vmatpush1.msra.mxu0 %v2039
    %2350 = vmatprep.subr.mxu0 0.0
    %2351 = vmatpush1.msra.mxu0 %v2038
    %2352 = vmatprep.subr.mxu0 0.0
    %2353 = vmatpush1.msra.mxu0 %v2037
    %2354 = vmatprep.subr.mxu0 0.0
    %2355 = vmatpush1.msra.mxu0 %v2036
    %2356 = vmatprep.subr.mxu0 0.0
    %2357 = vmatpush1.msra.mxu0 %v2035
    %2358 = vmatprep.subr.mxu0 0.0
    %2359 = vmatpush1.msra.mxu0 %v2034
    %2360 = vmatprep.subr.mxu0 0.0
    %2361 = vmatpush1.msra.mxu0 %v2033
    %2362 = vmatprep.subr.mxu0 0.0
    %2363 = vmatpush1.msra.mxu0 %v2032
    %2364 = vmatprep.subr.mxu0 0.0
    %2365 = vmatpush1.msra.mxu0 %v2031
    %2366 = vmatprep.subr.mxu0 0.0
    %2367 = vmatpush2.msra.mxu0 %v2062
    %2368 = vmatprep.subr.mxu0 0.0
    %2369 = vmatpush2.msra.mxu0 %v2061
    %2370 = vmatprep.subr.mxu0 0.0
    %2371 = vmatpush2.msra.mxu0 %v2060
    %2372 = vmatprep.subr.mxu0 0.0
    %2373 = vmatpush2.msra.mxu0 %v2059
    %2374 = vmatprep.subr.mxu0 0.0
    %2375 = vmatpush2.msra.mxu0 %v2058
    %2376 = vmatprep.subr.mxu0 0.0
    %2377 = vmatpush2.msra.mxu0 %v2057
    %2378 = vmatprep.subr.mxu0 0.0
    %2379 = vmatpush2.msra.mxu0 %v2056
    %2380 = vmatprep.subr.mxu0 0.0
    %2381 = vmatpush2.msra.mxu0 %v2055
    %2382 = vmatprep.subr.mxu0 0.0
    %2383 = vmatpush2.msra.mxu0 %v2054
    %2384 = vmatprep.subr.mxu0 0.0
    %2385 = vmatpush2.msra.mxu0 %v2053
    %2386 = vmatprep.subr.mxu0 0.0
    %2387 = vmatpush2.msra.mxu0 %v2052
    %2388 = vmatprep.subr.mxu0 0.0
    %2389 = vmatpush2.msra.mxu0 %v2051
    %2390 = vmatprep.subr.mxu0 0.0
    %2391 = vmatpush2.msra.mxu0 %v2050
    %2392 = vmatprep.subr.mxu0 0.0
    %2393 = vmatpush2.msra.mxu0 %v2049
    %2394 = vmatprep.subr.mxu0 0.0
    %2395 = vmatpush2.msra.mxu0 %v2048
    %2396 = vmatprep.subr.mxu0 0.0
    %2397 = vmatpush2.msra.mxu0 %v2047
    %2398 = vmatprep.mubr.f32.mxu0 %v2217
    %2399 = vmatmul.mubr.f32.gmra.mxu0 %v2215
    %v2400 = vpop.f32.mrf.mxu0
    %v2401 = vadd.f32 %v2331, %v2400
    %v2402 = vpop.f32.mrf.mxu0
    %2403 = vdwg.mxu0
    %2404 = vmatprep.subr.mxu0 0.0
    %2405 = vmatpush1.msra.mxu0 %v2078
    %2406 = vmatprep.subr.mxu0 0.0
    %2407 = vmatpush1.msra.mxu0 %v2077
    %2408 = vmatprep.subr.mxu0 0.0
    %2409 = vmatpush1.msra.mxu0 %v2076
    %2410 = vmatprep.subr.mxu0 0.0
    %2411 = vmatpush1.msra.mxu0 %v2075
    %2412 = vmatprep.subr.mxu0 0.0
    %2413 = vmatpush1.msra.mxu0 %v2074
    %2414 = vmatprep.subr.mxu0 0.0
    %2415 = vmatpush1.msra.mxu0 %v2073
    %2416 = vmatprep.subr.mxu0 0.0
    %2417 = vmatpush1.msra.mxu0 %v2072
    %2418 = vmatprep.subr.mxu0 0.0
    %2419 = vmatpush1.msra.mxu0 %v2071
    %2420 = vmatprep.subr.mxu0 0.0
    %2421 = vmatpush1.msra.mxu0 %v2070
    %2422 = vmatprep.subr.mxu0 0.0
    %2423 = vmatpush1.msra.mxu0 %v2069
    %2424 = vmatprep.subr.mxu0 0.0
    %2425 = vmatpush1.msra.mxu0 %v2068
    %2426 = vmatprep.subr.mxu0 0.0
    %2427 = vmatpush1.msra.mxu0 %v2067
    %2428 = vmatprep.subr.mxu0 0.0
    %2429 = vmatpush1.msra.mxu0 %v2066
    %2430 = vmatprep.subr.mxu0 0.0
    %2431 = vmatpush1.msra.mxu0 %v2065
    %2432 = vmatprep.subr.mxu0 0.0
    %2433 = vmatpush1.msra.mxu0 %v2064
    %2434 = vmatprep.subr.mxu0 0.0
    %2435 = vmatpush1.msra.mxu0 %v2063
    %2436 = vmatprep.subr.mxu0 0.0
    %2437 = vmatpush2.msra.mxu0 %v2094
    %2438 = vmatprep.subr.mxu0 0.0
    %2439 = vmatpush2.msra.mxu0 %v2093
    %2440 = vmatprep.subr.mxu0 0.0
    %2441 = vmatpush2.msra.mxu0 %v2092
    %2442 = vmatprep.subr.mxu0 0.0
    %2443 = vmatpush2.msra.mxu0 %v2091
    %2444 = vmatprep.subr.mxu0 0.0
    %2445 = vmatpush2.msra.mxu0 %v2090
    %2446 = vmatprep.subr.mxu0 0.0
    %2447 = vmatpush2.msra.mxu0 %v2089
    %2448 = vmatprep.subr.mxu0 0.0
    %2449 = vmatpush2.msra.mxu0 %v2088
    %2450 = vmatprep.subr.mxu0 0.0
    %2451 = vmatpush2.msra.mxu0 %v2087
    %2452 = vmatprep.subr.mxu0 0.0
    %2453 = vmatpush2.msra.mxu0 %v2086
    %2454 = vmatprep.subr.mxu0 0.0
    %2455 = vmatpush2.msra.mxu0 %v2085
    %2456 = vmatprep.subr.mxu0 0.0
    %2457 = vmatpush2.msra.mxu0 %v2084
    %2458 = vmatprep.subr.mxu0 0.0
    %2459 = vmatpush2.msra.mxu0 %v2083
    %2460 = vmatprep.subr.mxu0 0.0
    %2461 = vmatpush2.msra.mxu0 %v2082
    %2462 = vmatprep.subr.mxu0 0.0
    %2463 = vmatpush2.msra.mxu0 %v2081
    %2464 = vmatprep.subr.mxu0 0.0
    %2465 = vmatpush2.msra.mxu0 %v2080
    %2466 = vmatprep.subr.mxu0 0.0
    %2467 = vmatpush2.msra.mxu0 %v2079
    %2468 = vmatprep.mubr.f32.mxu0 %v2233
    %2469 = vmatmul.mubr.f32.gmra.mxu0 %v2225
    %v2470 = vpop.f32.mrf.mxu0
    %v2471 = vadd.f32 %v2401, %v2470
    %v2472 = vpop.f32.mrf.mxu0
    %2473 = vdwg.mxu0
    %2474 = vmatprep.subr.mxu0 0.0
    %2475 = vmatpush1.msra.mxu0 %v2110
    %2476 = vmatprep.subr.mxu0 0.0
    %2477 = vmatpush1.msra.mxu0 %v2109
    %2478 = vmatprep.subr.mxu0 0.0
    %2479 = vmatpush1.msra.mxu0 %v2108
    %2480 = vmatprep.subr.mxu0 0.0
    %2481 = vmatpush1.msra.mxu0 %v2107
    %2482 = vmatprep.subr.mxu0 0.0
    %2483 = vmatpush1.msra.mxu0 %v2106
    %2484 = vmatprep.subr.mxu0 0.0
    %2485 = vmatpush1.msra.mxu0 %v2105
    %2486 = vmatprep.subr.mxu0 0.0
    %2487 = vmatpush1.msra.mxu0 %v2104
    %2488 = vmatprep.subr.mxu0 0.0
    %2489 = vmatpush1.msra.mxu0 %v2103
    %2490 = vmatprep.subr.mxu0 0.0
    %2491 = vmatpush1.msra.mxu0 %v2102
    %2492 = vmatprep.subr.mxu0 0.0
    %2493 = vmatpush1.msra.mxu0 %v2101
    %2494 = vmatprep.subr.mxu0 0.0
    %2495 = vmatpush1.msra.mxu0 %v2100
    %2496 = vmatprep.subr.mxu0 0.0
    %2497 = vmatpush1.msra.mxu0 %v2099
    %2498 = vmatprep.subr.mxu0 0.0
    %2499 = vmatpush1.msra.mxu0 %v2098
    %2500 = vmatprep.subr.mxu0 0.0
    %2501 = vmatpush1.msra.mxu0 %v2097
    %2502 = vmatprep.subr.mxu0 0.0
    %2503 = vmatpush1.msra.mxu0 %v2096
    %2504 = vmatprep.subr.mxu0 0.0
    %2505 = vmatpush1.msra.mxu0 %v2095
    %2506 = vmatprep.subr.mxu0 0.0
    %2507 = vmatpush2.msra.mxu0 %v2126
    %2508 = vmatprep.subr.mxu0 0.0
    %2509 = vmatpush2.msra.mxu0 %v2125
    %2510 = vmatprep.subr.mxu0 0.0
    %2511 = vmatpush2.msra.mxu0 %v2124
    %2512 = vmatprep.subr.mxu0 0.0
    %2513 = vmatpush2.msra.mxu0 %v2123
    %2514 = vmatprep.subr.mxu0 0.0
    %2515 = vmatpush2.msra.mxu0 %v2122
    %2516 = vmatprep.subr.mxu0 0.0
    %2517 = vmatpush2.msra.mxu0 %v2121
    %2518 = vmatprep.subr.mxu0 0.0
    %2519 = vmatpush2.msra.mxu0 %v2120
    %2520 = vmatprep.subr.mxu0 0.0
    %2521 = vmatpush2.msra.mxu0 %v2119
    %2522 = vmatprep.subr.mxu0 0.0
    %2523 = vmatpush2.msra.mxu0 %v2118
    %2524 = vmatprep.subr.mxu0 0.0
    %2525 = vmatpush2.msra.mxu0 %v2117
    %2526 = vmatprep.subr.mxu0 0.0
    %2527 = vmatpush2.msra.mxu0 %v2116
    %2528 = vmatprep.subr.mxu0 0.0
    %2529 = vmatpush2.msra.mxu0 %v2115
    %2530 = vmatprep.subr.mxu0 0.0
    %2531 = vmatpush2.msra.mxu0 %v2114
    %2532 = vmatprep.subr.mxu0 0.0
    %2533 = vmatpush2.msra.mxu0 %v2113
    %2534 = vmatprep.subr.mxu0 0.0
    %2535 = vmatpush2.msra.mxu0 %v2112
    %2536 = vmatprep.subr.mxu0 0.0
    %2537 = vmatpush2.msra.mxu0 %v2111
    %2538 = vmatprep.mubr.f32.mxu0 %v2234
    %2539 = vmatmul.mubr.f32.gmra.mxu0 %v2232
    %v2540 = vpop.f32.mrf.mxu0
    %v2541 = vadd.f32 %v2471, %v2540
    %v2542 = vpop.f32.mrf.mxu0
    %2543 = vdwg.mxu0
    %2544 = vmatprep.subr.mxu0 0.0
    %2545 = vmatpush1.msra.mxu0 %v2142
    %2546 = vmatprep.subr.mxu0 0.0
    %2547 = vmatpush1.msra.mxu0 %v2141
    %2548 = vmatprep.subr.mxu0 0.0
    %2549 = vmatpush1.msra.mxu0 %v2140
    %2550 = vmatprep.subr.mxu0 0.0
    %2551 = vmatpush1.msra.mxu0 %v2139
    %2552 = vmatprep.subr.mxu0 0.0
    %2553 = vmatpush1.msra.mxu0 %v2138
    %2554 = vmatprep.subr.mxu0 0.0
    %2555 = vmatpush1.msra.mxu0 %v2137
    %2556 = vmatprep.subr.mxu0 0.0
    %2557 = vmatpush1.msra.mxu0 %v2136
    %2558 = vmatprep.subr.mxu0 0.0
    %2559 = vmatpush1.msra.mxu0 %v2135
    %2560 = vmatprep.subr.mxu0 0.0
    %2561 = vmatpush1.msra.mxu0 %v2134
    %2562 = vmatprep.subr.mxu0 0.0
    %2563 = vmatpush1.msra.mxu0 %v2133
    %2564 = vmatprep.subr.mxu0 0.0
    %2565 = vmatpush1.msra.mxu0 %v2132
    %2566 = vmatprep.subr.mxu0 0.0
    %2567 = vmatpush1.msra.mxu0 %v2131
    %2568 = vmatprep.subr.mxu0 0.0
    %2569 = vmatpush1.msra.mxu0 %v2130
    %2570 = vmatprep.subr.mxu0 0.0
    %2571 = vmatpush1.msra.mxu0 %v2129
    %2572 = vmatprep.subr.mxu0 0.0
    %2573 = vmatpush1.msra.mxu0 %v2128
    %2574 = vmatprep.subr.mxu0 0.0
    %2575 = vmatpush1.msra.mxu0 %v2127
    %2576 = vmatprep.subr.mxu0 0.0
    %2577 = vmatpush2.msra.mxu0 %v2158
    %2578 = vmatprep.subr.mxu0 0.0
    %2579 = vmatpush2.msra.mxu0 %v2157
    %2580 = vmatprep.subr.mxu0 0.0
    %2581 = vmatpush2.msra.mxu0 %v2156
    %2582 = vmatprep.subr.mxu0 0.0
    %2583 = vmatpush2.msra.mxu0 %v2155
    %2584 = vmatprep.subr.mxu0 0.0
    %2585 = vmatpush2.msra.mxu0 %v2154
    %2586 = vmatprep.subr.mxu0 0.0
    %2587 = vmatpush2.msra.mxu0 %v2153
    %2588 = vmatprep.subr.mxu0 0.0
    %2589 = vmatpush2.msra.mxu0 %v2152
    %2590 = vmatprep.subr.mxu0 0.0
    %2591 = vmatpush2.msra.mxu0 %v2151
    %2592 = vmatprep.subr.mxu0 0.0
    %2593 = vmatpush2.msra.mxu0 %v2150
    %2594 = vmatprep.subr.mxu0 0.0
    %2595 = vmatpush2.msra.mxu0 %v2149
    %2596 = vmatprep.subr.mxu0 0.0
    %2597 = vmatpush2.msra.mxu0 %v2148
    %2598 = vmatprep.subr.mxu0 0.0
    %2599 = vmatpush2.msra.mxu0 %v2147
    %2600 = vmatprep.subr.mxu0 0.0
    %2601 = vmatpush2.msra.mxu0 %v2146
    %2602 = vmatprep.subr.mxu0 0.0
    %2603 = vmatpush2.msra.mxu0 %v2145
    %2604 = vmatprep.subr.mxu0 0.0
    %2605 = vmatpush2.msra.mxu0 %v2144
    %2606 = vmatprep.subr.mxu0 0.0
    %2607 = vmatpush2.msra.mxu0 %v2143
    %2608 = vmatprep.mubr.f32.mxu0 %v2250
    %2609 = vmatmul.mubr.f32.gmra.mxu0 %v2242
    %v2610 = vpop.f32.mrf.mxu0
    %v2611 = vadd.f32 %v2541, %v2610
    %v2612 = vpop.f32.mrf.mxu0
    %2613 = vdwg.mxu0
    %2614 = vmatprep.subr.mxu0 0.0
    %2615 = vmatpush1.msra.mxu0 %v2174
    %2616 = vmatprep.subr.mxu0 0.0
    %2617 = vmatpush1.msra.mxu0 %v2173
    %2618 = vmatprep.subr.mxu0 0.0
    %2619 = vmatpush1.msra.mxu0 %v2172
    %2620 = vmatprep.subr.mxu0 0.0
    %2621 = vmatpush1.msra.mxu0 %v2171
    %2622 = vmatprep.subr.mxu0 0.0
    %2623 = vmatpush1.msra.mxu0 %v2170
    %2624 = vmatprep.subr.mxu0 0.0
    %2625 = vmatpush1.msra.mxu0 %v2169
    %2626 = vmatprep.subr.mxu0 0.0
    %2627 = vmatpush1.msra.mxu0 %v2168
    %2628 = vmatprep.subr.mxu0 0.0
    %2629 = vmatpush1.msra.mxu0 %v2167
    %2630 = vmatprep.subr.mxu0 0.0
    %2631 = vmatpush1.msra.mxu0 %v2166
    %2632 = vmatprep.subr.mxu0 0.0
    %2633 = vmatpush1.msra.mxu0 %v2165
    %2634 = vmatprep.subr.mxu0 0.0
    %2635 = vmatpush1.msra.mxu0 %v2164
    %2636 = vmatprep.subr.mxu0 0.0
    %2637 = vmatpush1.msra.mxu0 %v2163
    %2638 = vmatprep.subr.mxu0 0.0
    %2639 = vmatpush1.msra.mxu0 %v2162
    %2640 = vmatprep.subr.mxu0 0.0
    %2641 = vmatpush1.msra.mxu0 %v2161
    %2642 = vmatprep.subr.mxu0 0.0
    %2643 = vmatpush1.msra.mxu0 %v2160
    %2644 = vmatprep.subr.mxu0 0.0
    %2645 = vmatpush1.msra.mxu0 %v2159
    %2646 = vmatprep.subr.mxu0 0.0
    %2647 = vmatpush2.msra.mxu0 %v2190
    %2648 = vmatprep.subr.mxu0 0.0
    %2649 = vmatpush2.msra.mxu0 %v2189
    %2650 = vmatprep.subr.mxu0 0.0
    %2651 = vmatpush2.msra.mxu0 %v2188
    %2652 = vmatprep.subr.mxu0 0.0
    %2653 = vmatpush2.msra.mxu0 %v2187
    %2654 = vmatprep.subr.mxu0 0.0
    %2655 = vmatpush2.msra.mxu0 %v2186
    %2656 = vmatprep.subr.mxu0 0.0
    %2657 = vmatpush2.msra.mxu0 %v2185
    %2658 = vmatprep.subr.mxu0 0.0
    %2659 = vmatpush2.msra.mxu0 %v2184
    %2660 = vmatprep.subr.mxu0 0.0
    %2661 = vmatpush2.msra.mxu0 %v2183
    %2662 = vmatprep.subr.mxu0 0.0
    %2663 = vmatpush2.msra.mxu0 %v2182
    %2664 = vmatprep.subr.mxu0 0.0
    %2665 = vmatpush2.msra.mxu0 %v2181
    %2666 = vmatprep.subr.mxu0 0.0
    %2667 = vmatpush2.msra.mxu0 %v2180
    %2668 = vmatprep.subr.mxu0 0.0
    %2669 = vmatpush2.msra.mxu0 %v2179
    %2670 = vmatprep.subr.mxu0 0.0
    %2671 = vmatpush2.msra.mxu0 %v2178
    %2672 = vmatprep.subr.mxu0 0.0
    %2673 = vmatpush2.msra.mxu0 %v2177
    %2674 = vmatprep.subr.mxu0 0.0
    %2675 = vmatpush2.msra.mxu0 %v2176
    %2676 = vmatprep.subr.mxu0 0.0
    %2677 = vmatpush2.msra.mxu0 %v2175
    %2678 = vmatprep.mubr.f32.mxu0 %v2251
    %2679 = vmatmul.mubr.f32.gmra.mxu0 %v2249
    %v2680 = vpop.f32.mrf.mxu0
    %v2681 = vadd.f32 %v2611, %v2680
    %v2682 = vpop.f32.mrf.mxu0
    %2683 = vdwg.mxu0
    %vm2684 = vcmp.gt.f32.partialorder %v2681, 0.0
    %v2685 = vmin.f32 %v2681, 0.0
    %v2686 = vmul.f32 %v2685, 1.442695
    %v2687 = vpow.pop %v2686
    %v2688 = vsub.f32 %v2687, 1.0
    %v2689 = vmul.f32 %v2688, 1.6732632
    %v2690 = vsel %vm2684, %v2681, %v2689
    %v2691 = vmul.f32 %v2690, 1.050701
    %v2692 = vld [vmem:[%s10] sm:$0xff]
    %v2693 = vld [vmem:[%s10 + $0x8] sm:$0xff]
    %v2694 = vld [vmem:[%s10 + $0x10] sm:$0xff]
    %v2695 = vld [vmem:[%s10 + $0x18] sm:$0xff]
    %v2696 = vld [vmem:[%s10 + $0x20] sm:$0xff]
    %v2697 = vld [vmem:[%s10 + $0x28] sm:$0xff]
    %v2698 = vld [vmem:[%s10 + $0x30] sm:$0xff]
    %v2699 = vld [vmem:[%s10 + $0x38] sm:$0xff]
    %v2700 = vld [vmem:[%s10 + $0x40] sm:$0xff]
    %v2701 = vld [vmem:[%s10 + $0x48] sm:$0xff]
    %v2702 = vld [vmem:[%s10 + $0x50] sm:$0xff]
    %v2703 = vld [vmem:[%s10 + $0x58] sm:$0xff]
    %v2704 = vld [vmem:[%s10 + $0x60] sm:$0xff]
    %v2705 = vld [vmem:[%s10 + $0x68] sm:$0xff]
    %v2706 = vld [vmem:[%s10 + $0x70] sm:$0xff]
    %v2707 = vld [vmem:[%s10 + $0x78] sm:$0xff]
    %v2708 = vld [vmem:[%s11] sm:$0x1]
    %v2710 = vlaneseq
    %v2711 = vshrl.u32 %v2710, 7
    %v2712 = vsub.s32 0, %v2711
    %v2713 = vrot.slane %v2708, %v2712
    %2715 = vmatprep.subr.mxu0 0.0
    %2716 = vmatpush1.msra.mxu0 %v2707
    %2717 = vmatprep.subr.mxu0 0.0
    %2718 = vmatpush1.msra.mxu0 %v2706
    %2719 = vmatprep.subr.mxu0 0.0
    %2720 = vmatpush1.msra.mxu0 %v2705
    %2721 = vmatprep.subr.mxu0 0.0
    %2722 = vmatpush1.msra.mxu0 %v2704
    %2723 = vmatprep.subr.mxu0 0.0
    %2724 = vmatpush1.msra.mxu0 %v2703
    %2725 = vmatprep.subr.mxu0 0.0
    %2726 = vmatpush1.msra.mxu0 %v2702
    %2727 = vmatprep.subr.mxu0 0.0
    %2728 = vmatpush1.msra.mxu0 %v2701
    %2729 = vmatprep.subr.mxu0 0.0
    %2730 = vmatpush1.msra.mxu0 %v2700
    %2731 = vmatprep.subr.mxu0 0.0
    %2732 = vmatpush1.msra.mxu0 %v2699
    %2733 = vmatprep.subr.mxu0 0.0
    %2734 = vmatpush1.msra.mxu0 %v2698
    %2735 = vmatprep.subr.mxu0 0.0
    %2736 = vmatpush1.msra.mxu0 %v2697
    %2737 = vmatprep.subr.mxu0 0.0
    %2738 = vmatpush1.msra.mxu0 %v2696
    %2739 = vmatprep.subr.mxu0 0.0
    %2740 = vmatpush1.msra.mxu0 %v2695
    %2741 = vmatprep.subr.mxu0 0.0
    %2742 = vmatpush1.msra.mxu0 %v2694
    %2743 = vmatprep.subr.mxu0 0.0
    %2744 = vmatpush1.msra.mxu0 %v2693
    %2745 = vmatprep.subr.mxu0 0.0
    %2746 = vmatpush1.msra.mxu0 %v2692
    %2747 = vmatprep.subr.mxu0 0.0
    %2748 = vmatpush2.msra.mxu0 0.0
    %2749 = vmatprep.subr.mxu0 0.0
    %2750 = vmatpush2.msra.mxu0 0.0
    %2751 = vmatprep.subr.mxu0 0.0
    %2752 = vmatpush2.msra.mxu0 0.0
    %2753 = vmatprep.subr.mxu0 0.0
    %2754 = vmatpush2.msra.mxu0 0.0
    %2755 = vmatprep.subr.mxu0 0.0
    %2756 = vmatpush2.msra.mxu0 0.0
    %2757 = vmatprep.subr.mxu0 0.0
    %2758 = vmatpush2.msra.mxu0 0.0
    %2759 = vmatprep.subr.mxu0 0.0
    %2760 = vmatpush2.msra.mxu0 0.0
    %2761 = vmatprep.subr.mxu0 0.0
    %2762 = vmatpush2.msra.mxu0 0.0
    %2763 = vmatprep.subr.mxu0 0.0
    %2764 = vmatpush2.msra.mxu0 0.0
    %2765 = vmatprep.subr.mxu0 0.0
    %2766 = vmatpush2.msra.mxu0 0.0
    %2767 = vmatprep.subr.mxu0 0.0
    %2768 = vmatpush2.msra.mxu0 0.0
    %2769 = vmatprep.subr.mxu0 0.0
    %2770 = vmatpush2.msra.mxu0 0.0
    %2771 = vmatprep.subr.mxu0 0.0
    %2772 = vmatpush2.msra.mxu0 0.0
    %2773 = vmatprep.subr.mxu0 0.0
    %2774 = vmatpush2.msra.mxu0 0.0
    %2775 = vmatprep.subr.mxu0 0.0
    %2776 = vmatpush2.msra.mxu0 0.0
    %2777 = vmatprep.subr.mxu0 0.0
    %2778 = vmatpush2.msra.mxu0 0.0
    %2779 = vmatprep.mubr.f32.mxu0 0.0
    %2780 = vmatmul.mubr.f32.gmra.mxu0 %v2691
    %v2781 = vpop.f32.mrf.mxu0
    %v2782 = vadd.f32 %v2713, %v2781
    %v2783 = vpop.f32.mrf.mxu0
    %2784 = vdwg.mxu0
    %2785 = vst [vmem:[%s22] sm:$0x3] %v2782
    %v2786 = vld [vmem:[%s22] sm:$0x3]
    %v2787 = vld [vmem:[%s1] sm:$0x3]
    %v2788 = vmul.f32 %v2786, 0.5
    %v2789 = vmul.f32 %v2788, 1.442695
    %v2790 = vpow.pop %v2789
    %2792 = vrot.lane.b32.xlu0 %v2790, 64
    %v2793 = vpop.permute.xlu0 %2792
    %v2795 = vmul.f32 %v2787, %v2793
    %v2796 = vadd.f32 %v2786, %v2795
    %v2797 = vld [vmem:[%s12] sm:$0xff]
    %v2798 = vld [vmem:[%s12 + $0x8] sm:$0xff]
    %v2799 = vld [vmem:[%s12 + $0x10] sm:$0xff]
    %v2800 = vld [vmem:[%s12 + $0x18] sm:$0xff]
    %v2801 = vld [vmem:[%s12 + $0x20] sm:$0xff]
    %v2802 = vld [vmem:[%s12 + $0x28] sm:$0xff]
    %v2803 = vld [vmem:[%s12 + $0x30] sm:$0xff]
    %v2804 = vld [vmem:[%s12 + $0x38] sm:$0xff]
    %v2805 = vld [vmem:[%s13] sm:$0x1]
    %v2807 = vlaneseq
    %v2808 = vshrl.u32 %v2807, 7
    %v2809 = vsub.s32 0, %v2808
    %v2810 = vrot.slane %v2805, %v2809
    %v2813 = vsel %vm87, %v2796, 0
    %2815 = vmatprep.subr.mxu0 0.0
    %2816 = vmatpush1.msra.mxu0 0.0
    %2817 = vmatprep.subr.mxu0 0.0
    %2818 = vmatpush1.msra.mxu0 0.0
    %2819 = vmatprep.subr.mxu0 0.0
    %2820 = vmatpush1.msra.mxu0 0.0
    %2821 = vmatprep.subr.mxu0 0.0
    %2822 = vmatpush1.msra.mxu0 0.0
    %2823 = vmatprep.subr.mxu0 0.0
    %2824 = vmatpush1.msra.mxu0 0.0
    %2825 = vmatprep.subr.mxu0 0.0
    %2826 = vmatpush1.msra.mxu0 0.0
    %2827 = vmatprep.subr.mxu0 0.0
    %2828 = vmatpush1.msra.mxu0 0.0
    %2829 = vmatprep.subr.mxu0 0.0
    %2830 = vmatpush1.msra.mxu0 0.0
    %2831 = vmatprep.subr.mxu0 0.0
    %2832 = vmatpush1.msra.mxu0 %v2804
    %2833 = vmatprep.subr.mxu0 0.0
    %2834 = vmatpush1.msra.mxu0 %v2803
    %2835 = vmatprep.subr.mxu0 0.0
    %2836 = vmatpush1.msra.mxu0 %v2802
    %2837 = vmatprep.subr.mxu0 0.0
    %2838 = vmatpush1.msra.mxu0 %v2801
    %2839 = vmatprep.subr.mxu0 0.0
    %2840 = vmatpush1.msra.mxu0 %v2800
    %2841 = vmatprep.subr.mxu0 0.0
    %2842 = vmatpush1.msra.mxu0 %v2799
    %2843 = vmatprep.subr.mxu0 0.0
    %2844 = vmatpush1.msra.mxu0 %v2798
    %2845 = vmatprep.subr.mxu0 0.0
    %2846 = vmatpush1.msra.mxu0 %v2797
    %2847 = vmatprep.subr.mxu0 0.0
    %2848 = vmatpush2.msra.mxu0 0.0
    %2849 = vmatprep.subr.mxu0 0.0
    %2850 = vmatpush2.msra.mxu0 0.0
    %2851 = vmatprep.subr.mxu0 0.0
    %2852 = vmatpush2.msra.mxu0 0.0
    %2853 = vmatprep.subr.mxu0 0.0
    %2854 = vmatpush2.msra.mxu0 0.0
    %2855 = vmatprep.subr.mxu0 0.0
    %2856 = vmatpush2.msra.mxu0 0.0
    %2857 = vmatprep.subr.mxu0 0.0
    %2858 = vmatpush2.msra.mxu0 0.0
    %2859 = vmatprep.subr.mxu0 0.0
    %2860 = vmatpush2.msra.mxu0 0.0
    %2861 = vmatprep.subr.mxu0 0.0
    %2862 = vmatpush2.msra.mxu0 0.0
    %2863 = vmatprep.subr.mxu0 0.0
    %2864 = vmatpush2.msra.mxu0 0.0
    %2865 = vmatprep.subr.mxu0 0.0
    %2866 = vmatpush2.msra.mxu0 0.0
    %2867 = vmatprep.subr.mxu0 0.0
    %2868 = vmatpush2.msra.mxu0 0.0
    %2869 = vmatprep.subr.mxu0 0.0
    %2870 = vmatpush2.msra.mxu0 0.0
    %2871 = vmatprep.subr.mxu0 0.0
    %2872 = vmatpush2.msra.mxu0 0.0
    %2873 = vmatprep.subr.mxu0 0.0
    %2874 = vmatpush2.msra.mxu0 0.0
    %2875 = vmatprep.subr.mxu0 0.0
    %2876 = vmatpush2.msra.mxu0 0.0
    %2877 = vmatprep.subr.mxu0 0.0
    %2878 = vmatpush2.msra.mxu0 0.0
    %2879 = vmatprep.mubr.f32.mxu0 0.0
    %2880 = vmatmul.mubr.f32.gmra.mxu0 %v2813
    %v2881 = vpop.f32.mrf.mxu0
    %v2882 = vadd.f32 %v2810, %v2881
    %v2883 = vpop.f32.mrf.mxu0
    %2884 = vdwg.mxu0
    %vm2885 = vcmp.gt.f32.partialorder %v2882, 0.0
    %v2886 = vmul.f32 %v2882, 0.01
    %v2887 = vsel %vm2885, %v2882, %v2886
    %v2888 = vld [vmem:[#allocation5] sm:$0xff]
    %v2889 = vld [vmem:[#allocation5 + $0x8] sm:$0xff]
    %v2890 = vld [vmem:[#allocation5 + $0x10] sm:$0xff]
    %v2891 = vld [vmem:[#allocation5 + $0x18] sm:$0xff]
    %v2892 = vld [vmem:[#allocation5 + $0x20] sm:$0xff]
    %v2893 = vld [vmem:[#allocation5 + $0x28] sm:$0xff]
    %v2894 = vld [vmem:[#allocation5 + $0x30] sm:$0xff]
    %v2895 = vld [vmem:[#allocation5 + $0x38] sm:$0xff]
    %v2896 = vld [vmem:[#allocation5 + $0x40] sm:$0xff]
    %v2897 = vld [vmem:[#allocation5 + $0x48] sm:$0xff]
    %v2898 = vld [vmem:[#allocation5 + $0x50] sm:$0xff]
    %v2899 = vld [vmem:[#allocation5 + $0x58] sm:$0xff]
    %v2900 = vld [vmem:[#allocation5 + $0x60] sm:$0xff]
    %v2901 = vld [vmem:[#allocation5 + $0x68] sm:$0xff]
    %v2902 = vld [vmem:[#allocation5 + $0x70] sm:$0xff]
    %v2903 = vld [vmem:[#allocation5 + $0x78] sm:$0xff]
    %v2904 = vld [vmem:[#allocation5 + $0x80] sm:$0xff]
    %v2905 = vld [vmem:[#allocation5 + $0x88] sm:$0xff]
    %v2906 = vld [vmem:[#allocation5 + $0x90] sm:$0xff]
    %v2907 = vld [vmem:[#allocation5 + $0x98] sm:$0xff]
    %v2908 = vld [vmem:[#allocation5 + $0xa0] sm:$0xff]
    %v2909 = vld [vmem:[#allocation5 + $0xa8] sm:$0xff]
    %v2910 = vld [vmem:[#allocation5 + $0xb0] sm:$0xff]
    %v2911 = vld [vmem:[#allocation5 + $0xb8] sm:$0xff]
    %v2912 = vld [vmem:[#allocation5 + $0xc0] sm:$0xff]
    %v2913 = vld [vmem:[#allocation5 + $0xc8] sm:$0xff]
    %v2914 = vld [vmem:[#allocation5 + $0xd0] sm:$0xff]
    %v2915 = vld [vmem:[#allocation5 + $0xd8] sm:$0xff]
    %v2916 = vld [vmem:[#allocation5 + $0xe0] sm:$0xff]
    %v2917 = vld [vmem:[#allocation5 + $0xe8] sm:$0xff]
    %v2918 = vld [vmem:[#allocation5 + $0xf0] sm:$0xff]
    %v2919 = vld [vmem:[#allocation5 + $0xf8] sm:$0xff]
    %v2920 = vld [vmem:[#allocation5 + $0x100] sm:$0xff]
    %v2921 = vld [vmem:[#allocation5 + $0x108] sm:$0xff]
    %v2922 = vld [vmem:[#allocation5 + $0x110] sm:$0xff]
    %v2923 = vld [vmem:[#allocation5 + $0x118] sm:$0xff]
    %v2924 = vld [vmem:[#allocation5 + $0x120] sm:$0xff]
    %v2925 = vld [vmem:[#allocation5 + $0x128] sm:$0xff]
    %v2926 = vld [vmem:[#allocation5 + $0x130] sm:$0xff]
    %v2927 = vld [vmem:[#allocation5 + $0x138] sm:$0xff]
    %v2928 = vld [vmem:[#allocation5 + $0x140] sm:$0xff]
    %v2929 = vld [vmem:[#allocation5 + $0x148] sm:$0xff]
    %v2930 = vld [vmem:[#allocation5 + $0x150] sm:$0xff]
    %v2931 = vld [vmem:[#allocation5 + $0x158] sm:$0xff]
    %v2932 = vld [vmem:[#allocation5 + $0x160] sm:$0xff]
    %v2933 = vld [vmem:[#allocation5 + $0x168] sm:$0xff]
    %v2934 = vld [vmem:[#allocation5 + $0x170] sm:$0xff]
    %v2935 = vld [vmem:[#allocation5 + $0x178] sm:$0xff]
    %v2936 = vld [vmem:[#allocation5 + $0x180] sm:$0xff]
    %v2937 = vld [vmem:[#allocation5 + $0x188] sm:$0xff]
    %v2938 = vld [vmem:[#allocation5 + $0x190] sm:$0xff]
    %v2939 = vld [vmem:[#allocation5 + $0x198] sm:$0xff]
    %v2940 = vld [vmem:[#allocation5 + $0x1a0] sm:$0xff]
    %v2941 = vld [vmem:[#allocation5 + $0x1a8] sm:$0xff]
    %v2942 = vld [vmem:[#allocation5 + $0x1b0] sm:$0xff]
    %v2943 = vld [vmem:[#allocation5 + $0x1b8] sm:$0xff]
    %v2944 = vld [vmem:[#allocation5 + $0x1c0] sm:$0xff]
    %v2945 = vld [vmem:[#allocation5 + $0x1c8] sm:$0xff]
    %v2946 = vld [vmem:[#allocation5 + $0x1d0] sm:$0xff]
    %v2947 = vld [vmem:[#allocation5 + $0x1d8] sm:$0xff]
    %v2948 = vld [vmem:[#allocation5 + $0x1e0] sm:$0xff]
    %v2949 = vld [vmem:[#allocation5 + $0x1e8] sm:$0xff]
    %v2950 = vld [vmem:[#allocation5 + $0x1f0] sm:$0xff]
    %v2951 = vld [vmem:[#allocation5 + $0x1f8] sm:$0xff]
    %v2952 = vld [vmem:[#allocation5 + $0x200] sm:$0xff]
    %v2953 = vld [vmem:[#allocation5 + $0x208] sm:$0xff]
    %v2954 = vld [vmem:[#allocation5 + $0x210] sm:$0xff]
    %v2955 = vld [vmem:[#allocation5 + $0x218] sm:$0xff]
    %v2956 = vld [vmem:[#allocation5 + $0x220] sm:$0xff]
    %v2957 = vld [vmem:[#allocation5 + $0x228] sm:$0xff]
    %v2958 = vld [vmem:[#allocation5 + $0x230] sm:$0xff]
    %v2959 = vld [vmem:[#allocation5 + $0x238] sm:$0xff]
    %v2960 = vld [vmem:[#allocation5 + $0x240] sm:$0xff]
    %v2961 = vld [vmem:[#allocation5 + $0x248] sm:$0xff]
    %v2962 = vld [vmem:[#allocation5 + $0x250] sm:$0xff]
    %v2963 = vld [vmem:[#allocation5 + $0x258] sm:$0xff]
    %v2964 = vld [vmem:[#allocation5 + $0x260] sm:$0xff]
    %v2965 = vld [vmem:[#allocation5 + $0x268] sm:$0xff]
    %v2966 = vld [vmem:[#allocation5 + $0x270] sm:$0xff]
    %v2967 = vld [vmem:[#allocation5 + $0x278] sm:$0xff]
    %v2968 = vld [vmem:[#allocation5 + $0x280] sm:$0xff]
    %v2969 = vld [vmem:[#allocation5 + $0x288] sm:$0xff]
    %v2970 = vld [vmem:[#allocation5 + $0x290] sm:$0xff]
    %v2971 = vld [vmem:[#allocation5 + $0x298] sm:$0xff]
    %v2972 = vld [vmem:[#allocation5 + $0x2a0] sm:$0xff]
    %v2973 = vld [vmem:[#allocation5 + $0x2a8] sm:$0xff]
    %v2974 = vld [vmem:[#allocation5 + $0x2b0] sm:$0xff]
    %v2975 = vld [vmem:[#allocation5 + $0x2b8] sm:$0xff]
    %v2976 = vld [vmem:[#allocation5 + $0x2c0] sm:$0xff]
    %v2977 = vld [vmem:[#allocation5 + $0x2c8] sm:$0xff]
    %v2978 = vld [vmem:[#allocation5 + $0x2d0] sm:$0xff]
    %v2979 = vld [vmem:[#allocation5 + $0x2d8] sm:$0xff]
    %v2980 = vld [vmem:[#allocation5 + $0x2e0] sm:$0xff]
    %v2981 = vld [vmem:[#allocation5 + $0x2e8] sm:$0xff]
    %v2982 = vld [vmem:[#allocation5 + $0x2f0] sm:$0xff]
    %v2983 = vld [vmem:[#allocation5 + $0x2f8] sm:$0xff]
    %v2984 = vld [vmem:[#allocation5 + $0x300] sm:$0xff]
    %v2985 = vld [vmem:[#allocation5 + $0x308] sm:$0xff]
    %v2986 = vld [vmem:[#allocation5 + $0x310] sm:$0xff]
    %v2987 = vld [vmem:[#allocation5 + $0x318] sm:$0xff]
    %v2988 = vld [vmem:[#allocation5 + $0x320] sm:$0xff]
    %v2989 = vld [vmem:[#allocation5 + $0x328] sm:$0xff]
    %v2990 = vld [vmem:[#allocation5 + $0x330] sm:$0xff]
    %v2991 = vld [vmem:[#allocation5 + $0x338] sm:$0xff]
    %v2992 = vld [vmem:[#allocation5 + $0x340] sm:$0xff]
    %v2993 = vld [vmem:[#allocation5 + $0x348] sm:$0xff]
    %v2994 = vld [vmem:[#allocation5 + $0x350] sm:$0xff]
    %v2995 = vld [vmem:[#allocation5 + $0x358] sm:$0xff]
    %v2996 = vld [vmem:[#allocation5 + $0x360] sm:$0xff]
    %v2997 = vld [vmem:[#allocation5 + $0x368] sm:$0xff]
    %v2998 = vld [vmem:[#allocation5 + $0x370] sm:$0xff]
    %v2999 = vld [vmem:[#allocation5 + $0x378] sm:$0xff]
    %v3000 = vld [vmem:[#allocation5 + $0x380] sm:$0xff]
    %v3001 = vld [vmem:[#allocation5 + $0x388] sm:$0xff]
    %v3002 = vld [vmem:[#allocation5 + $0x390] sm:$0xff]
    %v3003 = vld [vmem:[#allocation5 + $0x398] sm:$0xff]
    %v3004 = vld [vmem:[#allocation5 + $0x3a0] sm:$0xff]
    %v3005 = vld [vmem:[#allocation5 + $0x3a8] sm:$0xff]
    %v3006 = vld [vmem:[#allocation5 + $0x3b0] sm:$0xff]
    %v3007 = vld [vmem:[#allocation5 + $0x3b8] sm:$0xff]
    %v3008 = vld [vmem:[#allocation5 + $0x3c0] sm:$0xff]
    %v3009 = vld [vmem:[#allocation5 + $0x3c8] sm:$0xff]
    %v3010 = vld [vmem:[#allocation5 + $0x3d0] sm:$0xff]
    %v3011 = vld [vmem:[#allocation5 + $0x3d8] sm:$0xff]
    %v3012 = vld [vmem:[#allocation5 + $0x3e0] sm:$0xff]
    %v3013 = vld [vmem:[#allocation5 + $0x3e8] sm:$0xff]
    %v3014 = vld [vmem:[#allocation5 + $0x3f0] sm:$0xff]
    %v3015 = vld [vmem:[#allocation5 + $0x3f8] sm:$0xff]
    %v3016 = vld [vmem:[#allocation5 + $0x400] sm:$0xff]
    %v3017 = vld [vmem:[#allocation5 + $0x408] sm:$0xff]
    %v3018 = vld [vmem:[#allocation5 + $0x410] sm:$0xff]
    %v3019 = vld [vmem:[#allocation5 + $0x418] sm:$0xff]
    %v3020 = vld [vmem:[#allocation5 + $0x420] sm:$0xff]
    %v3021 = vld [vmem:[#allocation5 + $0x428] sm:$0xff]
    %v3022 = vld [vmem:[#allocation5 + $0x430] sm:$0xff]
    %v3023 = vld [vmem:[#allocation5 + $0x438] sm:$0xff]
    %v3024 = vld [vmem:[#allocation5 + $0x440] sm:$0xff]
    %v3025 = vld [vmem:[#allocation5 + $0x448] sm:$0xff]
    %v3026 = vld [vmem:[#allocation5 + $0x450] sm:$0xff]
    %v3027 = vld [vmem:[#allocation5 + $0x458] sm:$0xff]
    %v3028 = vld [vmem:[#allocation5 + $0x460] sm:$0xff]
    %v3029 = vld [vmem:[#allocation5 + $0x468] sm:$0xff]
    %v3030 = vld [vmem:[#allocation5 + $0x470] sm:$0xff]
    %v3031 = vld [vmem:[#allocation5 + $0x478] sm:$0xff]
    %v3032 = vld [vmem:[#allocation5 + $0x480] sm:$0xff]
    %v3033 = vld [vmem:[#allocation5 + $0x488] sm:$0xff]
    %v3034 = vld [vmem:[#allocation5 + $0x490] sm:$0xff]
    %v3035 = vld [vmem:[#allocation5 + $0x498] sm:$0xff]
    %v3036 = vld [vmem:[#allocation5 + $0x4a0] sm:$0xff]
    %v3037 = vld [vmem:[#allocation5 + $0x4a8] sm:$0xff]
    %v3038 = vld [vmem:[#allocation5 + $0x4b0] sm:$0xff]
    %v3039 = vld [vmem:[#allocation5 + $0x4b8] sm:$0xff]
    %v3040 = vld [vmem:[#allocation5 + $0x4c0] sm:$0xff]
    %v3041 = vld [vmem:[#allocation5 + $0x4c8] sm:$0xff]
    %v3042 = vld [vmem:[#allocation5 + $0x4d0] sm:$0xff]
    %v3043 = vld [vmem:[#allocation5 + $0x4d8] sm:$0xff]
    %v3044 = vld [vmem:[#allocation5 + $0x4e0] sm:$0xff]
    %v3045 = vld [vmem:[#allocation5 + $0x4e8] sm:$0xff]
    %v3046 = vld [vmem:[#allocation5 + $0x4f0] sm:$0xff]
    %v3047 = vld [vmem:[#allocation5 + $0x4f8] sm:$0xff]
    %v3048 = vld [vmem:[#allocation5 + $0x500] sm:$0xff]
    %v3049 = vld [vmem:[#allocation5 + $0x508] sm:$0xff]
    %v3050 = vld [vmem:[#allocation5 + $0x510] sm:$0xff]
    %v3051 = vld [vmem:[#allocation5 + $0x518] sm:$0xff]
    %v3052 = vld [vmem:[#allocation5 + $0x520] sm:$0xff]
    %v3053 = vld [vmem:[#allocation5 + $0x528] sm:$0xff]
    %v3054 = vld [vmem:[#allocation5 + $0x530] sm:$0xff]
    %v3055 = vld [vmem:[#allocation5 + $0x538] sm:$0xff]
    %v3056 = vld [vmem:[#allocation5 + $0x540] sm:$0xff]
    %v3057 = vld [vmem:[#allocation5 + $0x548] sm:$0xff]
    %v3058 = vld [vmem:[#allocation5 + $0x550] sm:$0xff]
    %v3059 = vld [vmem:[#allocation5 + $0x558] sm:$0xff]
    %v3060 = vld [vmem:[#allocation5 + $0x560] sm:$0xff]
    %v3061 = vld [vmem:[#allocation5 + $0x568] sm:$0xff]
    %v3062 = vld [vmem:[#allocation5 + $0x570] sm:$0xff]
    %v3063 = vld [vmem:[#allocation5 + $0x578] sm:$0xff]
    %v3064 = vld [vmem:[#allocation5 + $0x580] sm:$0xff]
    %v3065 = vld [vmem:[#allocation5 + $0x588] sm:$0xff]
    %v3066 = vld [vmem:[#allocation5 + $0x590] sm:$0xff]
    %v3067 = vld [vmem:[#allocation5 + $0x598] sm:$0xff]
    %v3068 = vld [vmem:[#allocation5 + $0x5a0] sm:$0xff]
    %v3069 = vld [vmem:[#allocation5 + $0x5a8] sm:$0xff]
    %v3070 = vld [vmem:[#allocation5 + $0x5b0] sm:$0xff]
    %v3071 = vld [vmem:[#allocation5 + $0x5b8] sm:$0xff]
    %v3072 = vld [vmem:[#allocation5 + $0x5c0] sm:$0xff]
    %v3073 = vld [vmem:[#allocation5 + $0x5c8] sm:$0xff]
    %v3074 = vld [vmem:[#allocation5 + $0x5d0] sm:$0xff]
    %v3075 = vld [vmem:[#allocation5 + $0x5d8] sm:$0xff]
    %v3076 = vld [vmem:[#allocation5 + $0x5e0] sm:$0xff]
    %v3077 = vld [vmem:[#allocation5 + $0x5e8] sm:$0xff]
    %v3078 = vld [vmem:[#allocation5 + $0x5f0] sm:$0xff]
    %v3079 = vld [vmem:[#allocation5 + $0x5f8] sm:$0xff]
    %v3080 = vld [vmem:[%s15] sm:$0xff]
    %v3081 = vld [vmem:[%s15 + $0x8] sm:$0xf]
    %v3084 = vlaneseq
    %v3085 = vshrl.u32 %v3084, 7
    %v3086 = vsub.s32 0, %v3085
    %v3087 = vrot.slane %v3080, %v3086
    %v3088 = vlaneseq
    %v3089 = vshrl.u32 %v3088, 7
    %v3090 = vsub.s32 1, %v3089
    %v3091 = vrot.slane %v3080, %v3090
    %v3092 = vlaneseq
    %v3093 = vshrl.u32 %v3092, 7
    %v3094 = vsub.s32 2, %v3093
    %v3095 = vrot.slane %v3080, %v3094
    %v3096 = vlaneseq
    %v3097 = vshrl.u32 %v3096, 7
    %v3098 = vsub.s32 3, %v3097
    %v3099 = vrot.slane %v3080, %v3098
    %v3100 = vlaneseq
    %v3101 = vshrl.u32 %v3100, 7
    %v3102 = vsub.s32 4, %v3101
    %v3103 = vrot.slane %v3080, %v3102
    %v3104 = vlaneseq
    %v3105 = vshrl.u32 %v3104, 7
    %v3106 = vsub.s32 5, %v3105
    %v3107 = vrot.slane %v3080, %v3106
    %v3108 = vlaneseq
    %v3109 = vshrl.u32 %v3108, 7
    %v3110 = vsub.s32 6, %v3109
    %v3111 = vrot.slane %v3080, %v3110
    %v3112 = vlaneseq
    %v3113 = vshrl.u32 %v3112, 7
    %v3114 = vsub.s32 7, %v3113
    %v3115 = vrot.slane %v3080, %v3114
    %v3116 = vlaneseq
    %v3117 = vshrl.u32 %v3116, 7
    %v3118 = vsub.s32 0, %v3117
    %v3119 = vrot.slane %v3081, %v3118
    %v3120 = vlaneseq
    %v3121 = vshrl.u32 %v3120, 7
    %v3122 = vsub.s32 1, %v3121
    %v3123 = vrot.slane %v3081, %v3122
    %v3124 = vlaneseq
    %v3125 = vshrl.u32 %v3124, 7
    %v3126 = vsub.s32 2, %v3125
    %v3127 = vrot.slane %v3081, %v3126
    %v3128 = vlaneseq
    %v3129 = vshrl.u32 %v3128, 7
    %v3130 = vsub.s32 3, %v3129
    %v3131 = vrot.slane %v3081, %v3130
    %3144 = vmatprep.subr.mxu0 %v3069
    %3145 = vmatpush1.msra.mxu0 %v3068
    %3146 = vmatprep.subr.mxu0 %v3057
    %3147 = vmatpush1.msra.mxu0 %v3056
    %3148 = vmatprep.subr.mxu0 %v3045
    %3149 = vmatpush1.msra.mxu0 %v3044
    %3150 = vmatprep.subr.mxu0 %v3033
    %3151 = vmatpush1.msra.mxu0 %v3032
    %3152 = vmatprep.subr.mxu0 %v3021
    %3153 = vmatpush1.msra.mxu0 %v3020
    %3154 = vmatprep.subr.mxu0 %v3009
    %3155 = vmatpush1.msra.mxu0 %v3008
    %3156 = vmatprep.subr.mxu0 %v2997
    %3157 = vmatpush1.msra.mxu0 %v2996
    %3158 = vmatprep.subr.mxu0 %v2985
    %3159 = vmatpush1.msra.mxu0 %v2984
    %3160 = vmatprep.subr.mxu0 %v2973
    %3161 = vmatpush1.msra.mxu0 %v2972
    %3162 = vmatprep.subr.mxu0 %v2961
    %3163 = vmatpush1.msra.mxu0 %v2960
    %3164 = vmatprep.subr.mxu0 %v2949
    %3165 = vmatpush1.msra.mxu0 %v2948
    %3166 = vmatprep.subr.mxu0 %v2937
    %3167 = vmatpush1.msra.mxu0 %v2936
    %3168 = vmatprep.subr.mxu0 %v2925
    %3169 = vmatpush1.msra.mxu0 %v2924
    %3170 = vmatprep.subr.mxu0 %v2913
    %3171 = vmatpush1.msra.mxu0 %v2912
    %3172 = vmatprep.subr.mxu0 %v2901
    %3173 = vmatpush1.msra.mxu0 %v2900
    %3174 = vmatprep.subr.mxu0 %v2889
    %3175 = vmatpush1.msra.mxu0 %v2888
    %3176 = vmatprep.subr.mxu0 0.0
    %3177 = vmatpush2.msra.mxu0 0.0
    %3178 = vmatprep.subr.mxu0 0.0
    %3179 = vmatpush2.msra.mxu0 0.0
    %3180 = vmatprep.subr.mxu0 0.0
    %3181 = vmatpush2.msra.mxu0 0.0
    %3182 = vmatprep.subr.mxu0 0.0
    %3183 = vmatpush2.msra.mxu0 0.0
    %3184 = vmatprep.subr.mxu0 0.0
    %3185 = vmatpush2.msra.mxu0 0.0
    %3186 = vmatprep.subr.mxu0 0.0
    %3187 = vmatpush2.msra.mxu0 0.0
    %3188 = vmatprep.subr.mxu0 0.0
    %3189 = vmatpush2.msra.mxu0 0.0
    %3190 = vmatprep.subr.mxu0 0.0
    %3191 = vmatpush2.msra.mxu0 0.0
    %3192 = vmatprep.subr.mxu0 0.0
    %3193 = vmatpush2.msra.mxu0 0.0
    %3194 = vmatprep.subr.mxu0 0.0
    %3195 = vmatpush2.msra.mxu0 0.0
    %3196 = vmatprep.subr.mxu0 0.0
    %3197 = vmatpush2.msra.mxu0 0.0
    %3198 = vmatprep.subr.mxu0 0.0
    %3199 = vmatpush2.msra.mxu0 0.0
    %3200 = vmatprep.subr.mxu0 0.0
    %3201 = vmatpush2.msra.mxu0 0.0
    %3202 = vmatprep.subr.mxu0 0.0
    %3203 = vmatpush2.msra.mxu0 0.0
    %3204 = vmatprep.subr.mxu0 0.0
    %3205 = vmatpush2.msra.mxu0 0.0
    %3206 = vmatprep.subr.mxu0 0.0
    %3207 = vmatpush2.msra.mxu0 0.0
    %3208 = vmatprep.mubr.f32.mxu0 0.0
    %3209 = vmatmul.mubr.f32.gmra.mxu0 %v2887
    %v3210 = vpop.f32.mrf.mxu0
    %v3211 = vadd.f32 %v3087, %v3210
    %v3212 = vpop.f32.mrf.mxu0
    %v3213 = vadd.f32 %v3091, %v3212
    %3214 = vdwg.mxu0
    %3215 = vmatprep.subr.mxu0 %v3071
    %3216 = vmatpush1.msra.mxu0 %v3070
    %3217 = vmatprep.subr.mxu0 %v3059
    %3218 = vmatpush1.msra.mxu0 %v3058
    %3219 = vmatprep.subr.mxu0 %v3047
    %3220 = vmatpush1.msra.mxu0 %v3046
    %3221 = vmatprep.subr.mxu0 %v3035
    %3222 = vmatpush1.msra.mxu0 %v3034
    %3223 = vmatprep.subr.mxu0 %v3023
    %3224 = vmatpush1.msra.mxu0 %v3022
    %3225 = vmatprep.subr.mxu0 %v3011
    %3226 = vmatpush1.msra.mxu0 %v3010
    %3227 = vmatprep.subr.mxu0 %v2999
    %3228 = vmatpush1.msra.mxu0 %v2998
    %3229 = vmatprep.subr.mxu0 %v2987
    %3230 = vmatpush1.msra.mxu0 %v2986
    %3231 = vmatprep.subr.mxu0 %v2975
    %3232 = vmatpush1.msra.mxu0 %v2974
    %3233 = vmatprep.subr.mxu0 %v2963
    %3234 = vmatpush1.msra.mxu0 %v2962
    %3235 = vmatprep.subr.mxu0 %v2951
    %3236 = vmatpush1.msra.mxu0 %v2950
    %3237 = vmatprep.subr.mxu0 %v2939
    %3238 = vmatpush1.msra.mxu0 %v2938
    %3239 = vmatprep.subr.mxu0 %v2927
    %3240 = vmatpush1.msra.mxu0 %v2926
    %3241 = vmatprep.subr.mxu0 %v2915
    %3242 = vmatpush1.msra.mxu0 %v2914
    %3243 = vmatprep.subr.mxu0 %v2903
    %3244 = vmatpush1.msra.mxu0 %v2902
    %3245 = vmatprep.subr.mxu0 %v2891
    %3246 = vmatpush1.msra.mxu0 %v2890
    %3247 = vmatprep.subr.mxu0 0.0
    %3248 = vmatpush2.msra.mxu0 0.0
    %3249 = vmatprep.subr.mxu0 0.0
    %3250 = vmatpush2.msra.mxu0 0.0
    %3251 = vmatprep.subr.mxu0 0.0
    %3252 = vmatpush2.msra.mxu0 0.0
    %3253 = vmatprep.subr.mxu0 0.0
    %3254 = vmatpush2.msra.mxu0 0.0
    %3255 = vmatprep.subr.mxu0 0.0
    %3256 = vmatpush2.msra.mxu0 0.0
    %3257 = vmatprep.subr.mxu0 0.0
    %3258 = vmatpush2.msra.mxu0 0.0
    %3259 = vmatprep.subr.mxu0 0.0
    %3260 = vmatpush2.msra.mxu0 0.0
    %3261 = vmatprep.subr.mxu0 0.0
    %3262 = vmatpush2.msra.mxu0 0.0
    %3263 = vmatprep.subr.mxu0 0.0
    %3264 = vmatpush2.msra.mxu0 0.0
    %3265 = vmatprep.subr.mxu0 0.0
    %3266 = vmatpush2.msra.mxu0 0.0
    %3267 = vmatprep.subr.mxu0 0.0
    %3268 = vmatpush2.msra.mxu0 0.0
    %3269 = vmatprep.subr.mxu0 0.0
    %3270 = vmatpush2.msra.mxu0 0.0
    %3271 = vmatprep.subr.mxu0 0.0
    %3272 = vmatpush2.msra.mxu0 0.0
    %3273 = vmatprep.subr.mxu0 0.0
    %3274 = vmatpush2.msra.mxu0 0.0
    %3275 = vmatprep.subr.mxu0 0.0
    %3276 = vmatpush2.msra.mxu0 0.0
    %3277 = vmatprep.subr.mxu0 0.0
    %3278 = vmatpush2.msra.mxu0 0.0
    %3279 = vmatprep.mubr.f32.mxu0 0.0
    %3280 = vmatmul.mubr.f32.gmra.mxu0 %v2887
    %v3281 = vpop.f32.mrf.mxu0
    %v3282 = vadd.f32 %v3095, %v3281
    %v3283 = vpop.f32.mrf.mxu0
    %v3284 = vadd.f32 %v3099, %v3283
    %3285 = vdwg.mxu0
    %3286 = vmatprep.subr.mxu0 %v3073
    %3287 = vmatpush1.msra.mxu0 %v3072
    %3288 = vmatprep.subr.mxu0 %v3061
    %3289 = vmatpush1.msra.mxu0 %v3060
    %3290 = vmatprep.subr.mxu0 %v3049
    %3291 = vmatpush1.msra.mxu0 %v3048
    %3292 = vmatprep.subr.mxu0 %v3037
    %3293 = vmatpush1.msra.mxu0 %v3036
    %3294 = vmatprep.subr.mxu0 %v3025
    %3295 = vmatpush1.msra.mxu0 %v3024
    %3296 = vmatprep.subr.mxu0 %v3013
    %3297 = vmatpush1.msra.mxu0 %v3012
    %3298 = vmatprep.subr.mxu0 %v3001
    %3299 = vmatpush1.msra.mxu0 %v3000
    %3300 = vmatprep.subr.mxu0 %v2989
    %3301 = vmatpush1.msra.mxu0 %v2988
    %3302 = vmatprep.subr.mxu0 %v2977
    %3303 = vmatpush1.msra.mxu0 %v2976
    %3304 = vmatprep.subr.mxu0 %v2965
    %3305 = vmatpush1.msra.mxu0 %v2964
    %3306 = vmatprep.subr.mxu0 %v2953
    %3307 = vmatpush1.msra.mxu0 %v2952
    %3308 = vmatprep.subr.mxu0 %v2941
    %3309 = vmatpush1.msra.mxu0 %v2940
    %3310 = vmatprep.subr.mxu0 %v2929
    %3311 = vmatpush1.msra.mxu0 %v2928
    %3312 = vmatprep.subr.mxu0 %v2917
    %3313 = vmatpush1.msra.mxu0 %v2916
    %3314 = vmatprep.subr.mxu0 %v2905
    %3315 = vmatpush1.msra.mxu0 %v2904
    %3316 = vmatprep.subr.mxu0 %v2893
    %3317 = vmatpush1.msra.mxu0 %v2892
    %3318 = vmatprep.subr.mxu0 0.0
    %3319 = vmatpush2.msra.mxu0 0.0
    %3320 = vmatprep.subr.mxu0 0.0
    %3321 = vmatpush2.msra.mxu0 0.0
    %3322 = vmatprep.subr.mxu0 0.0
    %3323 = vmatpush2.msra.mxu0 0.0
    %3324 = vmatprep.subr.mxu0 0.0
    %3325 = vmatpush2.msra.mxu0 0.0
    %3326 = vmatprep.subr.mxu0 0.0
    %3327 = vmatpush2.msra.mxu0 0.0
    %3328 = vmatprep.subr.mxu0 0.0
    %3329 = vmatpush2.msra.mxu0 0.0
    %3330 = vmatprep.subr.mxu0 0.0
    %3331 = vmatpush2.msra.mxu0 0.0
    %3332 = vmatprep.subr.mxu0 0.0
    %3333 = vmatpush2.msra.mxu0 0.0
    %3334 = vmatprep.subr.mxu0 0.0
    %3335 = vmatpush2.msra.mxu0 0.0
    %3336 = vmatprep.subr.mxu0 0.0
    %3337 = vmatpush2.msra.mxu0 0.0
    %3338 = vmatprep.subr.mxu0 0.0
    %3339 = vmatpush2.msra.mxu0 0.0
    %3340 = vmatprep.subr.mxu0 0.0
    %3341 = vmatpush2.msra.mxu0 0.0
    %3342 = vmatprep.subr.mxu0 0.0
    %3343 = vmatpush2.msra.mxu0 0.0
    %3344 = vmatprep.subr.mxu0 0.0
    %3345 = vmatpush2.msra.mxu0 0.0
    %3346 = vmatprep.subr.mxu0 0.0
    %3347 = vmatpush2.msra.mxu0 0.0
    %3348 = vmatprep.subr.mxu0 0.0
    %3349 = vmatpush2.msra.mxu0 0.0
    %3350 = vmatprep.mubr.f32.mxu0 0.0
    %3351 = vmatmul.mubr.f32.gmra.mxu0 %v2887
    %v3352 = vpop.f32.mrf.mxu0
    %v3353 = vadd.f32 %v3103, %v3352
    %v3354 = vpop.f32.mrf.mxu0
    %v3355 = vadd.f32 %v3107, %v3354
    %3356 = vdwg.mxu0
    %3357 = vmatprep.subr.mxu0 %v3075
    %3358 = vmatpush1.msra.mxu0 %v3074
    %3359 = vmatprep.subr.mxu0 %v3063
    %3360 = vmatpush1.msra.mxu0 %v3062
    %3361 = vmatprep.subr.mxu0 %v3051
    %3362 = vmatpush1.msra.mxu0 %v3050
    %3363 = vmatprep.subr.mxu0 %v3039
    %3364 = vmatpush1.msra.mxu0 %v3038
    %3365 = vmatprep.subr.mxu0 %v3027
    %3366 = vmatpush1.msra.mxu0 %v3026
    %3367 = vmatprep.subr.mxu0 %v3015
    %3368 = vmatpush1.msra.mxu0 %v3014
    %3369 = vmatprep.subr.mxu0 %v3003
    %3370 = vmatpush1.msra.mxu0 %v3002
    %3371 = vmatprep.subr.mxu0 %v2991
    %3372 = vmatpush1.msra.mxu0 %v2990
    %3373 = vmatprep.subr.mxu0 %v2979
    %3374 = vmatpush1.msra.mxu0 %v2978
    %3375 = vmatprep.subr.mxu0 %v2967
    %3376 = vmatpush1.msra.mxu0 %v2966
    %3377 = vmatprep.subr.mxu0 %v2955
    %3378 = vmatpush1.msra.mxu0 %v2954
    %3379 = vmatprep.subr.mxu0 %v2943
    %3380 = vmatpush1.msra.mxu0 %v2942
    %3381 = vmatprep.subr.mxu0 %v2931
    %3382 = vmatpush1.msra.mxu0 %v2930
    %3383 = vmatprep.subr.mxu0 %v2919
    %3384 = vmatpush1.msra.mxu0 %v2918
    %3385 = vmatprep.subr.mxu0 %v2907
    %3386 = vmatpush1.msra.mxu0 %v2906
    %3387 = vmatprep.subr.mxu0 %v2895
    %3388 = vmatpush1.msra.mxu0 %v2894
    %3389 = vmatprep.subr.mxu0 0.0
    %3390 = vmatpush2.msra.mxu0 0.0
    %3391 = vmatprep.subr.mxu0 0.0
    %3392 = vmatpush2.msra.mxu0 0.0
    %3393 = vmatprep.subr.mxu0 0.0
    %3394 = vmatpush2.msra.mxu0 0.0
    %3395 = vmatprep.subr.mxu0 0.0
    %3396 = vmatpush2.msra.mxu0 0.0
    %3397 = vmatprep.subr.mxu0 0.0
    %3398 = vmatpush2.msra.mxu0 0.0
    %3399 = vmatprep.subr.mxu0 0.0
    %3400 = vmatpush2.msra.mxu0 0.0
    %3401 = vmatprep.subr.mxu0 0.0
    %3402 = vmatpush2.msra.mxu0 0.0
    %3403 = vmatprep.subr.mxu0 0.0
    %3404 = vmatpush2.msra.mxu0 0.0
    %3405 = vmatprep.subr.mxu0 0.0
    %3406 = vmatpush2.msra.mxu0 0.0
    %3407 = vmatprep.subr.mxu0 0.0
    %3408 = vmatpush2.msra.mxu0 0.0
    %3409 = vmatprep.subr.mxu0 0.0
    %3410 = vmatpush2.msra.mxu0 0.0
    %3411 = vmatprep.subr.mxu0 0.0
    %3412 = vmatpush2.msra.mxu0 0.0
    %3413 = vmatprep.subr.mxu0 0.0
    %3414 = vmatpush2.msra.mxu0 0.0
    %3415 = vmatprep.subr.mxu0 0.0
    %3416 = vmatpush2.msra.mxu0 0.0
    %3417 = vmatprep.subr.mxu0 0.0
    %3418 = vmatpush2.msra.mxu0 0.0
    %3419 = vmatprep.subr.mxu0 0.0
    %3420 = vmatpush2.msra.mxu0 0.0
    %3421 = vmatprep.mubr.f32.mxu0 0.0
    %3422 = vmatmul.mubr.f32.gmra.mxu0 %v2887
    %v3423 = vpop.f32.mrf.mxu0
    %v3424 = vadd.f32 %v3111, %v3423
    %v3425 = vpop.f32.mrf.mxu0
    %v3426 = vadd.f32 %v3115, %v3425
    %3427 = vdwg.mxu0
    %3428 = vmatprep.subr.mxu0 %v3077
    %3429 = vmatpush1.msra.mxu0 %v3076
    %3430 = vmatprep.subr.mxu0 %v3065
    %3431 = vmatpush1.msra.mxu0 %v3064
    %3432 = vmatprep.subr.mxu0 %v3053
    %3433 = vmatpush1.msra.mxu0 %v3052
    %3434 = vmatprep.subr.mxu0 %v3041
    %3435 = vmatpush1.msra.mxu0 %v3040
    %3436 = vmatprep.subr.mxu0 %v3029
    %3437 = vmatpush1.msra.mxu0 %v3028
    %3438 = vmatprep.subr.mxu0 %v3017
    %3439 = vmatpush1.msra.mxu0 %v3016
    %3440 = vmatprep.subr.mxu0 %v3005
    %3441 = vmatpush1.msra.mxu0 %v3004
    %3442 = vmatprep.subr.mxu0 %v2993
    %3443 = vmatpush1.msra.mxu0 %v2992
    %3444 = vmatprep.subr.mxu0 %v2981
    %3445 = vmatpush1.msra.mxu0 %v2980
    %3446 = vmatprep.subr.mxu0 %v2969
    %3447 = vmatpush1.msra.mxu0 %v2968
    %3448 = vmatprep.subr.mxu0 %v2957
    %3449 = vmatpush1.msra.mxu0 %v2956
    %3450 = vmatprep.subr.mxu0 %v2945
    %3451 = vmatpush1.msra.mxu0 %v2944
    %3452 = vmatprep.subr.mxu0 %v2933
    %3453 = vmatpush1.msra.mxu0 %v2932
    %3454 = vmatprep.subr.mxu0 %v2921
    %3455 = vmatpush1.msra.mxu0 %v2920
    %3456 = vmatprep.subr.mxu0 %v2909
    %3457 = vmatpush1.msra.mxu0 %v2908
    %3458 = vmatprep.subr.mxu0 %v2897
    %3459 = vmatpush1.msra.mxu0 %v2896
    %3460 = vmatprep.subr.mxu0 0.0
    %3461 = vmatpush2.msra.mxu0 0.0
    %3462 = vmatprep.subr.mxu0 0.0
    %3463 = vmatpush2.msra.mxu0 0.0
    %3464 = vmatprep.subr.mxu0 0.0
    %3465 = vmatpush2.msra.mxu0 0.0
    %3466 = vmatprep.subr.mxu0 0.0
    %3467 = vmatpush2.msra.mxu0 0.0
    %3468 = vmatprep.subr.mxu0 0.0
    %3469 = vmatpush2.msra.mxu0 0.0
    %3470 = vmatprep.subr.mxu0 0.0
    %3471 = vmatpush2.msra.mxu0 0.0
    %3472 = vmatprep.subr.mxu0 0.0
    %3473 = vmatpush2.msra.mxu0 0.0
    %3474 = vmatprep.subr.mxu0 0.0
    %3475 = vmatpush2.msra.mxu0 0.0
    %3476 = vmatprep.subr.mxu0 0.0
    %3477 = vmatpush2.msra.mxu0 0.0
    %3478 = vmatprep.subr.mxu0 0.0
    %3479 = vmatpush2.msra.mxu0 0.0
    %3480 = vmatprep.subr.mxu0 0.0
    %3481 = vmatpush2.msra.mxu0 0.0
    %3482 = vmatprep.subr.mxu0 0.0
    %3483 = vmatpush2.msra.mxu0 0.0
    %3484 = vmatprep.subr.mxu0 0.0
    %3485 = vmatpush2.msra.mxu0 0.0
    %3486 = vmatprep.subr.mxu0 0.0
    %3487 = vmatpush2.msra.mxu0 0.0
    %3488 = vmatprep.subr.mxu0 0.0
    %3489 = vmatpush2.msra.mxu0 0.0
    %3490 = vmatprep.subr.mxu0 0.0
    %3491 = vmatpush2.msra.mxu0 0.0
    %3492 = vmatprep.mubr.f32.mxu0 0.0
    %3493 = vmatmul.mubr.f32.gmra.mxu0 %v2887
    %v3494 = vpop.f32.mrf.mxu0
    %v3495 = vadd.f32 %v3119, %v3494
    %v3496 = vpop.f32.mrf.mxu0
    %v3497 = vadd.f32 %v3123, %v3496
    %3498 = vdwg.mxu0
    %3499 = vmatprep.subr.mxu0 %v3079
    %3500 = vmatpush1.msra.mxu0 %v3078
    %3501 = vmatprep.subr.mxu0 %v3067
    %3502 = vmatpush1.msra.mxu0 %v3066
    %3503 = vmatprep.subr.mxu0 %v3055
    %3504 = vmatpush1.msra.mxu0 %v3054
    %3505 = vmatprep.subr.mxu0 %v3043
    %3506 = vmatpush1.msra.mxu0 %v3042
    %3507 = vmatprep.subr.mxu0 %v3031
    %3508 = vmatpush1.msra.mxu0 %v3030
    %3509 = vmatprep.subr.mxu0 %v3019
    %3510 = vmatpush1.msra.mxu0 %v3018
    %3511 = vmatprep.subr.mxu0 %v3007
    %3512 = vmatpush1.msra.mxu0 %v3006
    %3513 = vmatprep.subr.mxu0 %v2995
    %3514 = vmatpush1.msra.mxu0 %v2994
    %3515 = vmatprep.subr.mxu0 %v2983
    %3516 = vmatpush1.msra.mxu0 %v2982
    %3517 = vmatprep.subr.mxu0 %v2971
    %3518 = vmatpush1.msra.mxu0 %v2970
    %3519 = vmatprep.subr.mxu0 %v2959
    %3520 = vmatpush1.msra.mxu0 %v2958
    %3521 = vmatprep.subr.mxu0 %v2947
    %3522 = vmatpush1.msra.mxu0 %v2946
    %3523 = vmatprep.subr.mxu0 %v2935
    %3524 = vmatpush1.msra.mxu0 %v2934
    %3525 = vmatprep.subr.mxu0 %v2923
    %3526 = vmatpush1.msra.mxu0 %v2922
    %3527 = vmatprep.subr.mxu0 %v2911
    %3528 = vmatpush1.msra.mxu0 %v2910
    %3529 = vmatprep.subr.mxu0 %v2899
    %3530 = vmatpush1.msra.mxu0 %v2898
    %3531 = vmatprep.subr.mxu0 0.0
    %3532 = vmatpush2.msra.mxu0 0.0
    %3533 = vmatprep.subr.mxu0 0.0
    %3534 = vmatpush2.msra.mxu0 0.0
    %3535 = vmatprep.subr.mxu0 0.0
    %3536 = vmatpush2.msra.mxu0 0.0
    %3537 = vmatprep.subr.mxu0 0.0
    %3538 = vmatpush2.msra.mxu0 0.0
    %3539 = vmatprep.subr.mxu0 0.0
    %3540 = vmatpush2.msra.mxu0 0.0
    %3541 = vmatprep.subr.mxu0 0.0
    %3542 = vmatpush2.msra.mxu0 0.0
    %3543 = vmatprep.subr.mxu0 0.0
    %3544 = vmatpush2.msra.mxu0 0.0
    %3545 = vmatprep.subr.mxu0 0.0
    %3546 = vmatpush2.msra.mxu0 0.0
    %3547 = vmatprep.subr.mxu0 0.0
    %3548 = vmatpush2.msra.mxu0 0.0
    %3549 = vmatprep.subr.mxu0 0.0
    %3550 = vmatpush2.msra.mxu0 0.0
    %3551 = vmatprep.subr.mxu0 0.0
    %3552 = vmatpush2.msra.mxu0 0.0
    %3553 = vmatprep.subr.mxu0 0.0
    %3554 = vmatpush2.msra.mxu0 0.0
    %3555 = vmatprep.subr.mxu0 0.0
    %3556 = vmatpush2.msra.mxu0 0.0
    %3557 = vmatprep.subr.mxu0 0.0
    %3558 = vmatpush2.msra.mxu0 0.0
    %3559 = vmatprep.subr.mxu0 0.0
    %3560 = vmatpush2.msra.mxu0 0.0
    %3561 = vmatprep.subr.mxu0 0.0
    %3562 = vmatpush2.msra.mxu0 0.0
    %3563 = vmatprep.mubr.f32.mxu0 0.0
    %3564 = vmatmul.mubr.f32.gmra.mxu0 %v2887
    %v3565 = vpop.f32.mrf.mxu0
    %v3566 = vadd.f32 %v3127, %v3565
    %v3567 = vpop.f32.mrf.mxu0
    %v3568 = vadd.f32 %v3131, %v3567
    %3569 = vdwg.mxu0
    %vm3570 = vcmp.gt.f32.partialorder %v3211, 0.0
    %vm3571 = vcmp.gt.f32.partialorder %v3213, 0.0
    %vm3572 = vcmp.gt.f32.partialorder %v3282, 0.0
    %vm3573 = vcmp.gt.f32.partialorder %v3284, 0.0
    %vm3574 = vcmp.gt.f32.partialorder %v3353, 0.0
    %vm3575 = vcmp.gt.f32.partialorder %v3355, 0.0
    %vm3576 = vcmp.gt.f32.partialorder %v3424, 0.0
    %vm3577 = vcmp.gt.f32.partialorder %v3426, 0.0
    %vm3578 = vcmp.gt.f32.partialorder %v3495, 0.0
    %vm3579 = vcmp.gt.f32.partialorder %v3497, 0.0
    %vm3580 = vcmp.gt.f32.partialorder %v3566, 0.0
    %vm3581 = vcmp.gt.f32.partialorder %v3568, 0.0
    %v3582 = vmul.f32 %v3211, 0.01
    %v3583 = vmul.f32 %v3213, 0.01
    %v3584 = vmul.f32 %v3282, 0.01
    %v3585 = vmul.f32 %v3284, 0.01
    %v3586 = vmul.f32 %v3353, 0.01
    %v3587 = vmul.f32 %v3355, 0.01
    %v3588 = vmul.f32 %v3424, 0.01
    %v3589 = vmul.f32 %v3426, 0.01
    %v3590 = vmul.f32 %v3495, 0.01
    %v3591 = vmul.f32 %v3497, 0.01
    %v3592 = vmul.f32 %v3566, 0.01
    %v3593 = vmul.f32 %v3568, 0.01
    %v3594 = vsel %vm3570, %v3211, %v3582
    %v3595 = vsel %vm3571, %v3213, %v3583
    %v3596 = vsel %vm3572, %v3282, %v3584
    %v3597 = vsel %vm3573, %v3284, %v3585
    %v3598 = vsel %vm3574, %v3353, %v3586
    %v3599 = vsel %vm3575, %v3355, %v3587
    %v3600 = vsel %vm3576, %v3424, %v3588
    %v3601 = vsel %vm3577, %v3426, %v3589
    %v3602 = vsel %vm3578, %v3495, %v3590
    %v3603 = vsel %vm3579, %v3497, %v3591
    %v3604 = vsel %vm3580, %v3566, %v3592
    %v3605 = vsel %vm3581, %v3568, %v3593
    %v3618 = vcombine.low %v3594, %v3595
    %v3619 = vcombine.low %v3596, %v3597
    %v3621 = vunpack.c.l.s4 1983009808
    %v3622 = vunpack.c.0.s8 %v3621
    %v3623 = vlaneseq
    %v3624 = vshrl.u32 %v3623, 7
    %v3625 = vsub.s32 %v3622, %v3624
    %v3626 = vrot.slane %v3618, %v3625
    %v3628 = vunpack.c.l.s4 1983009808
    %v3629 = vunpack.c.0.s8 %v3628
    %v3630 = vlaneseq
    %v3631 = vshrl.u32 %v3630, 7
    %v3632 = vsub.s32 %v3629, %v3631
    %v3633 = vrot.slane %v3619, %v3632
    %v3634 = vcombine.low %v3626, %v3633
    %v3635 = vcombine.low %v3598, %v3599
    %v3636 = vcombine.low %v3600, %v3601
    %v3638 = vunpack.c.l.s4 1983009808
    %v3639 = vunpack.c.0.s8 %v3638
    %v3640 = vlaneseq
    %v3641 = vshrl.u32 %v3640, 7
    %v3642 = vsub.s32 %v3639, %v3641
    %v3643 = vrot.slane %v3635, %v3642
    %v3645 = vunpack.c.l.s4 1983009808
    %v3646 = vunpack.c.0.s8 %v3645
    %v3647 = vlaneseq
    %v3648 = vshrl.u32 %v3647, 7
    %v3649 = vsub.s32 %v3646, %v3648
    %v3650 = vrot.slane %v3636, %v3649
    %v3651 = vcombine.low %v3643, %v3650
    %v3652 = vcombine.low %v3602, %v3603
    %v3653 = vcombine.low %v3604, %v3605
    %v3655 = vunpack.c.l.s4 1983009808
    %v3656 = vunpack.c.0.s8 %v3655
    %v3657 = vlaneseq
    %v3658 = vshrl.u32 %v3657, 7
    %v3659 = vsub.s32 %v3656, %v3658
    %v3660 = vrot.slane %v3652, %v3659
    %v3662 = vunpack.c.l.s4 1983009808
    %v3663 = vunpack.c.0.s8 %v3662
    %v3664 = vlaneseq
    %v3665 = vshrl.u32 %v3664, 7
    %v3666 = vsub.s32 %v3663, %v3665
    %v3667 = vrot.slane %v3653, %v3666
    %v3668 = vcombine.low %v3660, %v3667
    %3672 = vst [vmem:[#allocation4] sm:$0xff] %v3634
    %3673 = vst [vmem:[#allocation4 + $0x8] sm:$0xff] %v3651
    %3674 = vst [vmem:[#allocation4 + $0x10] sm:$0xff] %v3668
    %v3675 = vld [vmem:[#allocation4] sm:$0x3]
    %3676 = vst.msk [vmem:[#allocation2 + $0xa] sm:$0x3] %vm89, %v3675
    %v3677 = vld [vmem:[#allocation4] sm:$0x3]
    %v3680 = vunpack.c.l.s4 1983009808
    %v3681 = vunpack.c.0.s8 %v3680
    %v3682 = vlaneseq
    %v3683 = vshrl.u32 %v3682, 7
    %v3684 = vsub.s32 %v3681, %v3683
    %v3685 = vrot.slane %v3677, %v3684
    %3686 = vrot.lane.b32.xlu0 %v3685, 64
    %v3687 = vpop.permute.xlu0 %3686
    %3689 = vst.msk [vmem:[#allocation2 + $0xc] sm:$0x3] %vm89, %v3687
    %v3690 = vld [vmem:[#allocation4 + $0x2] sm:$0x3]
    %3691 = vst.msk [vmem:[#allocation2 + $0xe] sm:$0x3] %vm89, %v3690
    %v3692 = vld [vmem:[#allocation4 + $0x2] sm:$0x3]
    %v3695 = vunpack.c.l.s4 1983009808
    %v3696 = vunpack.c.0.s8 %v3695
    %v3697 = vlaneseq
    %v3698 = vshrl.u32 %v3697, 7
    %v3699 = vsub.s32 %v3696, %v3698
    %v3700 = vrot.slane %v3692, %v3699
    %3701 = vrot.lane.b32.xlu0 %v3700, 64
    %v3702 = vpop.permute.xlu0 %3701
    %3704 = vst.msk [vmem:[#allocation2 + $0x10] sm:$0x3] %vm89, %v3702
    %v3705 = vld [vmem:[#allocation4 + $0x4] sm:$0x3]
    %3706 = vst.msk [vmem:[#allocation2 + $0x12] sm:$0x3] %vm89, %v3705
    %v3707 = vld [vmem:[#allocation4 + $0x4] sm:$0x3]
    %v3710 = vunpack.c.l.s4 1983009808
    %v3711 = vunpack.c.0.s8 %v3710
    %v3712 = vlaneseq
    %v3713 = vshrl.u32 %v3712, 7
    %v3714 = vsub.s32 %v3711, %v3713
    %v3715 = vrot.slane %v3707, %v3714
    %3716 = vrot.lane.b32.xlu0 %v3715, 64
    %v3717 = vpop.permute.xlu0 %3716
    %3719 = vst.msk [vmem:[#allocation2 + $0x14] sm:$0x3] %vm89, %v3717
    %v3720 = vld [vmem:[#allocation4 + $0x6] sm:$0x3]
    %3721 = vst.msk [vmem:[#allocation2 + $0x16] sm:$0x3] %vm89, %v3720
    %v3722 = vld [vmem:[#allocation4 + $0x6] sm:$0x3]
    %v3725 = vunpack.c.l.s4 1983009808
    %v3726 = vunpack.c.0.s8 %v3725
    %v3727 = vlaneseq
    %v3728 = vshrl.u32 %v3727, 7
    %v3729 = vsub.s32 %v3726, %v3728
    %v3730 = vrot.slane %v3722, %v3729
    %3731 = vrot.lane.b32.xlu0 %v3730, 64
    %v3732 = vpop.permute.xlu0 %3731
    %3734 = vst.msk [vmem:[#allocation2 + $0x18] sm:$0x3] %vm89, %v3732
    %v3735 = vld [vmem:[#allocation4 + $0x8] sm:$0x3]
    %3736 = vst.msk [vmem:[#allocation2 + $0x1a] sm:$0x3] %vm89, %v3735
    %v3737 = vld [vmem:[#allocation4 + $0x8] sm:$0x3]
    %v3740 = vunpack.c.l.s4 1983009808
    %v3741 = vunpack.c.0.s8 %v3740
    %v3742 = vlaneseq
    %v3743 = vshrl.u32 %v3742, 7
    %v3744 = vsub.s32 %v3741, %v3743
    %v3745 = vrot.slane %v3737, %v3744
    %3746 = vrot.lane.b32.xlu0 %v3745, 64
    %v3747 = vpop.permute.xlu0 %3746
    %3749 = vst.msk [vmem:[#allocation2 + $0x1c] sm:$0x3] %vm89, %v3747
    %v3750 = vld [vmem:[#allocation4 + $0xa] sm:$0x3]
    %3751 = vst.msk [vmem:[#allocation2 + $0x1e] sm:$0x3] %vm89, %v3750
    %v3752 = vld [vmem:[#allocation4 + $0xa] sm:$0x3]
    %v3755 = vunpack.c.l.s4 1983009808
    %v3756 = vunpack.c.0.s8 %v3755
    %v3757 = vlaneseq
    %v3758 = vshrl.u32 %v3757, 7
    %v3759 = vsub.s32 %v3756, %v3758
    %v3760 = vrot.slane %v3752, %v3759
    %3761 = vrot.lane.b32.xlu0 %v3760, 64
    %v3762 = vpop.permute.xlu0 %3761
    %3764 = vst.msk [vmem:[#allocation2 + $0x20] sm:$0x3] %vm89, %v3762
    %v3765 = vld [vmem:[#allocation4 + $0xc] sm:$0x3]
    %3766 = vst.msk [vmem:[#allocation2 + $0x22] sm:$0x3] %vm89, %v3765
    %v3767 = vld [vmem:[#allocation4 + $0xc] sm:$0x3]
    %v3770 = vunpack.c.l.s4 1983009808
    %v3771 = vunpack.c.0.s8 %v3770
    %v3772 = vlaneseq
    %v3773 = vshrl.u32 %v3772, 7
    %v3774 = vsub.s32 %v3771, %v3773
    %v3775 = vrot.slane %v3767, %v3774
    %3776 = vrot.lane.b32.xlu0 %v3775, 64
    %v3777 = vpop.permute.xlu0 %3776
    %3779 = vst.msk [vmem:[#allocation2 + $0x24] sm:$0x3] %vm89, %v3777
    %v3780 = vld [vmem:[#allocation4 + $0xe] sm:$0x3]
    %3781 = vst.msk [vmem:[#allocation2 + $0x26] sm:$0x3] %vm89, %v3780
    %v3782 = vld [vmem:[#allocation4 + $0xe] sm:$0x3]
    %v3785 = vunpack.c.l.s4 1983009808
    %v3786 = vunpack.c.0.s8 %v3785
    %v3787 = vlaneseq
    %v3788 = vshrl.u32 %v3787, 7
    %v3789 = vsub.s32 %v3786, %v3788
    %v3790 = vrot.slane %v3782, %v3789
    %3791 = vrot.lane.b32.xlu0 %v3790, 64
    %v3792 = vpop.permute.xlu0 %3791
    %3794 = vst.msk [vmem:[#allocation2 + $0x28] sm:$0x3] %vm89, %v3792
    %v3795 = vld [vmem:[#allocation4 + $0x10] sm:$0x3]
    %3796 = vst.msk [vmem:[#allocation2 + $0x2a] sm:$0x3] %vm89, %v3795
    %v3797 = vld [vmem:[#allocation4 + $0x10] sm:$0x3]
    %v3800 = vunpack.c.l.s4 1983009808
    %v3801 = vunpack.c.0.s8 %v3800
    %v3802 = vlaneseq
    %v3803 = vshrl.u32 %v3802, 7
    %v3804 = vsub.s32 %v3801, %v3803
    %v3805 = vrot.slane %v3797, %v3804
    %3806 = vrot.lane.b32.xlu0 %v3805, 64
    %v3807 = vpop.permute.xlu0 %3806
    %3809 = vst.msk [vmem:[#allocation2 + $0x2c] sm:$0x3] %vm89, %v3807
    %v3810 = vld [vmem:[#allocation4 + $0x12] sm:$0x3]
    %3811 = vst.msk [vmem:[#allocation2 + $0x2e] sm:$0x3] %vm89, %v3810
    %v3812 = vld [vmem:[#allocation4 + $0x12] sm:$0x3]
    %v3815 = vunpack.c.l.s4 1983009808
    %v3816 = vunpack.c.0.s8 %v3815
    %v3817 = vlaneseq
    %v3818 = vshrl.u32 %v3817, 7
    %v3819 = vsub.s32 %v3816, %v3818
    %v3820 = vrot.slane %v3812, %v3819
    %3821 = vrot.lane.b32.xlu0 %v3820, 64
    %v3822 = vpop.permute.xlu0 %3821
    %3824 = vst.msk [vmem:[#allocation2 + $0x30] sm:$0x3] %vm89, %v3822
    %v3825 = vld [vmem:[#allocation4 + $0x14] sm:$0x3]
    %3826 = vst.msk [vmem:[#allocation2 + $0x32] sm:$0x3] %vm89, %v3825
    %v3827 = vld [vmem:[#allocation4 + $0x14] sm:$0x3]
    %v3830 = vunpack.c.l.s4 1983009808
    %v3831 = vunpack.c.0.s8 %v3830
    %v3832 = vlaneseq
    %v3833 = vshrl.u32 %v3832, 7
    %v3834 = vsub.s32 %v3831, %v3833
    %v3835 = vrot.slane %v3827, %v3834
    %3836 = vrot.lane.b32.xlu0 %v3835, 64
    %v3837 = vpop.permute.xlu0 %3836
    %3839 = vst.msk [vmem:[#allocation2 + $0x34] sm:$0x3] %vm89, %v3837
    %v3840 = vld [vmem:[#allocation4 + $0x16] sm:$0x3]
    %3841 = vst.msk [vmem:[#allocation2 + $0x36] sm:$0x3] %vm89, %v3840
    %v3842 = vld [vmem:[#allocation4 + $0x16] sm:$0x3]
    %v3845 = vunpack.c.l.s4 1983009808
    %v3846 = vunpack.c.0.s8 %v3845
    %v3847 = vlaneseq
    %v3848 = vshrl.u32 %v3847, 7
    %v3849 = vsub.s32 %v3846, %v3848
    %v3850 = vrot.slane %v3842, %v3849
    %3851 = vrot.lane.b32.xlu0 %v3850, 64
    %v3852 = vpop.permute.xlu0 %3851
    %3854 = vst.msk [vmem:[#allocation2 + $0x38] sm:$0x3] %vm89, %v3852
    %v3855 = vld [vmem:[#allocation2] sm:$0xff]
    %v3856 = vld [vmem:[#allocation2 + $0x8] sm:$0xff]
    %v3857 = vld [vmem:[#allocation2 + $0x10] sm:$0xff]
    %v3858 = vld [vmem:[#allocation2 + $0x18] sm:$0xff]
    %v3859 = vld [vmem:[#allocation2 + $0x20] sm:$0xff]
    %v3860 = vld [vmem:[#allocation2 + $0x28] sm:$0xff]
    %3861 = vst.msk [vmem:[#allocation3] sm:$0xff] %vm87, %v3855
    %3862 = vst.msk [vmem:[#allocation3 + $0x30] sm:$0xff] %vm87, %v3856
    %3863 = vst.msk [vmem:[#allocation3 + $0x60] sm:$0xff] %vm87, %v3857
    %3864 = vst.msk [vmem:[#allocation3 + $0x90] sm:$0xff] %vm87, %v3858
    %3865 = vst.msk [vmem:[#allocation3 + $0xc0] sm:$0xff] %vm87, %v3859
    %3866 = vst.msk [vmem:[#allocation3 + $0xf0] sm:$0xff] %vm87, %v3860
    %v3867 = vld [vmem:[#allocation2 + $0x2] sm:$0xff]
    %v3868 = vld [vmem:[#allocation2 + $0xa] sm:$0xff]
    %v3869 = vld [vmem:[#allocation2 + $0x12] sm:$0xff]
    %v3870 = vld [vmem:[#allocation2 + $0x1a] sm:$0xff]
    %v3871 = vld [vmem:[#allocation2 + $0x22] sm:$0xff]
    %v3872 = vld [vmem:[#allocation2 + $0x2a] sm:$0xff]
    %3879 = vrot.lane.b32.xlu0 %v3867, 64
    %v3880 = vpop.permute.xlu0 %3879
    %3881 = vrot.lane.b32.xlu0 %v3868, 64
    %v3882 = vpop.permute.xlu0 %3881
    %3883 = vrot.lane.b32.xlu0 %v3869, 64
    %v3884 = vpop.permute.xlu0 %3883
    %3885 = vrot.lane.b32.xlu0 %v3870, 64
    %v3886 = vpop.permute.xlu0 %3885
    %3887 = vrot.lane.b32.xlu0 %v3871, 64
    %v3888 = vpop.permute.xlu0 %3887
    %3889 = vrot.lane.b32.xlu0 %v3872, 64
    %v3890 = vpop.permute.xlu0 %3889
    %vm3897 = vcmask 1048064
    %3898 = vst.msk [vmem:[#allocation3] sm:$0xff] %vm3897, %v3880
    %3899 = vst.msk [vmem:[#allocation3 + $0x30] sm:$0xff] %vm3897, %v3882
    %3900 = vst.msk [vmem:[#allocation3 + $0x60] sm:$0xff] %vm3897, %v3884
    %3901 = vst.msk [vmem:[#allocation3 + $0x90] sm:$0xff] %vm3897, %v3886
    %3902 = vst.msk [vmem:[#allocation3 + $0xc0] sm:$0xff] %vm3897, %v3888
    %3903 = vst.msk [vmem:[#allocation3 + $0xf0] sm:$0xff] %vm3897, %v3890
    %v3904 = vld [vmem:[#allocation2 + $0x4] sm:$0xff]
    %v3905 = vld [vmem:[#allocation2 + $0xc] sm:$0xff]
    %v3906 = vld [vmem:[#allocation2 + $0x14] sm:$0xff]
    %v3907 = vld [vmem:[#allocation2 + $0x1c] sm:$0xff]
    %v3908 = vld [vmem:[#allocation2 + $0x24] sm:$0xff]
    %v3909 = vld [vmem:[#allocation2 + $0x2c] sm:$0xff]
    %3910 = vst.msk [vmem:[#allocation3 + $0x8] sm:$0xff] %vm87, %v3904
    %3911 = vst.msk [vmem:[#allocation3 + $0x38] sm:$0xff] %vm87, %v3905
    %3912 = vst.msk [vmem:[#allocation3 + $0x68] sm:$0xff] %vm87, %v3906
    %3913 = vst.msk [vmem:[#allocation3 + $0x98] sm:$0xff] %vm87, %v3907
    %3914 = vst.msk [vmem:[#allocation3 + $0xc8] sm:$0xff] %vm87, %v3908
    %3915 = vst.msk [vmem:[#allocation3 + $0xf8] sm:$0xff] %vm87, %v3909
    %v3916 = vld [vmem:[#allocation2 + $0x6] sm:$0xff]
    %v3917 = vld [vmem:[#allocation2 + $0xe] sm:$0xff]
    %v3918 = vld [vmem:[#allocation2 + $0x16] sm:$0xff]
    %v3919 = vld [vmem:[#allocation2 + $0x1e] sm:$0xff]
    %v3920 = vld [vmem:[#allocation2 + $0x26] sm:$0xff]
    %v3921 = vld [vmem:[#allocation2 + $0x2e] sm:$0xff]
    %3928 = vrot.lane.b32.xlu0 %v3916, 64
    %v3929 = vpop.permute.xlu0 %3928
    %3930 = vrot.lane.b32.xlu0 %v3917, 64
    %v3931 = vpop.permute.xlu0 %3930
    %3932 = vrot.lane.b32.xlu0 %v3918, 64
    %v3933 = vpop.permute.xlu0 %3932
    %3934 = vrot.lane.b32.xlu0 %v3919, 64
    %v3935 = vpop.permute.xlu0 %3934
    %3936 = vrot.lane.b32.xlu0 %v3920, 64
    %v3937 = vpop.permute.xlu0 %3936
    %3938 = vrot.lane.b32.xlu0 %v3921, 64
    %v3939 = vpop.permute.xlu0 %3938
    %3946 = vst.msk [vmem:[#allocation3 + $0x8] sm:$0xff] %vm3897, %v3929
    %3947 = vst.msk [vmem:[#allocation3 + $0x38] sm:$0xff] %vm3897, %v3931
    %3948 = vst.msk [vmem:[#allocation3 + $0x68] sm:$0xff] %vm3897, %v3933
    %3949 = vst.msk [vmem:[#allocation3 + $0x98] sm:$0xff] %vm3897, %v3935
    %3950 = vst.msk [vmem:[#allocation3 + $0xc8] sm:$0xff] %vm3897, %v3937
    %3951 = vst.msk [vmem:[#allocation3 + $0xf8] sm:$0xff] %vm3897, %v3939
    %v3952 = vld [vmem:[#allocation2 + $0x8] sm:$0xff]
    %v3953 = vld [vmem:[#allocation2 + $0x10] sm:$0xff]
    %v3954 = vld [vmem:[#allocation2 + $0x18] sm:$0xff]
    %v3955 = vld [vmem:[#allocation2 + $0x20] sm:$0xff]
    %v3956 = vld [vmem:[#allocation2 + $0x28] sm:$0xff]
    %v3957 = vld [vmem:[#allocation2 + $0x30] sm:$0xff]
    %3958 = vst.msk [vmem:[#allocation3 + $0x10] sm:$0xff] %vm87, %v3952
    %3959 = vst.msk [vmem:[#allocation3 + $0x40] sm:$0xff] %vm87, %v3953
    %3960 = vst.msk [vmem:[#allocation3 + $0x70] sm:$0xff] %vm87, %v3954
    %3961 = vst.msk [vmem:[#allocation3 + $0xa0] sm:$0xff] %vm87, %v3955
    %3962 = vst.msk [vmem:[#allocation3 + $0xd0] sm:$0xff] %vm87, %v3956
    %3963 = vst.msk [vmem:[#allocation3 + $0x100] sm:$0xff] %vm87, %v3957
    %v3964 = vld [vmem:[#allocation2 + $0xa] sm:$0xff]
    %v3965 = vld [vmem:[#allocation2 + $0x12] sm:$0xff]
    %v3966 = vld [vmem:[#allocation2 + $0x1a] sm:$0xff]
    %v3967 = vld [vmem:[#allocation2 + $0x22] sm:$0xff]
    %v3968 = vld [vmem:[#allocation2 + $0x2a] sm:$0xff]
    %v3969 = vld [vmem:[#allocation2 + $0x32] sm:$0xff]
    %3976 = vrot.lane.b32.xlu0 %v3964, 64
    %v3977 = vpop.permute.xlu0 %3976
    %3978 = vrot.lane.b32.xlu0 %v3965, 64
    %v3979 = vpop.permute.xlu0 %3978
    %3980 = vrot.lane.b32.xlu0 %v3966, 64
    %v3981 = vpop.permute.xlu0 %3980
    %3982 = vrot.lane.b32.xlu0 %v3967, 64
    %v3983 = vpop.permute.xlu0 %3982
    %3984 = vrot.lane.b32.xlu0 %v3968, 64
    %v3985 = vpop.permute.xlu0 %3984
    %3986 = vrot.lane.b32.xlu0 %v3969, 64
    %v3987 = vpop.permute.xlu0 %3986
    %3994 = vst.msk [vmem:[#allocation3 + $0x10] sm:$0xff] %vm3897, %v3977
    %3995 = vst.msk [vmem:[#allocation3 + $0x40] sm:$0xff] %vm3897, %v3979
    %3996 = vst.msk [vmem:[#allocation3 + $0x70] sm:$0xff] %vm3897, %v3981
    %3997 = vst.msk [vmem:[#allocation3 + $0xa0] sm:$0xff] %vm3897, %v3983
    %3998 = vst.msk [vmem:[#allocation3 + $0xd0] sm:$0xff] %vm3897, %v3985
    %3999 = vst.msk [vmem:[#allocation3 + $0x100] sm:$0xff] %vm3897, %v3987
    %v4000 = vld [vmem:[#allocation2 + $0xc] sm:$0xff]
    %v4001 = vld [vmem:[#allocation2 + $0x14] sm:$0xff]
    %v4002 = vld [vmem:[#allocation2 + $0x1c] sm:$0xff]
    %v4003 = vld [vmem:[#allocation2 + $0x24] sm:$0xff]
    %v4004 = vld [vmem:[#allocation2 + $0x2c] sm:$0xff]
    %v4005 = vld [vmem:[#allocation2 + $0x34] sm:$0xff]
    %4006 = vst.msk [vmem:[#allocation3 + $0x18] sm:$0xff] %vm87, %v4000
    %4007 = vst.msk [vmem:[#allocation3 + $0x48] sm:$0xff] %vm87, %v4001
    %4008 = vst.msk [vmem:[#allocation3 + $0x78] sm:$0xff] %vm87, %v4002
    %4009 = vst.msk [vmem:[#allocation3 + $0xa8] sm:$0xff] %vm87, %v4003
    %4010 = vst.msk [vmem:[#allocation3 + $0xd8] sm:$0xff] %vm87, %v4004
    %4011 = vst.msk [vmem:[#allocation3 + $0x108] sm:$0xff] %vm87, %v4005
    %v4012 = vld [vmem:[#allocation2 + $0xe] sm:$0xff]
    %v4013 = vld [vmem:[#allocation2 + $0x16] sm:$0xff]
    %v4014 = vld [vmem:[#allocation2 + $0x1e] sm:$0xff]
    %v4015 = vld [vmem:[#allocation2 + $0x26] sm:$0xff]
    %v4016 = vld [vmem:[#allocation2 + $0x2e] sm:$0xff]
    %v4017 = vld [vmem:[#allocation2 + $0x36] sm:$0xff]
    %4024 = vrot.lane.b32.xlu0 %v4012, 64
    %v4025 = vpop.permute.xlu0 %4024
    %4026 = vrot.lane.b32.xlu0 %v4013, 64
    %v4027 = vpop.permute.xlu0 %4026
    %4028 = vrot.lane.b32.xlu0 %v4014, 64
    %v4029 = vpop.permute.xlu0 %4028
    %4030 = vrot.lane.b32.xlu0 %v4015, 64
    %v4031 = vpop.permute.xlu0 %4030
    %4032 = vrot.lane.b32.xlu0 %v4016, 64
    %v4033 = vpop.permute.xlu0 %4032
    %4034 = vrot.lane.b32.xlu0 %v4017, 64
    %v4035 = vpop.permute.xlu0 %4034
    %4042 = vst.msk [vmem:[#allocation3 + $0x18] sm:$0xff] %vm3897, %v4025
    %4043 = vst.msk [vmem:[#allocation3 + $0x48] sm:$0xff] %vm3897, %v4027
    %4044 = vst.msk [vmem:[#allocation3 + $0x78] sm:$0xff] %vm3897, %v4029
    %4045 = vst.msk [vmem:[#allocation3 + $0xa8] sm:$0xff] %vm3897, %v4031
    %4046 = vst.msk [vmem:[#allocation3 + $0xd8] sm:$0xff] %vm3897, %v4033
    %4047 = vst.msk [vmem:[#allocation3 + $0x108] sm:$0xff] %vm3897, %v4035
    %v4048 = vld [vmem:[#allocation2 + $0x10] sm:$0xff]
    %v4049 = vld [vmem:[#allocation2 + $0x18] sm:$0xff]
    %v4050 = vld [vmem:[#allocation2 + $0x20] sm:$0xff]
    %v4051 = vld [vmem:[#allocation2 + $0x28] sm:$0xff]
    %v4052 = vld [vmem:[#allocation2 + $0x30] sm:$0xff]
    %v4053 = vld [vmem:[#allocation2 + $0x38] sm:$0xff]
    %4054 = vst.msk [vmem:[#allocation3 + $0x20] sm:$0xff] %vm87, %v4048
    %4055 = vst.msk [vmem:[#allocation3 + $0x50] sm:$0xff] %vm87, %v4049
    %4056 = vst.msk [vmem:[#allocation3 + $0x80] sm:$0xff] %vm87, %v4050
    %4057 = vst.msk [vmem:[#allocation3 + $0xb0] sm:$0xff] %vm87, %v4051
    %4058 = vst.msk [vmem:[#allocation3 + $0xe0] sm:$0xff] %vm87, %v4052
    %4059 = vst.msk [vmem:[#allocation3 + $0x110] sm:$0xff] %vm87, %v4053
    %v4060 = vld [vmem:[#allocation2 + $0x12] sm:$0xff]
    %v4061 = vld [vmem:[#allocation2 + $0x1a] sm:$0xff]
    %v4062 = vld [vmem:[#allocation2 + $0x22] sm:$0xff]
    %v4063 = vld [vmem:[#allocation2 + $0x2a] sm:$0xff]
    %v4064 = vld [vmem:[#allocation2 + $0x32] sm:$0xff]
    %v4065 = vld [vmem:[#allocation2 + $0x3a] sm:$0xff]
    %4072 = vrot.lane.b32.xlu0 %v4060, 64
    %v4073 = vpop.permute.xlu0 %4072
    %4074 = vrot.lane.b32.xlu0 %v4061, 64
    %v4075 = vpop.permute.xlu0 %4074
    %4076 = vrot.lane.b32.xlu0 %v4062, 64
    %v4077 = vpop.permute.xlu0 %4076
    %4078 = vrot.lane.b32.xlu0 %v4063, 64
    %v4079 = vpop.permute.xlu0 %4078
    %4080 = vrot.lane.b32.xlu0 %v4064, 64
    %v4081 = vpop.permute.xlu0 %4080
    %4082 = vrot.lane.b32.xlu0 %v4065, 64
    %v4083 = vpop.permute.xlu0 %4082
    %4090 = vst.msk [vmem:[#allocation3 + $0x20] sm:$0xff] %vm3897, %v4073
    %4091 = vst.msk [vmem:[#allocation3 + $0x50] sm:$0xff] %vm3897, %v4075
    %4092 = vst.msk [vmem:[#allocation3 + $0x80] sm:$0xff] %vm3897, %v4077
    %4093 = vst.msk [vmem:[#allocation3 + $0xb0] sm:$0xff] %vm3897, %v4079
    %4094 = vst.msk [vmem:[#allocation3 + $0xe0] sm:$0xff] %vm3897, %v4081
    %4095 = vst.msk [vmem:[#allocation3 + $0x110] sm:$0xff] %vm3897, %v4083
    %v4096 = vld [vmem:[#allocation2 + $0x14] sm:$0xff]
    %v4097 = vld [vmem:[#allocation2 + $0x1c] sm:$0xff]
    %v4098 = vld [vmem:[#allocation2 + $0x24] sm:$0xff]
    %v4099 = vld [vmem:[#allocation2 + $0x2c] sm:$0xff]
    %v4100 = vld [vmem:[#allocation2 + $0x34] sm:$0xff]
    %v4101 = vld [vmem:[#allocation2 + $0x3c] sm:$0xff]
    %4102 = vst.msk [vmem:[#allocation3 + $0x28] sm:$0xff] %vm87, %v4096
    %4103 = vst.msk [vmem:[#allocation3 + $0x58] sm:$0xff] %vm87, %v4097
    %4104 = vst.msk [vmem:[#allocation3 + $0x88] sm:$0xff] %vm87, %v4098
    %4105 = vst.msk [vmem:[#allocation3 + $0xb8] sm:$0xff] %vm87, %v4099
    %4106 = vst.msk [vmem:[#allocation3 + $0xe8] sm:$0xff] %vm87, %v4100
    %4107 = vst.msk [vmem:[#allocation3 + $0x118] sm:$0xff] %vm87, %v4101
    %v4108 = vld [vmem:[#allocation3] sm:$0xff]
    %v4109 = vld [vmem:[#allocation3 + $0x8] sm:$0xff]
    %v4110 = vld [vmem:[#allocation3 + $0x10] sm:$0xff]
    %v4111 = vld [vmem:[#allocation3 + $0x18] sm:$0xff]
    %v4112 = vld [vmem:[#allocation3 + $0x20] sm:$0xff]
    %v4113 = vld [vmem:[#allocation3 + $0x28] sm:$0xff]
    %v4114 = vld [vmem:[#allocation3 + $0x30] sm:$0xff]
    %v4115 = vld [vmem:[#allocation3 + $0x38] sm:$0xff]
    %v4116 = vld [vmem:[#allocation3 + $0x40] sm:$0xff]
    %v4117 = vld [vmem:[#allocation3 + $0x48] sm:$0xff]
    %v4118 = vld [vmem:[#allocation3 + $0x50] sm:$0xff]
    %v4119 = vld [vmem:[#allocation3 + $0x58] sm:$0xff]
    %v4120 = vld [vmem:[#allocation3 + $0x60] sm:$0xff]
    %v4121 = vld [vmem:[#allocation3 + $0x68] sm:$0xff]
    %v4122 = vld [vmem:[#allocation3 + $0x70] sm:$0xff]
    %v4123 = vld [vmem:[#allocation3 + $0x78] sm:$0xff]
    %v4124 = vld [vmem:[#allocation3 + $0x80] sm:$0xff]
    %v4125 = vld [vmem:[#allocation3 + $0x88] sm:$0xff]
    %v4126 = vld [vmem:[#allocation3 + $0x90] sm:$0xff]
    %v4127 = vld [vmem:[#allocation3 + $0x98] sm:$0xff]
    %v4128 = vld [vmem:[#allocation3 + $0xa0] sm:$0xff]
    %v4129 = vld [vmem:[#allocation3 + $0xa8] sm:$0xff]
    %v4130 = vld [vmem:[#allocation3 + $0xb0] sm:$0xff]
    %v4131 = vld [vmem:[#allocation3 + $0xb8] sm:$0xff]
    %v4132 = vld [vmem:[#allocation3 + $0xc0] sm:$0xff]
    %v4133 = vld [vmem:[#allocation3 + $0xc8] sm:$0xff]
    %v4134 = vld [vmem:[#allocation3 + $0xd0] sm:$0xff]
    %v4135 = vld [vmem:[#allocation3 + $0xd8] sm:$0xff]
    %v4136 = vld [vmem:[#allocation3 + $0xe0] sm:$0xff]
    %v4137 = vld [vmem:[#allocation3 + $0xe8] sm:$0xff]
    %v4138 = vld [vmem:[#allocation3 + $0xf0] sm:$0xff]
    %v4139 = vld [vmem:[#allocation3 + $0xf8] sm:$0xff]
    %v4140 = vld [vmem:[#allocation3 + $0x100] sm:$0xff]
    %v4141 = vld [vmem:[#allocation3 + $0x108] sm:$0xff]
    %v4142 = vld [vmem:[#allocation3 + $0x110] sm:$0xff]
    %v4143 = vld [vmem:[#allocation3 + $0x118] sm:$0xff]
    %v4144 = vld [vmem:[%s16] sm:$0xff]
    %v4145 = vld [vmem:[%s16 + $0x8] sm:$0xff]
    %v4146 = vld [vmem:[%s16 + $0x10] sm:$0xff]
    %v4147 = vld [vmem:[%s16 + $0x18] sm:$0xff]
    %v4148 = vld [vmem:[%s16 + $0x20] sm:$0xff]
    %v4149 = vld [vmem:[%s16 + $0x28] sm:$0xff]
    %v4150 = vld [vmem:[%s16 + $0x30] sm:$0xff]
    %v4151 = vld [vmem:[%s16 + $0x38] sm:$0xff]
    %v4152 = vld [vmem:[%s16 + $0x40] sm:$0xff]
    %v4153 = vld [vmem:[%s16 + $0x48] sm:$0xff]
    %v4154 = vld [vmem:[%s16 + $0x50] sm:$0xff]
    %v4155 = vld [vmem:[%s16 + $0x58] sm:$0xff]
    %v4156 = vld [vmem:[%s16 + $0x60] sm:$0xff]
    %v4157 = vld [vmem:[%s16 + $0x68] sm:$0xff]
    %v4158 = vld [vmem:[%s16 + $0x70] sm:$0xff]
    %v4159 = vld [vmem:[%s16 + $0x78] sm:$0xff]
    %v4160 = vld [vmem:[%s16 + $0x80] sm:$0xff]
    %v4161 = vld [vmem:[%s16 + $0x88] sm:$0xff]
    %v4162 = vld [vmem:[%s16 + $0x90] sm:$0xff]
    %v4163 = vld [vmem:[%s16 + $0x98] sm:$0xff]
    %v4164 = vld [vmem:[%s16 + $0xa0] sm:$0xff]
    %v4165 = vld [vmem:[%s16 + $0xa8] sm:$0xff]
    %v4166 = vld [vmem:[%s16 + $0xb0] sm:$0xff]
    %v4167 = vld [vmem:[%s16 + $0xb8] sm:$0xff]
    %v4168 = vld [vmem:[%s16 + $0xc0] sm:$0xff]
    %v4169 = vld [vmem:[%s16 + $0xc8] sm:$0xff]
    %v4170 = vld [vmem:[%s16 + $0xd0] sm:$0xff]
    %v4171 = vld [vmem:[%s16 + $0xd8] sm:$0xff]
    %v4172 = vld [vmem:[%s16 + $0xe0] sm:$0xff]
    %v4173 = vld [vmem:[%s16 + $0xe8] sm:$0xff]
    %v4174 = vld [vmem:[%s16 + $0xf0] sm:$0xff]
    %v4175 = vld [vmem:[%s16 + $0xf8] sm:$0xff]
    %v4176 = vld [vmem:[%s16 + $0x100] sm:$0xff]
    %v4177 = vld [vmem:[%s16 + $0x108] sm:$0xff]
    %v4178 = vld [vmem:[%s16 + $0x110] sm:$0xff]
    %v4179 = vld [vmem:[%s16 + $0x118] sm:$0xff]
    %v4180 = vld [vmem:[%s16 + $0x120] sm:$0xff]
    %v4181 = vld [vmem:[%s16 + $0x128] sm:$0xff]
    %v4182 = vld [vmem:[%s16 + $0x130] sm:$0xff]
    %v4183 = vld [vmem:[%s16 + $0x138] sm:$0xff]
    %v4184 = vld [vmem:[%s16 + $0x140] sm:$0xff]
    %v4185 = vld [vmem:[%s16 + $0x148] sm:$0xff]
    %v4186 = vld [vmem:[%s16 + $0x150] sm:$0xff]
    %v4187 = vld [vmem:[%s16 + $0x158] sm:$0xff]
    %v4188 = vld [vmem:[%s16 + $0x160] sm:$0xff]
    %v4189 = vld [vmem:[%s16 + $0x168] sm:$0xff]
    %v4190 = vld [vmem:[%s16 + $0x170] sm:$0xff]
    %v4191 = vld [vmem:[%s16 + $0x178] sm:$0xff]
    %v4192 = vld [vmem:[%s16 + $0x180] sm:$0xff]
    %v4193 = vld [vmem:[%s16 + $0x188] sm:$0xff]
    %v4194 = vld [vmem:[%s16 + $0x190] sm:$0xff]
    %v4195 = vld [vmem:[%s16 + $0x198] sm:$0xff]
    %v4196 = vld [vmem:[%s16 + $0x1a0] sm:$0xff]
    %v4197 = vld [vmem:[%s16 + $0x1a8] sm:$0xff]
    %v4198 = vld [vmem:[%s16 + $0x1b0] sm:$0xff]
    %v4199 = vld [vmem:[%s16 + $0x1b8] sm:$0xff]
    %v4200 = vld [vmem:[%s16 + $0x1c0] sm:$0xff]
    %v4201 = vld [vmem:[%s16 + $0x1c8] sm:$0xff]
    %v4202 = vld [vmem:[%s16 + $0x1d0] sm:$0xff]
    %v4203 = vld [vmem:[%s16 + $0x1d8] sm:$0xff]
    %v4204 = vld [vmem:[%s16 + $0x1e0] sm:$0xff]
    %v4205 = vld [vmem:[%s16 + $0x1e8] sm:$0xff]
    %v4206 = vld [vmem:[%s16 + $0x1f0] sm:$0xff]
    %v4207 = vld [vmem:[%s16 + $0x1f8] sm:$0xff]
    %v4208 = vld [vmem:[%s16 + $0x200] sm:$0xff]
    %v4209 = vld [vmem:[%s16 + $0x208] sm:$0xff]
    %v4210 = vld [vmem:[%s16 + $0x210] sm:$0xff]
    %v4211 = vld [vmem:[%s16 + $0x218] sm:$0xff]
    %v4212 = vld [vmem:[%s16 + $0x220] sm:$0xff]
    %v4213 = vld [vmem:[%s16 + $0x228] sm:$0xff]
    %v4214 = vld [vmem:[%s16 + $0x230] sm:$0xff]
    %v4215 = vld [vmem:[%s16 + $0x238] sm:$0xff]
    %v4216 = vld [vmem:[%s16 + $0x240] sm:$0xff]
    %v4217 = vld [vmem:[%s16 + $0x248] sm:$0xff]
    %v4218 = vld [vmem:[%s16 + $0x250] sm:$0xff]
    %v4219 = vld [vmem:[%s16 + $0x258] sm:$0xff]
    %v4220 = vld [vmem:[%s16 + $0x260] sm:$0xff]
    %v4221 = vld [vmem:[%s16 + $0x268] sm:$0xff]
    %v4222 = vld [vmem:[%s16 + $0x270] sm:$0xff]
    %v4223 = vld [vmem:[%s16 + $0x278] sm:$0xff]
    %v4224 = vld [vmem:[%s16 + $0x280] sm:$0xff]
    %v4225 = vld [vmem:[%s16 + $0x288] sm:$0xff]
    %v4226 = vld [vmem:[%s16 + $0x290] sm:$0xff]
    %v4227 = vld [vmem:[%s16 + $0x298] sm:$0xff]
    %v4228 = vld [vmem:[%s16 + $0x2a0] sm:$0xff]
    %v4229 = vld [vmem:[%s16 + $0x2a8] sm:$0xff]
    %v4230 = vld [vmem:[%s16 + $0x2b0] sm:$0xff]
    %v4231 = vld [vmem:[%s16 + $0x2b8] sm:$0xff]
    %v4232 = vld [vmem:[%s17] sm:$0x1]
    %v4234 = vlaneseq
    %v4235 = vshrl.u32 %v4234, 7
    %v4236 = vsub.s32 0, %v4235
    %v4237 = vrot.slane %v4232, %v4236
    %v4240 = vsel %vm87, %v4113, 0
    %v4243 = vsel %vm87, %v4119, 0
    %v4246 = vsel %vm87, %v4125, 0
    %v4249 = vsel %vm87, %v4131, 0
    %v4252 = vsel %vm87, %v4137, 0
    %v4255 = vsel %vm87, %v4143, 0
    %4257 = vmatprep.subr.mxu0 0.0
    %4258 = vmatpush1.msra.mxu0 %v4159
    %4259 = vmatprep.subr.mxu0 0.0
    %4260 = vmatpush1.msra.mxu0 %v4158
    %4261 = vmatprep.subr.mxu0 0.0
    %4262 = vmatpush1.msra.mxu0 %v4157
    %4263 = vmatprep.subr.mxu0 0.0
    %4264 = vmatpush1.msra.mxu0 %v4156
    %4265 = vmatprep.subr.mxu0 0.0
    %4266 = vmatpush1.msra.mxu0 %v4155
    %4267 = vmatprep.subr.mxu0 0.0
    %4268 = vmatpush1.msra.mxu0 %v4154
    %4269 = vmatprep.subr.mxu0 0.0
    %4270 = vmatpush1.msra.mxu0 %v4153
    %4271 = vmatprep.subr.mxu0 0.0
    %4272 = vmatpush1.msra.mxu0 %v4152
    %4273 = vmatprep.subr.mxu0 0.0
    %4274 = vmatpush1.msra.mxu0 %v4151
    %4275 = vmatprep.subr.mxu0 0.0
    %4276 = vmatpush1.msra.mxu0 %v4150
    %4277 = vmatprep.subr.mxu0 0.0
    %4278 = vmatpush1.msra.mxu0 %v4149
    %4279 = vmatprep.subr.mxu0 0.0
    %4280 = vmatpush1.msra.mxu0 %v4148
    %4281 = vmatprep.subr.mxu0 0.0
    %4282 = vmatpush1.msra.mxu0 %v4147
    %4283 = vmatprep.subr.mxu0 0.0
    %4284 = vmatpush1.msra.mxu0 %v4146
    %4285 = vmatprep.subr.mxu0 0.0
    %4286 = vmatpush1.msra.mxu0 %v4145
    %4287 = vmatprep.subr.mxu0 0.0
    %4288 = vmatpush1.msra.mxu0 %v4144
    %4289 = vmatprep.subr.mxu0 0.0
    %4290 = vmatpush2.msra.mxu0 %v4175
    %4291 = vmatprep.subr.mxu0 0.0
    %4292 = vmatpush2.msra.mxu0 %v4174
    %4293 = vmatprep.subr.mxu0 0.0
    %4294 = vmatpush2.msra.mxu0 %v4173
    %4295 = vmatprep.subr.mxu0 0.0
    %4296 = vmatpush2.msra.mxu0 %v4172
    %4297 = vmatprep.subr.mxu0 0.0
    %4298 = vmatpush2.msra.mxu0 %v4171
    %4299 = vmatprep.subr.mxu0 0.0
    %4300 = vmatpush2.msra.mxu0 %v4170
    %4301 = vmatprep.subr.mxu0 0.0
    %4302 = vmatpush2.msra.mxu0 %v4169
    %4303 = vmatprep.subr.mxu0 0.0
    %4304 = vmatpush2.msra.mxu0 %v4168
    %4305 = vmatprep.subr.mxu0 0.0
    %4306 = vmatpush2.msra.mxu0 %v4167
    %4307 = vmatprep.subr.mxu0 0.0
    %4308 = vmatpush2.msra.mxu0 %v4166
    %4309 = vmatprep.subr.mxu0 0.0
    %4310 = vmatpush2.msra.mxu0 %v4165
    %4311 = vmatprep.subr.mxu0 0.0
    %4312 = vmatpush2.msra.mxu0 %v4164
    %4313 = vmatprep.subr.mxu0 0.0
    %4314 = vmatpush2.msra.mxu0 %v4163
    %4315 = vmatprep.subr.mxu0 0.0
    %4316 = vmatpush2.msra.mxu0 %v4162
    %4317 = vmatprep.subr.mxu0 0.0
    %4318 = vmatpush2.msra.mxu0 %v4161
    %4319 = vmatprep.subr.mxu0 0.0
    %4320 = vmatpush2.msra.mxu0 %v4160
    %4321 = vmatprep.mubr.f32.mxu0 %v4109
    %4322 = vmatmul.mubr.f32.gmra.mxu0 %v4108
    %v4323 = vpop.f32.mrf.mxu0
    %v4324 = vadd.f32 %v4237, %v4323
    %v4325 = vpop.f32.mrf.mxu0
    %4326 = vmatprep.mubr.f32.mxu0 %v4115
    %4327 = vmatmul.mubr.f32.gmra.mxu0 %v4114
    %v4328 = vpop.f32.mrf.mxu0
    %v4329 = vadd.f32 %v4237, %v4328
    %v4330 = vpop.f32.mrf.mxu0
    %4331 = vmatprep.mubr.f32.mxu0 %v4121
    %4332 = vmatmul.mubr.f32.gmra.mxu0 %v4120
    %v4333 = vpop.f32.mrf.mxu0
    %v4334 = vadd.f32 %v4237, %v4333
    %v4335 = vpop.f32.mrf.mxu0
    %4336 = vmatprep.mubr.f32.mxu0 %v4127
    %4337 = vmatmul.mubr.f32.gmra.mxu0 %v4126
    %v4338 = vpop.f32.mrf.mxu0
    %v4339 = vadd.f32 %v4237, %v4338
    %v4340 = vpop.f32.mrf.mxu0
    %4341 = vmatprep.mubr.f32.mxu0 %v4133
    %4342 = vmatmul.mubr.f32.gmra.mxu0 %v4132
    %v4343 = vpop.f32.mrf.mxu0
    %v4344 = vadd.f32 %v4237, %v4343
    %v4345 = vpop.f32.mrf.mxu0
    %4346 = vmatprep.mubr.f32.mxu0 %v4139
    %4347 = vmatmul.mubr.f32.gmra.mxu0 %v4138
    %v4348 = vpop.f32.mrf.mxu0
    %v4349 = vadd.f32 %v4237, %v4348
    %v4350 = vpop.f32.mrf.mxu0
    %4351 = vdwg.mxu0
    %4352 = vmatprep.subr.mxu0 0.0
    %4353 = vmatpush1.msra.mxu0 %v4191
    %4354 = vmatprep.subr.mxu0 0.0
    %4355 = vmatpush1.msra.mxu0 %v4190
    %4356 = vmatprep.subr.mxu0 0.0
    %4357 = vmatpush1.msra.mxu0 %v4189
    %4358 = vmatprep.subr.mxu0 0.0
    %4359 = vmatpush1.msra.mxu0 %v4188
    %4360 = vmatprep.subr.mxu0 0.0
    %4361 = vmatpush1.msra.mxu0 %v4187
    %4362 = vmatprep.subr.mxu0 0.0
    %4363 = vmatpush1.msra.mxu0 %v4186
    %4364 = vmatprep.subr.mxu0 0.0
    %4365 = vmatpush1.msra.mxu0 %v4185
    %4366 = vmatprep.subr.mxu0 0.0
    %4367 = vmatpush1.msra.mxu0 %v4184
    %4368 = vmatprep.subr.mxu0 0.0
    %4369 = vmatpush1.msra.mxu0 %v4183
    %4370 = vmatprep.subr.mxu0 0.0
    %4371 = vmatpush1.msra.mxu0 %v4182
    %4372 = vmatprep.subr.mxu0 0.0
    %4373 = vmatpush1.msra.mxu0 %v4181
    %4374 = vmatprep.subr.mxu0 0.0
    %4375 = vmatpush1.msra.mxu0 %v4180
    %4376 = vmatprep.subr.mxu0 0.0
    %4377 = vmatpush1.msra.mxu0 %v4179
    %4378 = vmatprep.subr.mxu0 0.0
    %4379 = vmatpush1.msra.mxu0 %v4178
    %4380 = vmatprep.subr.mxu0 0.0
    %4381 = vmatpush1.msra.mxu0 %v4177
    %4382 = vmatprep.subr.mxu0 0.0
    %4383 = vmatpush1.msra.mxu0 %v4176
    %4384 = vmatprep.subr.mxu0 0.0
    %4385 = vmatpush2.msra.mxu0 %v4207
    %4386 = vmatprep.subr.mxu0 0.0
    %4387 = vmatpush2.msra.mxu0 %v4206
    %4388 = vmatprep.subr.mxu0 0.0
    %4389 = vmatpush2.msra.mxu0 %v4205
    %4390 = vmatprep.subr.mxu0 0.0
    %4391 = vmatpush2.msra.mxu0 %v4204
    %4392 = vmatprep.subr.mxu0 0.0
    %4393 = vmatpush2.msra.mxu0 %v4203
    %4394 = vmatprep.subr.mxu0 0.0
    %4395 = vmatpush2.msra.mxu0 %v4202
    %4396 = vmatprep.subr.mxu0 0.0
    %4397 = vmatpush2.msra.mxu0 %v4201
    %4398 = vmatprep.subr.mxu0 0.0
    %4399 = vmatpush2.msra.mxu0 %v4200
    %4400 = vmatprep.subr.mxu0 0.0
    %4401 = vmatpush2.msra.mxu0 %v4199
    %4402 = vmatprep.subr.mxu0 0.0
    %4403 = vmatpush2.msra.mxu0 %v4198
    %4404 = vmatprep.subr.mxu0 0.0
    %4405 = vmatpush2.msra.mxu0 %v4197
    %4406 = vmatprep.subr.mxu0 0.0
    %4407 = vmatpush2.msra.mxu0 %v4196
    %4408 = vmatprep.subr.mxu0 0.0
    %4409 = vmatpush2.msra.mxu0 %v4195
    %4410 = vmatprep.subr.mxu0 0.0
    %4411 = vmatpush2.msra.mxu0 %v4194
    %4412 = vmatprep.subr.mxu0 0.0
    %4413 = vmatpush2.msra.mxu0 %v4193
    %4414 = vmatprep.subr.mxu0 0.0
    %4415 = vmatpush2.msra.mxu0 %v4192
    %4416 = vmatprep.mubr.f32.mxu0 %v4111
    %4417 = vmatmul.mubr.f32.gmra.mxu0 %v4110
    %v4418 = vpop.f32.mrf.mxu0
    %v4419 = vadd.f32 %v4324, %v4418
    %v4420 = vpop.f32.mrf.mxu0
    %4421 = vmatprep.mubr.f32.mxu0 %v4117
    %4422 = vmatmul.mubr.f32.gmra.mxu0 %v4116
    %v4423 = vpop.f32.mrf.mxu0
    %v4424 = vadd.f32 %v4329, %v4423
    %v4425 = vpop.f32.mrf.mxu0
    %4426 = vmatprep.mubr.f32.mxu0 %v4123
    %4427 = vmatmul.mubr.f32.gmra.mxu0 %v4122
    %v4428 = vpop.f32.mrf.mxu0
    %v4429 = vadd.f32 %v4334, %v4428
    %v4430 = vpop.f32.mrf.mxu0
    %4431 = vmatprep.mubr.f32.mxu0 %v4129
    %4432 = vmatmul.mubr.f32.gmra.mxu0 %v4128
    %v4433 = vpop.f32.mrf.mxu0
    %v4434 = vadd.f32 %v4339, %v4433
    %v4435 = vpop.f32.mrf.mxu0
    %4436 = vmatprep.mubr.f32.mxu0 %v4135
    %4437 = vmatmul.mubr.f32.gmra.mxu0 %v4134
    %v4438 = vpop.f32.mrf.mxu0
    %v4439 = vadd.f32 %v4344, %v4438
    %v4440 = vpop.f32.mrf.mxu0
    %4441 = vmatprep.mubr.f32.mxu0 %v4141
    %4442 = vmatmul.mubr.f32.gmra.mxu0 %v4140
    %v4443 = vpop.f32.mrf.mxu0
    %v4444 = vadd.f32 %v4349, %v4443
    %v4445 = vpop.f32.mrf.mxu0
    %4446 = vdwg.mxu0
    %4447 = vmatprep.subr.mxu0 0.0
    %4448 = vmatpush1.msra.mxu0 %v4223
    %4449 = vmatprep.subr.mxu0 0.0
    %4450 = vmatpush1.msra.mxu0 %v4222
    %4451 = vmatprep.subr.mxu0 0.0
    %4452 = vmatpush1.msra.mxu0 %v4221
    %4453 = vmatprep.subr.mxu0 0.0
    %4454 = vmatpush1.msra.mxu0 %v4220
    %4455 = vmatprep.subr.mxu0 0.0
    %4456 = vmatpush1.msra.mxu0 %v4219
    %4457 = vmatprep.subr.mxu0 0.0
    %4458 = vmatpush1.msra.mxu0 %v4218
    %4459 = vmatprep.subr.mxu0 0.0
    %4460 = vmatpush1.msra.mxu0 %v4217
    %4461 = vmatprep.subr.mxu0 0.0
    %4462 = vmatpush1.msra.mxu0 %v4216
    %4463 = vmatprep.subr.mxu0 0.0
    %4464 = vmatpush1.msra.mxu0 %v4215
    %4465 = vmatprep.subr.mxu0 0.0
    %4466 = vmatpush1.msra.mxu0 %v4214
    %4467 = vmatprep.subr.mxu0 0.0
    %4468 = vmatpush1.msra.mxu0 %v4213
    %4469 = vmatprep.subr.mxu0 0.0
    %4470 = vmatpush1.msra.mxu0 %v4212
    %4471 = vmatprep.subr.mxu0 0.0
    %4472 = vmatpush1.msra.mxu0 %v4211
    %4473 = vmatprep.subr.mxu0 0.0
    %4474 = vmatpush1.msra.mxu0 %v4210
    %4475 = vmatprep.subr.mxu0 0.0
    %4476 = vmatpush1.msra.mxu0 %v4209
    %4477 = vmatprep.subr.mxu0 0.0
    %4478 = vmatpush1.msra.mxu0 %v4208
    %4479 = vmatprep.subr.mxu0 0.0
    %4480 = vmatpush2.msra.mxu0 0.0
    %4481 = vmatprep.subr.mxu0 0.0
    %4482 = vmatpush2.msra.mxu0 0.0
    %4483 = vmatprep.subr.mxu0 0.0
    %4484 = vmatpush2.msra.mxu0 0.0
    %4485 = vmatprep.subr.mxu0 0.0
    %4486 = vmatpush2.msra.mxu0 0.0
    %4487 = vmatprep.subr.mxu0 0.0
    %4488 = vmatpush2.msra.mxu0 0.0
    %4489 = vmatprep.subr.mxu0 0.0
    %4490 = vmatpush2.msra.mxu0 0.0
    %4491 = vmatprep.subr.mxu0 0.0
    %4492 = vmatpush2.msra.mxu0 0.0
    %4493 = vmatprep.subr.mxu0 0.0
    %4494 = vmatpush2.msra.mxu0 0.0
    %4495 = vmatprep.subr.mxu0 0.0
    %4496 = vmatpush2.msra.mxu0 %v4231
    %4497 = vmatprep.subr.mxu0 0.0
    %4498 = vmatpush2.msra.mxu0 %v4230
    %4499 = vmatprep.subr.mxu0 0.0
    %4500 = vmatpush2.msra.mxu0 %v4229
    %4501 = vmatprep.subr.mxu0 0.0
    %4502 = vmatpush2.msra.mxu0 %v4228
    %4503 = vmatprep.subr.mxu0 0.0
    %4504 = vmatpush2.msra.mxu0 %v4227
    %4505 = vmatprep.subr.mxu0 0.0
    %4506 = vmatpush2.msra.mxu0 %v4226
    %4507 = vmatprep.subr.mxu0 0.0
    %4508 = vmatpush2.msra.mxu0 %v4225
    %4509 = vmatprep.subr.mxu0 0.0
    %4510 = vmatpush2.msra.mxu0 %v4224
    %4511 = vmatprep.mubr.f32.mxu0 %v4240
    %4512 = vmatmul.mubr.f32.gmra.mxu0 %v4112
    %v4513 = vpop.f32.mrf.mxu0
    %v4514 = vadd.f32 %v4419, %v4513
    %v4515 = vpop.f32.mrf.mxu0
    %4516 = vmatprep.mubr.f32.mxu0 %v4243
    %4517 = vmatmul.mubr.f32.gmra.mxu0 %v4118
    %v4518 = vpop.f32.mrf.mxu0
    %v4519 = vadd.f32 %v4424, %v4518
    %v4520 = vpop.f32.mrf.mxu0
    %4521 = vmatprep.mubr.f32.mxu0 %v4246
    %4522 = vmatmul.mubr.f32.gmra.mxu0 %v4124
    %v4523 = vpop.f32.mrf.mxu0
    %v4524 = vadd.f32 %v4429, %v4523
    %v4525 = vpop.f32.mrf.mxu0
    %4526 = vmatprep.mubr.f32.mxu0 %v4249
    %4527 = vmatmul.mubr.f32.gmra.mxu0 %v4130
    %v4528 = vpop.f32.mrf.mxu0
    %v4529 = vadd.f32 %v4434, %v4528
    %v4530 = vpop.f32.mrf.mxu0
    %4531 = vmatprep.mubr.f32.mxu0 %v4252
    %4532 = vmatmul.mubr.f32.gmra.mxu0 %v4136
    %v4533 = vpop.f32.mrf.mxu0
    %v4534 = vadd.f32 %v4439, %v4533
    %v4535 = vpop.f32.mrf.mxu0
    %4536 = vmatprep.mubr.f32.mxu0 %v4255
    %4537 = vmatmul.mubr.f32.gmra.mxu0 %v4142
    %v4538 = vpop.f32.mrf.mxu0
    %v4539 = vadd.f32 %v4444, %v4538
    %v4540 = vpop.f32.mrf.mxu0
    %4541 = vdwg.mxu0
    %vm4542 = vcmp.gt.f32.partialorder %v4514, 0.0
    %vm4543 = vcmp.gt.f32.partialorder %v4519, 0.0
    %vm4544 = vcmp.gt.f32.partialorder %v4524, 0.0
    %vm4545 = vcmp.gt.f32.partialorder %v4529, 0.0
    %vm4546 = vcmp.gt.f32.partialorder %v4534, 0.0
    %vm4547 = vcmp.gt.f32.partialorder %v4539, 0.0
    %v4548 = vmul.f32 %v4514, 0.01
    %v4549 = vmul.f32 %v4519, 0.01
    %v4550 = vmul.f32 %v4524, 0.01
    %v4551 = vmul.f32 %v4529, 0.01
    %v4552 = vmul.f32 %v4534, 0.01
    %v4553 = vmul.f32 %v4539, 0.01
    %v4554 = vsel %vm4542, %v4514, %v4548
    %v4555 = vsel %vm4543, %v4519, %v4549
    %v4556 = vsel %vm4544, %v4524, %v4550
    %v4557 = vsel %vm4545, %v4529, %v4551
    %v4558 = vsel %vm4546, %v4534, %v4552
    %v4559 = vsel %vm4547, %v4539, %v4553
    %4560 = vst.msk [vmem:[#allocation2 + $0xa] sm:$0xff] %vm1179, %v4554
    %4561 = vst.msk [vmem:[#allocation2 + $0x12] sm:$0xff] %vm1179, %v4555
    %4562 = vst.msk [vmem:[#allocation2 + $0x1a] sm:$0xff] %vm1179, %v4556
    %4563 = vst.msk [vmem:[#allocation2 + $0x22] sm:$0xff] %vm1179, %v4557
    %4564 = vst.msk [vmem:[#allocation2 + $0x2a] sm:$0xff] %vm1179, %v4558
    %4565 = vst.msk [vmem:[#allocation2 + $0x32] sm:$0xff] %vm1179, %v4559
    %v4566 = vld [vmem:[#allocation2] sm:$0xff]
    %v4567 = vld [vmem:[#allocation2 + $0x8] sm:$0xff]
    %v4568 = vld [vmem:[#allocation2 + $0x10] sm:$0xff]
    %v4569 = vld [vmem:[#allocation2 + $0x18] sm:$0xff]
    %v4570 = vld [vmem:[#allocation2 + $0x20] sm:$0xff]
    %v4571 = vld [vmem:[#allocation2 + $0x28] sm:$0xff]
    %4572 = vst.msk [vmem:[#allocation3] sm:$0xff] %vm1179, %v4566
    %4573 = vst.msk [vmem:[#allocation3 + $0x30] sm:$0xff] %vm1179, %v4567
    %4574 = vst.msk [vmem:[#allocation3 + $0x60] sm:$0xff] %vm1179, %v4568
    %4575 = vst.msk [vmem:[#allocation3 + $0x90] sm:$0xff] %vm1179, %v4569
    %4576 = vst.msk [vmem:[#allocation3 + $0xc0] sm:$0xff] %vm1179, %v4570
    %4577 = vst.msk [vmem:[#allocation3 + $0xf0] sm:$0xff] %vm1179, %v4571
    %v4578 = vld [vmem:[#allocation2 + $0x2] sm:$0xff]
    %v4579 = vld [vmem:[#allocation2 + $0xa] sm:$0xff]
    %v4580 = vld [vmem:[#allocation2 + $0x12] sm:$0xff]
    %v4581 = vld [vmem:[#allocation2 + $0x1a] sm:$0xff]
    %v4582 = vld [vmem:[#allocation2 + $0x22] sm:$0xff]
    %v4583 = vld [vmem:[#allocation2 + $0x2a] sm:$0xff]
    %4590 = vrot.lane.b32.xlu0 %v4578, 32
    %v4591 = vpop.permute.xlu0 %4590
    %4592 = vrot.lane.b32.xlu0 %v4579, 32
    %v4593 = vpop.permute.xlu0 %4592
    %4594 = vrot.lane.b32.xlu0 %v4580, 32
    %v4595 = vpop.permute.xlu0 %4594
    %4596 = vrot.lane.b32.xlu0 %v4581, 32
    %v4597 = vpop.permute.xlu0 %4596
    %4598 = vrot.lane.b32.xlu0 %v4582, 32
    %v4599 = vpop.permute.xlu0 %4598
    %4600 = vrot.lane.b32.xlu0 %v4583, 32
    %v4601 = vpop.permute.xlu0 %4600
    %4608 = vst.msk [vmem:[#allocation3] sm:$0xff] %vm1228, %v4591
    %4609 = vst.msk [vmem:[#allocation3 + $0x30] sm:$0xff] %vm1228, %v4593
    %4610 = vst.msk [vmem:[#allocation3 + $0x60] sm:$0xff] %vm1228, %v4595
    %4611 = vst.msk [vmem:[#allocation3 + $0x90] sm:$0xff] %vm1228, %v4597
    %4612 = vst.msk [vmem:[#allocation3 + $0xc0] sm:$0xff] %vm1228, %v4599
    %4613 = vst.msk [vmem:[#allocation3 + $0xf0] sm:$0xff] %vm1228, %v4601
    %v4614 = vld [vmem:[#allocation2 + $0x4] sm:$0xff]
    %v4615 = vld [vmem:[#allocation2 + $0xc] sm:$0xff]
    %v4616 = vld [vmem:[#allocation2 + $0x14] sm:$0xff]
    %v4617 = vld [vmem:[#allocation2 + $0x1c] sm:$0xff]
    %v4618 = vld [vmem:[#allocation2 + $0x24] sm:$0xff]
    %v4619 = vld [vmem:[#allocation2 + $0x2c] sm:$0xff]
    %4626 = vrot.lane.b32.xlu0 %v4614, 64
    %v4627 = vpop.permute.xlu0 %4626
    %4628 = vrot.lane.b32.xlu0 %v4615, 64
    %v4629 = vpop.permute.xlu0 %4628
    %4630 = vrot.lane.b32.xlu0 %v4616, 64
    %v4631 = vpop.permute.xlu0 %4630
    %4632 = vrot.lane.b32.xlu0 %v4617, 64
    %v4633 = vpop.permute.xlu0 %4632
    %4634 = vrot.lane.b32.xlu0 %v4618, 64
    %v4635 = vpop.permute.xlu0 %4634
    %4636 = vrot.lane.b32.xlu0 %v4619, 64
    %v4637 = vpop.permute.xlu0 %4636
    %4644 = vst.msk [vmem:[#allocation3] sm:$0xff] %vm1265, %v4627
    %4645 = vst.msk [vmem:[#allocation3 + $0x30] sm:$0xff] %vm1265, %v4629
    %4646 = vst.msk [vmem:[#allocation3 + $0x60] sm:$0xff] %vm1265, %v4631
    %4647 = vst.msk [vmem:[#allocation3 + $0x90] sm:$0xff] %vm1265, %v4633
    %4648 = vst.msk [vmem:[#allocation3 + $0xc0] sm:$0xff] %vm1265, %v4635
    %4649 = vst.msk [vmem:[#allocation3 + $0xf0] sm:$0xff] %vm1265, %v4637
    %v4650 = vld [vmem:[#allocation2 + $0x6] sm:$0xff]
    %v4651 = vld [vmem:[#allocation2 + $0xe] sm:$0xff]
    %v4652 = vld [vmem:[#allocation2 + $0x16] sm:$0xff]
    %v4653 = vld [vmem:[#allocation2 + $0x1e] sm:$0xff]
    %v4654 = vld [vmem:[#allocation2 + $0x26] sm:$0xff]
    %v4655 = vld [vmem:[#allocation2 + $0x2e] sm:$0xff]
    %4662 = vrot.lane.b32.xlu0 %v4650, 96
    %v4663 = vpop.permute.xlu0 %4662
    %4664 = vrot.lane.b32.xlu0 %v4651, 96
    %v4665 = vpop.permute.xlu0 %4664
    %4666 = vrot.lane.b32.xlu0 %v4652, 96
    %v4667 = vpop.permute.xlu0 %4666
    %4668 = vrot.lane.b32.xlu0 %v4653, 96
    %v4669 = vpop.permute.xlu0 %4668
    %4670 = vrot.lane.b32.xlu0 %v4654, 96
    %v4671 = vpop.permute.xlu0 %4670
    %4672 = vrot.lane.b32.xlu0 %v4655, 96
    %v4673 = vpop.permute.xlu0 %4672
    %4680 = vst.msk [vmem:[#allocation3] sm:$0xff] %vm1302, %v4663
    %4681 = vst.msk [vmem:[#allocation3 + $0x30] sm:$0xff] %vm1302, %v4665
    %4682 = vst.msk [vmem:[#allocation3 + $0x60] sm:$0xff] %vm1302, %v4667
    %4683 = vst.msk [vmem:[#allocation3 + $0x90] sm:$0xff] %vm1302, %v4669
    %4684 = vst.msk [vmem:[#allocation3 + $0xc0] sm:$0xff] %vm1302, %v4671
    %4685 = vst.msk [vmem:[#allocation3 + $0xf0] sm:$0xff] %vm1302, %v4673
    %v4686 = vld [vmem:[#allocation2 + $0x8] sm:$0xff]
    %v4687 = vld [vmem:[#allocation2 + $0x10] sm:$0xff]
    %v4688 = vld [vmem:[#allocation2 + $0x18] sm:$0xff]
    %v4689 = vld [vmem:[#allocation2 + $0x20] sm:$0xff]
    %v4690 = vld [vmem:[#allocation2 + $0x28] sm:$0xff]
    %v4691 = vld [vmem:[#allocation2 + $0x30] sm:$0xff]
    %4692 = vst.msk [vmem:[#allocation3 + $0x8] sm:$0xff] %vm1179, %v4686
    %4693 = vst.msk [vmem:[#allocation3 + $0x38] sm:$0xff] %vm1179, %v4687
    %4694 = vst.msk [vmem:[#allocation3 + $0x68] sm:$0xff] %vm1179, %v4688
    %4695 = vst.msk [vmem:[#allocation3 + $0x98] sm:$0xff] %vm1179, %v4689
    %4696 = vst.msk [vmem:[#allocation3 + $0xc8] sm:$0xff] %vm1179, %v4690
    %4697 = vst.msk [vmem:[#allocation3 + $0xf8] sm:$0xff] %vm1179, %v4691
    %v4698 = vld [vmem:[#allocation2 + $0xa] sm:$0xff]
    %v4699 = vld [vmem:[#allocation2 + $0x12] sm:$0xff]
    %v4700 = vld [vmem:[#allocation2 + $0x1a] sm:$0xff]
    %v4701 = vld [vmem:[#allocation2 + $0x22] sm:$0xff]
    %v4702 = vld [vmem:[#allocation2 + $0x2a] sm:$0xff]
    %v4703 = vld [vmem:[#allocation2 + $0x32] sm:$0xff]
    %4710 = vrot.lane.b32.xlu0 %v4698, 32
    %v4711 = vpop.permute.xlu0 %4710
    %4712 = vrot.lane.b32.xlu0 %v4699, 32
    %v4713 = vpop.permute.xlu0 %4712
    %4714 = vrot.lane.b32.xlu0 %v4700, 32
    %v4715 = vpop.permute.xlu0 %4714
    %4716 = vrot.lane.b32.xlu0 %v4701, 32
    %v4717 = vpop.permute.xlu0 %4716
    %4718 = vrot.lane.b32.xlu0 %v4702, 32
    %v4719 = vpop.permute.xlu0 %4718
    %4720 = vrot.lane.b32.xlu0 %v4703, 32
    %v4721 = vpop.permute.xlu0 %4720
    %4728 = vst.msk [vmem:[#allocation3 + $0x8] sm:$0xff] %vm1228, %v4711
    %4729 = vst.msk [vmem:[#allocation3 + $0x38] sm:$0xff] %vm1228, %v4713
    %4730 = vst.msk [vmem:[#allocation3 + $0x68] sm:$0xff] %vm1228, %v4715
    %4731 = vst.msk [vmem:[#allocation3 + $0x98] sm:$0xff] %vm1228, %v4717
    %4732 = vst.msk [vmem:[#allocation3 + $0xc8] sm:$0xff] %vm1228, %v4719
    %4733 = vst.msk [vmem:[#allocation3 + $0xf8] sm:$0xff] %vm1228, %v4721
    %v4734 = vld [vmem:[#allocation2 + $0xc] sm:$0xff]
    %v4735 = vld [vmem:[#allocation2 + $0x14] sm:$0xff]
    %v4736 = vld [vmem:[#allocation2 + $0x1c] sm:$0xff]
    %v4737 = vld [vmem:[#allocation2 + $0x24] sm:$0xff]
    %v4738 = vld [vmem:[#allocation2 + $0x2c] sm:$0xff]
    %v4739 = vld [vmem:[#allocation2 + $0x34] sm:$0xff]
    %4746 = vrot.lane.b32.xlu0 %v4734, 64
    %v4747 = vpop.permute.xlu0 %4746
    %4748 = vrot.lane.b32.xlu0 %v4735, 64
    %v4749 = vpop.permute.xlu0 %4748
    %4750 = vrot.lane.b32.xlu0 %v4736, 64
    %v4751 = vpop.permute.xlu0 %4750
    %4752 = vrot.lane.b32.xlu0 %v4737, 64
    %v4753 = vpop.permute.xlu0 %4752
    %4754 = vrot.lane.b32.xlu0 %v4738, 64
    %v4755 = vpop.permute.xlu0 %4754
    %4756 = vrot.lane.b32.xlu0 %v4739, 64
    %v4757 = vpop.permute.xlu0 %4756
    %4764 = vst.msk [vmem:[#allocation3 + $0x8] sm:$0xff] %vm1265, %v4747
    %4765 = vst.msk [vmem:[#allocation3 + $0x38] sm:$0xff] %vm1265, %v4749
    %4766 = vst.msk [vmem:[#allocation3 + $0x68] sm:$0xff] %vm1265, %v4751
    %4767 = vst.msk [vmem:[#allocation3 + $0x98] sm:$0xff] %vm1265, %v4753
    %4768 = vst.msk [vmem:[#allocation3 + $0xc8] sm:$0xff] %vm1265, %v4755
    %4769 = vst.msk [vmem:[#allocation3 + $0xf8] sm:$0xff] %vm1265, %v4757
    %v4770 = vld [vmem:[#allocation2 + $0xe] sm:$0xff]
    %v4771 = vld [vmem:[#allocation2 + $0x16] sm:$0xff]
    %v4772 = vld [vmem:[#allocation2 + $0x1e] sm:$0xff]
    %v4773 = vld [vmem:[#allocation2 + $0x26] sm:$0xff]
    %v4774 = vld [vmem:[#allocation2 + $0x2e] sm:$0xff]
    %v4775 = vld [vmem:[#allocation2 + $0x36] sm:$0xff]
    %4782 = vrot.lane.b32.xlu0 %v4770, 96
    %v4783 = vpop.permute.xlu0 %4782
    %4784 = vrot.lane.b32.xlu0 %v4771, 96
    %v4785 = vpop.permute.xlu0 %4784
    %4786 = vrot.lane.b32.xlu0 %v4772, 96
    %v4787 = vpop.permute.xlu0 %4786
    %4788 = vrot.lane.b32.xlu0 %v4773, 96
    %v4789 = vpop.permute.xlu0 %4788
    %4790 = vrot.lane.b32.xlu0 %v4774, 96
    %v4791 = vpop.permute.xlu0 %4790
    %4792 = vrot.lane.b32.xlu0 %v4775, 96
    %v4793 = vpop.permute.xlu0 %4792
    %4800 = vst.msk [vmem:[#allocation3 + $0x8] sm:$0xff] %vm1302, %v4783
    %4801 = vst.msk [vmem:[#allocation3 + $0x38] sm:$0xff] %vm1302, %v4785
    %4802 = vst.msk [vmem:[#allocation3 + $0x68] sm:$0xff] %vm1302, %v4787
    %4803 = vst.msk [vmem:[#allocation3 + $0x98] sm:$0xff] %vm1302, %v4789
    %4804 = vst.msk [vmem:[#allocation3 + $0xc8] sm:$0xff] %vm1302, %v4791
    %4805 = vst.msk [vmem:[#allocation3 + $0xf8] sm:$0xff] %vm1302, %v4793
    %v4806 = vld [vmem:[#allocation2 + $0x10] sm:$0xff]
    %v4807 = vld [vmem:[#allocation2 + $0x18] sm:$0xff]
    %v4808 = vld [vmem:[#allocation2 + $0x20] sm:$0xff]
    %v4809 = vld [vmem:[#allocation2 + $0x28] sm:$0xff]
    %v4810 = vld [vmem:[#allocation2 + $0x30] sm:$0xff]
    %v4811 = vld [vmem:[#allocation2 + $0x38] sm:$0xff]
    %4812 = vst.msk [vmem:[#allocation3 + $0x10] sm:$0xff] %vm1179, %v4806
    %4813 = vst.msk [vmem:[#allocation3 + $0x40] sm:$0xff] %vm1179, %v4807
    %4814 = vst.msk [vmem:[#allocation3 + $0x70] sm:$0xff] %vm1179, %v4808
    %4815 = vst.msk [vmem:[#allocation3 + $0xa0] sm:$0xff] %vm1179, %v4809
    %4816 = vst.msk [vmem:[#allocation3 + $0xd0] sm:$0xff] %vm1179, %v4810
    %4817 = vst.msk [vmem:[#allocation3 + $0x100] sm:$0xff] %vm1179, %v4811
    %v4818 = vld [vmem:[#allocation2 + $0x12] sm:$0xff]
    %v4819 = vld [vmem:[#allocation2 + $0x1a] sm:$0xff]
    %v4820 = vld [vmem:[#allocation2 + $0x22] sm:$0xff]
    %v4821 = vld [vmem:[#allocation2 + $0x2a] sm:$0xff]
    %v4822 = vld [vmem:[#allocation2 + $0x32] sm:$0xff]
    %v4823 = vld [vmem:[#allocation2 + $0x3a] sm:$0xff]
    %4830 = vrot.lane.b32.xlu0 %v4818, 32
    %v4831 = vpop.permute.xlu0 %4830
    %4832 = vrot.lane.b32.xlu0 %v4819, 32
    %v4833 = vpop.permute.xlu0 %4832
    %4834 = vrot.lane.b32.xlu0 %v4820, 32
    %v4835 = vpop.permute.xlu0 %4834
    %4836 = vrot.lane.b32.xlu0 %v4821, 32
    %v4837 = vpop.permute.xlu0 %4836
    %4838 = vrot.lane.b32.xlu0 %v4822, 32
    %v4839 = vpop.permute.xlu0 %4838
    %4840 = vrot.lane.b32.xlu0 %v4823, 32
    %v4841 = vpop.permute.xlu0 %4840
    %4848 = vst.msk [vmem:[#allocation3 + $0x10] sm:$0xff] %vm1228, %v4831
    %4849 = vst.msk [vmem:[#allocation3 + $0x40] sm:$0xff] %vm1228, %v4833
    %4850 = vst.msk [vmem:[#allocation3 + $0x70] sm:$0xff] %vm1228, %v4835
    %4851 = vst.msk [vmem:[#allocation3 + $0xa0] sm:$0xff] %vm1228, %v4837
    %4852 = vst.msk [vmem:[#allocation3 + $0xd0] sm:$0xff] %vm1228, %v4839
    %4853 = vst.msk [vmem:[#allocation3 + $0x100] sm:$0xff] %vm1228, %v4841
    %v4854 = vld [vmem:[#allocation2 + $0x14] sm:$0xff]
    %v4855 = vld [vmem:[#allocation2 + $0x1c] sm:$0xff]
    %v4856 = vld [vmem:[#allocation2 + $0x24] sm:$0xff]
    %v4857 = vld [vmem:[#allocation2 + $0x2c] sm:$0xff]
    %v4858 = vld [vmem:[#allocation2 + $0x34] sm:$0xff]
    %v4859 = vld [vmem:[#allocation2 + $0x3c] sm:$0xff]
    %4866 = vrot.lane.b32.xlu0 %v4854, 64
    %v4867 = vpop.permute.xlu0 %4866
    %4868 = vrot.lane.b32.xlu0 %v4855, 64
    %v4869 = vpop.permute.xlu0 %4868
    %4870 = vrot.lane.b32.xlu0 %v4856, 64
    %v4871 = vpop.permute.xlu0 %4870
    %4872 = vrot.lane.b32.xlu0 %v4857, 64
    %v4873 = vpop.permute.xlu0 %4872
    %4874 = vrot.lane.b32.xlu0 %v4858, 64
    %v4875 = vpop.permute.xlu0 %4874
    %4876 = vrot.lane.b32.xlu0 %v4859, 64
    %v4877 = vpop.permute.xlu0 %4876
    %4884 = vst.msk [vmem:[#allocation3 + $0x10] sm:$0xff] %vm1265, %v4867
    %4885 = vst.msk [vmem:[#allocation3 + $0x40] sm:$0xff] %vm1265, %v4869
    %4886 = vst.msk [vmem:[#allocation3 + $0x70] sm:$0xff] %vm1265, %v4871
    %4887 = vst.msk [vmem:[#allocation3 + $0xa0] sm:$0xff] %vm1265, %v4873
    %4888 = vst.msk [vmem:[#allocation3 + $0xd0] sm:$0xff] %vm1265, %v4875
    %4889 = vst.msk [vmem:[#allocation3 + $0x100] sm:$0xff] %vm1265, %v4877
    %v4890 = vld [vmem:[#allocation3] sm:$0xff]
    %v4891 = vld [vmem:[#allocation3 + $0x8] sm:$0xff]
    %v4892 = vld [vmem:[#allocation3 + $0x10] sm:$0xff]
    %v4893 = vld [vmem:[#allocation3 + $0x30] sm:$0xff]
    %v4894 = vld [vmem:[#allocation3 + $0x38] sm:$0xff]
    %v4895 = vld [vmem:[#allocation3 + $0x40] sm:$0xff]
    %v4896 = vld [vmem:[#allocation3 + $0x60] sm:$0xff]
    %v4897 = vld [vmem:[#allocation3 + $0x68] sm:$0xff]
    %v4898 = vld [vmem:[#allocation3 + $0x70] sm:$0xff]
    %v4899 = vld [vmem:[#allocation3 + $0x90] sm:$0xff]
    %v4900 = vld [vmem:[#allocation3 + $0x98] sm:$0xff]
    %v4901 = vld [vmem:[#allocation3 + $0xa0] sm:$0xff]
    %v4902 = vld [vmem:[#allocation3 + $0xc0] sm:$0xff]
    %v4903 = vld [vmem:[#allocation3 + $0xc8] sm:$0xff]
    %v4904 = vld [vmem:[#allocation3 + $0xd0] sm:$0xff]
    %v4905 = vld [vmem:[#allocation3 + $0xf0] sm:$0xff]
    %v4906 = vld [vmem:[#allocation3 + $0xf8] sm:$0xff]
    %v4907 = vld [vmem:[#allocation3 + $0x100] sm:$0xff]
    %v4908 = vld [vmem:[%s18] sm:$0xff]
    %v4909 = vld [vmem:[%s18 + $0x8] sm:$0xff]
    %v4910 = vld [vmem:[%s18 + $0x10] sm:$0xff]
    %v4911 = vld [vmem:[%s18 + $0x18] sm:$0xff]
    %v4912 = vld [vmem:[%s18 + $0x20] sm:$0xff]
    %v4913 = vld [vmem:[%s18 + $0x28] sm:$0xff]
    %v4914 = vld [vmem:[%s18 + $0x30] sm:$0xff]
    %v4915 = vld [vmem:[%s18 + $0x38] sm:$0xff]
    %v4916 = vld [vmem:[%s18 + $0x40] sm:$0xff]
    %v4917 = vld [vmem:[%s18 + $0x48] sm:$0xff]
    %v4918 = vld [vmem:[%s18 + $0x50] sm:$0xff]
    %v4919 = vld [vmem:[%s18 + $0x58] sm:$0xff]
    %v4920 = vld [vmem:[%s18 + $0x60] sm:$0xff]
    %v4921 = vld [vmem:[%s18 + $0x68] sm:$0xff]
    %v4922 = vld [vmem:[%s18 + $0x70] sm:$0xff]
    %v4923 = vld [vmem:[%s18 + $0x78] sm:$0xff]
    %v4924 = vld [vmem:[%s18 + $0x80] sm:$0xff]
    %v4925 = vld [vmem:[%s18 + $0x88] sm:$0xff]
    %v4926 = vld [vmem:[%s18 + $0x90] sm:$0xff]
    %v4927 = vld [vmem:[%s18 + $0x98] sm:$0xff]
    %v4928 = vld [vmem:[%s18 + $0xa0] sm:$0xff]
    %v4929 = vld [vmem:[%s18 + $0xa8] sm:$0xff]
    %v4930 = vld [vmem:[%s18 + $0xb0] sm:$0xff]
    %v4931 = vld [vmem:[%s18 + $0xb8] sm:$0xff]
    %v4932 = vld [vmem:[%s18 + $0xc0] sm:$0xff]
    %v4933 = vld [vmem:[%s18 + $0xc8] sm:$0xff]
    %v4934 = vld [vmem:[%s18 + $0xd0] sm:$0xff]
    %v4935 = vld [vmem:[%s18 + $0xd8] sm:$0xff]
    %v4936 = vld [vmem:[%s18 + $0xe0] sm:$0xff]
    %v4937 = vld [vmem:[%s18 + $0xe8] sm:$0xff]
    %v4938 = vld [vmem:[%s18 + $0xf0] sm:$0xff]
    %v4939 = vld [vmem:[%s18 + $0xf8] sm:$0xff]
    %v4940 = vld [vmem:[%s18 + $0x100] sm:$0xff]
    %v4941 = vld [vmem:[%s18 + $0x108] sm:$0xff]
    %v4942 = vld [vmem:[%s18 + $0x110] sm:$0xff]
    %v4943 = vld [vmem:[%s18 + $0x118] sm:$0xff]
    %v4944 = vld [vmem:[%s18 + $0x120] sm:$0xff]
    %v4945 = vld [vmem:[%s18 + $0x128] sm:$0xff]
    %v4946 = vld [vmem:[%s18 + $0x130] sm:$0xff]
    %v4947 = vld [vmem:[%s18 + $0x138] sm:$0xff]
    %v4948 = vld [vmem:[%s18 + $0x140] sm:$0xff]
    %v4949 = vld [vmem:[%s18 + $0x148] sm:$0xff]
    %v4950 = vld [vmem:[%s18 + $0x150] sm:$0xff]
    %v4951 = vld [vmem:[%s18 + $0x158] sm:$0xff]
    %v4952 = vld [vmem:[%s19] sm:$0x1]
    %v4954 = vlaneseq
    %v4955 = vshrl.u32 %v4954, 7
    %v4956 = vsub.s32 0, %v4955
    %v4957 = vrot.slane %v4952, %v4956
    %v4960 = vsel %vm1582, %v4892, 0
    %v4963 = vsel %vm1582, %v4895, 0
    %v4966 = vsel %vm1582, %v4898, 0
    %v4969 = vsel %vm1582, %v4901, 0
    %v4972 = vsel %vm1582, %v4904, 0
    %v4975 = vsel %vm1582, %v4907, 0
    %4977 = vmatprep.subr.mxu0 0.0
    %4978 = vmatpush1.msra.mxu0 %v4923
    %4979 = vmatprep.subr.mxu0 0.0
    %4980 = vmatpush1.msra.mxu0 %v4922
    %4981 = vmatprep.subr.mxu0 0.0
    %4982 = vmatpush1.msra.mxu0 %v4921
    %4983 = vmatprep.subr.mxu0 0.0
    %4984 = vmatpush1.msra.mxu0 %v4920
    %4985 = vmatprep.subr.mxu0 0.0
    %4986 = vmatpush1.msra.mxu0 %v4919
    %4987 = vmatprep.subr.mxu0 0.0
    %4988 = vmatpush1.msra.mxu0 %v4918
    %4989 = vmatprep.subr.mxu0 0.0
    %4990 = vmatpush1.msra.mxu0 %v4917
    %4991 = vmatprep.subr.mxu0 0.0
    %4992 = vmatpush1.msra.mxu0 %v4916
    %4993 = vmatprep.subr.mxu0 0.0
    %4994 = vmatpush1.msra.mxu0 %v4915
    %4995 = vmatprep.subr.mxu0 0.0
    %4996 = vmatpush1.msra.mxu0 %v4914
    %4997 = vmatprep.subr.mxu0 0.0
    %4998 = vmatpush1.msra.mxu0 %v4913
    %4999 = vmatprep.subr.mxu0 0.0
    %5000 = vmatpush1.msra.mxu0 %v4912
    %5001 = vmatprep.subr.mxu0 0.0
    %5002 = vmatpush1.msra.mxu0 %v4911
    %5003 = vmatprep.subr.mxu0 0.0
    %5004 = vmatpush1.msra.mxu0 %v4910
    %5005 = vmatprep.subr.mxu0 0.0
    %5006 = vmatpush1.msra.mxu0 %v4909
    %5007 = vmatprep.subr.mxu0 0.0
    %5008 = vmatpush1.msra.mxu0 %v4908
    %5009 = vmatprep.subr.mxu0 0.0
    %5010 = vmatpush2.msra.mxu0 %v4939
    %5011 = vmatprep.subr.mxu0 0.0
    %5012 = vmatpush2.msra.mxu0 %v4938
    %5013 = vmatprep.subr.mxu0 0.0
    %5014 = vmatpush2.msra.mxu0 %v4937
    %5015 = vmatprep.subr.mxu0 0.0
    %5016 = vmatpush2.msra.mxu0 %v4936
    %5017 = vmatprep.subr.mxu0 0.0
    %5018 = vmatpush2.msra.mxu0 %v4935
    %5019 = vmatprep.subr.mxu0 0.0
    %5020 = vmatpush2.msra.mxu0 %v4934
    %5021 = vmatprep.subr.mxu0 0.0
    %5022 = vmatpush2.msra.mxu0 %v4933
    %5023 = vmatprep.subr.mxu0 0.0
    %5024 = vmatpush2.msra.mxu0 %v4932
    %5025 = vmatprep.subr.mxu0 0.0
    %5026 = vmatpush2.msra.mxu0 %v4931
    %5027 = vmatprep.subr.mxu0 0.0
    %5028 = vmatpush2.msra.mxu0 %v4930
    %5029 = vmatprep.subr.mxu0 0.0
    %5030 = vmatpush2.msra.mxu0 %v4929
    %5031 = vmatprep.subr.mxu0 0.0
    %5032 = vmatpush2.msra.mxu0 %v4928
    %5033 = vmatprep.subr.mxu0 0.0
    %5034 = vmatpush2.msra.mxu0 %v4927
    %5035 = vmatprep.subr.mxu0 0.0
    %5036 = vmatpush2.msra.mxu0 %v4926
    %5037 = vmatprep.subr.mxu0 0.0
    %5038 = vmatpush2.msra.mxu0 %v4925
    %5039 = vmatprep.subr.mxu0 0.0
    %5040 = vmatpush2.msra.mxu0 %v4924
    %5041 = vmatprep.mubr.f32.mxu0 %v4891
    %5042 = vmatmul.mubr.f32.gmra.mxu0 %v4890
    %v5043 = vpop.f32.mrf.mxu0
    %v5044 = vadd.f32 %v4957, %v5043
    %v5045 = vpop.f32.mrf.mxu0
    %5046 = vmatprep.mubr.f32.mxu0 %v4894
    %5047 = vmatmul.mubr.f32.gmra.mxu0 %v4893
    %v5048 = vpop.f32.mrf.mxu0
    %v5049 = vadd.f32 %v4957, %v5048
    %v5050 = vpop.f32.mrf.mxu0
    %5051 = vmatprep.mubr.f32.mxu0 %v4897
    %5052 = vmatmul.mubr.f32.gmra.mxu0 %v4896
    %v5053 = vpop.f32.mrf.mxu0
    %v5054 = vadd.f32 %v4957, %v5053
    %v5055 = vpop.f32.mrf.mxu0
    %5056 = vmatprep.mubr.f32.mxu0 %v4900
    %5057 = vmatmul.mubr.f32.gmra.mxu0 %v4899
    %v5058 = vpop.f32.mrf.mxu0
    %v5059 = vadd.f32 %v4957, %v5058
    %v5060 = vpop.f32.mrf.mxu0
    %5061 = vmatprep.mubr.f32.mxu0 %v4903
    %5062 = vmatmul.mubr.f32.gmra.mxu0 %v4902
    %v5063 = vpop.f32.mrf.mxu0
    %v5064 = vadd.f32 %v4957, %v5063
    %v5065 = vpop.f32.mrf.mxu0
    %5066 = vmatprep.mubr.f32.mxu0 %v4906
    %5067 = vmatmul.mubr.f32.gmra.mxu0 %v4905
    %v5068 = vpop.f32.mrf.mxu0
    %v5069 = vadd.f32 %v4957, %v5068
    %v5070 = vpop.f32.mrf.mxu0
    %5071 = vdwg.mxu0
    %5072 = vmatprep.subr.mxu0 0.0
    %5073 = vmatpush1.msra.mxu0 0.0
    %5074 = vmatprep.subr.mxu0 0.0
    %5075 = vmatpush1.msra.mxu0 0.0
    %5076 = vmatprep.subr.mxu0 0.0
    %5077 = vmatpush1.msra.mxu0 0.0
    %5078 = vmatprep.subr.mxu0 0.0
    %5079 = vmatpush1.msra.mxu0 0.0
    %5080 = vmatprep.subr.mxu0 0.0
    %5081 = vmatpush1.msra.mxu0 %v4951
    %5082 = vmatprep.subr.mxu0 0.0
    %5083 = vmatpush1.msra.mxu0 %v4950
    %5084 = vmatprep.subr.mxu0 0.0
    %5085 = vmatpush1.msra.mxu0 %v4949
    %5086 = vmatprep.subr.mxu0 0.0
    %5087 = vmatpush1.msra.mxu0 %v4948
    %5088 = vmatprep.subr.mxu0 0.0
    %5089 = vmatpush1.msra.mxu0 %v4947
    %5090 = vmatprep.subr.mxu0 0.0
    %5091 = vmatpush1.msra.mxu0 %v4946
    %5092 = vmatprep.subr.mxu0 0.0
    %5093 = vmatpush1.msra.mxu0 %v4945
    %5094 = vmatprep.subr.mxu0 0.0
    %5095 = vmatpush1.msra.mxu0 %v4944
    %5096 = vmatprep.subr.mxu0 0.0
    %5097 = vmatpush1.msra.mxu0 %v4943
    %5098 = vmatprep.subr.mxu0 0.0
    %5099 = vmatpush1.msra.mxu0 %v4942
    %5100 = vmatprep.subr.mxu0 0.0
    %5101 = vmatpush1.msra.mxu0 %v4941
    %5102 = vmatprep.subr.mxu0 0.0
    %5103 = vmatpush1.msra.mxu0 %v4940
    %5104 = vmatprep.subr.mxu0 0.0
    %5105 = vmatpush2.msra.mxu0 0.0
    %5106 = vmatprep.subr.mxu0 0.0
    %5107 = vmatpush2.msra.mxu0 0.0
    %5108 = vmatprep.subr.mxu0 0.0
    %5109 = vmatpush2.msra.mxu0 0.0
    %5110 = vmatprep.subr.mxu0 0.0
    %5111 = vmatpush2.msra.mxu0 0.0
    %5112 = vmatprep.subr.mxu0 0.0
    %5113 = vmatpush2.msra.mxu0 0.0
    %5114 = vmatprep.subr.mxu0 0.0
    %5115 = vmatpush2.msra.mxu0 0.0
    %5116 = vmatprep.subr.mxu0 0.0
    %5117 = vmatpush2.msra.mxu0 0.0
    %5118 = vmatprep.subr.mxu0 0.0
    %5119 = vmatpush2.msra.mxu0 0.0
    %5120 = vmatprep.subr.mxu0 0.0
    %5121 = vmatpush2.msra.mxu0 0.0
    %5122 = vmatprep.subr.mxu0 0.0
    %5123 = vmatpush2.msra.mxu0 0.0
    %5124 = vmatprep.subr.mxu0 0.0
    %5125 = vmatpush2.msra.mxu0 0.0
    %5126 = vmatprep.subr.mxu0 0.0
    %5127 = vmatpush2.msra.mxu0 0.0
    %5128 = vmatprep.subr.mxu0 0.0
    %5129 = vmatpush2.msra.mxu0 0.0
    %5130 = vmatprep.subr.mxu0 0.0
    %5131 = vmatpush2.msra.mxu0 0.0
    %5132 = vmatprep.subr.mxu0 0.0
    %5133 = vmatpush2.msra.mxu0 0.0
    %5134 = vmatprep.subr.mxu0 0.0
    %5135 = vmatpush2.msra.mxu0 0.0
    %5136 = vmatprep.mubr.f32.mxu0 0.0
    %5137 = vmatmul.mubr.f32.gmra.mxu0 %v4960
    %v5138 = vpop.f32.mrf.mxu0
    %v5139 = vadd.f32 %v5044, %v5138
    %v5140 = vpop.f32.mrf.mxu0
    %5141 = vmatprep.mubr.f32.mxu0 0.0
    %5142 = vmatmul.mubr.f32.gmra.mxu0 %v4963
    %v5143 = vpop.f32.mrf.mxu0
    %v5144 = vadd.f32 %v5049, %v5143
    %v5145 = vpop.f32.mrf.mxu0
    %5146 = vmatprep.mubr.f32.mxu0 0.0
    %5147 = vmatmul.mubr.f32.gmra.mxu0 %v4966
    %v5148 = vpop.f32.mrf.mxu0
    %v5149 = vadd.f32 %v5054, %v5148
    %v5150 = vpop.f32.mrf.mxu0
    %5151 = vmatprep.mubr.f32.mxu0 0.0
    %5152 = vmatmul.mubr.f32.gmra.mxu0 %v4969
    %v5153 = vpop.f32.mrf.mxu0
    %v5154 = vadd.f32 %v5059, %v5153
    %v5155 = vpop.f32.mrf.mxu0
    %5156 = vmatprep.mubr.f32.mxu0 0.0
    %5157 = vmatmul.mubr.f32.gmra.mxu0 %v4972
    %v5158 = vpop.f32.mrf.mxu0
    %v5159 = vadd.f32 %v5064, %v5158
    %v5160 = vpop.f32.mrf.mxu0
    %5161 = vmatprep.mubr.f32.mxu0 0.0
    %5162 = vmatmul.mubr.f32.gmra.mxu0 %v4975
    %v5163 = vpop.f32.mrf.mxu0
    %v5164 = vadd.f32 %v5069, %v5163
    %v5165 = vpop.f32.mrf.mxu0
    %5166 = vdwg.mxu0
    %vm5167 = vcmp.gt.f32.partialorder %v5139, 0.0
    %vm5168 = vcmp.gt.f32.partialorder %v5144, 0.0
    %vm5169 = vcmp.gt.f32.partialorder %v5149, 0.0
    %vm5170 = vcmp.gt.f32.partialorder %v5154, 0.0
    %vm5171 = vcmp.gt.f32.partialorder %v5159, 0.0
    %vm5172 = vcmp.gt.f32.partialorder %v5164, 0.0
    %v5173 = vmul.f32 %v5139, 0.01
    %v5174 = vmul.f32 %v5144, 0.01
    %v5175 = vmul.f32 %v5149, 0.01
    %v5176 = vmul.f32 %v5154, 0.01
    %v5177 = vmul.f32 %v5159, 0.01
    %v5178 = vmul.f32 %v5164, 0.01
    %v5179 = vsel %vm5167, %v5139, %v5173
    %v5180 = vsel %vm5168, %v5144, %v5174
    %v5181 = vsel %vm5169, %v5149, %v5175
    %v5182 = vsel %vm5170, %v5154, %v5176
    %v5183 = vsel %vm5171, %v5159, %v5177
    %v5184 = vsel %vm5172, %v5164, %v5178
    %5185 = vst.msk [vmem:[#allocation2 + $0xa] sm:$0xff] %vm644, %v5179
    %5186 = vst.msk [vmem:[#allocation2 + $0x12] sm:$0xff] %vm644, %v5180
    %5187 = vst.msk [vmem:[#allocation2 + $0x1a] sm:$0xff] %vm644, %v5181
    %5188 = vst.msk [vmem:[#allocation2 + $0x22] sm:$0xff] %vm644, %v5182
    %5189 = vst.msk [vmem:[#allocation2 + $0x2a] sm:$0xff] %vm644, %v5183
    %5190 = vst.msk [vmem:[#allocation2 + $0x32] sm:$0xff] %vm644, %v5184
    %v5191 = vld [vmem:[#allocation2] sm:$0xff]
    %v5192 = vld [vmem:[#allocation2 + $0x8] sm:$0xff]
    %v5193 = vld [vmem:[#allocation2 + $0x10] sm:$0xff]
    %v5194 = vld [vmem:[#allocation2 + $0x18] sm:$0xff]
    %v5195 = vld [vmem:[#allocation2 + $0x20] sm:$0xff]
    %v5196 = vld [vmem:[#allocation2 + $0x28] sm:$0xff]
    %5197 = vst.msk [vmem:[#allocation3] sm:$0xff] %vm644, %v5191
    %5198 = vst.msk [vmem:[#allocation3 + $0x30] sm:$0xff] %vm644, %v5192
    %5199 = vst.msk [vmem:[#allocation3 + $0x60] sm:$0xff] %vm644, %v5193
    %5200 = vst.msk [vmem:[#allocation3 + $0x90] sm:$0xff] %vm644, %v5194
    %5201 = vst.msk [vmem:[#allocation3 + $0xc0] sm:$0xff] %vm644, %v5195
    %5202 = vst.msk [vmem:[#allocation3 + $0xf0] sm:$0xff] %vm644, %v5196
    %v5203 = vld [vmem:[#allocation2 + $0x2] sm:$0xff]
    %v5204 = vld [vmem:[#allocation2 + $0xa] sm:$0xff]
    %v5205 = vld [vmem:[#allocation2 + $0x12] sm:$0xff]
    %v5206 = vld [vmem:[#allocation2 + $0x1a] sm:$0xff]
    %v5207 = vld [vmem:[#allocation2 + $0x22] sm:$0xff]
    %v5208 = vld [vmem:[#allocation2 + $0x2a] sm:$0xff]
    %5215 = vrot.lane.b32.xlu0 %v5203, 16
    %v5216 = vpop.permute.xlu0 %5215
    %5217 = vrot.lane.b32.xlu0 %v5204, 16
    %v5218 = vpop.permute.xlu0 %5217
    %5219 = vrot.lane.b32.xlu0 %v5205, 16
    %v5220 = vpop.permute.xlu0 %5219
    %5221 = vrot.lane.b32.xlu0 %v5206, 16
    %v5222 = vpop.permute.xlu0 %5221
    %5223 = vrot.lane.b32.xlu0 %v5207, 16
    %v5224 = vpop.permute.xlu0 %5223
    %5225 = vrot.lane.b32.xlu0 %v5208, 16
    %v5226 = vpop.permute.xlu0 %5225
    %5233 = vst.msk [vmem:[#allocation3] sm:$0xff] %vm693, %v5216
    %5234 = vst.msk [vmem:[#allocation3 + $0x30] sm:$0xff] %vm693, %v5218
    %5235 = vst.msk [vmem:[#allocation3 + $0x60] sm:$0xff] %vm693, %v5220
    %5236 = vst.msk [vmem:[#allocation3 + $0x90] sm:$0xff] %vm693, %v5222
    %5237 = vst.msk [vmem:[#allocation3 + $0xc0] sm:$0xff] %vm693, %v5224
    %5238 = vst.msk [vmem:[#allocation3 + $0xf0] sm:$0xff] %vm693, %v5226
    %v5239 = vld [vmem:[#allocation2 + $0x4] sm:$0xff]
    %v5240 = vld [vmem:[#allocation2 + $0xc] sm:$0xff]
    %v5241 = vld [vmem:[#allocation2 + $0x14] sm:$0xff]
    %v5242 = vld [vmem:[#allocation2 + $0x1c] sm:$0xff]
    %v5243 = vld [vmem:[#allocation2 + $0x24] sm:$0xff]
    %v5244 = vld [vmem:[#allocation2 + $0x2c] sm:$0xff]
    %5251 = vrot.lane.b32.xlu0 %v5239, 32
    %v5252 = vpop.permute.xlu0 %5251
    %5253 = vrot.lane.b32.xlu0 %v5240, 32
    %v5254 = vpop.permute.xlu0 %5253
    %5255 = vrot.lane.b32.xlu0 %v5241, 32
    %v5256 = vpop.permute.xlu0 %5255
    %5257 = vrot.lane.b32.xlu0 %v5242, 32
    %v5258 = vpop.permute.xlu0 %5257
    %5259 = vrot.lane.b32.xlu0 %v5243, 32
    %v5260 = vpop.permute.xlu0 %5259
    %5261 = vrot.lane.b32.xlu0 %v5244, 32
    %v5262 = vpop.permute.xlu0 %5261
    %5269 = vst.msk [vmem:[#allocation3] sm:$0xff] %vm730, %v5252
    %5270 = vst.msk [vmem:[#allocation3 + $0x30] sm:$0xff] %vm730, %v5254
    %5271 = vst.msk [vmem:[#allocation3 + $0x60] sm:$0xff] %vm730, %v5256
    %5272 = vst.msk [vmem:[#allocation3 + $0x90] sm:$0xff] %vm730, %v5258
    %5273 = vst.msk [vmem:[#allocation3 + $0xc0] sm:$0xff] %vm730, %v5260
    %5274 = vst.msk [vmem:[#allocation3 + $0xf0] sm:$0xff] %vm730, %v5262
    %v5275 = vld [vmem:[#allocation2 + $0x6] sm:$0xff]
    %v5276 = vld [vmem:[#allocation2 + $0xe] sm:$0xff]
    %v5277 = vld [vmem:[#allocation2 + $0x16] sm:$0xff]
    %v5278 = vld [vmem:[#allocation2 + $0x1e] sm:$0xff]
    %v5279 = vld [vmem:[#allocation2 + $0x26] sm:$0xff]
    %v5280 = vld [vmem:[#allocation2 + $0x2e] sm:$0xff]
    %5287 = vrot.lane.b32.xlu0 %v5275, 48
    %v5288 = vpop.permute.xlu0 %5287
    %5289 = vrot.lane.b32.xlu0 %v5276, 48
    %v5290 = vpop.permute.xlu0 %5289
    %5291 = vrot.lane.b32.xlu0 %v5277, 48
    %v5292 = vpop.permute.xlu0 %5291
    %5293 = vrot.lane.b32.xlu0 %v5278, 48
    %v5294 = vpop.permute.xlu0 %5293
    %5295 = vrot.lane.b32.xlu0 %v5279, 48
    %v5296 = vpop.permute.xlu0 %5295
    %5297 = vrot.lane.b32.xlu0 %v5280, 48
    %v5298 = vpop.permute.xlu0 %5297
    %5305 = vst.msk [vmem:[#allocation3] sm:$0xff] %vm767, %v5288
    %5306 = vst.msk [vmem:[#allocation3 + $0x30] sm:$0xff] %vm767, %v5290
    %5307 = vst.msk [vmem:[#allocation3 + $0x60] sm:$0xff] %vm767, %v5292
    %5308 = vst.msk [vmem:[#allocation3 + $0x90] sm:$0xff] %vm767, %v5294
    %5309 = vst.msk [vmem:[#allocation3 + $0xc0] sm:$0xff] %vm767, %v5296
    %5310 = vst.msk [vmem:[#allocation3 + $0xf0] sm:$0xff] %vm767, %v5298
    %v5311 = vld [vmem:[#allocation2 + $0x8] sm:$0xff]
    %v5312 = vld [vmem:[#allocation2 + $0x10] sm:$0xff]
    %v5313 = vld [vmem:[#allocation2 + $0x18] sm:$0xff]
    %v5314 = vld [vmem:[#allocation2 + $0x20] sm:$0xff]
    %v5315 = vld [vmem:[#allocation2 + $0x28] sm:$0xff]
    %v5316 = vld [vmem:[#allocation2 + $0x30] sm:$0xff]
    %5323 = vrot.lane.b32.xlu0 %v5311, 64
    %v5324 = vpop.permute.xlu0 %5323
    %5325 = vrot.lane.b32.xlu0 %v5312, 64
    %v5326 = vpop.permute.xlu0 %5325
    %5327 = vrot.lane.b32.xlu0 %v5313, 64
    %v5328 = vpop.permute.xlu0 %5327
    %5329 = vrot.lane.b32.xlu0 %v5314, 64
    %v5330 = vpop.permute.xlu0 %5329
    %5331 = vrot.lane.b32.xlu0 %v5315, 64
    %v5332 = vpop.permute.xlu0 %5331
    %5333 = vrot.lane.b32.xlu0 %v5316, 64
    %v5334 = vpop.permute.xlu0 %5333
    %5341 = vst.msk [vmem:[#allocation3] sm:$0xff] %vm804, %v5324
    %5342 = vst.msk [vmem:[#allocation3 + $0x30] sm:$0xff] %vm804, %v5326
    %5343 = vst.msk [vmem:[#allocation3 + $0x60] sm:$0xff] %vm804, %v5328
    %5344 = vst.msk [vmem:[#allocation3 + $0x90] sm:$0xff] %vm804, %v5330
    %5345 = vst.msk [vmem:[#allocation3 + $0xc0] sm:$0xff] %vm804, %v5332
    %5346 = vst.msk [vmem:[#allocation3 + $0xf0] sm:$0xff] %vm804, %v5334
    %v5347 = vld [vmem:[#allocation2 + $0xa] sm:$0xff]
    %v5348 = vld [vmem:[#allocation2 + $0x12] sm:$0xff]
    %v5349 = vld [vmem:[#allocation2 + $0x1a] sm:$0xff]
    %v5350 = vld [vmem:[#allocation2 + $0x22] sm:$0xff]
    %v5351 = vld [vmem:[#allocation2 + $0x2a] sm:$0xff]
    %v5352 = vld [vmem:[#allocation2 + $0x32] sm:$0xff]
    %5359 = vrot.lane.b32.xlu0 %v5347, 80
    %v5360 = vpop.permute.xlu0 %5359
    %5361 = vrot.lane.b32.xlu0 %v5348, 80
    %v5362 = vpop.permute.xlu0 %5361
    %5363 = vrot.lane.b32.xlu0 %v5349, 80
    %v5364 = vpop.permute.xlu0 %5363
    %5365 = vrot.lane.b32.xlu0 %v5350, 80
    %v5366 = vpop.permute.xlu0 %5365
    %5367 = vrot.lane.b32.xlu0 %v5351, 80
    %v5368 = vpop.permute.xlu0 %5367
    %5369 = vrot.lane.b32.xlu0 %v5352, 80
    %v5370 = vpop.permute.xlu0 %5369
    %5377 = vst.msk [vmem:[#allocation3] sm:$0xff] %vm841, %v5360
    %5378 = vst.msk [vmem:[#allocation3 + $0x30] sm:$0xff] %vm841, %v5362
    %5379 = vst.msk [vmem:[#allocation3 + $0x60] sm:$0xff] %vm841, %v5364
    %5380 = vst.msk [vmem:[#allocation3 + $0x90] sm:$0xff] %vm841, %v5366
    %5381 = vst.msk [vmem:[#allocation3 + $0xc0] sm:$0xff] %vm841, %v5368
    %5382 = vst.msk [vmem:[#allocation3 + $0xf0] sm:$0xff] %vm841, %v5370
    %v5383 = vld [vmem:[#allocation2 + $0xc] sm:$0xff]
    %v5384 = vld [vmem:[#allocation2 + $0x14] sm:$0xff]
    %v5385 = vld [vmem:[#allocation2 + $0x1c] sm:$0xff]
    %v5386 = vld [vmem:[#allocation2 + $0x24] sm:$0xff]
    %v5387 = vld [vmem:[#allocation2 + $0x2c] sm:$0xff]
    %v5388 = vld [vmem:[#allocation2 + $0x34] sm:$0xff]
    %5395 = vrot.lane.b32.xlu0 %v5383, 96
    %v5396 = vpop.permute.xlu0 %5395
    %5397 = vrot.lane.b32.xlu0 %v5384, 96
    %v5398 = vpop.permute.xlu0 %5397
    %5399 = vrot.lane.b32.xlu0 %v5385, 96
    %v5400 = vpop.permute.xlu0 %5399
    %5401 = vrot.lane.b32.xlu0 %v5386, 96
    %v5402 = vpop.permute.xlu0 %5401
    %5403 = vrot.lane.b32.xlu0 %v5387, 96
    %v5404 = vpop.permute.xlu0 %5403
    %5405 = vrot.lane.b32.xlu0 %v5388, 96
    %v5406 = vpop.permute.xlu0 %5405
    %5413 = vst.msk [vmem:[#allocation3] sm:$0xff] %vm878, %v5396
    %5414 = vst.msk [vmem:[#allocation3 + $0x30] sm:$0xff] %vm878, %v5398
    %5415 = vst.msk [vmem:[#allocation3 + $0x60] sm:$0xff] %vm878, %v5400
    %5416 = vst.msk [vmem:[#allocation3 + $0x90] sm:$0xff] %vm878, %v5402
    %5417 = vst.msk [vmem:[#allocation3 + $0xc0] sm:$0xff] %vm878, %v5404
    %5418 = vst.msk [vmem:[#allocation3 + $0xf0] sm:$0xff] %vm878, %v5406
    %v5419 = vld [vmem:[#allocation2 + $0xe] sm:$0xff]
    %v5420 = vld [vmem:[#allocation2 + $0x16] sm:$0xff]
    %v5421 = vld [vmem:[#allocation2 + $0x1e] sm:$0xff]
    %v5422 = vld [vmem:[#allocation2 + $0x26] sm:$0xff]
    %v5423 = vld [vmem:[#allocation2 + $0x2e] sm:$0xff]
    %v5424 = vld [vmem:[#allocation2 + $0x36] sm:$0xff]
    %5431 = vrot.lane.b32.xlu0 %v5419, 112
    %v5432 = vpop.permute.xlu0 %5431
    %5433 = vrot.lane.b32.xlu0 %v5420, 112
    %v5434 = vpop.permute.xlu0 %5433
    %5435 = vrot.lane.b32.xlu0 %v5421, 112
    %v5436 = vpop.permute.xlu0 %5435
    %5437 = vrot.lane.b32.xlu0 %v5422, 112
    %v5438 = vpop.permute.xlu0 %5437
    %5439 = vrot.lane.b32.xlu0 %v5423, 112
    %v5440 = vpop.permute.xlu0 %5439
    %5441 = vrot.lane.b32.xlu0 %v5424, 112
    %v5442 = vpop.permute.xlu0 %5441
    %5449 = vst.msk [vmem:[#allocation3] sm:$0xff] %vm915, %v5432
    %5450 = vst.msk [vmem:[#allocation3 + $0x30] sm:$0xff] %vm915, %v5434
    %5451 = vst.msk [vmem:[#allocation3 + $0x60] sm:$0xff] %vm915, %v5436
    %5452 = vst.msk [vmem:[#allocation3 + $0x90] sm:$0xff] %vm915, %v5438
    %5453 = vst.msk [vmem:[#allocation3 + $0xc0] sm:$0xff] %vm915, %v5440
    %5454 = vst.msk [vmem:[#allocation3 + $0xf0] sm:$0xff] %vm915, %v5442
    %v5455 = vld [vmem:[#allocation2 + $0x10] sm:$0xff]
    %v5456 = vld [vmem:[#allocation2 + $0x18] sm:$0xff]
    %v5457 = vld [vmem:[#allocation2 + $0x20] sm:$0xff]
    %v5458 = vld [vmem:[#allocation2 + $0x28] sm:$0xff]
    %v5459 = vld [vmem:[#allocation2 + $0x30] sm:$0xff]
    %v5460 = vld [vmem:[#allocation2 + $0x38] sm:$0xff]
    %5461 = vst.msk [vmem:[#allocation3 + $0x8] sm:$0xff] %vm644, %v5455
    %5462 = vst.msk [vmem:[#allocation3 + $0x38] sm:$0xff] %vm644, %v5456
    %5463 = vst.msk [vmem:[#allocation3 + $0x68] sm:$0xff] %vm644, %v5457
    %5464 = vst.msk [vmem:[#allocation3 + $0x98] sm:$0xff] %vm644, %v5458
    %5465 = vst.msk [vmem:[#allocation3 + $0xc8] sm:$0xff] %vm644, %v5459
    %5466 = vst.msk [vmem:[#allocation3 + $0xf8] sm:$0xff] %vm644, %v5460
    %v5467 = vld [vmem:[#allocation2 + $0x12] sm:$0xff]
    %v5468 = vld [vmem:[#allocation2 + $0x1a] sm:$0xff]
    %v5469 = vld [vmem:[#allocation2 + $0x22] sm:$0xff]
    %v5470 = vld [vmem:[#allocation2 + $0x2a] sm:$0xff]
    %v5471 = vld [vmem:[#allocation2 + $0x32] sm:$0xff]
    %v5472 = vld [vmem:[#allocation2 + $0x3a] sm:$0xff]
    %5479 = vrot.lane.b32.xlu0 %v5467, 16
    %v5480 = vpop.permute.xlu0 %5479
    %5481 = vrot.lane.b32.xlu0 %v5468, 16
    %v5482 = vpop.permute.xlu0 %5481
    %5483 = vrot.lane.b32.xlu0 %v5469, 16
    %v5484 = vpop.permute.xlu0 %5483
    %5485 = vrot.lane.b32.xlu0 %v5470, 16
    %v5486 = vpop.permute.xlu0 %5485
    %5487 = vrot.lane.b32.xlu0 %v5471, 16
    %v5488 = vpop.permute.xlu0 %5487
    %5489 = vrot.lane.b32.xlu0 %v5472, 16
    %v5490 = vpop.permute.xlu0 %5489
    %5497 = vst.msk [vmem:[#allocation3 + $0x8] sm:$0xff] %vm693, %v5480
    %5498 = vst.msk [vmem:[#allocation3 + $0x38] sm:$0xff] %vm693, %v5482
    %5499 = vst.msk [vmem:[#allocation3 + $0x68] sm:$0xff] %vm693, %v5484
    %5500 = vst.msk [vmem:[#allocation3 + $0x98] sm:$0xff] %vm693, %v5486
    %5501 = vst.msk [vmem:[#allocation3 + $0xc8] sm:$0xff] %vm693, %v5488
    %5502 = vst.msk [vmem:[#allocation3 + $0xf8] sm:$0xff] %vm693, %v5490
    %v5503 = vld [vmem:[#allocation2 + $0x14] sm:$0xff]
    %v5504 = vld [vmem:[#allocation2 + $0x1c] sm:$0xff]
    %v5505 = vld [vmem:[#allocation2 + $0x24] sm:$0xff]
    %v5506 = vld [vmem:[#allocation2 + $0x2c] sm:$0xff]
    %v5507 = vld [vmem:[#allocation2 + $0x34] sm:$0xff]
    %v5508 = vld [vmem:[#allocation2 + $0x3c] sm:$0xff]
    %5515 = vrot.lane.b32.xlu0 %v5503, 32
    %v5516 = vpop.permute.xlu0 %5515
    %5517 = vrot.lane.b32.xlu0 %v5504, 32
    %v5518 = vpop.permute.xlu0 %5517
    %5519 = vrot.lane.b32.xlu0 %v5505, 32
    %v5520 = vpop.permute.xlu0 %5519
    %5521 = vrot.lane.b32.xlu0 %v5506, 32
    %v5522 = vpop.permute.xlu0 %5521
    %5523 = vrot.lane.b32.xlu0 %v5507, 32
    %v5524 = vpop.permute.xlu0 %5523
    %5525 = vrot.lane.b32.xlu0 %v5508, 32
    %v5526 = vpop.permute.xlu0 %5525
    %5533 = vst.msk [vmem:[#allocation3 + $0x8] sm:$0xff] %vm730, %v5516
    %5534 = vst.msk [vmem:[#allocation3 + $0x38] sm:$0xff] %vm730, %v5518
    %5535 = vst.msk [vmem:[#allocation3 + $0x68] sm:$0xff] %vm730, %v5520
    %5536 = vst.msk [vmem:[#allocation3 + $0x98] sm:$0xff] %vm730, %v5522
    %5537 = vst.msk [vmem:[#allocation3 + $0xc8] sm:$0xff] %vm730, %v5524
    %5538 = vst.msk [vmem:[#allocation3 + $0xf8] sm:$0xff] %vm730, %v5526
    %v5539 = vld [vmem:[#allocation3] sm:$0xff]
    %v5540 = vld [vmem:[#allocation3 + $0x8] sm:$0xff]
    %v5541 = vld [vmem:[#allocation3 + $0x30] sm:$0xff]
    %v5542 = vld [vmem:[#allocation3 + $0x38] sm:$0xff]
    %v5543 = vld [vmem:[#allocation3 + $0x60] sm:$0xff]
    %v5544 = vld [vmem:[#allocation3 + $0x68] sm:$0xff]
    %v5545 = vld [vmem:[#allocation3 + $0x90] sm:$0xff]
    %v5546 = vld [vmem:[#allocation3 + $0x98] sm:$0xff]
    %v5547 = vld [vmem:[#allocation3 + $0xc0] sm:$0xff]
    %v5548 = vld [vmem:[#allocation3 + $0xc8] sm:$0xff]
    %v5549 = vld [vmem:[#allocation3 + $0xf0] sm:$0xff]
    %v5550 = vld [vmem:[#allocation3 + $0xf8] sm:$0xff]
    %v5551 = vld [vmem:[%s20] sm:$0xff]
    %v5552 = vld [vmem:[%s20 + $0x8] sm:$0xff]
    %v5553 = vld [vmem:[%s20 + $0x10] sm:$0xff]
    %v5554 = vld [vmem:[%s20 + $0x18] sm:$0xff]
    %v5555 = vld [vmem:[%s20 + $0x20] sm:$0xff]
    %v5556 = vld [vmem:[%s20 + $0x28] sm:$0xff]
    %v5557 = vld [vmem:[%s20 + $0x30] sm:$0xff]
    %v5558 = vld [vmem:[%s20 + $0x38] sm:$0xff]
    %v5559 = vld [vmem:[%s20 + $0x40] sm:$0xff]
    %v5560 = vld [vmem:[%s20 + $0x48] sm:$0xff]
    %v5561 = vld [vmem:[%s20 + $0x50] sm:$0xff]
    %v5562 = vld [vmem:[%s20 + $0x58] sm:$0xff]
    %v5563 = vld [vmem:[%s20 + $0x60] sm:$0xff]
    %v5564 = vld [vmem:[%s20 + $0x68] sm:$0xff]
    %v5565 = vld [vmem:[%s20 + $0x70] sm:$0xff]
    %v5566 = vld [vmem:[%s20 + $0x78] sm:$0xff]
    %v5567 = vld [vmem:[%s20 + $0x80] sm:$0xff]
    %v5568 = vld [vmem:[%s20 + $0x88] sm:$0xff]
    %v5569 = vld [vmem:[%s20 + $0x90] sm:$0xff]
    %v5570 = vld [vmem:[%s20 + $0x98] sm:$0xff]
    %v5571 = vld [vmem:[%s20 + $0xa0] sm:$0xff]
    %v5572 = vld [vmem:[%s20 + $0xa8] sm:$0xff]
    %v5573 = vld [vmem:[%s21] sm:$0x1]
    %v5575 = vlaneseq
    %v5576 = vshrl.u32 %v5575, 7
    %v5577 = vsub.s32 0, %v5576
    %v5578 = vrot.slane %v5573, %v5577
    %v5581 = vsel %vm1047, %v5540, 0
    %v5584 = vsel %vm1047, %v5542, 0
    %v5587 = vsel %vm1047, %v5544, 0
    %v5590 = vsel %vm1047, %v5546, 0
    %v5593 = vsel %vm1047, %v5548, 0
    %v5596 = vsel %vm1047, %v5550, 0
    %5598 = vmatprep.subr.mxu0 0.0
    %5599 = vmatpush1.msra.mxu0 %v5566
    %5600 = vmatprep.subr.mxu0 0.0
    %5601 = vmatpush1.msra.mxu0 %v5565
    %5602 = vmatprep.subr.mxu0 0.0
    %5603 = vmatpush1.msra.mxu0 %v5564
    %5604 = vmatprep.subr.mxu0 0.0
    %5605 = vmatpush1.msra.mxu0 %v5563
    %5606 = vmatprep.subr.mxu0 0.0
    %5607 = vmatpush1.msra.mxu0 %v5562
    %5608 = vmatprep.subr.mxu0 0.0
    %5609 = vmatpush1.msra.mxu0 %v5561
    %5610 = vmatprep.subr.mxu0 0.0
    %5611 = vmatpush1.msra.mxu0 %v5560
    %5612 = vmatprep.subr.mxu0 0.0
    %5613 = vmatpush1.msra.mxu0 %v5559
    %5614 = vmatprep.subr.mxu0 0.0
    %5615 = vmatpush1.msra.mxu0 %v5558
    %5616 = vmatprep.subr.mxu0 0.0
    %5617 = vmatpush1.msra.mxu0 %v5557
    %5618 = vmatprep.subr.mxu0 0.0
    %5619 = vmatpush1.msra.mxu0 %v5556
    %5620 = vmatprep.subr.mxu0 0.0
    %5621 = vmatpush1.msra.mxu0 %v5555
    %5622 = vmatprep.subr.mxu0 0.0
    %5623 = vmatpush1.msra.mxu0 %v5554
    %5624 = vmatprep.subr.mxu0 0.0
    %5625 = vmatpush1.msra.mxu0 %v5553
    %5626 = vmatprep.subr.mxu0 0.0
    %5627 = vmatpush1.msra.mxu0 %v5552
    %5628 = vmatprep.subr.mxu0 0.0
    %5629 = vmatpush1.msra.mxu0 %v5551
    %5630 = vmatprep.subr.mxu0 0.0
    %5631 = vmatpush2.msra.mxu0 0.0
    %5632 = vmatprep.subr.mxu0 0.0
    %5633 = vmatpush2.msra.mxu0 0.0
    %5634 = vmatprep.subr.mxu0 0.0
    %5635 = vmatpush2.msra.mxu0 0.0
    %5636 = vmatprep.subr.mxu0 0.0
    %5637 = vmatpush2.msra.mxu0 0.0
    %5638 = vmatprep.subr.mxu0 0.0
    %5639 = vmatpush2.msra.mxu0 0.0
    %5640 = vmatprep.subr.mxu0 0.0
    %5641 = vmatpush2.msra.mxu0 0.0
    %5642 = vmatprep.subr.mxu0 0.0
    %5643 = vmatpush2.msra.mxu0 0.0
    %5644 = vmatprep.subr.mxu0 0.0
    %5645 = vmatpush2.msra.mxu0 0.0
    %5646 = vmatprep.subr.mxu0 0.0
    %5647 = vmatpush2.msra.mxu0 0.0
    %5648 = vmatprep.subr.mxu0 0.0
    %5649 = vmatpush2.msra.mxu0 0.0
    %5650 = vmatprep.subr.mxu0 0.0
    %5651 = vmatpush2.msra.mxu0 %v5572
    %5652 = vmatprep.subr.mxu0 0.0
    %5653 = vmatpush2.msra.mxu0 %v5571
    %5654 = vmatprep.subr.mxu0 0.0
    %5655 = vmatpush2.msra.mxu0 %v5570
    %5656 = vmatprep.subr.mxu0 0.0
    %5657 = vmatpush2.msra.mxu0 %v5569
    %5658 = vmatprep.subr.mxu0 0.0
    %5659 = vmatpush2.msra.mxu0 %v5568
    %5660 = vmatprep.subr.mxu0 0.0
    %5661 = vmatpush2.msra.mxu0 %v5567
    %5662 = vmatprep.mubr.f32.mxu0 %v5581
    %5663 = vmatmul.mubr.f32.gmra.mxu0 %v5539
    %v5664 = vpop.f32.mrf.mxu0
    %v5665 = vadd.f32 %v5578, %v5664
    %v5666 = vpop.f32.mrf.mxu0
    %5667 = vmatprep.mubr.f32.mxu0 %v5584
    %5668 = vmatmul.mubr.f32.gmra.mxu0 %v5541
    %v5669 = vpop.f32.mrf.mxu0
    %v5670 = vadd.f32 %v5578, %v5669
    %v5671 = vpop.f32.mrf.mxu0
    %5672 = vmatprep.mubr.f32.mxu0 %v5587
    %5673 = vmatmul.mubr.f32.gmra.mxu0 %v5543
    %v5674 = vpop.f32.mrf.mxu0
    %v5675 = vadd.f32 %v5578, %v5674
    %v5676 = vpop.f32.mrf.mxu0
    %5677 = vmatprep.mubr.f32.mxu0 %v5590
    %5678 = vmatmul.mubr.f32.gmra.mxu0 %v5545
    %v5679 = vpop.f32.mrf.mxu0
    %v5680 = vadd.f32 %v5578, %v5679
    %v5681 = vpop.f32.mrf.mxu0
    %5682 = vmatprep.mubr.f32.mxu0 %v5593
    %5683 = vmatmul.mubr.f32.gmra.mxu0 %v5547
    %v5684 = vpop.f32.mrf.mxu0
    %v5685 = vadd.f32 %v5578, %v5684
    %v5686 = vpop.f32.mrf.mxu0
    %5687 = vmatprep.mubr.f32.mxu0 %v5596
    %5688 = vmatmul.mubr.f32.gmra.mxu0 %v5549
    %v5689 = vpop.f32.mrf.mxu0
    %v5690 = vadd.f32 %v5578, %v5689
    %v5691 = vpop.f32.mrf.mxu0
    %5692 = vdwg.mxu0
    %v5693 = vsub.f32 0.0, %v5665
    %v5694 = vsub.f32 0.0, %v5670
    %v5695 = vsub.f32 0.0, %v5675
    %v5696 = vsub.f32 0.0, %v5680
    %v5697 = vsub.f32 0.0, %v5685
    %v5698 = vsub.f32 0.0, %v5690
    %v5699 = vmul.f32 %v5693, 1.442695
    %v5700 = vpow.pop %v5699
    %v5701 = vmul.f32 %v5694, 1.442695
    %v5702 = vpow.pop %v5701
    %v5703 = vmul.f32 %v5695, 1.442695
    %v5704 = vpow.pop %v5703
    %v5705 = vmul.f32 %v5696, 1.442695
    %v5706 = vpow.pop %v5705
    %v5707 = vmul.f32 %v5697, 1.442695
    %v5708 = vpow.pop %v5707
    %v5709 = vmul.f32 %v5698, 1.442695
    %v5710 = vpow.pop %v5709
    %v5711 = vadd.f32 %v5700, 1.0
    %v5712 = vadd.f32 %v5702, 1.0
    %v5713 = vadd.f32 %v5704, 1.0
    %v5714 = vadd.f32 %v5706, 1.0
    %v5715 = vadd.f32 %v5708, 1.0
    %v5716 = vadd.f32 %v5710, 1.0
    %v5717 = vrcp.pop %v5711
    %v5718 = vmul.f32 1.0, %v5717
    %v5719 = vrcp.pop %v5712
    %v5720 = vmul.f32 1.0, %v5719
    %v5721 = vrcp.pop %v5713
    %v5722 = vmul.f32 1.0, %v5721
    %v5723 = vrcp.pop %v5714
    %v5724 = vmul.f32 1.0, %v5723
    %v5725 = vrcp.pop %v5715
    %v5726 = vmul.f32 1.0, %v5725
    %v5727 = vrcp.pop %v5716
    %v5728 = vmul.f32 1.0, %v5727
    %5729 = vst.msk [vmem:[%s23] sm:$0xff] %vm99, %v5718
    %5730 = vst.msk [vmem:[%s23 + $0x8] sm:$0xff] %vm99, %v5720
    %5731 = vst.msk [vmem:[%s23 + $0x10] sm:$0xff] %vm99, %v5722
    %5732 = vst.msk [vmem:[%s23 + $0x18] sm:$0xff] %vm99, %v5724
    %5733 = vst.msk [vmem:[%s23 + $0x20] sm:$0xff] %vm99, %v5726
    %5734 = vst.msk [vmem:[%s23 + $0x28] sm:$0xff] %vm99, %v5728
    // Predicated region
    $region94: #{molecular_vae_forward.1} parent=1 // pred_check
      _
    $region95: #{molecular_vae_forward.1} parent=1 // pred_check_branch
      %5736 = sbr.rel (0) target = $region97
    $region96: #{molecular_vae_forward.1} parent=1 // pred_region
      _
    $region97: #{molecular_vae_forward.1} parent=1 // pred_fallthru
      _
    // Predicated region
    $region98: #{molecular_vae_forward.1} parent=1 // pred_check
      _
    $region99: #{molecular_vae_forward.1} parent=1 // pred_check_branch
      %5738 = sbr.rel (0) target = $region101
    $region100: #{molecular_vae_forward.1} parent=1 // pred_region
      _
    $region101: #{molecular_vae_forward.1} parent=1 // pred_fallthru
      _
    // Predicated region
    $region102: #{molecular_vae_forward.1} parent=1 // pred_check
      _
    $region103: #{molecular_vae_forward.1} parent=1 // pred_check_branch
      %5740 = sbr.rel (0) target = $region105
    $region104: #{molecular_vae_forward.1} parent=1 // pred_region
      _
    $region105: #{molecular_vae_forward.1} parent=1 // pred_fallthru
      _
    // Predicated region
    $region106: #{molecular_vae_forward.1} parent=1 // pred_check
      _
    $region107: #{molecular_vae_forward.1} parent=1 // pred_check_branch
      %5742 = sbr.rel (0) target = $region109
    $region108: #{molecular_vae_forward.1} parent=1 // pred_region
      _
    $region109: #{molecular_vae_forward.1} parent=1 // pred_fallthru
      _
    %5743 = vsyncpa [#allocation6], 1

</llo_original>
